<compile_context>
chip_gen: v7x
topology: tpu7x:2x2x1
jax: 0.10.0
libtpu: 0.0.40
codegen_flags: <defaults>
</compile_context>

<pallas_src>
import functools

import jax
import jax.numpy as jnp
import numpy as np
from jax.experimental import pallas as pl
from jax.experimental.pallas import tpu as pltpu

QUAN_WIDTH = 16
QMAX = 2.0 ** (QUAN_WIDTH - 1) - 1.0
BN_EPS = 1e-5
LANE = 128

# bf16 MXU operands (f32 accumulate) + bf16 storage of the two big
# intermediates; trades ~1e-3-level absolute error for 2x MXU / HBM savings.
MATMUL_DTYPE = jnp.bfloat16
ACT_DTYPE = jnp.bfloat16


# --------------------------------------------------------------------------- helpers
def _round_up(x, m):
    return (x + m - 1) // m * m


def _vmem_limit_bytes():
    # Generation-aware: ~3/4 of physical VMEM, capped at 100 MiB.
    #   v5e/v6e (128 MiB) -> 96 MiB, v7x (64 MiB) -> 48 MiB.
    try:
        cap = int(getattr(pltpu.get_tpu_info(), "vmem_capacity_bytes",
                          64 * 1024 * 1024))
    except Exception:
        cap = 64 * 1024 * 1024
    return int(max(32 * 1024 * 1024, min(100 * 1024 * 1024, cap * 3 // 4)))


VMEM_LIMIT_BYTES = _vmem_limit_bytes()
_COMPILER_PARAMS = pltpu.CompilerParams(
    dimension_semantics=("parallel",),
    vmem_limit_bytes=VMEM_LIMIT_BYTES)


def _pick_row_tile(rows):
    # Largest tile that divides the row count; prefer >= 2 grid steps so the
    # BlockSpec pipeline actually double-buffers.
    for tm in (1024, 512, 256, 128):
        if rows % tm == 0 and rows // tm >= 2:
            return tm
    for tm in (1024, 512, 256, 128, 64, 32, 16, 8):
        if rows % tm == 0:
            return tm
    # TODO(synk): ragged row counts would need a masked final tile.
    raise ValueError(f"row count {rows} must be a multiple of 8")


def fake_quantize(x, width=QUAN_WIDTH):
    """Symmetric per-tensor fake quantization (stand-in for FakeQuantize.apply)."""
    n = 2.0 ** (width - 1) - 1.0
    s = jnp.max(jnp.abs(x))
    s = jnp.where(s > 0.0, s, 1.0)
    return jnp.round(x * (n / s)) * (s / n)


def conv_bn_fold(w, gamma, beta, mean, var, eps=BN_EPS):
    """ConvBNTrans: fold BatchNorm (running stats) into a bias-free conv."""
    scale = gamma / jnp.sqrt(var + eps)
    w_f = w * scale[:, None, None, None]
    b_f = beta - mean * scale
    return w_f, b_f


def _smem_scale(s):
    """Raw FQ max as a (1, 1) f32 SMEM operand; n/s and s/n derived in-kernel."""
    return jnp.reshape(s, (1, 1)).astype(jnp.float32)


def _fq_consts(scale_ref):
    """In-kernel scalar math: s -> (QMAX/s, s/QMAX), guarded against s == 0."""
    s = scale_ref[0, 0]
    s = jnp.where(s > 0.0, s, jnp.float32(1.0))
    return QMAX / s, s / QMAX


# --------------------------------------------------------------------------- 1x1 conv (matmul) stage
def _mm_kernel(scale_ref, x_ref, w_ref, b_ref, o_ref, mx_ref, *,
               relu, quantize_input, abs_max):
    x = x_ref[...].astype(jnp.float32)
    if quantize_input:      # apply the producer's FakeQuantize (hoisted scale)
        inv, sc = _fq_consts(scale_ref)
        x = jnp.round(x * inv) * sc
    acc = jnp.dot(x.astype(MATMUL_DTYPE), w_ref[...],
                  preferred_element_type=jnp.float32)
    acc = acc + b_ref[...]
    if relu:
        acc = jnp.maximum(acc, 0.0)
    y = acc.astype(o_ref.dtype)
    o_ref[...] = y
    m = y.astype(jnp.float32)
    if abs_max:
        m = jnp.abs(m)
    mx_ref[...] = jnp.max(m, axis=0, keepdims=True)   # per-tile max -> FQ scale


def _mm_stage(x, w, b, scale, *, relu, quantize_input, abs_max, tm, out_dtype):
    rows, k = x.shape
    c = w.shape[1]
    nt = rows // tm
    kern = functools.partial(_mm_kernel, relu=relu,
                             quantize_input=quantize_input, abs_max=abs_max)
    b_in = np.dtype(x.dtype).itemsize
    b_out = np.dtype(out_dtype).itemsize
    out, mx = pl.pallas_call(
        kern,
        grid=(nt,),
        in_specs=[
            pl.BlockSpec((1, 1), lambda i: (0, 0),
                         memory_space=pltpu.MemorySpace.SMEM),
            pl.BlockSpec((tm, k), lambda i: (i, 0)),
            pl.BlockSpec((k, c), lambda i: (0, 0)),
            pl.BlockSpec((1, c), lambda i: (0, 0)),
        ],
        out_specs=[
            pl.BlockSpec((tm, c), lambda i: (i, 0)),
            pl.BlockSpec((1, c), lambda i: (0, i)),
        ],
        out_shape=[
            jax.ShapeDtypeStruct((rows, c), out_dtype),
            jax.ShapeDtypeStruct((1, nt * c), jnp.float32),
        ],
        compiler_params=_COMPILER_PARAMS,
        cost_estimate=pl.CostEstimate(
            flops=2 * rows * k * c, transcendentals=0,
            bytes_accessed=int(b_in * rows * k + 2 * k * c + b_out * rows * c)),
    )(scale, x, w, b.reshape(1, c))
    return out, jnp.max(mx)


# --------------------------------------------------------------------------- 3x3 conv stage
def _conv3x3_kernel(scale_ref, x_ref, w_ref, b_ref, o_ref, mx_ref, s_ref, *, H, W):
    C = w_ref.shape[2]            # output / input channels (lane-padded)
    Wp = s_ref.shape[1]           # padded width, rounded up to a multiple of 8
    inv, sc = _fq_consts(scale_ref)

    # Zero the slab every grid step (safe under megacore "parallel" sharding),
    # then scatter the FQ'd image into the three dx-shifted lane groups.
    # Group dx holds padded_flat[r + dx] at slab row r, so each dy is a single
    # sublane-aligned matmul with K = 3*C.
    s_ref[...] = jnp.zeros_like(s_ref)
    img_q = jnp.round(x_ref[0].astype(jnp.float32) * inv) * sc     # (H, W, C)
    s_ref[1:H + 1, 1:W + 1, 0:C] = img_q                           # dx = 0
    s_ref[1:H + 1, 0:W, C:2 * C] = img_q                           # dx = 1
    s_ref[1:H + 1, 0:W - 1, 2 * C:3 * C] = img_q[:, 1:W, :]        # dx = 2
    s_ref[0:H, Wp - 1:Wp, 2 * C:3 * C] = img_q[:, 0:1, :]          # dx = 2 wrap

    # 3x3 / stride-1 / pad-1 conv == 3 aligned matmuls (one per kernel row dy).
    # TODO(synk): allocate the slab in bf16 and quantize directly into it to
    #             halve tap-read traffic (requires 16-aligned Wp for packing).
    acc = None
    for dy in range(3):
        lhs = s_ref[dy:dy + H, :, :].reshape(H * Wp, 3 * C).astype(MATMUL_DTYPE)
        t = jnp.dot(lhs, w_ref[dy], preferred_element_type=jnp.float32)
        acc = t if acc is None else acc + t

    y = jnp.maximum(acc + b_ref[...], 0.0)                         # (H*Wp, C)
    y = y.reshape(H, Wp, C)[:, 0:W, :]                             # drop pad cols
    yb = y.astype(o_ref.dtype)
    o_ref[0] = yb                                                  # compact (H, W, C)
    mx_ref[...] = jnp.max(yb.astype(jnp.float32).reshape(H * W, C),
                          axis=0, keepdims=True)


def _conv3x3_stage(a1_img, w2s, b2, scale, *, H, W):
    n = a1_img.shape[0]
    cin3 = w2s.shape[1]           # 3 * C
    c = w2s.shape[2]
    wp = _round_up(W + 2, 8)
    kern = functools.partial(_conv3x3_kernel, H=H, W=W)
    b_act = np.dtype(ACT_DTYPE).itemsize
    out, mx = pl.pallas_call(
        kern,
        grid=(n,),
        in_specs=[
            pl.BlockSpec((1, 1), lambda i: (0, 0),
                         memory_space=pltpu.MemorySpace.SMEM),
            pl.BlockSpec((1, H, W, c), lambda i: (i, 0, 0, 0)),
            pl.BlockSpec((3, cin3, c), lambda i: (0, 0, 0)),
            pl.BlockSpec((1, c), lambda i: (0, 0)),
        ],
        out_specs=[
            pl.BlockSpec((1, H, W, c), lambda i: (i, 0, 0, 0)),
            pl.BlockSpec((1, c), lambda i: (0, i)),
        ],
        out_shape=[
            jax.ShapeDtypeStruct((n, H, W, c), ACT_DTYPE),
            jax.ShapeDtypeStruct((1, n * c), jnp.float32),
        ],
        scratch_shapes=[pltpu.VMEM((H + 2, wp, 3 * c), jnp.float32)],
        compiler_params=_COMPILER_PARAMS,
        cost_estimate=pl.CostEstimate(
            flops=2 * n * H * wp * cin3 * c * 3, transcendentals=0,
            bytes_accessed=int(2 * b_act * n * H * W * c + 2 * 3 * cin3 * c)),
    )(scale, a1_img, w2s, b2.reshape(1, c))
    return out, jnp.max(mx)


# --------------------------------------------------------------------------- epilogues
def _residual_kernel(scale_ref, y_ref, r_ref, o_ref, mx_ref):
    inv, sc = _fq_consts(scale_ref)
    yq = jnp.round(y_ref[...] * inv) * sc          # FQ(conv3 out)
    z = jnp.maximum(yq + r_ref[...], 0.0)          # += identity residual; relu
    o_ref[...] = z
    mx_ref[...] = jnp.max(z, axis=0, keepdims=True)


def _residual_stage(y, residual, scale, *, tm):
    rows, c = y.shape
    nt = rows // tm
    out, mx = pl.pallas_call(
        _residual_kernel,
        grid=(nt,),
        in_specs=[
            pl.BlockSpec((1, 1), lambda i: (0, 0),
                         memory_space=pltpu.MemorySpace.SMEM),
            pl.BlockSpec((tm, c), lambda i: (i, 0)),
            pl.BlockSpec((tm, c), lambda i: (i, 0)),
        ],
        out_specs=[
            pl.BlockSpec((tm, c), lambda i: (i, 0)),
            pl.BlockSpec((1, c), lambda i: (0, i)),
        ],
        out_shape=[
            jax.ShapeDtypeStruct((rows, c), jnp.float32),
            jax.ShapeDtypeStruct((1, nt * c), jnp.float32),
        ],
        compiler_params=_COMPILER_PARAMS,
        cost_estimate=pl.CostEstimate(
            flops=4 * rows * c, transcendentals=0,
            bytes_accessed=int(4 * 3 * rows * c)),
    )(scale, y, residual)
    return out, jnp.max(mx)


def _quantize_kernel(scale_ref, x_ref, o_ref):
    inv, sc = _fq_consts(scale_ref)
    o_ref[...] = jnp.round(x_ref[...] * inv) * sc


def _quantize_stage(x, scale, *, tm):
    rows, c = x.shape
    nt = rows // tm
    return pl.pallas_call(
        _quantize_kernel,
        grid=(nt,),
        in_specs=[
            pl.BlockSpec((1, 1), lambda i: (0, 0),
                         memory_space=pltpu.MemorySpace.SMEM),
            pl.BlockSpec((tm, c), lambda i: (i, 0)),
        ],
        out_specs=pl.BlockSpec((tm, c), lambda i: (i, 0)),
        out_shape=jax.ShapeDtypeStruct((rows, c), jnp.float32),
        compiler_params=_COMPILER_PARAMS,
        cost_estimate=pl.CostEstimate(
            flops=2 * rows * c, transcendentals=0,
            bytes_accessed=int(4 * 2 * rows * c)),
    )(scale, x)


# --------------------------------------------------------------------------- forward
def bottleneck_forward(x_nchw, w1, bn1, w2, bn2, w3, bn3):
    n, cin, h, w = x_nchw.shape
    planes = w1.shape[0]
    cout = planes * 4
    assert cin == cout, "identity residual requires inplanes == planes * 4"
    # TODO(synk): downsample branch (strided 1x1 conv + BN) / stride != 1.

    # ---- parameter glue (tiny, plain JAX): BN fold + weight/bias fake-quant ----
    w1f, b1f = conv_bn_fold(w1, *bn1)
    w2f, b2f = conv_bn_fold(w2, *bn2)
    w3f, b3f = conv_bn_fold(w3, *bn3)
    qw1, qb1 = fake_quantize(w1f), fake_quantize(b1f)
    qw2, qb2 = fake_quantize(w2f), fake_quantize(b2f)
    qw3, qb3 = fake_quantize(w3f), fake_quantize(b3f)

    # ---- pad channel dims to multiples of 128 lanes (dense stores, full MXU tiles) ----
    cin_p = _round_up(cin, LANE)
    mid_p = _round_up(planes, LANE)
    cout_p = _round_up(cout, LANE)

    w1m = (jnp.zeros((cin_p, mid_p), jnp.float32)
           .at[:cin, :planes].set(jnp.transpose(qw1[:, :, 0, 0], (1, 0)))
           .astype(MATMUL_DTYPE))
    b1v = jnp.zeros((mid_p,), jnp.float32).at[:planes].set(qb1)
    # conv2 weights as (dy, dx*C + cin, cout): matches the lane-concatenated slab.
    w2t = jnp.transpose(qw2, (2, 3, 1, 0))                 # (kh, kw, cin, cout)
    w2s = (jnp.zeros((3, 3, mid_p, mid_p), jnp.float32)
           .at[:, :, :planes, :planes].set(w2t)
           .reshape(3, 3 * mid_p, mid_p).astype(MATMUL_DTYPE))
    b2v = jnp.zeros((mid_p,), jnp.float32).at[:planes].set(qb2)
    w3m = (jnp.zeros((mid_p, cout_p), jnp.float32)
           .at[:planes, :cout].set(jnp.transpose(qw3[:, :, 0, 0], (1, 0)))
           .astype(MATMUL_DTYPE))
    b3v = jnp.zeros((cout_p,), jnp.float32).at[:cout].set(qb3)

    # ---- activations as (rows = N*H*W, channels) matrices ----
    rows = n * h * w
    tm = _pick_row_tile(rows)
    x_nhwc = jnp.transpose(x_nchw, (0, 2, 3, 1))
    xmat = jnp.zeros((rows, cin_p), jnp.float32).at[:, :cin].set(
        x_nhwc.reshape(rows, cin))

    ident = jnp.ones((1, 1), jnp.float32)   # unused (stage 1 input not quantized)

    # stage 1: 1x1 conv + bias + relu (bf16 out); per-tile maxima -> s1
    a1, s1 = _mm_stage(xmat, w1m, b1v, ident, relu=True, quantize_input=False,
                       abs_max=False, tm=tm, out_dtype=ACT_DTYPE)

    # stage 2: FQ(s1) + in-kernel spatial padding + 3x3 conv (3 aligned matmuls)
    # + relu, compact (n, H, W, C) output; per-image maxima -> s2
    a1_img = a1.reshape(n, h, w, mid_p)                    # free reshape
    a2, s2 = _conv3x3_stage(a1_img, w2s, b2v, _smem_scale(s1), H=h, W=w)
    a2_mat = a2.reshape(rows, mid_p)                       # free reshape

    # stage 3: FQ(s2) in-kernel, 1x1 conv + bias (no relu, f32 out); max|.| -> s3a
    y3, s3a = _mm_stage(a2_mat, w3m, b3v, _smem_scale(s2), relu=False,
                        quantize_input=True, abs_max=True, tm=tm,
                        out_dtype=jnp.float32)

    # epilogue 1: FQ(s3a) + identity residual + relu; per-tile maxima -> s3b
    z, s3b = _residual_stage(y3, xmat, _smem_scale(s3a), tm=tm)

    # epilogue 2: final FQ(s3b)
    out = _quantize_stage(z, _smem_scale(s3b), tm=tm)

    out = out.reshape(n, h, w, cout_p)[:, :, :, :cout]
    return jnp.transpose(out, (0, 3, 1, 2))


# --------------------------------------------------------------------------- reference
def reference_forward(x, w1, bn1, w2, bn2, w3, bn3):
    def conv(x, w, b, padding=0):
        y = jax.lax.conv_general_dilated(
            x, w, window_strides=(1, 1),
            padding=[(padding, padding), (padding, padding)],
            dimension_numbers=("NCHW", "OIHW", "NCHW"))
        return y + b[None, :, None, None]

    w1f, b1f = conv_bn_fold(w1, *bn1)
    w2f, b2f = conv_bn_fold(w2, *bn2)
    w3f, b3f = conv_bn_fold(w3, *bn3)
    out = conv(x, fake_quantize(w1f), fake_quantize(b1f))
    out = fake_quantize(jnp.maximum(out, 0.0))
    out = conv(out, fake_quantize(w2f), fake_quantize(b2f), padding=1)
    out = fake_quantize(jnp.maximum(out, 0.0))
    out = conv(out, fake_quantize(w3f), fake_quantize(b3f))
    out = fake_quantize(out)
    out = out + x
    out = jnp.maximum(out, 0.0)
    return fake_quantize(out)


# --------------------------------------------------------------------------- main
if __name__ == "__main__":
    key = jax.random.PRNGKey(0)
    keys = jax.random.split(key, 8)

    N, H, W = 2, 16, 16
    planes = 4
    inplanes = planes * 4  # identity residual is shape-compatible

    x = jax.random.normal(keys[0], (N, inplanes, H, W), jnp.float32)

    # conv weights in PyTorch layout (Cout, Cin, kH, kW), bias-free convs
    w1 = 0.1 * jax.random.normal(keys[1], (planes, inplanes, 1, 1), jnp.float32)
    w2 = 0.1 * jax.random.normal(keys[2], (planes, planes, 3, 3), jnp.float32)
    w3 = 0.1 * jax.random.normal(keys[3], (planes * 4, planes, 1, 1), jnp.float32)

    def bn_params(k, c):
        k1, k2, k3, k4 = jax.random.split(k, 4)
        gamma = 1.0 + 0.1 * jax.random.normal(k1, (c,), jnp.float32)
        beta = 0.1 * jax.random.normal(k2, (c,), jnp.float32)
        mean = 0.1 * jax.random.normal(k3, (c,), jnp.float32)
        var = jnp.abs(jax.random.normal(k4, (c,), jnp.float32)) + 0.5
        return gamma, beta, mean, var

    bn1 = bn_params(keys[4], planes)
    bn2 = bn_params(keys[5], planes)
    bn3 = bn_params(keys[6], planes * 4)

    out = jax.jit(bottleneck_forward)(x, w1, bn1, w2, bn2, w3, bn3)
    out = jax.block_until_ready(out)

    ref = reference_forward(x, w1, bn1, w2, bn2, w3, bn3)
    # Tolerance accounts for bf16 MXU operands / bf16 intermediate storage
    # (per the performance review); the fake-quant grid itself is ~1e-4 here.
    np.testing.assert_allclose(np.asarray(out), np.asarray(ref), rtol=0, atol=5e-3)

    print("KERNEL_OK")
</pallas_src>

<mosaic_0001>
module attributes {stable_mosaic.version = 11 : i64} {
  func.func @_mm_kernel(%arg0: i32, %arg1: memref<1x1xf32, #tpu.memory_space<smem>>, %arg2: memref<256x128xf32, #tpu.memory_space<vmem>>, %arg3: memref<128x128xbf16, #tpu.memory_space<vmem>>, %arg4: memref<1x128xf32, #tpu.memory_space<vmem>>, %arg5: memref<256x128xbf16, #tpu.memory_space<vmem>>, %arg6: memref<1x128xf32, #tpu.memory_space<vmem>>) attributes {dimension_semantics = [#tpu.dimension_semantics<parallel>], iteration_bounds = array<i64: 2>, scalar_prefetch = 0 : i64, scratch_operands = 0 : i64, tpu.core_type = #tpu.core_type<tc>, window_params = [{transform_indices = @transform_0, window_bounds = array<i64: 1, 1>}, {transform_indices = @transform_1, window_bounds = array<i64: 256, 128>}, {pipeline_mode = #tpu.pipeline_mode<synchronous>, transform_indices = @transform_2, window_bounds = array<i64: 128, 128>}, {pipeline_mode = #tpu.pipeline_mode<synchronous>, transform_indices = @transform_3, window_bounds = array<i64: 1, 128>}, {transform_indices = @transform_4, window_bounds = array<i64: 256, 128>}, {transform_indices = @transform_5, window_bounds = array<i64: 1, 128>}]} {
    %c0 = arith.constant 0 : index
    %c0_0 = arith.constant 0 : index
    %0 = vector.load %arg2[%c0, %c0_0] : memref<256x128xf32, #tpu.memory_space<vmem>>, vector<256x128xf32>
    %1 = arith.truncf %0 : vector<256x128xf32> to vector<256x128xbf16>
    %c0_1 = arith.constant 0 : index
    %c0_2 = arith.constant 0 : index
    %2 = vector.load %arg3[%c0_1, %c0_2] : memref<128x128xbf16, #tpu.memory_space<vmem>>, vector<128x128xbf16>
    %cst = arith.constant dense<0.000000e+00> : vector<256x128xf32>
    %3 = tpu.matmul %1, %2, %cst {dimension_numbers = #tpu.dot_dimension_numbers<[1], [0], [0], [1], [0, 0, 1, 1], [], []>} : vector<256x128xbf16>, vector<128x128xbf16>, vector<256x128xf32> -> vector<256x128xf32>
    %c0_3 = arith.constant 0 : index
    %c0_4 = arith.constant 0 : index
    %4 = vector.load %arg4[%c0_3, %c0_4] : memref<1x128xf32, #tpu.memory_space<vmem>>, vector<1x128xf32>
    %5 = vector.broadcast %4 : vector<1x128xf32> to vector<256x128xf32>
    %6 = arith.addf %3, %5 : vector<256x128xf32>
    %cst_5 = arith.constant 0.000000e+00 : f32
    %7 = vector.broadcast %cst_5 : f32 to vector<256x128xf32>
    %8 = arith.maximumf %6, %7 : vector<256x128xf32>
    %9 = arith.truncf %8 : vector<256x128xf32> to vector<256x128xbf16>
    %c0_6 = arith.constant 0 : index
    %c0_7 = arith.constant 0 : index
    %10 = vector.load %arg5[%c0_6, %c0_7] : memref<256x128xbf16, #tpu.memory_space<vmem>>, vector<256x128xbf16>
    tpu.vector_store %arg5[%c0_6, %c0_7], %9 {strides = array<i32>} : memref<256x128xbf16, #tpu.memory_space<vmem>>, vector<256x128xbf16>,
    %11 = arith.extf %9 : vector<256x128xbf16> to vector<256x128xf32>
    %cst_8 = arith.constant dense<0xFF800000> : vector<128xf32>
    %12 = vector.multi_reduction <maximumf>, %11, %cst_8 [0] : vector<256x128xf32> to vector<128xf32>
    %13 = vector.shape_cast %12 : vector<128xf32> to vector<1x128xf32>
    %c0_9 = arith.constant 0 : index
    %c0_10 = arith.constant 0 : index
    %14 = vector.load %arg6[%c0_9, %c0_10] : memref<1x128xf32, #tpu.memory_space<vmem>>, vector<1x128xf32>
    tpu.vector_store %arg6[%c0_9, %c0_10], %13 {strides = array<i32>} : memref<1x128xf32, #tpu.memory_space<vmem>>, vector<1x128xf32>,
    return
  }
  func.func @transform_0(%arg0: i32) -> (i32, i32) {
    %c0_i32 = arith.constant 0 : i32
    %c0_i32_0 = arith.constant 0 : i32
    %c0_i32_1 = arith.constant 0 : i32
    return %c0_i32, %c0_i32_0 : i32, i32
  }
  func.func @transform_1(%arg0: i32) -> (i32, i32) {
    %c0_i32 = arith.constant 0 : i32
    %c0_i32_0 = arith.constant 0 : i32
    return %arg0, %c0_i32 : i32, i32
  }
  func.func @transform_2(%arg0: i32) -> (i32, i32) {
    %c0_i32 = arith.constant 0 : i32
    %c0_i32_0 = arith.constant 0 : i32
    %c0_i32_1 = arith.constant 0 : i32
    return %c0_i32, %c0_i32_0 : i32, i32
  }
  func.func @transform_3(%arg0: i32) -> (i32, i32) {
    %c0_i32 = arith.constant 0 : i32
    %c0_i32_0 = arith.constant 0 : i32
    %c0_i32_1 = arith.constant 0 : i32
    return %c0_i32, %c0_i32_0 : i32, i32
  }
  func.func @transform_4(%arg0: i32) -> (i32, i32) {
    %c0_i32 = arith.constant 0 : i32
    %c0_i32_0 = arith.constant 0 : i32
    return %arg0, %c0_i32 : i32, i32
  }
  func.func @transform_5(%arg0: i32) -> (i32, i32) {
    %c0_i32 = arith.constant 0 : i32
    %c0_i32_0 = arith.constant 0 : i32
    return %c0_i32, %arg0 : i32, i32
  }
}

module attributes {stable_mosaic.version = 11 : i64} {
  func.func @_conv3x3_kernel(%arg0: i32, %arg1: memref<1x1xf32, #tpu.memory_space<smem>>, %arg2: memref<1x16x16x128xbf16, #tpu.memory_space<vmem>>, %arg3: memref<3x384x128xbf16, #tpu.memory_space<vmem>>, %arg4: memref<1x128xf32, #tpu.memory_space<vmem>>, %arg5: memref<1x16x16x128xbf16, #tpu.memory_space<vmem>>, %arg6: memref<1x128xf32, #tpu.memory_space<vmem>>, %arg7: memref<18x24x384xf32, #tpu.memory_space<vmem>>) attributes {dimension_semantics = [#tpu.dimension_semantics<parallel>], iteration_bounds = array<i64: 2>, scalar_prefetch = 0 : i64, scratch_operands = 1 : i64, tpu.core_type = #tpu.core_type<tc>, window_params = [{transform_indices = @transform_0, window_bounds = array<i64: 1, 1>}, {transform_indices = @transform_1, window_bounds = array<i64: 1, 16, 16, 128>}, {pipeline_mode = #tpu.pipeline_mode<synchronous>, transform_indices = @transform_2, window_bounds = array<i64: 3, 384, 128>}, {pipeline_mode = #tpu.pipeline_mode<synchronous>, transform_indices = @transform_3, window_bounds = array<i64: 1, 128>}, {transform_indices = @transform_4, window_bounds = array<i64: 1, 16, 16, 128>}, {transform_indices = @transform_5, window_bounds = array<i64: 1, 128>}]} {
    %c0 = arith.constant 0 : index
    %c0_0 = arith.constant 0 : index
    %0 = memref.load %arg1[%c0, %c0_0] : memref<1x1xf32, #tpu.memory_space<smem>>
    %cst = arith.constant 0.000000e+00 : f32
    %1 = arith.cmpf ogt, %0, %cst : f32
    %cst_1 = arith.constant 1.000000e+00 : f32
    %2 = arith.select %1, %0, %cst_1 : f32
    %cst_2 = arith.constant 3.276700e+04 : f32
    %3 = arith.divf %cst_2, %2 : f32
    %cst_3 = arith.constant 3.276700e+04 : f32
    %4 = arith.divf %2, %cst_3 : f32
    %cst_4 = arith.constant 0.000000e+00 : f32
    %5 = vector.broadcast %cst_4 : f32 to vector<18x24x384xf32>
    %c0_5 = arith.constant 0 : index
    %c0_6 = arith.constant 0 : index
    %c0_7 = arith.constant 0 : index
    %6 = vector.load %arg7[%c0_5, %c0_6, %c0_7] : memref<18x24x384xf32, #tpu.memory_space<vmem>>, vector<18x24x384xf32>
    tpu.vector_store %arg7[%c0_5, %c0_6, %c0_7], %5 {strides = array<i32>} : memref<18x24x384xf32, #tpu.memory_space<vmem>>, vector<18x24x384xf32>,
    %c0_8 = arith.constant 0 : index
    %c0_9 = arith.constant 0 : index
    %c0_10 = arith.constant 0 : index
    %c0_11 = arith.constant 0 : index
    %7 = vector.load %arg2[%c0_8, %c0_9, %c0_10, %c0_11] : memref<1x16x16x128xbf16, #tpu.memory_space<vmem>>, vector<1x16x16x128xbf16>
    %8 = vector.shape_cast %7 : vector<1x16x16x128xbf16> to vector<16x16x128xbf16>
    %9 = arith.extf %8 : vector<16x16x128xbf16> to vector<16x16x128xf32>
    %10 = vector.broadcast %3 : f32 to vector<16x16x128xf32>
    %11 = arith.mulf %9, %10 : vector<16x16x128xf32>
    %12 = math.roundeven %11 : vector<16x16x128xf32>
    %13 = vector.broadcast %4 : f32 to vector<16x16x128xf32>
    %14 = arith.mulf %12, %13 : vector<16x16x128xf32>
    %c1 = arith.constant 1 : index
    %c1_12 = arith.constant 1 : index
    %c0_13 = arith.constant 0 : index
    %15 = vector.load %arg7[%c1, %c1_12, %c0_13] : memref<18x24x384xf32, #tpu.memory_space<vmem>>, vector<16x16x128xf32>
    tpu.vector_store %arg7[%c1, %c1_12, %c0_13], %14 {strides = array<i32>} : memref<18x24x384xf32, #tpu.memory_space<vmem>>, vector<16x16x128xf32>,
    %c1_14 = arith.constant 1 : index
    %c0_15 = arith.constant 0 : index
    %c128 = arith.constant 128 : index
    %16 = vector.load %arg7[%c1_14, %c0_15, %c128] : memref<18x24x384xf32, #tpu.memory_space<vmem>>, vector<16x16x128xf32>
    tpu.vector_store %arg7[%c1_14, %c0_15, %c128], %14 {strides = array<i32>} : memref<18x24x384xf32, #tpu.memory_space<vmem>>, vector<16x16x128xf32>,
    %17 = vector.extract_strided_slice %14 {offsets = [0, 1, 0], sizes = [16, 15, 128], strides = [1, 1, 1]} : vector<16x16x128xf32> to vector<16x15x128xf32>
    %c1_16 = arith.constant 1 : index
    %c0_17 = arith.constant 0 : index
    %c256 = arith.constant 256 : index
    %18 = vector.load %arg7[%c1_16, %c0_17, %c256] : memref<18x24x384xf32, #tpu.memory_space<vmem>>, vector<16x15x128xf32>
    tpu.vector_store %arg7[%c1_16, %c0_17, %c256], %17 {strides = array<i32>} : memref<18x24x384xf32, #tpu.memory_space<vmem>>, vector<16x15x128xf32>,
    %19 = vector.extract_strided_slice %14 {offsets = [0, 0, 0], sizes = [16, 1, 128], strides = [1, 1, 1]} : vector<16x16x128xf32> to vector<16x1x128xf32>
    %c0_18 = arith.constant 0 : index
    %c23 = arith.constant 23 : index
    %c256_19 = arith.constant 256 : index
    %20 = vector.load %arg7[%c0_18, %c23, %c256_19] : memref<18x24x384xf32, #tpu.memory_space<vmem>>, vector<16x1x128xf32>
    tpu.vector_store %arg7[%c0_18, %c23, %c256_19], %19 {strides = array<i32>} : memref<18x24x384xf32, #tpu.memory_space<vmem>>, vector<16x1x128xf32>,
    %c0_20 = arith.constant 0 : index
    %c0_21 = arith.constant 0 : index
    %c0_22 = arith.constant 0 : index
    %21 = vector.load %arg7[%c0_20, %c0_21, %c0_22] : memref<18x24x384xf32, #tpu.memory_space<vmem>>, vector<16x24x384xf32>
    %22 = vector.shape_cast %21 : vector<16x24x384xf32> to vector<384x384xf32>
    %23 = arith.truncf %22 : vector<384x384xf32> to vector<384x384xbf16>
    %c0_23 = arith.constant 0 : index
    %c0_24 = arith.constant 0 : index
    %c0_25 = arith.constant 0 : index
    %24 = vector.load %arg3[%c0_23, %c0_24, %c0_25] : memref<3x384x128xbf16, #tpu.memory_space<vmem>>, vector<1x384x128xbf16>
    %25 = vector.shape_cast %24 : vector<1x384x128xbf16> to vector<384x128xbf16>
    %cst_26 = arith.constant dense<0.000000e+00> : vector<384x128xf32>
    %26 = tpu.matmul %23, %25, %cst_26 {dimension_numbers = #tpu.dot_dimension_numbers<[1], [0], [0], [1], [0, 0, 1, 1], [], []>} : vector<384x384xbf16>, vector<384x128xbf16>, vector<384x128xf32> -> vector<384x128xf32>
    %c1_27 = arith.constant 1 : index
    %c0_28 = arith.constant 0 : index
    %c0_29 = arith.constant 0 : index
    %27 = vector.load %arg7[%c1_27, %c0_28, %c0_29] : memref<18x24x384xf32, #tpu.memory_space<vmem>>, vector<16x24x384xf32>
    %28 = vector.shape_cast %27 : vector<16x24x384xf32> to vector<384x384xf32>
    %29 = arith.truncf %28 : vector<384x384xf32> to vector<384x384xbf16>
    %c1_30 = arith.constant 1 : index
    %c0_31 = arith.constant 0 : index
    %c0_32 = arith.constant 0 : index
    %30 = vector.load %arg3[%c1_30, %c0_31, %c0_32] : memref<3x384x128xbf16, #tpu.memory_space<vmem>>, vector<1x384x128xbf16>
    %31 = vector.shape_cast %30 : vector<1x384x128xbf16> to vector<384x128xbf16>
    %cst_33 = arith.constant dense<0.000000e+00> : vector<384x128xf32>
    %32 = tpu.matmul %29, %31, %cst_33 {dimension_numbers = #tpu.dot_dimension_numbers<[1], [0], [0], [1], [0, 0, 1, 1], [], []>} : vector<384x384xbf16>, vector<384x128xbf16>, vector<384x128xf32> -> vector<384x128xf32>
    %33 = arith.addf %26, %32 : vector<384x128xf32>
    %c2 = arith.constant 2 : index
    %c0_34 = arith.constant 0 : index
    %c0_35 = arith.constant 0 : index
    %34 = vector.load %arg7[%c2, %c0_34, %c0_35] : memref<18x24x384xf32, #tpu.memory_space<vmem>>, vector<16x24x384xf32>
    %35 = vector.shape_cast %34 : vector<16x24x384xf32> to vector<384x384xf32>
    %36 = arith.truncf %35 : vector<384x384xf32> to vector<384x384xbf16>
    %c2_36 = arith.constant 2 : index
    %c0_37 = arith.constant 0 : index
    %c0_38 = arith.constant 0 : index
    %37 = vector.load %arg3[%c2_36, %c0_37, %c0_38] : memref<3x384x128xbf16, #tpu.memory_space<vmem>>, vector<1x384x128xbf16>
    %38 = vector.shape_cast %37 : vector<1x384x128xbf16> to vector<384x128xbf16>
    %cst_39 = arith.constant dense<0.000000e+00> : vector<384x128xf32>
    %39 = tpu.matmul %36, %38, %cst_39 {dimension_numbers = #tpu.dot_dimension_numbers<[1], [0], [0], [1], [0, 0, 1, 1], [], []>} : vector<384x384xbf16>, vector<384x128xbf16>, vector<384x128xf32> -> vector<384x128xf32>
    %40 = arith.addf %33, %39 : vector<384x128xf32>
    %c0_40 = arith.constant 0 : index
    %c0_41 = arith.constant 0 : index
    %41 = vector.load %arg4[%c0_40, %c0_41] : memref<1x128xf32, #tpu.memory_space<vmem>>, vector<1x128xf32>
    %42 = vector.broadcast %41 : vector<1x128xf32> to vector<384x128xf32>
    %43 = arith.addf %40, %42 : vector<384x128xf32>
    %cst_42 = arith.constant 0.000000e+00 : f32
    %44 = vector.broadcast %cst_42 : f32 to vector<384x128xf32>
    %45 = arith.maximumf %43, %44 : vector<384x128xf32>
    %46 = vector.shape_cast %45 : vector<384x128xf32> to vector<16x24x128xf32>
    %47 = vector.extract_strided_slice %46 {offsets = [0, 0, 0], sizes = [16, 16, 128], strides = [1, 1, 1]} : vector<16x24x128xf32> to vector<16x16x128xf32>
    %48 = arith.truncf %47 : vector<16x16x128xf32> to vector<16x16x128xbf16>
    %c0_43 = arith.constant 0 : index
    %c0_44 = arith.constant 0 : index
    %c0_45 = arith.constant 0 : index
    %c0_46 = arith.constant 0 : index
    %49 = vector.load %arg5[%c0_43, %c0_44, %c0_45, %c0_46] : memref<1x16x16x128xbf16, #tpu.memory_space<vmem>>, vector<1x16x16x128xbf16>
    %50 = vector.shape_cast %49 : vector<1x16x16x128xbf16> to vector<16x16x128xbf16>
    %51 = vector.shape_cast %48 : vector<16x16x128xbf16> to vector<1x16x16x128xbf16>
    tpu.vector_store %arg5[%c0_43, %c0_44, %c0_45, %c0_46], %51 {strides = array<i32>} : memref<1x16x16x128xbf16, #tpu.memory_space<vmem>>, vector<1x16x16x128xbf16>,
    %52 = arith.extf %48 : vector<16x16x128xbf16> to vector<16x16x128xf32>
    %53 = vector.shape_cast %52 : vector<16x16x128xf32> to vector<256x128xf32>
    %cst_47 = arith.constant dense<0xFF800000> : vector<128xf32>
    %54 = vector.multi_reduction <maximumf>, %53, %cst_47 [0] : vector<256x128xf32> to vector<128xf32>
    %55 = vector.shape_cast %54 : vector<128xf32> to vector<1x128xf32>
    %c0_48 = arith.constant 0 : index
    %c0_49 = arith.constant 0 : index
    %56 = vector.load %arg6[%c0_48, %c0_49] : memref<1x128xf32, #tpu.memory_space<vmem>>, vector<1x128xf32>
    tpu.vector_store %arg6[%c0_48, %c0_49], %55 {strides = array<i32>} : memref<1x128xf32, #tpu.memory_space<vmem>>, vector<1x128xf32>,
    return
  }
  func.func @transform_0(%arg0: i32) -> (i32, i32) {
    %c0_i32 = arith.constant 0 : i32
    %c0_i32_0 = arith.constant 0 : i32
    %c0_i32_1 = arith.constant 0 : i32
    return %c0_i32, %c0_i32_0 : i32, i32
  }
  func.func @transform_1(%arg0: i32) -> (i32, i32, i32, i32) {
    %c0_i32 = arith.constant 0 : i32
    %c0_i32_0 = arith.constant 0 : i32
    %c0_i32_1 = arith.constant 0 : i32
    %c0_i32_2 = arith.constant 0 : i32
    return %arg0, %c0_i32, %c0_i32_0, %c0_i32_1 : i32, i32, i32, i32
  }
  func.func @transform_2(%arg0: i32) -> (i32, i32, i32) {
    %c0_i32 = arith.constant 0 : i32
    %c0_i32_0 = arith.constant 0 : i32
    %c0_i32_1 = arith.constant 0 : i32
    %c0_i32_2 = arith.constant 0 : i32
    return %c0_i32, %c0_i32_0, %c0_i32_1 : i32, i32, i32
  }
  func.func @transform_3(%arg0: i32) -> (i32, i32) {
    %c0_i32 = arith.constant 0 : i32
    %c0_i32_0 = arith.constant 0 : i32
    %c0_i32_1 = arith.constant 0 : i32
    return %c0_i32, %c0_i32_0 : i32, i32
  }
  func.func @transform_4(%arg0: i32) -> (i32, i32, i32, i32) {
    %c0_i32 = arith.constant 0 : i32
    %c0_i32_0 = arith.constant 0 : i32
    %c0_i32_1 = arith.constant 0 : i32
    %c0_i32_2 = arith.constant 0 : i32
    return %arg0, %c0_i32, %c0_i32_0, %c0_i32_1 : i32, i32, i32, i32
  }
  func.func @transform_5(%arg0: i32) -> (i32, i32) {
    %c0_i32 = arith.constant 0 : i32
    %c0_i32_0 = arith.constant 0 : i32
    return %c0_i32, %arg0 : i32, i32
  }
}

module attributes {stable_mosaic.version = 11 : i64} {
  func.func @_mm_kernel(%arg0: i32, %arg1: memref<1x1xf32, #tpu.memory_space<smem>>, %arg2: memref<256x128xbf16, #tpu.memory_space<vmem>>, %arg3: memref<128x128xbf16, #tpu.memory_space<vmem>>, %arg4: memref<1x128xf32, #tpu.memory_space<vmem>>, %arg5: memref<256x128xf32, #tpu.memory_space<vmem>>, %arg6: memref<1x128xf32, #tpu.memory_space<vmem>>) attributes {dimension_semantics = [#tpu.dimension_semantics<parallel>], iteration_bounds = array<i64: 2>, scalar_prefetch = 0 : i64, scratch_operands = 0 : i64, tpu.core_type = #tpu.core_type<tc>, window_params = [{transform_indices = @transform_0, window_bounds = array<i64: 1, 1>}, {transform_indices = @transform_1, window_bounds = array<i64: 256, 128>}, {pipeline_mode = #tpu.pipeline_mode<synchronous>, transform_indices = @transform_2, window_bounds = array<i64: 128, 128>}, {pipeline_mode = #tpu.pipeline_mode<synchronous>, transform_indices = @transform_3, window_bounds = array<i64: 1, 128>}, {transform_indices = @transform_4, window_bounds = array<i64: 256, 128>}, {transform_indices = @transform_5, window_bounds = array<i64: 1, 128>}]} {
    %c0 = arith.constant 0 : index
    %c0_0 = arith.constant 0 : index
    %0 = vector.load %arg2[%c0, %c0_0] : memref<256x128xbf16, #tpu.memory_space<vmem>>, vector<256x128xbf16>
    %1 = arith.extf %0 : vector<256x128xbf16> to vector<256x128xf32>
    %c0_1 = arith.constant 0 : index
    %c0_2 = arith.constant 0 : index
    %2 = memref.load %arg1[%c0_1, %c0_2] : memref<1x1xf32, #tpu.memory_space<smem>>
    %cst = arith.constant 0.000000e+00 : f32
    %3 = arith.cmpf ogt, %2, %cst : f32
    %cst_3 = arith.constant 1.000000e+00 : f32
    %4 = arith.select %3, %2, %cst_3 : f32
    %cst_4 = arith.constant 3.276700e+04 : f32
    %5 = arith.divf %cst_4, %4 : f32
    %cst_5 = arith.constant 3.276700e+04 : f32
    %6 = arith.divf %4, %cst_5 : f32
    %7 = vector.broadcast %5 : f32 to vector<256x128xf32>
    %8 = arith.mulf %1, %7 : vector<256x128xf32>
    %9 = math.roundeven %8 : vector<256x128xf32>
    %10 = vector.broadcast %6 : f32 to vector<256x128xf32>
    %11 = arith.mulf %9, %10 : vector<256x128xf32>
    %12 = arith.truncf %11 : vector<256x128xf32> to vector<256x128xbf16>
    %c0_6 = arith.constant 0 : index
    %c0_7 = arith.constant 0 : index
    %13 = vector.load %arg3[%c0_6, %c0_7] : memref<128x128xbf16, #tpu.memory_space<vmem>>, vector<128x128xbf16>
    %cst_8 = arith.constant dense<0.000000e+00> : vector<256x128xf32>
    %14 = tpu.matmul %12, %13, %cst_8 {dimension_numbers = #tpu.dot_dimension_numbers<[1], [0], [0], [1], [0, 0, 1, 1], [], []>} : vector<256x128xbf16>, vector<128x128xbf16>, vector<256x128xf32> -> vector<256x128xf32>
    %c0_9 = arith.constant 0 : index
    %c0_10 = arith.constant 0 : index
    %15 = vector.load %arg4[%c0_9, %c0_10] : memref<1x128xf32, #tpu.memory_space<vmem>>, vector<1x128xf32>
    %16 = vector.broadcast %15 : vector<1x128xf32> to vector<256x128xf32>
    %17 = arith.addf %14, %16 : vector<256x128xf32>
    %c0_11 = arith.constant 0 : index
    %c0_12 = arith.constant 0 : index
    %18 = vector.load %arg5[%c0_11, %c0_12] : memref<256x128xf32, #tpu.memory_space<vmem>>, vector<256x128xf32>
    tpu.vector_store %arg5[%c0_11, %c0_12], %17 {strides = array<i32>} : memref<256x128xf32, #tpu.memory_space<vmem>>, vector<256x128xf32>,
    %19 = math.absf %17 : vector<256x128xf32>
    %cst_13 = arith.constant dense<0xFF800000> : vector<128xf32>
    %20 = vector.multi_reduction <maximumf>, %19, %cst_13 [0] : vector<256x128xf32> to vector<128xf32>
    %21 = vector.shape_cast %20 : vector<128xf32> to vector<1x128xf32>
    %c0_14 = arith.constant 0 : index
    %c0_15 = arith.constant 0 : index
    %22 = vector.load %arg6[%c0_14, %c0_15] : memref<1x128xf32, #tpu.memory_space<vmem>>, vector<1x128xf32>
    tpu.vector_store %arg6[%c0_14, %c0_15], %21 {strides = array<i32>} : memref<1x128xf32, #tpu.memory_space<vmem>>, vector<1x128xf32>,
    return
  }
  func.func @transform_0(%arg0: i32) -> (i32, i32) {
    %c0_i32 = arith.constant 0 : i32
    %c0_i32_0 = arith.constant 0 : i32
    %c0_i32_1 = arith.constant 0 : i32
    return %c0_i32, %c0_i32_0 : i32, i32
  }
  func.func @transform_1(%arg0: i32) -> (i32, i32) {
    %c0_i32 = arith.constant 0 : i32
    %c0_i32_0 = arith.constant 0 : i32
    return %arg0, %c0_i32 : i32, i32
  }
  func.func @transform_2(%arg0: i32) -> (i32, i32) {
    %c0_i32 = arith.constant 0 : i32
    %c0_i32_0 = arith.constant 0 : i32
    %c0_i32_1 = arith.constant 0 : i32
    return %c0_i32, %c0_i32_0 : i32, i32
  }
  func.func @transform_3(%arg0: i32) -> (i32, i32) {
    %c0_i32 = arith.constant 0 : i32
    %c0_i32_0 = arith.constant 0 : i32
    %c0_i32_1 = arith.constant 0 : i32
    return %c0_i32, %c0_i32_0 : i32, i32
  }
  func.func @transform_4(%arg0: i32) -> (i32, i32) {
    %c0_i32 = arith.constant 0 : i32
    %c0_i32_0 = arith.constant 0 : i32
    return %arg0, %c0_i32 : i32, i32
  }
  func.func @transform_5(%arg0: i32) -> (i32, i32) {
    %c0_i32 = arith.constant 0 : i32
    %c0_i32_0 = arith.constant 0 : i32
    return %c0_i32, %arg0 : i32, i32
  }
}

module attributes {stable_mosaic.version = 11 : i64} {
  func.func @_quantize_kernel(%arg0: i32, %arg1: memref<1x1xf32, #tpu.memory_space<smem>>, %arg2: memref<256x128xf32, #tpu.memory_space<vmem>>, %arg3: memref<256x128xf32, #tpu.memory_space<vmem>>) attributes {dimension_semantics = [#tpu.dimension_semantics<parallel>], iteration_bounds = array<i64: 2>, scalar_prefetch = 0 : i64, scratch_operands = 0 : i64, tpu.core_type = #tpu.core_type<tc>, window_params = [{transform_indices = @transform_0, window_bounds = array<i64: 1, 1>}, {transform_indices = @transform_1, window_bounds = array<i64: 256, 128>}, {transform_indices = @transform_2, window_bounds = array<i64: 256, 128>}]} {
    %c0 = arith.constant 0 : index
    %c0_0 = arith.constant 0 : index
    %0 = memref.load %arg1[%c0, %c0_0] : memref<1x1xf32, #tpu.memory_space<smem>>
    %cst = arith.constant 0.000000e+00 : f32
    %1 = arith.cmpf ogt, %0, %cst : f32
    %cst_1 = arith.constant 1.000000e+00 : f32
    %2 = arith.select %1, %0, %cst_1 : f32
    %cst_2 = arith.constant 3.276700e+04 : f32
    %3 = arith.divf %cst_2, %2 : f32
    %cst_3 = arith.constant 3.276700e+04 : f32
    %4 = arith.divf %2, %cst_3 : f32
    %c0_4 = arith.constant 0 : index
    %c0_5 = arith.constant 0 : index
    %5 = vector.load %arg2[%c0_4, %c0_5] : memref<256x128xf32, #tpu.memory_space<vmem>>, vector<256x128xf32>
    %6 = vector.broadcast %3 : f32 to vector<256x128xf32>
    %7 = arith.mulf %5, %6 : vector<256x128xf32>
    %8 = math.roundeven %7 : vector<256x128xf32>
    %9 = vector.broadcast %4 : f32 to vector<256x128xf32>
    %10 = arith.mulf %8, %9 : vector<256x128xf32>
    %c0_6 = arith.constant 0 : index
    %c0_7 = arith.constant 0 : index
    %11 = vector.load %arg3[%c0_6, %c0_7] : memref<256x128xf32, #tpu.memory_space<vmem>>, vector<256x128xf32>
    tpu.vector_store %arg3[%c0_6, %c0_7], %10 {strides = array<i32>} : memref<256x128xf32, #tpu.memory_space<vmem>>, vector<256x128xf32>,
    return
  }
  func.func @transform_0(%arg0: i32) -> (i32, i32) {
    %c0_i32 = arith.constant 0 : i32
    %c0_i32_0 = arith.constant 0 : i32
    %c0_i32_1 = arith.constant 0 : i32
    return %c0_i32, %c0_i32_0 : i32, i32
  }
  func.func @transform_1(%arg0: i32) -> (i32, i32) {
    %c0_i32 = arith.constant 0 : i32
    %c0_i32_0 = arith.constant 0 : i32
    return %arg0, %c0_i32 : i32, i32
  }
  func.func @transform_2(%arg0: i32) -> (i32, i32) {
    %c0_i32 = arith.constant 0 : i32
    %c0_i32_0 = arith.constant 0 : i32
    return %arg0, %c0_i32 : i32, i32
  }
}

module attributes {stable_mosaic.version = 11 : i64} {
  func.func @_residual_kernel(%arg0: i32, %arg1: memref<1x1xf32, #tpu.memory_space<smem>>, %arg2: memref<256x128xf32, #tpu.memory_space<vmem>>, %arg3: memref<256x128xf32, #tpu.memory_space<vmem>>, %arg4: memref<256x128xf32, #tpu.memory_space<vmem>>, %arg5: memref<1x128xf32, #tpu.memory_space<vmem>>) attributes {dimension_semantics = [#tpu.dimension_semantics<parallel>], iteration_bounds = array<i64: 2>, scalar_prefetch = 0 : i64, scratch_operands = 0 : i64, tpu.core_type = #tpu.core_type<tc>, window_params = [{transform_indices = @transform_0, window_bounds = array<i64: 1, 1>}, {transform_indices = @transform_1, window_bounds = array<i64: 256, 128>}, {transform_indices = @transform_2, window_bounds = array<i64: 256, 128>}, {transform_indices = @transform_3, window_bounds = array<i64: 256, 128>}, {transform_indices = @transform_4, window_bounds = array<i64: 1, 128>}]} {
    %c0 = arith.constant 0 : index
    %c0_0 = arith.constant 0 : index
    %0 = memref.load %arg1[%c0, %c0_0] : memref<1x1xf32, #tpu.memory_space<smem>>
    %cst = arith.constant 0.000000e+00 : f32
    %1 = arith.cmpf ogt, %0, %cst : f32
    %cst_1 = arith.constant 1.000000e+00 : f32
    %2 = arith.select %1, %0, %cst_1 : f32
    %cst_2 = arith.constant 3.276700e+04 : f32
    %3 = arith.divf %cst_2, %2 : f32
    %cst_3 = arith.constant 3.276700e+04 : f32
    %4 = arith.divf %2, %cst_3 : f32
    %c0_4 = arith.constant 0 : index
    %c0_5 = arith.constant 0 : index
    %5 = vector.load %arg2[%c0_4, %c0_5] : memref<256x128xf32, #tpu.memory_space<vmem>>, vector<256x128xf32>
    %6 = vector.broadcast %3 : f32 to vector<256x128xf32>
    %7 = arith.mulf %5, %6 : vector<256x128xf32>
    %8 = math.roundeven %7 : vector<256x128xf32>
    %9 = vector.broadcast %4 : f32 to vector<256x128xf32>
    %10 = arith.mulf %8, %9 : vector<256x128xf32>
    %c0_6 = arith.constant 0 : index
    %c0_7 = arith.constant 0 : index
    %11 = vector.load %arg3[%c0_6, %c0_7] : memref<256x128xf32, #tpu.memory_space<vmem>>, vector<256x128xf32>
    %12 = arith.addf %10, %11 : vector<256x128xf32>
    %cst_8 = arith.constant 0.000000e+00 : f32
    %13 = vector.broadcast %cst_8 : f32 to vector<256x128xf32>
    %14 = arith.maximumf %12, %13 : vector<256x128xf32>
    %c0_9 = arith.constant 0 : index
    %c0_10 = arith.constant 0 : index
    %15 = vector.load %arg4[%c0_9, %c0_10] : memref<256x128xf32, #tpu.memory_space<vmem>>, vector<256x128xf32>
    tpu.vector_store %arg4[%c0_9, %c0_10], %14 {strides = array<i32>} : memref<256x128xf32, #tpu.memory_space<vmem>>, vector<256x128xf32>,
    %cst_11 = arith.constant dense<0xFF800000> : vector<128xf32>
    %16 = vector.multi_reduction <maximumf>, %14, %cst_11 [0] : vector<256x128xf32> to vector<128xf32>
    %17 = vector.shape_cast %16 : vector<128xf32> to vector<1x128xf32>
    %c0_12 = arith.constant 0 : index
    %c0_13 = arith.constant 0 : index
    %18 = vector.load %arg5[%c0_12, %c0_13] : memref<1x128xf32, #tpu.memory_space<vmem>>, vector<1x128xf32>
    tpu.vector_store %arg5[%c0_12, %c0_13], %17 {strides = array<i32>} : memref<1x128xf32, #tpu.memory_space<vmem>>, vector<1x128xf32>,
    return
  }
  func.func @transform_0(%arg0: i32) -> (i32, i32) {
    %c0_i32 = arith.constant 0 : i32
    %c0_i32_0 = arith.constant 0 : i32
    %c0_i32_1 = arith.constant 0 : i32
    return %c0_i32, %c0_i32_0 : i32, i32
  }
  func.func @transform_1(%arg0: i32) -> (i32, i32) {
    %c0_i32 = arith.constant 0 : i32
    %c0_i32_0 = arith.constant 0 : i32
    return %arg0, %c0_i32 : i32, i32
  }
  func.func @transform_2(%arg0: i32) -> (i32, i32) {
    %c0_i32 = arith.constant 0 : i32
    %c0_i32_0 = arith.constant 0 : i32
    return %arg0, %c0_i32 : i32, i32
  }
  func.func @transform_3(%arg0: i32) -> (i32, i32) {
    %c0_i32 = arith.constant 0 : i32
    %c0_i32_0 = arith.constant 0 : i32
    return %arg0, %c0_i32 : i32, i32
  }
  func.func @transform_4(%arg0: i32) -> (i32, i32) {
    %c0_i32 = arith.constant 0 : i32
    %c0_i32_0 = arith.constant 0 : i32
    return %c0_i32, %arg0 : i32, i32
  }
}

</mosaic_0001>

<llo_original>
// kernel: bottleneck_forward.5
$region0: #{bottleneck_forward.5}
  #allocation0 [shape = 'u32[]', space=smem, size = 0x4, offset = 0x4, fixed_abs, tag = 'smem constant byte address 0x4 - core index']
  #allocation1 [shape = 'u32[144,128]{1,0:T(1,128)}', space=vmem, size = 0x12000, scoped, tag = 'internal scratch']
  #allocation2 [shape = 'f32[1,1]{1,0:T(1,128)S(6)}', space=smem, size = 0x200, scoped, tag = 'scoped memory for bottleneck_forward.5']
  %s0 = inlined_call_operand.<no memory space> [shape: f32[1,1], index: 0, kind: input, shape index: {}]
  %s1 = inlined_call_operand.vmem [shape: f32[512,128], index: 1, kind: input, shape index: {}]
  %s2 = inlined_call_operand.vmem [shape: bf16[128,128], index: 2, kind: input, shape index: {}]
  %s3 = inlined_call_operand.vmem [shape: f32[1,128], index: 3, kind: input, shape index: {}]
  %s4 = inlined_call_operand.vmem [shape: bf16[512,128], index: 4, kind: output, shape index: {0}]
  %s5 = inlined_call_operand.vmem [shape: f32[1,256], index: 5, kind: output, shape index: {1}]
  %6 = xla_tuple %s4, %s5
  %s7 = sld [smem:[#allocation0]]
  $region57: #{bottleneck_forward.5} parent=0
    _
  %s9 = ssub.s32 1, %s7
  %s10 = scalar_select 0, %s9, %s7
  %11 = sst [smem:[#allocation2]] %s0
  loop: start=0, step=1, limit=4
  $region2: #{bottleneck_forward.5} parent=0 // loop_pre_header
    _
  $region3: #{bottleneck_forward.5} parent=0 // loop_header
    %s13 = sphi 0, %s17
    %p14 = scmp.ge.s32.totalorder %s13, 4
    %s21 = sphi 0, %s21
    %s23 = sphi 0, %s21
    %s24 = sphi 0, %s23
    %s38 = sphi 0, %s24
    %s44 = sphi 0, %s46
    %s47 = sphi 0, %s44
    %s48 = sphi 0, %s47
    %s64 = sphi 0, %s48
    %s68 = sphi 0, %s68
    %s70 = sphi 0, %s68
    %s71 = sphi 0, %s70
    %s85 = sphi 0, %s71
    %s89 = sphi 0, %s89
    %s91 = sphi 0, %s89
    %s92 = sphi 0, %s91
    %s106 = sphi 0, %s92
    %s112 = sphi 0, %s114
    %s115 = sphi 0, %s112
    %s116 = sphi 0, %s115
    %s132 = sphi 0, %s116
    %s138 = sphi 0, %s140
    %s141 = sphi 0, %s138
    %s142 = sphi 0, %s141
    %s158 = sphi 0, %s142
  $region4: #{bottleneck_forward.5} parent=0 // loop_header_branch
    %16 = sbr.rel (%p14) target = $region8
  $region5: #{bottleneck_forward.5} parent=0 // loop_body
    %s18 = ssub.s32 %s13, 1
    %s19 = ssub.s32 %s13, 2
    %s20 = sadd.s32 %s13, 1
    %s22 = sadd.s32 %s21, 1
    %p25 = scmp.eq.s32.totalorder %s13, 1
    %p26 = scmp.ne.s32.totalorder %s21, %s23
    %p27 = scmp.eq.s32.totalorder %s13, 0
    %p28 = por %p26, %p27
    %p29 = scmp.ne.s32.totalorder %s21, %s23
    %p30 = scmp.eq.s32.totalorder %s18, 1
    %p31 = por %p29, %p30
    %p32 = scmp.ne.s32.totalorder %s23, %s24
    %p33 = scmp.eq.s32.totalorder %s18, 0
    %p34 = por %p32, %p33
    %p35 = scmp.ne.s32.totalorder %s23, %s24
    %p36 = scmp.eq.s32.totalorder %s19, 1
    %p37 = por %p35, %p36
    %p39 = scmp.ne.s32.totalorder %s24, %s38
    %p40 = scmp.eq.s32.totalorder %s19, 0
    %p41 = por %p39, %p40
    %s42 = ssub.s32 %s13, %s20
    %p43 = scmp.eq.s32.totalorder %s42, 0
    %s45 = sadd.s32 %s44, 1
    %s46 = scalar_select %p43, %s44, %s45
    %p49 = pneg %p43
    %p50 = scmp.eq.s32.totalorder %s13, 1
    %p51 = por %p49, %p50
    %p52 = scmp.ne.s32.totalorder %s44, %s47
    %p53 = scmp.eq.s32.totalorder %s13, 0
    %p54 = por %p52, %p53
    %p55 = scmp.ne.s32.totalorder %s44, %s47
    %p56 = scmp.eq.s32.totalorder %s18, 1
    %p57 = por %p55, %p56
    %p58 = scmp.ne.s32.totalorder %s47, %s48
    %p59 = scmp.eq.s32.totalorder %s18, 0
    %p60 = por %p58, %p59
    %p61 = scmp.ne.s32.totalorder %s47, %s48
    %p62 = scmp.eq.s32.totalorder %s19, 1
    %p63 = por %p61, %p62
    %p65 = scmp.ne.s32.totalorder %s48, %s64
    %p66 = scmp.eq.s32.totalorder %s19, 0
    %p67 = por %p65, %p66
    %s69 = sadd.s32 %s68, 1
    %p72 = scmp.eq.s32.totalorder %s13, 1
    %p73 = scmp.ne.s32.totalorder %s68, %s70
    %p74 = scmp.eq.s32.totalorder %s13, 0
    %p75 = por %p73, %p74
    %p76 = scmp.ne.s32.totalorder %s68, %s70
    %p77 = scmp.eq.s32.totalorder %s18, 1
    %p78 = por %p76, %p77
    %p79 = scmp.ne.s32.totalorder %s70, %s71
    %p80 = scmp.eq.s32.totalorder %s18, 0
    %p81 = por %p79, %p80
    %p82 = scmp.ne.s32.totalorder %s70, %s71
    %p83 = scmp.eq.s32.totalorder %s19, 1
    %p84 = por %p82, %p83
    %p86 = scmp.ne.s32.totalorder %s71, %s85
    %p87 = scmp.eq.s32.totalorder %s19, 0
    %p88 = por %p86, %p87
    %s90 = sadd.s32 %s89, 1
    %p93 = scmp.eq.s32.totalorder %s13, 1
    %p94 = scmp.ne.s32.totalorder %s89, %s91
    %p95 = scmp.eq.s32.totalorder %s13, 0
    %p96 = por %p94, %p95
    %p97 = scmp.ne.s32.totalorder %s89, %s91
    %p98 = scmp.eq.s32.totalorder %s18, 1
    %p99 = por %p97, %p98
    %p100 = scmp.ne.s32.totalorder %s91, %s92
    %p101 = scmp.eq.s32.totalorder %s18, 0
    %p102 = por %p100, %p101
    %p103 = scmp.ne.s32.totalorder %s91, %s92
    %p104 = scmp.eq.s32.totalorder %s19, 1
    %p105 = por %p103, %p104
    %p107 = scmp.ne.s32.totalorder %s92, %s106
    %p108 = scmp.eq.s32.totalorder %s19, 0
    %p109 = por %p107, %p108
    %s110 = ssub.s32 %s13, %s20
    %p111 = scmp.eq.s32.totalorder %s110, 0
    %s113 = sadd.s32 %s112, 1
    %s114 = scalar_select %p111, %s112, %s113
    %p117 = pneg %p111
    %p118 = scmp.eq.s32.totalorder %s13, 1
    %p119 = por %p117, %p118
    %p120 = scmp.ne.s32.totalorder %s112, %s115
    %p121 = scmp.eq.s32.totalorder %s13, 0
    %p122 = por %p120, %p121
    %p123 = scmp.ne.s32.totalorder %s112, %s115
    %p124 = scmp.eq.s32.totalorder %s18, 1
    %p125 = por %p123, %p124
    %p126 = scmp.ne.s32.totalorder %s115, %s116
    %p127 = scmp.eq.s32.totalorder %s18, 0
    %p128 = por %p126, %p127
    %p129 = scmp.ne.s32.totalorder %s115, %s116
    %p130 = scmp.eq.s32.totalorder %s19, 1
    %p131 = por %p129, %p130
    %p133 = scmp.ne.s32.totalorder %s116, %s132
    %p134 = scmp.eq.s32.totalorder %s19, 0
    %p135 = por %p133, %p134
    %s136 = ssub.s32 %s13, %s20
    %p137 = scmp.eq.s32.totalorder %s136, 0
    %s139 = sadd.s32 %s138, 1
    %s140 = scalar_select %p137, %s138, %s139
    %p143 = pneg %p137
    %p144 = scmp.eq.s32.totalorder %s13, 1
    %p145 = por %p143, %p144
    %p146 = scmp.ne.s32.totalorder %s138, %s141
    %p147 = scmp.eq.s32.totalorder %s13, 0
    %p148 = por %p146, %p147
    %p149 = scmp.ne.s32.totalorder %s138, %s141
    %p150 = scmp.eq.s32.totalorder %s18, 1
    %p151 = por %p149, %p150
    %p152 = scmp.ne.s32.totalorder %s141, %s142
    %p153 = scmp.eq.s32.totalorder %s18, 0
    %p154 = por %p152, %p153
    %p155 = scmp.ne.s32.totalorder %s141, %s142
    %p156 = scmp.eq.s32.totalorder %s19, 1
    %p157 = por %p155, %p156
    %p159 = scmp.ne.s32.totalorder %s142, %s158
    %p160 = scmp.eq.s32.totalorder %s19, 0
    %p161 = por %p159, %p160
    %p162 = scmp.le.s32.totalorder 1, %s13
    %p163 = scmp.lt.s32.totalorder %s13, 3
    %p164 = pnand %p162, %p163
    %p165 = pneg %p164
    // Predicated region
    $region9: #{bottleneck_forward.5} parent=5 // pred_check
      _
    $region10: #{bottleneck_forward.5} parent=5 // pred_check_branch
      %167 = sbr.rel (%p164) target = $region12
    $region11: #{bottleneck_forward.5} parent=5 // pred_region
      %s168 = ssub.s32 %s13, 1
      // Predicated region
      $region13: #{bottleneck_forward.5} parent=11 // pred_check
        %p169 = pneg %p34
      $region14: #{bottleneck_forward.5} parent=11 // pred_check_branch
        %171 = sbr.rel (%p169) target = $region16
      $region15: #{bottleneck_forward.5} parent=11 // pred_region
        _
      $region16: #{bottleneck_forward.5} parent=11 // pred_fallthru
        _
      // Predicated region
      $region17: #{bottleneck_forward.5} parent=11 // pred_check
        %p172 = pneg %p81
      $region18: #{bottleneck_forward.5} parent=11 // pred_check_branch
        %174 = sbr.rel (%p172) target = $region20
      $region19: #{bottleneck_forward.5} parent=11 // pred_region
        _
      $region20: #{bottleneck_forward.5} parent=11 // pred_fallthru
        _
      // Predicated region
      $region21: #{bottleneck_forward.5} parent=11 // pred_check
        %p175 = pneg %p102
      $region22: #{bottleneck_forward.5} parent=11 // pred_check_branch
        %177 = sbr.rel (%p175) target = $region24
      $region23: #{bottleneck_forward.5} parent=11 // pred_region
        _
      $region24: #{bottleneck_forward.5} parent=11 // pred_fallthru
        _
    $region12: #{bottleneck_forward.5} parent=5 // pred_fallthru
      _
    %p178 = scmp.lt.s32.totalorder %s13, 2
    // Predicated region
    $region25: #{bottleneck_forward.5} parent=5 // pred_check
      %p179 = pneg %p178
    $region26: #{bottleneck_forward.5} parent=5 // pred_check_branch
      %181 = sbr.rel (%p179) target = $region28
    $region27: #{bottleneck_forward.5} parent=5 // pred_region
      // Predicated region
      $region29: #{bottleneck_forward.5} parent=27 // pred_check
        %p182 = pneg %p54
      $region30: #{bottleneck_forward.5} parent=27 // pred_check_branch
        %184 = sbr.rel (%p182) target = $region32
      $region31: #{bottleneck_forward.5} parent=27 // pred_region
        %s185 = smul.u32 32, %s13
        %p186 = scmp.lt.s32.totalorder %s185, 63
        %s187 = scalar_select %p186, %s185, 63
        %s188 = smul.addr %s187, 8
        %s189 = scalar_lea.vmem %s1, %s188
        %s190 = smul.u32 32, %s13
      $region32: #{bottleneck_forward.5} parent=27 // pred_fallthru
        _
    $region28: #{bottleneck_forward.5} parent=5 // pred_fallthru
      _
    %p191 = scmp.le.s32.totalorder 1, %s13
    %p192 = scmp.lt.s32.totalorder %s13, 3
    %p193 = pnand %p191, %p192
    %p194 = pneg %p193
    // Predicated region
    $region33: #{bottleneck_forward.5} parent=5 // pred_check
      _
    $region34: #{bottleneck_forward.5} parent=5 // pred_check_branch
      %196 = sbr.rel (%p193) target = $region36
    $region35: #{bottleneck_forward.5} parent=5 // pred_region
      %s197 = ssub.s32 %s13, 1
      %p198 = pneg %p34
      %p199 = pneg %p31
      %s200 = smul.u32 32, %s18
      %p201 = scmp.lt.s32.totalorder %s200, 63
      %s202 = scalar_select %p201, %s200, 63
      %s203 = smul.addr %s202, 8
      %s204 = scalar_lea.vmem %s1, %s203
      %p205 = pneg %p60
      %p206 = pneg %p57
      %p207 = pneg %p81
      %p208 = pneg %p78
      %p209 = pneg %p102
      %p210 = pneg %p99
      %p211 = pneg %p128
      %p212 = pneg %p125
      %s213 = smul.u32 32, %s18
      %p214 = scmp.lt.s32.totalorder %s213, 63
      %s215 = scalar_select %p214, %s213, 63
      %s216 = smul.addr %s215, 4
      %s217 = scalar_lea.vmem %s4, %s216
      %p218 = pneg %p154
      %p219 = pneg %p151
      %p220 = scmp.lt.s32.totalorder %s18, 1
      %s221 = scalar_select %p220, %s18, 1
      %s222 = scalar_lea.vmem %s5, %s221
      %s223 = smul.u32 32, %s18
      %p224 = scmp.lt.s32.totalorder %s223, 63
      %s225 = scalar_select %p224, %s223, 63
      %s226 = smul.addr %s225, 8
      %s227 = scalar_lea.vmem %s1, %s226
      %s228 = smul.u32 32, %s18
      %s229 = smul.u32 32, %s18
      %p230 = scmp.lt.s32.totalorder %s229, 63
      %s231 = scalar_select %p230, %s229, 63
      %s232 = smul.addr %s231, 4
      %s233 = scalar_lea.vmem %s4, %s232
      %s234 = smul.u32 32, %s18
      %p235 = scmp.lt.s32.totalorder %s18, 1
      %s236 = scalar_select %p235, %s18, 1
      %s237 = scalar_lea.vmem %s5, %s236
      %v239 = vld [vmem:[%s227] sm:$0xff]
      %v240 = vld [vmem:[%s227 + $0x8] sm:$0xff]
      %v241 = vld [vmem:[%s227 + $0x10] sm:$0xff]
      %v242 = vld [vmem:[%s227 + $0x18] sm:$0xff]
      %v243 = vld [vmem:[%s227 + $0x20] sm:$0xff]
      %v244 = vld [vmem:[%s227 + $0x28] sm:$0xff]
      %v245 = vld [vmem:[%s227 + $0x30] sm:$0xff]
      %v246 = vld [vmem:[%s227 + $0x38] sm:$0xff]
      %v247 = vld [vmem:[%s227 + $0x40] sm:$0xff]
      %v248 = vld [vmem:[%s227 + $0x48] sm:$0xff]
      %v249 = vld [vmem:[%s227 + $0x50] sm:$0xff]
      %v250 = vld [vmem:[%s227 + $0x58] sm:$0xff]
      %v251 = vld [vmem:[%s227 + $0x60] sm:$0xff]
      %v252 = vld [vmem:[%s227 + $0x68] sm:$0xff]
      %v253 = vld [vmem:[%s227 + $0x70] sm:$0xff]
      %v254 = vld [vmem:[%s227 + $0x78] sm:$0xff]
      %v255 = vld [vmem:[%s227 + $0x80] sm:$0xff]
      %v256 = vld [vmem:[%s227 + $0x88] sm:$0xff]
      %v257 = vld [vmem:[%s227 + $0x90] sm:$0xff]
      %v258 = vld [vmem:[%s227 + $0x98] sm:$0xff]
      %v259 = vld [vmem:[%s227 + $0xa0] sm:$0xff]
      %v260 = vld [vmem:[%s227 + $0xa8] sm:$0xff]
      %v261 = vld [vmem:[%s227 + $0xb0] sm:$0xff]
      %v262 = vld [vmem:[%s227 + $0xb8] sm:$0xff]
      %v263 = vld [vmem:[%s227 + $0xc0] sm:$0xff]
      %v264 = vld [vmem:[%s227 + $0xc8] sm:$0xff]
      %v265 = vld [vmem:[%s227 + $0xd0] sm:$0xff]
      %v266 = vld [vmem:[%s227 + $0xd8] sm:$0xff]
      %v267 = vld [vmem:[%s227 + $0xe0] sm:$0xff]
      %v268 = vld [vmem:[%s227 + $0xe8] sm:$0xff]
      %v269 = vld [vmem:[%s227 + $0xf0] sm:$0xff]
      %v270 = vld [vmem:[%s227 + $0xf8] sm:$0xff]
      %v271 = vpack.c.bf16 %v240, %v239
      %v272 = vpack.c.bf16 %v242, %v241
      %v273 = vpack.c.bf16 %v244, %v243
      %v274 = vpack.c.bf16 %v246, %v245
      %v275 = vpack.c.bf16 %v248, %v247
      %v276 = vpack.c.bf16 %v250, %v249
      %v277 = vpack.c.bf16 %v252, %v251
      %v278 = vpack.c.bf16 %v254, %v253
      %v279 = vpack.c.bf16 %v256, %v255
      %v280 = vpack.c.bf16 %v258, %v257
      %v281 = vpack.c.bf16 %v260, %v259
      %v282 = vpack.c.bf16 %v262, %v261
      %v283 = vpack.c.bf16 %v264, %v263
      %v284 = vpack.c.bf16 %v266, %v265
      %v285 = vpack.c.bf16 %v268, %v267
      %v286 = vpack.c.bf16 %v270, %v269
      %v287 = vld [vmem:[%s2] sm:$0xf]
      %v288 = vld [vmem:[%s2 + $0x4] sm:$0xf]
      %v289 = vld [vmem:[%s2 + $0x8] sm:$0xf]
      %v290 = vld [vmem:[%s2 + $0xc] sm:$0xf]
      %v291 = vld [vmem:[%s2 + $0x10] sm:$0xf]
      %v292 = vld [vmem:[%s2 + $0x14] sm:$0xf]
      %v293 = vld [vmem:[%s2 + $0x18] sm:$0xf]
      %v294 = vld [vmem:[%s2 + $0x1c] sm:$0xf]
      %v295 = vld [vmem:[%s2 + $0x20] sm:$0xf]
      %v296 = vld [vmem:[%s2 + $0x24] sm:$0xf]
      %v297 = vld [vmem:[%s2 + $0x28] sm:$0xf]
      %v298 = vld [vmem:[%s2 + $0x2c] sm:$0xf]
      %v299 = vld [vmem:[%s2 + $0x30] sm:$0xf]
      %v300 = vld [vmem:[%s2 + $0x34] sm:$0xf]
      %v301 = vld [vmem:[%s2 + $0x38] sm:$0xf]
      %v302 = vld [vmem:[%s2 + $0x3c] sm:$0xf]
      %v303 = vld [vmem:[%s3] sm:$0x1]
      %v305 = vlaneseq
      %v306 = vshrl.u32 %v305, 7
      %v307 = vsub.s32 0, %v306
      %v308 = vrot.slane %v303, %v307
      %v326 = vunpack.c.l.b16 %v287
      %v327 = vunpack.c.l.b16 %v288
      %v328 = vunpack.c.l.b16 %v289
      %v329 = vunpack.c.l.b16 %v290
      %v330 = vunpack.c.l.b16 %v291
      %v331 = vunpack.c.l.b16 %v292
      %v332 = vunpack.c.l.b16 %v293
      %v333 = vunpack.c.l.b16 %v294
      %v334 = vunpack.c.l.b16 %v295
      %v335 = vunpack.c.l.b16 %v296
      %v336 = vunpack.c.l.b16 %v297
      %v337 = vunpack.c.l.b16 %v298
      %v338 = vunpack.c.l.b16 %v299
      %v339 = vunpack.c.l.b16 %v300
      %v340 = vunpack.c.l.b16 %v301
      %v341 = vunpack.c.l.b16 %v302
      %v342 = vpack.c.b16 %v327, %v326
      %v343 = vpack.c.b16 %v329, %v328
      %v344 = vpack.c.b16 %v331, %v330
      %v345 = vpack.c.b16 %v333, %v332
      %v346 = vpack.c.b16 %v335, %v334
      %v347 = vpack.c.b16 %v337, %v336
      %v348 = vpack.c.b16 %v339, %v338
      %v349 = vpack.c.b16 %v341, %v340
      %358 = vmatprep.subr.bf16.mxu0 0
      %359 = vmatpush1.bf16.msra.mxu0 %v342
      %360 = vmatprep.subr.bf16.mxu0 0
      %361 = vmatpush1.bf16.msra.mxu0 %v343
      %362 = vmatprep.subr.bf16.mxu0 0
      %363 = vmatpush1.bf16.msra.mxu0 %v344
      %364 = vmatprep.subr.bf16.mxu0 0
      %365 = vmatpush1.bf16.msra.mxu0 %v345
      %366 = vmatprep.subr.bf16.mxu0 0
      %367 = vmatpush1.bf16.msra.mxu0 %v346
      %368 = vmatprep.subr.bf16.mxu0 0
      %369 = vmatpush1.bf16.msra.mxu0 %v347
      %370 = vmatprep.subr.bf16.mxu0 0
      %371 = vmatpush1.bf16.msra.mxu0 %v348
      %372 = vmatprep.subr.bf16.mxu0 0
      %373 = vmatpush1.bf16.msra.mxu0 %v349
      %374 = vmatprep.subr.bf16.mxu0 0
      %375 = vmatpush1.bf16.msra.mxu0 0
      %376 = vmatprep.subr.bf16.mxu0 0
      %377 = vmatpush1.bf16.msra.mxu0 0
      %378 = vmatprep.subr.bf16.mxu0 0
      %379 = vmatpush1.bf16.msra.mxu0 0
      %380 = vmatprep.subr.bf16.mxu0 0
      %381 = vmatpush1.bf16.msra.mxu0 0
      %382 = vmatprep.subr.bf16.mxu0 0
      %383 = vmatpush1.bf16.msra.mxu0 0
      %384 = vmatprep.subr.bf16.mxu0 0
      %385 = vmatpush1.bf16.msra.mxu0 0
      %386 = vmatprep.subr.bf16.mxu0 0
      %387 = vmatpush1.bf16.msra.mxu0 0
      %388 = vmatprep.subr.bf16.mxu0 0
      %389 = vmatpush1.bf16.msra.mxu0 0
      %390 = vmatprep.mubr.bf16.mxu0 0
      %391 = vmatmul.mubr.bf16.gmra.mrb[0].mxu0 %v271
      %v392 = vpop.f32.mrb[0].mxu0
      %v393 = vadd.f32 %v308, %v392
      %v394 = vpop.f32.mrb[0].mxu0
      %v395 = vpop.f32.mrb[0].mxu0
      %v396 = vadd.f32 %v308, %v395
      %v397 = vpop.f32.mrb[0].mxu0
      %398 = vmatprep.mubr.bf16.mxu0 0
      %399 = vmatmul.mubr.bf16.gmra.mrb[0].mxu0 %v272
      %v400 = vpop.f32.mrb[0].mxu0
      %v401 = vadd.f32 %v308, %v400
      %v402 = vpop.f32.mrb[0].mxu0
      %v403 = vpop.f32.mrb[0].mxu0
      %v404 = vadd.f32 %v308, %v403
      %v405 = vpop.f32.mrb[0].mxu0
      %406 = vmatprep.mubr.bf16.mxu0 0
      %407 = vmatmul.mubr.bf16.gmra.mrb[0].mxu0 %v273
      %v408 = vpop.f32.mrb[0].mxu0
      %v409 = vadd.f32 %v308, %v408
      %v410 = vpop.f32.mrb[0].mxu0
      %v411 = vpop.f32.mrb[0].mxu0
      %v412 = vadd.f32 %v308, %v411
      %v413 = vpop.f32.mrb[0].mxu0
      %414 = vmatprep.mubr.bf16.mxu0 0
      %415 = vmatmul.mubr.bf16.gmra.mrb[0].mxu0 %v274
      %v416 = vpop.f32.mrb[0].mxu0
      %v417 = vadd.f32 %v308, %v416
      %v418 = vpop.f32.mrb[0].mxu0
      %v419 = vpop.f32.mrb[0].mxu0
      %v420 = vadd.f32 %v308, %v419
      %v421 = vpop.f32.mrb[0].mxu0
      %422 = vmatprep.mubr.bf16.mxu0 0
      %423 = vmatmul.mubr.bf16.gmra.mrb[0].mxu0 %v275
      %v424 = vpop.f32.mrb[0].mxu0
      %v425 = vadd.f32 %v308, %v424
      %v426 = vpop.f32.mrb[0].mxu0
      %v427 = vpop.f32.mrb[0].mxu0
      %v428 = vadd.f32 %v308, %v427
      %v429 = vpop.f32.mrb[0].mxu0
      %430 = vmatprep.mubr.bf16.mxu0 0
      %431 = vmatmul.mubr.bf16.gmra.mrb[0].mxu0 %v276
      %v432 = vpop.f32.mrb[0].mxu0
      %v433 = vadd.f32 %v308, %v432
      %v434 = vpop.f32.mrb[0].mxu0
      %v435 = vpop.f32.mrb[0].mxu0
      %v436 = vadd.f32 %v308, %v435
      %v437 = vpop.f32.mrb[0].mxu0
      %438 = vmatprep.mubr.bf16.mxu0 0
      %439 = vmatmul.mubr.bf16.gmra.mrb[0].mxu0 %v277
      %v440 = vpop.f32.mrb[0].mxu0
      %v441 = vadd.f32 %v308, %v440
      %v442 = vpop.f32.mrb[0].mxu0
      %v443 = vpop.f32.mrb[0].mxu0
      %v444 = vadd.f32 %v308, %v443
      %v445 = vpop.f32.mrb[0].mxu0
      %446 = vmatprep.mubr.bf16.mxu0 0
      %447 = vmatmul.mubr.bf16.gmra.mrb[0].mxu0 %v278
      %v448 = vpop.f32.mrb[0].mxu0
      %v449 = vadd.f32 %v308, %v448
      %v450 = vpop.f32.mrb[0].mxu0
      %v451 = vpop.f32.mrb[0].mxu0
      %v452 = vadd.f32 %v308, %v451
      %v453 = vpop.f32.mrb[0].mxu0
      %454 = vmatprep.mubr.bf16.mxu0 0
      %455 = vmatmul.mubr.bf16.gmra.mrb[0].mxu0 %v279
      %v456 = vpop.f32.mrb[0].mxu0
      %v457 = vadd.f32 %v308, %v456
      %v458 = vpop.f32.mrb[0].mxu0
      %v459 = vpop.f32.mrb[0].mxu0
      %v460 = vadd.f32 %v308, %v459
      %v461 = vpop.f32.mrb[0].mxu0
      %462 = vmatprep.mubr.bf16.mxu0 0
      %463 = vmatmul.mubr.bf16.gmra.mrb[0].mxu0 %v280
      %v464 = vpop.f32.mrb[0].mxu0
      %v465 = vadd.f32 %v308, %v464
      %v466 = vpop.f32.mrb[0].mxu0
      %v467 = vpop.f32.mrb[0].mxu0
      %v468 = vadd.f32 %v308, %v467
      %v469 = vpop.f32.mrb[0].mxu0
      %470 = vmatprep.mubr.bf16.mxu0 0
      %471 = vmatmul.mubr.bf16.gmra.mrb[0].mxu0 %v281
      %v472 = vpop.f32.mrb[0].mxu0
      %v473 = vadd.f32 %v308, %v472
      %v474 = vpop.f32.mrb[0].mxu0
      %v475 = vpop.f32.mrb[0].mxu0
      %v476 = vadd.f32 %v308, %v475
      %v477 = vpop.f32.mrb[0].mxu0
      %478 = vmatprep.mubr.bf16.mxu0 0
      %479 = vmatmul.mubr.bf16.gmra.mrb[0].mxu0 %v282
      %v480 = vpop.f32.mrb[0].mxu0
      %v481 = vadd.f32 %v308, %v480
      %v482 = vpop.f32.mrb[0].mxu0
      %v483 = vpop.f32.mrb[0].mxu0
      %v484 = vadd.f32 %v308, %v483
      %v485 = vpop.f32.mrb[0].mxu0
      %486 = vmatprep.mubr.bf16.mxu0 0
      %487 = vmatmul.mubr.bf16.gmra.mrb[0].mxu0 %v283
      %v488 = vpop.f32.mrb[0].mxu0
      %v489 = vadd.f32 %v308, %v488
      %v490 = vpop.f32.mrb[0].mxu0
      %v491 = vpop.f32.mrb[0].mxu0
      %v492 = vadd.f32 %v308, %v491
      %v493 = vpop.f32.mrb[0].mxu0
      %494 = vmatprep.mubr.bf16.mxu0 0
      %495 = vmatmul.mubr.bf16.gmra.mrb[0].mxu0 %v284
      %v496 = vpop.f32.mrb[0].mxu0
      %v497 = vadd.f32 %v308, %v496
      %v498 = vpop.f32.mrb[0].mxu0
      %v499 = vpop.f32.mrb[0].mxu0
      %v500 = vadd.f32 %v308, %v499
      %v501 = vpop.f32.mrb[0].mxu0
      %502 = vmatprep.mubr.bf16.mxu0 0
      %503 = vmatmul.mubr.bf16.gmra.mrb[0].mxu0 %v285
      %v504 = vpop.f32.mrb[0].mxu0
      %v505 = vadd.f32 %v308, %v504
      %v506 = vpop.f32.mrb[0].mxu0
      %v507 = vpop.f32.mrb[0].mxu0
      %v508 = vadd.f32 %v308, %v507
      %v509 = vpop.f32.mrb[0].mxu0
      %510 = vmatprep.mubr.bf16.mxu0 0
      %511 = vmatmul.mubr.bf16.gmra.mrb[0].mxu0 %v286
      %v512 = vpop.f32.mrb[0].mxu0
      %v513 = vadd.f32 %v308, %v512
      %v514 = vpop.f32.mrb[0].mxu0
      %v515 = vpop.f32.mrb[0].mxu0
      %v516 = vadd.f32 %v308, %v515
      %v517 = vpop.f32.mrb[0].mxu0
      %518 = vdwg.mxu0
      %v519 = vmax.f32 %v393, 0.0
      %v520 = vmax.f32 %v396, 0.0
      %v521 = vmax.f32 %v401, 0.0
      %v522 = vmax.f32 %v404, 0.0
      %v523 = vmax.f32 %v409, 0.0
      %v524 = vmax.f32 %v412, 0.0
      %v525 = vmax.f32 %v417, 0.0
      %v526 = vmax.f32 %v420, 0.0
      %v527 = vmax.f32 %v425, 0.0
      %v528 = vmax.f32 %v428, 0.0
      %v529 = vmax.f32 %v433, 0.0
      %v530 = vmax.f32 %v436, 0.0
      %v531 = vmax.f32 %v441, 0.0
      %v532 = vmax.f32 %v444, 0.0
      %v533 = vmax.f32 %v449, 0.0
      %v534 = vmax.f32 %v452, 0.0
      %v535 = vmax.f32 %v457, 0.0
      %v536 = vmax.f32 %v460, 0.0
      %v537 = vmax.f32 %v465, 0.0
      %v538 = vmax.f32 %v468, 0.0
      %v539 = vmax.f32 %v473, 0.0
      %v540 = vmax.f32 %v476, 0.0
      %v541 = vmax.f32 %v481, 0.0
      %v542 = vmax.f32 %v484, 0.0
      %v543 = vmax.f32 %v489, 0.0
      %v544 = vmax.f32 %v492, 0.0
      %v545 = vmax.f32 %v497, 0.0
      %v546 = vmax.f32 %v500, 0.0
      %v547 = vmax.f32 %v505, 0.0
      %v548 = vmax.f32 %v508, 0.0
      %v549 = vmax.f32 %v513, 0.0
      %v550 = vmax.f32 %v516, 0.0
      %v551 = vpack.c.bf16 %v520, %v519
      %v552 = vpack.c.bf16 %v522, %v521
      %v553 = vpack.c.bf16 %v524, %v523
      %v554 = vpack.c.bf16 %v526, %v525
      %v555 = vpack.c.bf16 %v528, %v527
      %v556 = vpack.c.bf16 %v530, %v529
      %v557 = vpack.c.bf16 %v532, %v531
      %v558 = vpack.c.bf16 %v534, %v533
      %v559 = vpack.c.bf16 %v536, %v535
      %v560 = vpack.c.bf16 %v538, %v537
      %v561 = vpack.c.bf16 %v540, %v539
      %v562 = vpack.c.bf16 %v542, %v541
      %v563 = vpack.c.bf16 %v544, %v543
      %v564 = vpack.c.bf16 %v546, %v545
      %v565 = vpack.c.bf16 %v548, %v547
      %v566 = vpack.c.bf16 %v550, %v549
      %v583 = vunpack.c.l.b16 %v551
      %v584 = vunpack.c.h.b16 %v551
      %v585 = vunpack.c.l.b16 %v552
      %v586 = vunpack.c.h.b16 %v552
      %v587 = vunpack.c.l.b16 %v553
      %v588 = vunpack.c.h.b16 %v553
      %v589 = vunpack.c.l.b16 %v554
      %v590 = vunpack.c.h.b16 %v554
      %v591 = vunpack.c.l.b16 %v555
      %v592 = vunpack.c.h.b16 %v555
      %v593 = vunpack.c.l.b16 %v556
      %v594 = vunpack.c.h.b16 %v556
      %v595 = vunpack.c.l.b16 %v557
      %v596 = vunpack.c.h.b16 %v557
      %v597 = vunpack.c.l.b16 %v558
      %v598 = vunpack.c.h.b16 %v558
      %v599 = vunpack.c.l.b16 %v559
      %v600 = vunpack.c.h.b16 %v559
      %v601 = vunpack.c.l.b16 %v560
      %v602 = vunpack.c.h.b16 %v560
      %v603 = vunpack.c.l.b16 %v561
      %v604 = vunpack.c.h.b16 %v561
      %v605 = vunpack.c.l.b16 %v562
      %v606 = vunpack.c.h.b16 %v562
      %v607 = vunpack.c.l.b16 %v563
      %v608 = vunpack.c.h.b16 %v563
      %v609 = vunpack.c.l.b16 %v564
      %v610 = vunpack.c.h.b16 %v564
      %v611 = vunpack.c.l.b16 %v565
      %v612 = vunpack.c.h.b16 %v565
      %v613 = vunpack.c.l.b16 %v566
      %v614 = vunpack.c.h.b16 %v566
      %v615 = vpack.c.b16 %v583, %v583
      %v616 = vpack.c.b16 %v584, %v584
      %v617 = vpack.c.b16 %v585, %v585
      %v618 = vpack.c.b16 %v586, %v586
      %v619 = vpack.c.b16 %v587, %v587
      %v620 = vpack.c.b16 %v588, %v588
      %v621 = vpack.c.b16 %v589, %v589
      %v622 = vpack.c.b16 %v590, %v590
      %v623 = vpack.c.b16 %v591, %v591
      %v624 = vpack.c.b16 %v592, %v592
      %v625 = vpack.c.b16 %v593, %v593
      %v626 = vpack.c.b16 %v594, %v594
      %v627 = vpack.c.b16 %v595, %v595
      %v628 = vpack.c.b16 %v596, %v596
      %v629 = vpack.c.b16 %v597, %v597
      %v630 = vpack.c.b16 %v598, %v598
      %v631 = vpack.c.b16 %v599, %v599
      %v632 = vpack.c.b16 %v600, %v600
      %v633 = vpack.c.b16 %v601, %v601
      %v634 = vpack.c.b16 %v602, %v602
      %v635 = vpack.c.b16 %v603, %v603
      %v636 = vpack.c.b16 %v604, %v604
      %v637 = vpack.c.b16 %v605, %v605
      %v638 = vpack.c.b16 %v606, %v606
      %v639 = vpack.c.b16 %v607, %v607
      %v640 = vpack.c.b16 %v608, %v608
      %v641 = vpack.c.b16 %v609, %v609
      %v642 = vpack.c.b16 %v610, %v610
      %v643 = vpack.c.b16 %v611, %v611
      %v644 = vpack.c.b16 %v612, %v612
      %v645 = vpack.c.b16 %v613, %v613
      %v646 = vpack.c.b16 %v614, %v614
      %679 = vst [vmem:[%s233] sm:$0xf] %v615
      %680 = vst [vmem:[%s233 + $0x4] sm:$0xf] %v616
      %681 = vst [vmem:[%s233 + $0x8] sm:$0xf] %v617
      %682 = vst [vmem:[%s233 + $0xc] sm:$0xf] %v618
      %683 = vst [vmem:[%s233 + $0x10] sm:$0xf] %v619
      %684 = vst [vmem:[%s233 + $0x14] sm:$0xf] %v620
      %685 = vst [vmem:[%s233 + $0x18] sm:$0xf] %v621
      %686 = vst [vmem:[%s233 + $0x1c] sm:$0xf] %v622
      %687 = vst [vmem:[%s233 + $0x20] sm:$0xf] %v623
      %688 = vst [vmem:[%s233 + $0x24] sm:$0xf] %v624
      %689 = vst [vmem:[%s233 + $0x28] sm:$0xf] %v625
      %690 = vst [vmem:[%s233 + $0x2c] sm:$0xf] %v626
      %691 = vst [vmem:[%s233 + $0x30] sm:$0xf] %v627
      %692 = vst [vmem:[%s233 + $0x34] sm:$0xf] %v628
      %693 = vst [vmem:[%s233 + $0x38] sm:$0xf] %v629
      %694 = vst [vmem:[%s233 + $0x3c] sm:$0xf] %v630
      %695 = vst [vmem:[%s233 + $0x40] sm:$0xf] %v631
      %696 = vst [vmem:[%s233 + $0x44] sm:$0xf] %v632
      %697 = vst [vmem:[%s233 + $0x48] sm:$0xf] %v633
      %698 = vst [vmem:[%s233 + $0x4c] sm:$0xf] %v634
      %699 = vst [vmem:[%s233 + $0x50] sm:$0xf] %v635
      %700 = vst [vmem:[%s233 + $0x54] sm:$0xf] %v636
      %701 = vst [vmem:[%s233 + $0x58] sm:$0xf] %v637
      %702 = vst [vmem:[%s233 + $0x5c] sm:$0xf] %v638
      %703 = vst [vmem:[%s233 + $0x60] sm:$0xf] %v639
      %704 = vst [vmem:[%s233 + $0x64] sm:$0xf] %v640
      %705 = vst [vmem:[%s233 + $0x68] sm:$0xf] %v641
      %706 = vst [vmem:[%s233 + $0x6c] sm:$0xf] %v642
      %707 = vst [vmem:[%s233 + $0x70] sm:$0xf] %v643
      %708 = vst [vmem:[%s233 + $0x74] sm:$0xf] %v644
      %709 = vst [vmem:[%s233 + $0x78] sm:$0xf] %v645
      %710 = vst [vmem:[%s233 + $0x7c] sm:$0xf] %v646
      %v711 = vunpack.c.l.bf16 %v551
      %v712 = vunpack.c.h.bf16 %v551
      %v713 = vunpack.c.l.bf16 %v552
      %v714 = vunpack.c.h.bf16 %v552
      %v715 = vunpack.c.l.bf16 %v553
      %v716 = vunpack.c.h.bf16 %v553
      %v717 = vunpack.c.l.bf16 %v554
      %v718 = vunpack.c.h.bf16 %v554
      %v719 = vunpack.c.l.bf16 %v555
      %v720 = vunpack.c.h.bf16 %v555
      %v721 = vunpack.c.l.bf16 %v556
      %v722 = vunpack.c.h.bf16 %v556
      %v723 = vunpack.c.l.bf16 %v557
      %v724 = vunpack.c.h.bf16 %v557
      %v725 = vunpack.c.l.bf16 %v558
      %v726 = vunpack.c.h.bf16 %v558
      %v727 = vunpack.c.l.bf16 %v559
      %v728 = vunpack.c.h.bf16 %v559
      %v729 = vunpack.c.l.bf16 %v560
      %v730 = vunpack.c.h.bf16 %v560
      %v731 = vunpack.c.l.bf16 %v561
      %v732 = vunpack.c.h.bf16 %v561
      %v733 = vunpack.c.l.bf16 %v562
      %v734 = vunpack.c.h.bf16 %v562
      %v735 = vunpack.c.l.bf16 %v563
      %v736 = vunpack.c.h.bf16 %v563
      %v737 = vunpack.c.l.bf16 %v564
      %v738 = vunpack.c.h.bf16 %v564
      %v739 = vunpack.c.l.bf16 %v565
      %v740 = vunpack.c.h.bf16 %v565
      %v741 = vunpack.c.l.bf16 %v566
      %v742 = vunpack.c.h.bf16 %v566
      %v743 = vmax.f32 %v711, %v715
      %v744 = vmax.f32 %v712, %v716
      %v745 = vmax.f32 %v713, %v717
      %v746 = vmax.f32 %v714, %v718
      %v747 = vmax.f32 %v743, %v719
      %v748 = vmax.f32 %v744, %v720
      %v749 = vmax.f32 %v745, %v721
      %v750 = vmax.f32 %v746, %v722
      %v751 = vmax.f32 %v747, %v723
      %v752 = vmax.f32 %v748, %v724
      %v753 = vmax.f32 %v749, %v725
      %v754 = vmax.f32 %v750, %v726
      %v755 = vmax.f32 %v751, %v727
      %v756 = vmax.f32 %v752, %v728
      %v757 = vmax.f32 %v753, %v729
      %v758 = vmax.f32 %v754, %v730
      %v759 = vmax.f32 %v755, %v731
      %v760 = vmax.f32 %v756, %v732
      %v761 = vmax.f32 %v757, %v733
      %v762 = vmax.f32 %v758, %v734
      %v763 = vmax.f32 %v759, %v735
      %v764 = vmax.f32 %v760, %v736
      %v765 = vmax.f32 %v761, %v737
      %v766 = vmax.f32 %v762, %v738
      %v767 = vmax.f32 %v763, %v739
      %v768 = vmax.f32 %v764, %v740
      %v769 = vmax.f32 %v765, %v741
      %v770 = vmax.f32 %v766, %v742
      %v771 = vmax.f32 %v767, %v768
      %v772 = vmax.f32 %v769, %v770
      %v773 = vmax.f32 %v771, %v772
      %v774 = vrot.slane %v773, 4
      %v775 = vmax.f32 %v773, %v774
      %v776 = vrot.slane %v775, 2
      %v777 = vmax.f32 %v775, %v776
      %v778 = vrot.slane %v777, 1
      %v779 = vmax.f32 %v777, %v778
      %780 = vst [vmem:[%s237] sm:$0x1] %v779
      %s781 = smul.u32 32, %s18
      %p782 = scmp.lt.s32.totalorder %s781, 63
      %s783 = scalar_select %p782, %s781, 63
      %s784 = smul.addr %s783, 4
      %s785 = scalar_lea.vmem %s4, %s784
      %p786 = scmp.lt.s32.totalorder %s18, 1
      %s787 = scalar_select %p786, %s18, 1
      %s788 = scalar_lea.vmem %s5, %s787
      // Predicated region
      $region37: #{bottleneck_forward.5} parent=35 // pred_check
        %p789 = pneg %p125
      $region38: #{bottleneck_forward.5} parent=35 // pred_check_branch
        %791 = sbr.rel (%p789) target = $region40
      $region39: #{bottleneck_forward.5} parent=35 // pred_region
        %s792 = smul.u32 32, %s18
      $region40: #{bottleneck_forward.5} parent=35 // pred_fallthru
        _
      // Predicated region
      $region41: #{bottleneck_forward.5} parent=35 // pred_check
        %p793 = pneg %p151
      $region42: #{bottleneck_forward.5} parent=35 // pred_check_branch
        %795 = sbr.rel (%p793) target = $region44
      $region43: #{bottleneck_forward.5} parent=35 // pred_region
        _
      $region44: #{bottleneck_forward.5} parent=35 // pred_fallthru
        _
    $region36: #{bottleneck_forward.5} parent=5 // pred_fallthru
      _
    %p796 = scmp.le.s32.totalorder 2, %s13
    // Predicated region
    $region45: #{bottleneck_forward.5} parent=5 // pred_check
      %p797 = pneg %p796
    $region46: #{bottleneck_forward.5} parent=5 // pred_check_branch
      %799 = sbr.rel (%p797) target = $region48
    $region47: #{bottleneck_forward.5} parent=5 // pred_region
      %s800 = ssub.s32 %s13, 2
      // Predicated region
      $region49: #{bottleneck_forward.5} parent=47 // pred_check
        %p801 = pneg %p131
      $region50: #{bottleneck_forward.5} parent=47 // pred_check_branch
        %803 = sbr.rel (%p801) target = $region52
      $region51: #{bottleneck_forward.5} parent=47 // pred_region
        %s804 = smul.u32 32, %s19
        %p805 = scmp.lt.s32.totalorder %s804, 63
        %s806 = scalar_select %p805, %s804, 63
        %s807 = smul.addr %s806, 4
        %s808 = scalar_lea.vmem %s4, %s807
      $region52: #{bottleneck_forward.5} parent=47 // pred_fallthru
        _
      // Predicated region
      $region53: #{bottleneck_forward.5} parent=47 // pred_check
        %p809 = pneg %p157
      $region54: #{bottleneck_forward.5} parent=47 // pred_check_branch
        %811 = sbr.rel (%p809) target = $region56
      $region55: #{bottleneck_forward.5} parent=47 // pred_region
        %p812 = scmp.lt.s32.totalorder %s19, 1
        %s813 = scalar_select %p812, %s19, 1
        %s814 = scalar_lea.vmem %s5, %s813
      $region56: #{bottleneck_forward.5} parent=47 // pred_fallthru
        _
    $region48: #{bottleneck_forward.5} parent=5 // pred_fallthru
      _
  $region6: #{bottleneck_forward.5} parent=0 // loop_footer
    %s17 = sadd.s32 1, %s13
  $region7: #{bottleneck_forward.5} parent=0 // loop_footer_branch
    %12 = sbr.rel target = $region3
  $region8: #{bottleneck_forward.5} parent=0 // loop_exit
    _

// kernel: bottleneck_forward.9
$region0: #{bottleneck_forward.9}
  #allocation0 [shape = 'u32[]', space=smem, size = 0x4, offset = 0x4, fixed_abs, tag = 'smem constant byte address 0x4 - core index']
  #allocation1 [shape = 'u32[144,128]{1,0:T(1,128)}', space=vmem, size = 0x12000, scoped, tag = 'internal scratch']
  #allocation2 [shape = 'f32[1,1]{1,0:T(1,128)S(6)}', space=smem, size = 0x200, scoped, tag = 'scoped memory for bottleneck_forward.9']
  %s0 = inlined_call_operand.<no memory space> [shape: f32[1,1], index: 0, kind: input, shape index: {}]
  %s1 = inlined_call_operand.vmem [shape: f32[512,128], index: 1, kind: input, shape index: {}]
  %s2 = inlined_call_operand.vmem [shape: f32[512,128], index: 2, kind: output, shape index: {}]
  %s3 = sld [smem:[#allocation0]]
  $region41: #{bottleneck_forward.9} parent=0
    _
  %s5 = ssub.s32 1, %s3
  %s6 = scalar_select 0, %s5, %s3
  %7 = sst [smem:[#allocation2]] %s0
  loop: start=0, step=1, limit=4
  $region2: #{bottleneck_forward.9} parent=0 // loop_pre_header
    _
  $region3: #{bottleneck_forward.9} parent=0 // loop_header
    %s9 = sphi 0, %s13
    %p10 = scmp.ge.s32.totalorder %s9, 4
    %s17 = sphi 0, %s17
    %s19 = sphi 0, %s17
    %s20 = sphi 0, %s19
    %s34 = sphi 0, %s20
    %s40 = sphi 0, %s42
    %s43 = sphi 0, %s40
    %s44 = sphi 0, %s43
    %s60 = sphi 0, %s44
    %s66 = sphi 0, %s68
    %s69 = sphi 0, %s66
    %s70 = sphi 0, %s69
    %s86 = sphi 0, %s70
  $region4: #{bottleneck_forward.9} parent=0 // loop_header_branch
    %12 = sbr.rel (%p10) target = $region8
  $region5: #{bottleneck_forward.9} parent=0 // loop_body
    %s14 = ssub.s32 %s9, 1
    %s15 = ssub.s32 %s9, 2
    %s16 = sadd.s32 %s9, 1
    %s18 = sadd.s32 %s17, 1
    %p21 = scmp.eq.s32.totalorder %s9, 1
    %p22 = scmp.ne.s32.totalorder %s17, %s19
    %p23 = scmp.eq.s32.totalorder %s9, 0
    %p24 = por %p22, %p23
    %p25 = scmp.ne.s32.totalorder %s17, %s19
    %p26 = scmp.eq.s32.totalorder %s14, 1
    %p27 = por %p25, %p26
    %p28 = scmp.ne.s32.totalorder %s19, %s20
    %p29 = scmp.eq.s32.totalorder %s14, 0
    %p30 = por %p28, %p29
    %p31 = scmp.ne.s32.totalorder %s19, %s20
    %p32 = scmp.eq.s32.totalorder %s15, 1
    %p33 = por %p31, %p32
    %p35 = scmp.ne.s32.totalorder %s20, %s34
    %p36 = scmp.eq.s32.totalorder %s15, 0
    %p37 = por %p35, %p36
    %s38 = ssub.s32 %s9, %s16
    %p39 = scmp.eq.s32.totalorder %s38, 0
    %s41 = sadd.s32 %s40, 1
    %s42 = scalar_select %p39, %s40, %s41
    %p45 = pneg %p39
    %p46 = scmp.eq.s32.totalorder %s9, 1
    %p47 = por %p45, %p46
    %p48 = scmp.ne.s32.totalorder %s40, %s43
    %p49 = scmp.eq.s32.totalorder %s9, 0
    %p50 = por %p48, %p49
    %p51 = scmp.ne.s32.totalorder %s40, %s43
    %p52 = scmp.eq.s32.totalorder %s14, 1
    %p53 = por %p51, %p52
    %p54 = scmp.ne.s32.totalorder %s43, %s44
    %p55 = scmp.eq.s32.totalorder %s14, 0
    %p56 = por %p54, %p55
    %p57 = scmp.ne.s32.totalorder %s43, %s44
    %p58 = scmp.eq.s32.totalorder %s15, 1
    %p59 = por %p57, %p58
    %p61 = scmp.ne.s32.totalorder %s44, %s60
    %p62 = scmp.eq.s32.totalorder %s15, 0
    %p63 = por %p61, %p62
    %s64 = ssub.s32 %s9, %s16
    %p65 = scmp.eq.s32.totalorder %s64, 0
    %s67 = sadd.s32 %s66, 1
    %s68 = scalar_select %p65, %s66, %s67
    %p71 = pneg %p65
    %p72 = scmp.eq.s32.totalorder %s9, 1
    %p73 = por %p71, %p72
    %p74 = scmp.ne.s32.totalorder %s66, %s69
    %p75 = scmp.eq.s32.totalorder %s9, 0
    %p76 = por %p74, %p75
    %p77 = scmp.ne.s32.totalorder %s66, %s69
    %p78 = scmp.eq.s32.totalorder %s14, 1
    %p79 = por %p77, %p78
    %p80 = scmp.ne.s32.totalorder %s69, %s70
    %p81 = scmp.eq.s32.totalorder %s14, 0
    %p82 = por %p80, %p81
    %p83 = scmp.ne.s32.totalorder %s69, %s70
    %p84 = scmp.eq.s32.totalorder %s15, 1
    %p85 = por %p83, %p84
    %p87 = scmp.ne.s32.totalorder %s70, %s86
    %p88 = scmp.eq.s32.totalorder %s15, 0
    %p89 = por %p87, %p88
    %p90 = scmp.le.s32.totalorder 1, %s9
    %p91 = scmp.lt.s32.totalorder %s9, 3
    %p92 = pnand %p90, %p91
    %p93 = pneg %p92
    // Predicated region
    $region9: #{bottleneck_forward.9} parent=5 // pred_check
      _
    $region10: #{bottleneck_forward.9} parent=5 // pred_check_branch
      %95 = sbr.rel (%p92) target = $region12
    $region11: #{bottleneck_forward.9} parent=5 // pred_region
      %s96 = ssub.s32 %s9, 1
      // Predicated region
      $region13: #{bottleneck_forward.9} parent=11 // pred_check
        %p97 = pneg %p30
      $region14: #{bottleneck_forward.9} parent=11 // pred_check_branch
        %99 = sbr.rel (%p97) target = $region16
      $region15: #{bottleneck_forward.9} parent=11 // pred_region
        _
      $region16: #{bottleneck_forward.9} parent=11 // pred_fallthru
        _
    $region12: #{bottleneck_forward.9} parent=5 // pred_fallthru
      _
    %p100 = scmp.lt.s32.totalorder %s9, 2
    // Predicated region
    $region17: #{bottleneck_forward.9} parent=5 // pred_check
      %p101 = pneg %p100
    $region18: #{bottleneck_forward.9} parent=5 // pred_check_branch
      %103 = sbr.rel (%p101) target = $region20
    $region19: #{bottleneck_forward.9} parent=5 // pred_region
      // Predicated region
      $region21: #{bottleneck_forward.9} parent=19 // pred_check
        %p104 = pneg %p50
      $region22: #{bottleneck_forward.9} parent=19 // pred_check_branch
        %106 = sbr.rel (%p104) target = $region24
      $region23: #{bottleneck_forward.9} parent=19 // pred_region
        %s107 = smul.u32 32, %s9
        %p108 = scmp.lt.s32.totalorder %s107, 63
        %s109 = scalar_select %p108, %s107, 63
        %s110 = smul.addr %s109, 8
        %s111 = scalar_lea.vmem %s1, %s110
        %s112 = smul.u32 32, %s9
      $region24: #{bottleneck_forward.9} parent=19 // pred_fallthru
        _
    $region20: #{bottleneck_forward.9} parent=5 // pred_fallthru
      _
    %p113 = scmp.le.s32.totalorder 1, %s9
    %p114 = scmp.lt.s32.totalorder %s9, 3
    %p115 = pnand %p113, %p114
    %p116 = pneg %p115
    // Predicated region
    $region25: #{bottleneck_forward.9} parent=5 // pred_check
      _
    $region26: #{bottleneck_forward.9} parent=5 // pred_check_branch
      %118 = sbr.rel (%p115) target = $region28
    $region27: #{bottleneck_forward.9} parent=5 // pred_region
      %s119 = ssub.s32 %s9, 1
      %p120 = pneg %p30
      %p121 = pneg %p27
      %s122 = smul.u32 32, %s14
      %p123 = scmp.lt.s32.totalorder %s122, 63
      %s124 = scalar_select %p123, %s122, 63
      %s125 = smul.addr %s124, 8
      %s126 = scalar_lea.vmem %s1, %s125
      %p127 = pneg %p56
      %p128 = pneg %p53
      %p129 = pneg %p82
      %p130 = pneg %p79
      %s131 = smul.u32 32, %s14
      %p132 = scmp.lt.s32.totalorder %s131, 63
      %s133 = scalar_select %p132, %s131, 63
      %s134 = smul.addr %s133, 8
      %s135 = scalar_lea.vmem %s2, %s134
      %s136 = smul.u32 32, %s14
      %p137 = scmp.lt.s32.totalorder %s136, 63
      %s138 = scalar_select %p137, %s136, 63
      %s139 = smul.addr %s138, 8
      %s140 = scalar_lea.vmem %s1, %s139
      %s141 = smul.u32 32, %s14
      %s142 = smul.u32 32, %s14
      %p143 = scmp.lt.s32.totalorder %s142, 63
      %s144 = scalar_select %p143, %s142, 63
      %s145 = smul.addr %s144, 8
      %s146 = scalar_lea.vmem %s2, %s145
      %s147 = smul.u32 32, %s14
      %s148 = sld [smem:[#allocation2]]
      %p149 = scmp.gt.f32.partialorder %s148, 0.0
      %s150 = scalar_select %p149, %s148, 1.0
      %v151 = vstv %s150
      %v152 = vrcp.pop %v151
      %s153 = vtos %v152
      %s154 = smul.f32 32767.0, %s153
      %v155 = vrcp.pop 32767.0
      %s156 = vtos %v155
      %s157 = smul.f32 %s150, %s156
      %v158 = vld [vmem:[%s140] sm:$0xff]
      %v159 = vld [vmem:[%s140 + $0x8] sm:$0xff]
      %v160 = vld [vmem:[%s140 + $0x10] sm:$0xff]
      %v161 = vld [vmem:[%s140 + $0x18] sm:$0xff]
      %v162 = vld [vmem:[%s140 + $0x20] sm:$0xff]
      %v163 = vld [vmem:[%s140 + $0x28] sm:$0xff]
      %v164 = vld [vmem:[%s140 + $0x30] sm:$0xff]
      %v165 = vld [vmem:[%s140 + $0x38] sm:$0xff]
      %v166 = vld [vmem:[%s140 + $0x40] sm:$0xff]
      %v167 = vld [vmem:[%s140 + $0x48] sm:$0xff]
      %v168 = vld [vmem:[%s140 + $0x50] sm:$0xff]
      %v169 = vld [vmem:[%s140 + $0x58] sm:$0xff]
      %v170 = vld [vmem:[%s140 + $0x60] sm:$0xff]
      %v171 = vld [vmem:[%s140 + $0x68] sm:$0xff]
      %v172 = vld [vmem:[%s140 + $0x70] sm:$0xff]
      %v173 = vld [vmem:[%s140 + $0x78] sm:$0xff]
      %v174 = vld [vmem:[%s140 + $0x80] sm:$0xff]
      %v175 = vld [vmem:[%s140 + $0x88] sm:$0xff]
      %v176 = vld [vmem:[%s140 + $0x90] sm:$0xff]
      %v177 = vld [vmem:[%s140 + $0x98] sm:$0xff]
      %v178 = vld [vmem:[%s140 + $0xa0] sm:$0xff]
      %v179 = vld [vmem:[%s140 + $0xa8] sm:$0xff]
      %v180 = vld [vmem:[%s140 + $0xb0] sm:$0xff]
      %v181 = vld [vmem:[%s140 + $0xb8] sm:$0xff]
      %v182 = vld [vmem:[%s140 + $0xc0] sm:$0xff]
      %v183 = vld [vmem:[%s140 + $0xc8] sm:$0xff]
      %v184 = vld [vmem:[%s140 + $0xd0] sm:$0xff]
      %v185 = vld [vmem:[%s140 + $0xd8] sm:$0xff]
      %v186 = vld [vmem:[%s140 + $0xe0] sm:$0xff]
      %v187 = vld [vmem:[%s140 + $0xe8] sm:$0xff]
      %v188 = vld [vmem:[%s140 + $0xf0] sm:$0xff]
      %v189 = vld [vmem:[%s140 + $0xf8] sm:$0xff]
      %v190 = vstv %s154
      %v191 = vmul.f32 %v158, %v190
      %v192 = vmul.f32 %v159, %v190
      %v193 = vmul.f32 %v160, %v190
      %v194 = vmul.f32 %v161, %v190
      %v195 = vmul.f32 %v162, %v190
      %v196 = vmul.f32 %v163, %v190
      %v197 = vmul.f32 %v164, %v190
      %v198 = vmul.f32 %v165, %v190
      %v199 = vmul.f32 %v166, %v190
      %v200 = vmul.f32 %v167, %v190
      %v201 = vmul.f32 %v168, %v190
      %v202 = vmul.f32 %v169, %v190
      %v203 = vmul.f32 %v170, %v190
      %v204 = vmul.f32 %v171, %v190
      %v205 = vmul.f32 %v172, %v190
      %v206 = vmul.f32 %v173, %v190
      %v207 = vmul.f32 %v174, %v190
      %v208 = vmul.f32 %v175, %v190
      %v209 = vmul.f32 %v176, %v190
      %v210 = vmul.f32 %v177, %v190
      %v211 = vmul.f32 %v178, %v190
      %v212 = vmul.f32 %v179, %v190
      %v213 = vmul.f32 %v180, %v190
      %v214 = vmul.f32 %v181, %v190
      %v215 = vmul.f32 %v182, %v190
      %v216 = vmul.f32 %v183, %v190
      %v217 = vmul.f32 %v184, %v190
      %v218 = vmul.f32 %v185, %v190
      %v219 = vmul.f32 %v186, %v190
      %v220 = vmul.f32 %v187, %v190
      %v221 = vmul.f32 %v188, %v190
      %v222 = vmul.f32 %v189, %v190
      %v223 = vround.ne.pseudo %v191
      %v224 = vround.ne.pseudo %v192
      %v225 = vround.ne.pseudo %v193
      %v226 = vround.ne.pseudo %v194
      %v227 = vround.ne.pseudo %v195
      %v228 = vround.ne.pseudo %v196
      %v229 = vround.ne.pseudo %v197
      %v230 = vround.ne.pseudo %v198
      %v231 = vround.ne.pseudo %v199
      %v232 = vround.ne.pseudo %v200
      %v233 = vround.ne.pseudo %v201
      %v234 = vround.ne.pseudo %v202
      %v235 = vround.ne.pseudo %v203
      %v236 = vround.ne.pseudo %v204
      %v237 = vround.ne.pseudo %v205
      %v238 = vround.ne.pseudo %v206
      %v239 = vround.ne.pseudo %v207
      %v240 = vround.ne.pseudo %v208
      %v241 = vround.ne.pseudo %v209
      %v242 = vround.ne.pseudo %v210
      %v243 = vround.ne.pseudo %v211
      %v244 = vround.ne.pseudo %v212
      %v245 = vround.ne.pseudo %v213
      %v246 = vround.ne.pseudo %v214
      %v247 = vround.ne.pseudo %v215
      %v248 = vround.ne.pseudo %v216
      %v249 = vround.ne.pseudo %v217
      %v250 = vround.ne.pseudo %v218
      %v251 = vround.ne.pseudo %v219
      %v252 = vround.ne.pseudo %v220
      %v253 = vround.ne.pseudo %v221
      %v254 = vround.ne.pseudo %v222
      %v255 = vstv %s157
      %v256 = vmul.f32 %v223, %v255
      %v257 = vmul.f32 %v224, %v255
      %v258 = vmul.f32 %v225, %v255
      %v259 = vmul.f32 %v226, %v255
      %v260 = vmul.f32 %v227, %v255
      %v261 = vmul.f32 %v228, %v255
      %v262 = vmul.f32 %v229, %v255
      %v263 = vmul.f32 %v230, %v255
      %v264 = vmul.f32 %v231, %v255
      %v265 = vmul.f32 %v232, %v255
      %v266 = vmul.f32 %v233, %v255
      %v267 = vmul.f32 %v234, %v255
      %v268 = vmul.f32 %v235, %v255
      %v269 = vmul.f32 %v236, %v255
      %v270 = vmul.f32 %v237, %v255
      %v271 = vmul.f32 %v238, %v255
      %v272 = vmul.f32 %v239, %v255
      %v273 = vmul.f32 %v240, %v255
      %v274 = vmul.f32 %v241, %v255
      %v275 = vmul.f32 %v242, %v255
      %v276 = vmul.f32 %v243, %v255
      %v277 = vmul.f32 %v244, %v255
      %v278 = vmul.f32 %v245, %v255
      %v279 = vmul.f32 %v246, %v255
      %v280 = vmul.f32 %v247, %v255
      %v281 = vmul.f32 %v248, %v255
      %v282 = vmul.f32 %v249, %v255
      %v283 = vmul.f32 %v250, %v255
      %v284 = vmul.f32 %v251, %v255
      %v285 = vmul.f32 %v252, %v255
      %v286 = vmul.f32 %v253, %v255
      %v287 = vmul.f32 %v254, %v255
      %288 = vst [vmem:[%s146] sm:$0xff] %v256
      %289 = vst [vmem:[%s146 + $0x8] sm:$0xff] %v257
      %290 = vst [vmem:[%s146 + $0x10] sm:$0xff] %v258
      %291 = vst [vmem:[%s146 + $0x18] sm:$0xff] %v259
      %292 = vst [vmem:[%s146 + $0x20] sm:$0xff] %v260
      %293 = vst [vmem:[%s146 + $0x28] sm:$0xff] %v261
      %294 = vst [vmem:[%s146 + $0x30] sm:$0xff] %v262
      %295 = vst [vmem:[%s146 + $0x38] sm:$0xff] %v263
      %296 = vst [vmem:[%s146 + $0x40] sm:$0xff] %v264
      %297 = vst [vmem:[%s146 + $0x48] sm:$0xff] %v265
      %298 = vst [vmem:[%s146 + $0x50] sm:$0xff] %v266
      %299 = vst [vmem:[%s146 + $0x58] sm:$0xff] %v267
      %300 = vst [vmem:[%s146 + $0x60] sm:$0xff] %v268
      %301 = vst [vmem:[%s146 + $0x68] sm:$0xff] %v269
      %302 = vst [vmem:[%s146 + $0x70] sm:$0xff] %v270
      %303 = vst [vmem:[%s146 + $0x78] sm:$0xff] %v271
      %304 = vst [vmem:[%s146 + $0x80] sm:$0xff] %v272
      %305 = vst [vmem:[%s146 + $0x88] sm:$0xff] %v273
      %306 = vst [vmem:[%s146 + $0x90] sm:$0xff] %v274
      %307 = vst [vmem:[%s146 + $0x98] sm:$0xff] %v275
      %308 = vst [vmem:[%s146 + $0xa0] sm:$0xff] %v276
      %309 = vst [vmem:[%s146 + $0xa8] sm:$0xff] %v277
      %310 = vst [vmem:[%s146 + $0xb0] sm:$0xff] %v278
      %311 = vst [vmem:[%s146 + $0xb8] sm:$0xff] %v279
      %312 = vst [vmem:[%s146 + $0xc0] sm:$0xff] %v280
      %313 = vst [vmem:[%s146 + $0xc8] sm:$0xff] %v281
      %314 = vst [vmem:[%s146 + $0xd0] sm:$0xff] %v282
      %315 = vst [vmem:[%s146 + $0xd8] sm:$0xff] %v283
      %316 = vst [vmem:[%s146 + $0xe0] sm:$0xff] %v284
      %317 = vst [vmem:[%s146 + $0xe8] sm:$0xff] %v285
      %318 = vst [vmem:[%s146 + $0xf0] sm:$0xff] %v286
      %319 = vst [vmem:[%s146 + $0xf8] sm:$0xff] %v287
      %s320 = smul.u32 32, %s14
      %p321 = scmp.lt.s32.totalorder %s320, 63
      %s322 = scalar_select %p321, %s320, 63
      %s323 = smul.addr %s322, 8
      %s324 = scalar_lea.vmem %s2, %s323
      // Predicated region
      $region29: #{bottleneck_forward.9} parent=27 // pred_check
        %p325 = pneg %p79
      $region30: #{bottleneck_forward.9} parent=27 // pred_check_branch
        %327 = sbr.rel (%p325) target = $region32
      $region31: #{bottleneck_forward.9} parent=27 // pred_region
        %s328 = smul.u32 32, %s14
      $region32: #{bottleneck_forward.9} parent=27 // pred_fallthru
        _
    $region28: #{bottleneck_forward.9} parent=5 // pred_fallthru
      _
    %p329 = scmp.le.s32.totalorder 2, %s9
    // Predicated region
    $region33: #{bottleneck_forward.9} parent=5 // pred_check
      %p330 = pneg %p329
    $region34: #{bottleneck_forward.9} parent=5 // pred_check_branch
      %332 = sbr.rel (%p330) target = $region36
    $region35: #{bottleneck_forward.9} parent=5 // pred_region
      %s333 = ssub.s32 %s9, 2
      // Predicated region
      $region37: #{bottleneck_forward.9} parent=35 // pred_check
        %p334 = pneg %p85
      $region38: #{bottleneck_forward.9} parent=35 // pred_check_branch
        %336 = sbr.rel (%p334) target = $region40
      $region39: #{bottleneck_forward.9} parent=35 // pred_region
        %s337 = smul.u32 32, %s15
        %p338 = scmp.lt.s32.totalorder %s337, 63
        %s339 = scalar_select %p338, %s337, 63
        %s340 = smul.addr %s339, 8
        %s341 = scalar_lea.vmem %s2, %s340
      $region40: #{bottleneck_forward.9} parent=35 // pred_fallthru
        _
    $region36: #{bottleneck_forward.9} parent=5 // pred_fallthru
      _
  $region6: #{bottleneck_forward.9} parent=0 // loop_footer
    %s13 = sadd.s32 1, %s9
  $region7: #{bottleneck_forward.9} parent=0 // loop_footer_branch
    %8 = sbr.rel target = $region3
  $region8: #{bottleneck_forward.9} parent=0 // loop_exit
    _

// kernel: bottleneck_forward.7
$region0: #{bottleneck_forward.7}
  #allocation0 [shape = 'u32[]', space=smem, size = 0x4, offset = 0x4, fixed_abs, tag = 'smem constant byte address 0x4 - core index']
  #allocation1 [shape = 'u32[144,128]{1,0:T(1,128)}', space=vmem, size = 0x12000, scoped, tag = 'internal scratch']
  #allocation2 [shape = 'f32[1,1]{1,0:T(1,128)S(6)}', space=smem, size = 0x200, scoped, tag = 'scoped memory for bottleneck_forward.7']
  %s0 = inlined_call_operand.<no memory space> [shape: f32[1,1], index: 0, kind: input, shape index: {}]
  %s1 = inlined_call_operand.vmem [shape: bf16[512,128], index: 1, kind: input, shape index: {}]
  %s2 = inlined_call_operand.vmem [shape: bf16[128,128], index: 2, kind: input, shape index: {}]
  %s3 = inlined_call_operand.vmem [shape: f32[1,128], index: 3, kind: input, shape index: {}]
  %s4 = inlined_call_operand.vmem [shape: f32[512,128], index: 4, kind: output, shape index: {0}]
  %s5 = inlined_call_operand.vmem [shape: f32[1,256], index: 5, kind: output, shape index: {1}]
  %6 = xla_tuple %s4, %s5
  %s7 = sld [smem:[#allocation0]]
  $region57: #{bottleneck_forward.7} parent=0
    _
  %s9 = ssub.s32 1, %s7
  %s10 = scalar_select 0, %s9, %s7
  %11 = sst [smem:[#allocation2]] %s0
  loop: start=0, step=1, limit=4
  $region2: #{bottleneck_forward.7} parent=0 // loop_pre_header
    _
  $region3: #{bottleneck_forward.7} parent=0 // loop_header
    %s13 = sphi 0, %s17
    %p14 = scmp.ge.s32.totalorder %s13, 4
    %s21 = sphi 0, %s21
    %s23 = sphi 0, %s21
    %s24 = sphi 0, %s23
    %s38 = sphi 0, %s24
    %s44 = sphi 0, %s46
    %s47 = sphi 0, %s44
    %s48 = sphi 0, %s47
    %s64 = sphi 0, %s48
    %s68 = sphi 0, %s68
    %s70 = sphi 0, %s68
    %s71 = sphi 0, %s70
    %s85 = sphi 0, %s71
    %s89 = sphi 0, %s89
    %s91 = sphi 0, %s89
    %s92 = sphi 0, %s91
    %s106 = sphi 0, %s92
    %s112 = sphi 0, %s114
    %s115 = sphi 0, %s112
    %s116 = sphi 0, %s115
    %s132 = sphi 0, %s116
    %s138 = sphi 0, %s140
    %s141 = sphi 0, %s138
    %s142 = sphi 0, %s141
    %s158 = sphi 0, %s142
  $region4: #{bottleneck_forward.7} parent=0 // loop_header_branch
    %16 = sbr.rel (%p14) target = $region8
  $region5: #{bottleneck_forward.7} parent=0 // loop_body
    %s18 = ssub.s32 %s13, 1
    %s19 = ssub.s32 %s13, 2
    %s20 = sadd.s32 %s13, 1
    %s22 = sadd.s32 %s21, 1
    %p25 = scmp.eq.s32.totalorder %s13, 1
    %p26 = scmp.ne.s32.totalorder %s21, %s23
    %p27 = scmp.eq.s32.totalorder %s13, 0
    %p28 = por %p26, %p27
    %p29 = scmp.ne.s32.totalorder %s21, %s23
    %p30 = scmp.eq.s32.totalorder %s18, 1
    %p31 = por %p29, %p30
    %p32 = scmp.ne.s32.totalorder %s23, %s24
    %p33 = scmp.eq.s32.totalorder %s18, 0
    %p34 = por %p32, %p33
    %p35 = scmp.ne.s32.totalorder %s23, %s24
    %p36 = scmp.eq.s32.totalorder %s19, 1
    %p37 = por %p35, %p36
    %p39 = scmp.ne.s32.totalorder %s24, %s38
    %p40 = scmp.eq.s32.totalorder %s19, 0
    %p41 = por %p39, %p40
    %s42 = ssub.s32 %s13, %s20
    %p43 = scmp.eq.s32.totalorder %s42, 0
    %s45 = sadd.s32 %s44, 1
    %s46 = scalar_select %p43, %s44, %s45
    %p49 = pneg %p43
    %p50 = scmp.eq.s32.totalorder %s13, 1
    %p51 = por %p49, %p50
    %p52 = scmp.ne.s32.totalorder %s44, %s47
    %p53 = scmp.eq.s32.totalorder %s13, 0
    %p54 = por %p52, %p53
    %p55 = scmp.ne.s32.totalorder %s44, %s47
    %p56 = scmp.eq.s32.totalorder %s18, 1
    %p57 = por %p55, %p56
    %p58 = scmp.ne.s32.totalorder %s47, %s48
    %p59 = scmp.eq.s32.totalorder %s18, 0
    %p60 = por %p58, %p59
    %p61 = scmp.ne.s32.totalorder %s47, %s48
    %p62 = scmp.eq.s32.totalorder %s19, 1
    %p63 = por %p61, %p62
    %p65 = scmp.ne.s32.totalorder %s48, %s64
    %p66 = scmp.eq.s32.totalorder %s19, 0
    %p67 = por %p65, %p66
    %s69 = sadd.s32 %s68, 1
    %p72 = scmp.eq.s32.totalorder %s13, 1
    %p73 = scmp.ne.s32.totalorder %s68, %s70
    %p74 = scmp.eq.s32.totalorder %s13, 0
    %p75 = por %p73, %p74
    %p76 = scmp.ne.s32.totalorder %s68, %s70
    %p77 = scmp.eq.s32.totalorder %s18, 1
    %p78 = por %p76, %p77
    %p79 = scmp.ne.s32.totalorder %s70, %s71
    %p80 = scmp.eq.s32.totalorder %s18, 0
    %p81 = por %p79, %p80
    %p82 = scmp.ne.s32.totalorder %s70, %s71
    %p83 = scmp.eq.s32.totalorder %s19, 1
    %p84 = por %p82, %p83
    %p86 = scmp.ne.s32.totalorder %s71, %s85
    %p87 = scmp.eq.s32.totalorder %s19, 0
    %p88 = por %p86, %p87
    %s90 = sadd.s32 %s89, 1
    %p93 = scmp.eq.s32.totalorder %s13, 1
    %p94 = scmp.ne.s32.totalorder %s89, %s91
    %p95 = scmp.eq.s32.totalorder %s13, 0
    %p96 = por %p94, %p95
    %p97 = scmp.ne.s32.totalorder %s89, %s91
    %p98 = scmp.eq.s32.totalorder %s18, 1
    %p99 = por %p97, %p98
    %p100 = scmp.ne.s32.totalorder %s91, %s92
    %p101 = scmp.eq.s32.totalorder %s18, 0
    %p102 = por %p100, %p101
    %p103 = scmp.ne.s32.totalorder %s91, %s92
    %p104 = scmp.eq.s32.totalorder %s19, 1
    %p105 = por %p103, %p104
    %p107 = scmp.ne.s32.totalorder %s92, %s106
    %p108 = scmp.eq.s32.totalorder %s19, 0
    %p109 = por %p107, %p108
    %s110 = ssub.s32 %s13, %s20
    %p111 = scmp.eq.s32.totalorder %s110, 0
    %s113 = sadd.s32 %s112, 1
    %s114 = scalar_select %p111, %s112, %s113
    %p117 = pneg %p111
    %p118 = scmp.eq.s32.totalorder %s13, 1
    %p119 = por %p117, %p118
    %p120 = scmp.ne.s32.totalorder %s112, %s115
    %p121 = scmp.eq.s32.totalorder %s13, 0
    %p122 = por %p120, %p121
    %p123 = scmp.ne.s32.totalorder %s112, %s115
    %p124 = scmp.eq.s32.totalorder %s18, 1
    %p125 = por %p123, %p124
    %p126 = scmp.ne.s32.totalorder %s115, %s116
    %p127 = scmp.eq.s32.totalorder %s18, 0
    %p128 = por %p126, %p127
    %p129 = scmp.ne.s32.totalorder %s115, %s116
    %p130 = scmp.eq.s32.totalorder %s19, 1
    %p131 = por %p129, %p130
    %p133 = scmp.ne.s32.totalorder %s116, %s132
    %p134 = scmp.eq.s32.totalorder %s19, 0
    %p135 = por %p133, %p134
    %s136 = ssub.s32 %s13, %s20
    %p137 = scmp.eq.s32.totalorder %s136, 0
    %s139 = sadd.s32 %s138, 1
    %s140 = scalar_select %p137, %s138, %s139
    %p143 = pneg %p137
    %p144 = scmp.eq.s32.totalorder %s13, 1
    %p145 = por %p143, %p144
    %p146 = scmp.ne.s32.totalorder %s138, %s141
    %p147 = scmp.eq.s32.totalorder %s13, 0
    %p148 = por %p146, %p147
    %p149 = scmp.ne.s32.totalorder %s138, %s141
    %p150 = scmp.eq.s32.totalorder %s18, 1
    %p151 = por %p149, %p150
    %p152 = scmp.ne.s32.totalorder %s141, %s142
    %p153 = scmp.eq.s32.totalorder %s18, 0
    %p154 = por %p152, %p153
    %p155 = scmp.ne.s32.totalorder %s141, %s142
    %p156 = scmp.eq.s32.totalorder %s19, 1
    %p157 = por %p155, %p156
    %p159 = scmp.ne.s32.totalorder %s142, %s158
    %p160 = scmp.eq.s32.totalorder %s19, 0
    %p161 = por %p159, %p160
    %p162 = scmp.le.s32.totalorder 1, %s13
    %p163 = scmp.lt.s32.totalorder %s13, 3
    %p164 = pnand %p162, %p163
    %p165 = pneg %p164
    // Predicated region
    $region9: #{bottleneck_forward.7} parent=5 // pred_check
      _
    $region10: #{bottleneck_forward.7} parent=5 // pred_check_branch
      %167 = sbr.rel (%p164) target = $region12
    $region11: #{bottleneck_forward.7} parent=5 // pred_region
      %s168 = ssub.s32 %s13, 1
      // Predicated region
      $region13: #{bottleneck_forward.7} parent=11 // pred_check
        %p169 = pneg %p34
      $region14: #{bottleneck_forward.7} parent=11 // pred_check_branch
        %171 = sbr.rel (%p169) target = $region16
      $region15: #{bottleneck_forward.7} parent=11 // pred_region
        _
      $region16: #{bottleneck_forward.7} parent=11 // pred_fallthru
        _
      // Predicated region
      $region17: #{bottleneck_forward.7} parent=11 // pred_check
        %p172 = pneg %p81
      $region18: #{bottleneck_forward.7} parent=11 // pred_check_branch
        %174 = sbr.rel (%p172) target = $region20
      $region19: #{bottleneck_forward.7} parent=11 // pred_region
        _
      $region20: #{bottleneck_forward.7} parent=11 // pred_fallthru
        _
      // Predicated region
      $region21: #{bottleneck_forward.7} parent=11 // pred_check
        %p175 = pneg %p102
      $region22: #{bottleneck_forward.7} parent=11 // pred_check_branch
        %177 = sbr.rel (%p175) target = $region24
      $region23: #{bottleneck_forward.7} parent=11 // pred_region
        _
      $region24: #{bottleneck_forward.7} parent=11 // pred_fallthru
        _
    $region12: #{bottleneck_forward.7} parent=5 // pred_fallthru
      _
    %p178 = scmp.lt.s32.totalorder %s13, 2
    // Predicated region
    $region25: #{bottleneck_forward.7} parent=5 // pred_check
      %p179 = pneg %p178
    $region26: #{bottleneck_forward.7} parent=5 // pred_check_branch
      %181 = sbr.rel (%p179) target = $region28
    $region27: #{bottleneck_forward.7} parent=5 // pred_region
      // Predicated region
      $region29: #{bottleneck_forward.7} parent=27 // pred_check
        %p182 = pneg %p54
      $region30: #{bottleneck_forward.7} parent=27 // pred_check_branch
        %184 = sbr.rel (%p182) target = $region32
      $region31: #{bottleneck_forward.7} parent=27 // pred_region
        %s185 = smul.u32 32, %s13
        %p186 = scmp.lt.s32.totalorder %s185, 63
        %s187 = scalar_select %p186, %s185, 63
        %s188 = smul.addr %s187, 4
        %s189 = scalar_lea.vmem %s1, %s188
        %s190 = smul.u32 32, %s13
      $region32: #{bottleneck_forward.7} parent=27 // pred_fallthru
        _
    $region28: #{bottleneck_forward.7} parent=5 // pred_fallthru
      _
    %p191 = scmp.le.s32.totalorder 1, %s13
    %p192 = scmp.lt.s32.totalorder %s13, 3
    %p193 = pnand %p191, %p192
    %p194 = pneg %p193
    // Predicated region
    $region33: #{bottleneck_forward.7} parent=5 // pred_check
      _
    $region34: #{bottleneck_forward.7} parent=5 // pred_check_branch
      %196 = sbr.rel (%p193) target = $region36
    $region35: #{bottleneck_forward.7} parent=5 // pred_region
      %s197 = ssub.s32 %s13, 1
      %p198 = pneg %p34
      %p199 = pneg %p31
      %s200 = smul.u32 32, %s18
      %p201 = scmp.lt.s32.totalorder %s200, 63
      %s202 = scalar_select %p201, %s200, 63
      %s203 = smul.addr %s202, 4
      %s204 = scalar_lea.vmem %s1, %s203
      %p205 = pneg %p60
      %p206 = pneg %p57
      %p207 = pneg %p81
      %p208 = pneg %p78
      %p209 = pneg %p102
      %p210 = pneg %p99
      %p211 = pneg %p128
      %p212 = pneg %p125
      %s213 = smul.u32 32, %s18
      %p214 = scmp.lt.s32.totalorder %s213, 63
      %s215 = scalar_select %p214, %s213, 63
      %s216 = smul.addr %s215, 8
      %s217 = scalar_lea.vmem %s4, %s216
      %p218 = pneg %p154
      %p219 = pneg %p151
      %p220 = scmp.lt.s32.totalorder %s18, 1
      %s221 = scalar_select %p220, %s18, 1
      %s222 = scalar_lea.vmem %s5, %s221
      %s223 = smul.u32 32, %s18
      %p224 = scmp.lt.s32.totalorder %s223, 63
      %s225 = scalar_select %p224, %s223, 63
      %s226 = smul.addr %s225, 4
      %s227 = scalar_lea.vmem %s1, %s226
      %s228 = smul.u32 32, %s18
      %s229 = smul.u32 32, %s18
      %p230 = scmp.lt.s32.totalorder %s229, 63
      %s231 = scalar_select %p230, %s229, 63
      %s232 = smul.addr %s231, 8
      %s233 = scalar_lea.vmem %s4, %s232
      %s234 = smul.u32 32, %s18
      %p235 = scmp.lt.s32.totalorder %s18, 1
      %s236 = scalar_select %p235, %s18, 1
      %s237 = scalar_lea.vmem %s5, %s236
      %v239 = vld [vmem:[%s227] sm:$0xf]
      %v240 = vld [vmem:[%s227 + $0x4] sm:$0xf]
      %v241 = vld [vmem:[%s227 + $0x8] sm:$0xf]
      %v242 = vld [vmem:[%s227 + $0xc] sm:$0xf]
      %v243 = vld [vmem:[%s227 + $0x10] sm:$0xf]
      %v244 = vld [vmem:[%s227 + $0x14] sm:$0xf]
      %v245 = vld [vmem:[%s227 + $0x18] sm:$0xf]
      %v246 = vld [vmem:[%s227 + $0x1c] sm:$0xf]
      %v247 = vld [vmem:[%s227 + $0x20] sm:$0xf]
      %v248 = vld [vmem:[%s227 + $0x24] sm:$0xf]
      %v249 = vld [vmem:[%s227 + $0x28] sm:$0xf]
      %v250 = vld [vmem:[%s227 + $0x2c] sm:$0xf]
      %v251 = vld [vmem:[%s227 + $0x30] sm:$0xf]
      %v252 = vld [vmem:[%s227 + $0x34] sm:$0xf]
      %v253 = vld [vmem:[%s227 + $0x38] sm:$0xf]
      %v254 = vld [vmem:[%s227 + $0x3c] sm:$0xf]
      %v255 = vld [vmem:[%s227 + $0x40] sm:$0xf]
      %v256 = vld [vmem:[%s227 + $0x44] sm:$0xf]
      %v257 = vld [vmem:[%s227 + $0x48] sm:$0xf]
      %v258 = vld [vmem:[%s227 + $0x4c] sm:$0xf]
      %v259 = vld [vmem:[%s227 + $0x50] sm:$0xf]
      %v260 = vld [vmem:[%s227 + $0x54] sm:$0xf]
      %v261 = vld [vmem:[%s227 + $0x58] sm:$0xf]
      %v262 = vld [vmem:[%s227 + $0x5c] sm:$0xf]
      %v263 = vld [vmem:[%s227 + $0x60] sm:$0xf]
      %v264 = vld [vmem:[%s227 + $0x64] sm:$0xf]
      %v265 = vld [vmem:[%s227 + $0x68] sm:$0xf]
      %v266 = vld [vmem:[%s227 + $0x6c] sm:$0xf]
      %v267 = vld [vmem:[%s227 + $0x70] sm:$0xf]
      %v268 = vld [vmem:[%s227 + $0x74] sm:$0xf]
      %v269 = vld [vmem:[%s227 + $0x78] sm:$0xf]
      %v270 = vld [vmem:[%s227 + $0x7c] sm:$0xf]
      %v271 = vunpack.c.l.bf16 %v239
      %v272 = vunpack.c.l.bf16 %v240
      %v273 = vunpack.c.l.bf16 %v241
      %v274 = vunpack.c.l.bf16 %v242
      %v275 = vunpack.c.l.bf16 %v243
      %v276 = vunpack.c.l.bf16 %v244
      %v277 = vunpack.c.l.bf16 %v245
      %v278 = vunpack.c.l.bf16 %v246
      %v279 = vunpack.c.l.bf16 %v247
      %v280 = vunpack.c.l.bf16 %v248
      %v281 = vunpack.c.l.bf16 %v249
      %v282 = vunpack.c.l.bf16 %v250
      %v283 = vunpack.c.l.bf16 %v251
      %v284 = vunpack.c.l.bf16 %v252
      %v285 = vunpack.c.l.bf16 %v253
      %v286 = vunpack.c.l.bf16 %v254
      %v287 = vunpack.c.l.bf16 %v255
      %v288 = vunpack.c.l.bf16 %v256
      %v289 = vunpack.c.l.bf16 %v257
      %v290 = vunpack.c.l.bf16 %v258
      %v291 = vunpack.c.l.bf16 %v259
      %v292 = vunpack.c.l.bf16 %v260
      %v293 = vunpack.c.l.bf16 %v261
      %v294 = vunpack.c.l.bf16 %v262
      %v295 = vunpack.c.l.bf16 %v263
      %v296 = vunpack.c.l.bf16 %v264
      %v297 = vunpack.c.l.bf16 %v265
      %v298 = vunpack.c.l.bf16 %v266
      %v299 = vunpack.c.l.bf16 %v267
      %v300 = vunpack.c.l.bf16 %v268
      %v301 = vunpack.c.l.bf16 %v269
      %v302 = vunpack.c.l.bf16 %v270
      %s303 = sld [smem:[#allocation2]]
      %p304 = scmp.gt.f32.partialorder %s303, 0.0
      %s305 = scalar_select %p304, %s303, 1.0
      %v306 = vstv %s305
      %v307 = vrcp.pop %v306
      %s308 = vtos %v307
      %s309 = smul.f32 32767.0, %s308
      %v310 = vrcp.pop 32767.0
      %s311 = vtos %v310
      %s312 = smul.f32 %s305, %s311
      %v313 = vstv %s309
      %v314 = vmul.f32 %v271, %v313
      %v315 = vmul.f32 %v272, %v313
      %v316 = vmul.f32 %v273, %v313
      %v317 = vmul.f32 %v274, %v313
      %v318 = vmul.f32 %v275, %v313
      %v319 = vmul.f32 %v276, %v313
      %v320 = vmul.f32 %v277, %v313
      %v321 = vmul.f32 %v278, %v313
      %v322 = vmul.f32 %v279, %v313
      %v323 = vmul.f32 %v280, %v313
      %v324 = vmul.f32 %v281, %v313
      %v325 = vmul.f32 %v282, %v313
      %v326 = vmul.f32 %v283, %v313
      %v327 = vmul.f32 %v284, %v313
      %v328 = vmul.f32 %v285, %v313
      %v329 = vmul.f32 %v286, %v313
      %v330 = vmul.f32 %v287, %v313
      %v331 = vmul.f32 %v288, %v313
      %v332 = vmul.f32 %v289, %v313
      %v333 = vmul.f32 %v290, %v313
      %v334 = vmul.f32 %v291, %v313
      %v335 = vmul.f32 %v292, %v313
      %v336 = vmul.f32 %v293, %v313
      %v337 = vmul.f32 %v294, %v313
      %v338 = vmul.f32 %v295, %v313
      %v339 = vmul.f32 %v296, %v313
      %v340 = vmul.f32 %v297, %v313
      %v341 = vmul.f32 %v298, %v313
      %v342 = vmul.f32 %v299, %v313
      %v343 = vmul.f32 %v300, %v313
      %v344 = vmul.f32 %v301, %v313
      %v345 = vmul.f32 %v302, %v313
      %v346 = vround.ne.pseudo %v314
      %v347 = vround.ne.pseudo %v315
      %v348 = vround.ne.pseudo %v316
      %v349 = vround.ne.pseudo %v317
      %v350 = vround.ne.pseudo %v318
      %v351 = vround.ne.pseudo %v319
      %v352 = vround.ne.pseudo %v320
      %v353 = vround.ne.pseudo %v321
      %v354 = vround.ne.pseudo %v322
      %v355 = vround.ne.pseudo %v323
      %v356 = vround.ne.pseudo %v324
      %v357 = vround.ne.pseudo %v325
      %v358 = vround.ne.pseudo %v326
      %v359 = vround.ne.pseudo %v327
      %v360 = vround.ne.pseudo %v328
      %v361 = vround.ne.pseudo %v329
      %v362 = vround.ne.pseudo %v330
      %v363 = vround.ne.pseudo %v331
      %v364 = vround.ne.pseudo %v332
      %v365 = vround.ne.pseudo %v333
      %v366 = vround.ne.pseudo %v334
      %v367 = vround.ne.pseudo %v335
      %v368 = vround.ne.pseudo %v336
      %v369 = vround.ne.pseudo %v337
      %v370 = vround.ne.pseudo %v338
      %v371 = vround.ne.pseudo %v339
      %v372 = vround.ne.pseudo %v340
      %v373 = vround.ne.pseudo %v341
      %v374 = vround.ne.pseudo %v342
      %v375 = vround.ne.pseudo %v343
      %v376 = vround.ne.pseudo %v344
      %v377 = vround.ne.pseudo %v345
      %v378 = vstv %s312
      %v379 = vmul.f32 %v346, %v378
      %v380 = vmul.f32 %v347, %v378
      %v381 = vmul.f32 %v348, %v378
      %v382 = vmul.f32 %v349, %v378
      %v383 = vmul.f32 %v350, %v378
      %v384 = vmul.f32 %v351, %v378
      %v385 = vmul.f32 %v352, %v378
      %v386 = vmul.f32 %v353, %v378
      %v387 = vmul.f32 %v354, %v378
      %v388 = vmul.f32 %v355, %v378
      %v389 = vmul.f32 %v356, %v378
      %v390 = vmul.f32 %v357, %v378
      %v391 = vmul.f32 %v358, %v378
      %v392 = vmul.f32 %v359, %v378
      %v393 = vmul.f32 %v360, %v378
      %v394 = vmul.f32 %v361, %v378
      %v395 = vmul.f32 %v362, %v378
      %v396 = vmul.f32 %v363, %v378
      %v397 = vmul.f32 %v364, %v378
      %v398 = vmul.f32 %v365, %v378
      %v399 = vmul.f32 %v366, %v378
      %v400 = vmul.f32 %v367, %v378
      %v401 = vmul.f32 %v368, %v378
      %v402 = vmul.f32 %v369, %v378
      %v403 = vmul.f32 %v370, %v378
      %v404 = vmul.f32 %v371, %v378
      %v405 = vmul.f32 %v372, %v378
      %v406 = vmul.f32 %v373, %v378
      %v407 = vmul.f32 %v374, %v378
      %v408 = vmul.f32 %v375, %v378
      %v409 = vmul.f32 %v376, %v378
      %v410 = vmul.f32 %v377, %v378
      %v411 = vpack.c.bf16 %v380, %v379
      %v412 = vpack.c.bf16 %v382, %v381
      %v413 = vpack.c.bf16 %v384, %v383
      %v414 = vpack.c.bf16 %v386, %v385
      %v415 = vpack.c.bf16 %v388, %v387
      %v416 = vpack.c.bf16 %v390, %v389
      %v417 = vpack.c.bf16 %v392, %v391
      %v418 = vpack.c.bf16 %v394, %v393
      %v419 = vpack.c.bf16 %v396, %v395
      %v420 = vpack.c.bf16 %v398, %v397
      %v421 = vpack.c.bf16 %v400, %v399
      %v422 = vpack.c.bf16 %v402, %v401
      %v423 = vpack.c.bf16 %v404, %v403
      %v424 = vpack.c.bf16 %v406, %v405
      %v425 = vpack.c.bf16 %v408, %v407
      %v426 = vpack.c.bf16 %v410, %v409
      %v427 = vld [vmem:[%s2] sm:$0xf]
      %v428 = vld [vmem:[%s2 + $0x4] sm:$0xf]
      %v429 = vld [vmem:[%s2 + $0x8] sm:$0xf]
      %v430 = vld [vmem:[%s2 + $0xc] sm:$0xf]
      %v431 = vld [vmem:[%s2 + $0x10] sm:$0xf]
      %v432 = vld [vmem:[%s2 + $0x14] sm:$0xf]
      %v433 = vld [vmem:[%s2 + $0x18] sm:$0xf]
      %v434 = vld [vmem:[%s2 + $0x1c] sm:$0xf]
      %v435 = vld [vmem:[%s2 + $0x20] sm:$0xf]
      %v436 = vld [vmem:[%s2 + $0x24] sm:$0xf]
      %v437 = vld [vmem:[%s2 + $0x28] sm:$0xf]
      %v438 = vld [vmem:[%s2 + $0x2c] sm:$0xf]
      %v439 = vld [vmem:[%s2 + $0x30] sm:$0xf]
      %v440 = vld [vmem:[%s2 + $0x34] sm:$0xf]
      %v441 = vld [vmem:[%s2 + $0x38] sm:$0xf]
      %v442 = vld [vmem:[%s2 + $0x3c] sm:$0xf]
      %v443 = vld [vmem:[%s3] sm:$0x1]
      %v445 = vlaneseq
      %v446 = vshrl.u32 %v445, 7
      %v447 = vsub.s32 0, %v446
      %v448 = vrot.slane %v443, %v447
      %v466 = vunpack.c.l.b16 %v427
      %v467 = vunpack.c.l.b16 %v428
      %v468 = vunpack.c.l.b16 %v429
      %v469 = vunpack.c.l.b16 %v430
      %v470 = vunpack.c.l.b16 %v431
      %v471 = vunpack.c.l.b16 %v432
      %v472 = vunpack.c.l.b16 %v433
      %v473 = vunpack.c.l.b16 %v434
      %v474 = vunpack.c.l.b16 %v435
      %v475 = vunpack.c.l.b16 %v436
      %v476 = vunpack.c.l.b16 %v437
      %v477 = vunpack.c.l.b16 %v438
      %v478 = vunpack.c.l.b16 %v439
      %v479 = vunpack.c.l.b16 %v440
      %v480 = vunpack.c.l.b16 %v441
      %v481 = vunpack.c.l.b16 %v442
      %v482 = vpack.c.b16 %v467, %v466
      %v483 = vpack.c.b16 %v469, %v468
      %v484 = vpack.c.b16 %v471, %v470
      %v485 = vpack.c.b16 %v473, %v472
      %v486 = vpack.c.b16 %v475, %v474
      %v487 = vpack.c.b16 %v477, %v476
      %v488 = vpack.c.b16 %v479, %v478
      %v489 = vpack.c.b16 %v481, %v480
      %498 = vmatprep.subr.bf16.mxu0 0
      %499 = vmatpush1.bf16.msra.mxu0 %v482
      %500 = vmatprep.subr.bf16.mxu0 0
      %501 = vmatpush1.bf16.msra.mxu0 %v483
      %502 = vmatprep.subr.bf16.mxu0 0
      %503 = vmatpush1.bf16.msra.mxu0 %v484
      %504 = vmatprep.subr.bf16.mxu0 0
      %505 = vmatpush1.bf16.msra.mxu0 %v485
      %506 = vmatprep.subr.bf16.mxu0 0
      %507 = vmatpush1.bf16.msra.mxu0 %v486
      %508 = vmatprep.subr.bf16.mxu0 0
      %509 = vmatpush1.bf16.msra.mxu0 %v487
      %510 = vmatprep.subr.bf16.mxu0 0
      %511 = vmatpush1.bf16.msra.mxu0 %v488
      %512 = vmatprep.subr.bf16.mxu0 0
      %513 = vmatpush1.bf16.msra.mxu0 %v489
      %514 = vmatprep.subr.bf16.mxu0 0
      %515 = vmatpush1.bf16.msra.mxu0 0
      %516 = vmatprep.subr.bf16.mxu0 0
      %517 = vmatpush1.bf16.msra.mxu0 0
      %518 = vmatprep.subr.bf16.mxu0 0
      %519 = vmatpush1.bf16.msra.mxu0 0
      %520 = vmatprep.subr.bf16.mxu0 0
      %521 = vmatpush1.bf16.msra.mxu0 0
      %522 = vmatprep.subr.bf16.mxu0 0
      %523 = vmatpush1.bf16.msra.mxu0 0
      %524 = vmatprep.subr.bf16.mxu0 0
      %525 = vmatpush1.bf16.msra.mxu0 0
      %526 = vmatprep.subr.bf16.mxu0 0
      %527 = vmatpush1.bf16.msra.mxu0 0
      %528 = vmatprep.subr.bf16.mxu0 0
      %529 = vmatpush1.bf16.msra.mxu0 0
      %530 = vmatprep.mubr.bf16.mxu0 0
      %531 = vmatmul.mubr.bf16.gmra.mrb[0].mxu0 %v411
      %v532 = vpop.f32.mrb[0].mxu0
      %v533 = vadd.f32 %v448, %v532
      %v534 = vpop.f32.mrb[0].mxu0
      %v535 = vpop.f32.mrb[0].mxu0
      %v536 = vadd.f32 %v448, %v535
      %v537 = vpop.f32.mrb[0].mxu0
      %538 = vmatprep.mubr.bf16.mxu0 0
      %539 = vmatmul.mubr.bf16.gmra.mrb[0].mxu0 %v412
      %v540 = vpop.f32.mrb[0].mxu0
      %v541 = vadd.f32 %v448, %v540
      %v542 = vpop.f32.mrb[0].mxu0
      %v543 = vpop.f32.mrb[0].mxu0
      %v544 = vadd.f32 %v448, %v543
      %v545 = vpop.f32.mrb[0].mxu0
      %546 = vmatprep.mubr.bf16.mxu0 0
      %547 = vmatmul.mubr.bf16.gmra.mrb[0].mxu0 %v413
      %v548 = vpop.f32.mrb[0].mxu0
      %v549 = vadd.f32 %v448, %v548
      %v550 = vpop.f32.mrb[0].mxu0
      %v551 = vpop.f32.mrb[0].mxu0
      %v552 = vadd.f32 %v448, %v551
      %v553 = vpop.f32.mrb[0].mxu0
      %554 = vmatprep.mubr.bf16.mxu0 0
      %555 = vmatmul.mubr.bf16.gmra.mrb[0].mxu0 %v414
      %v556 = vpop.f32.mrb[0].mxu0
      %v557 = vadd.f32 %v448, %v556
      %v558 = vpop.f32.mrb[0].mxu0
      %v559 = vpop.f32.mrb[0].mxu0
      %v560 = vadd.f32 %v448, %v559
      %v561 = vpop.f32.mrb[0].mxu0
      %562 = vmatprep.mubr.bf16.mxu0 0
      %563 = vmatmul.mubr.bf16.gmra.mrb[0].mxu0 %v415
      %v564 = vpop.f32.mrb[0].mxu0
      %v565 = vadd.f32 %v448, %v564
      %v566 = vpop.f32.mrb[0].mxu0
      %v567 = vpop.f32.mrb[0].mxu0
      %v568 = vadd.f32 %v448, %v567
      %v569 = vpop.f32.mrb[0].mxu0
      %570 = vmatprep.mubr.bf16.mxu0 0
      %571 = vmatmul.mubr.bf16.gmra.mrb[0].mxu0 %v416
      %v572 = vpop.f32.mrb[0].mxu0
      %v573 = vadd.f32 %v448, %v572
      %v574 = vpop.f32.mrb[0].mxu0
      %v575 = vpop.f32.mrb[0].mxu0
      %v576 = vadd.f32 %v448, %v575
      %v577 = vpop.f32.mrb[0].mxu0
      %578 = vmatprep.mubr.bf16.mxu0 0
      %579 = vmatmul.mubr.bf16.gmra.mrb[0].mxu0 %v417
      %v580 = vpop.f32.mrb[0].mxu0
      %v581 = vadd.f32 %v448, %v580
      %v582 = vpop.f32.mrb[0].mxu0
      %v583 = vpop.f32.mrb[0].mxu0
      %v584 = vadd.f32 %v448, %v583
      %v585 = vpop.f32.mrb[0].mxu0
      %586 = vmatprep.mubr.bf16.mxu0 0
      %587 = vmatmul.mubr.bf16.gmra.mrb[0].mxu0 %v418
      %v588 = vpop.f32.mrb[0].mxu0
      %v589 = vadd.f32 %v448, %v588
      %v590 = vpop.f32.mrb[0].mxu0
      %v591 = vpop.f32.mrb[0].mxu0
      %v592 = vadd.f32 %v448, %v591
      %v593 = vpop.f32.mrb[0].mxu0
      %594 = vmatprep.mubr.bf16.mxu0 0
      %595 = vmatmul.mubr.bf16.gmra.mrb[0].mxu0 %v419
      %v596 = vpop.f32.mrb[0].mxu0
      %v597 = vadd.f32 %v448, %v596
      %v598 = vpop.f32.mrb[0].mxu0
      %v599 = vpop.f32.mrb[0].mxu0
      %v600 = vadd.f32 %v448, %v599
      %v601 = vpop.f32.mrb[0].mxu0
      %602 = vmatprep.mubr.bf16.mxu0 0
      %603 = vmatmul.mubr.bf16.gmra.mrb[0].mxu0 %v420
      %v604 = vpop.f32.mrb[0].mxu0
      %v605 = vadd.f32 %v448, %v604
      %v606 = vpop.f32.mrb[0].mxu0
      %v607 = vpop.f32.mrb[0].mxu0
      %v608 = vadd.f32 %v448, %v607
      %v609 = vpop.f32.mrb[0].mxu0
      %610 = vmatprep.mubr.bf16.mxu0 0
      %611 = vmatmul.mubr.bf16.gmra.mrb[0].mxu0 %v421
      %v612 = vpop.f32.mrb[0].mxu0
      %v613 = vadd.f32 %v448, %v612
      %v614 = vpop.f32.mrb[0].mxu0
      %v615 = vpop.f32.mrb[0].mxu0
      %v616 = vadd.f32 %v448, %v615
      %v617 = vpop.f32.mrb[0].mxu0
      %618 = vmatprep.mubr.bf16.mxu0 0
      %619 = vmatmul.mubr.bf16.gmra.mrb[0].mxu0 %v422
      %v620 = vpop.f32.mrb[0].mxu0
      %v621 = vadd.f32 %v448, %v620
      %v622 = vpop.f32.mrb[0].mxu0
      %v623 = vpop.f32.mrb[0].mxu0
      %v624 = vadd.f32 %v448, %v623
      %v625 = vpop.f32.mrb[0].mxu0
      %626 = vmatprep.mubr.bf16.mxu0 0
      %627 = vmatmul.mubr.bf16.gmra.mrb[0].mxu0 %v423
      %v628 = vpop.f32.mrb[0].mxu0
      %v629 = vadd.f32 %v448, %v628
      %v630 = vpop.f32.mrb[0].mxu0
      %v631 = vpop.f32.mrb[0].mxu0
      %v632 = vadd.f32 %v448, %v631
      %v633 = vpop.f32.mrb[0].mxu0
      %634 = vmatprep.mubr.bf16.mxu0 0
      %635 = vmatmul.mubr.bf16.gmra.mrb[0].mxu0 %v424
      %v636 = vpop.f32.mrb[0].mxu0
      %v637 = vadd.f32 %v448, %v636
      %v638 = vpop.f32.mrb[0].mxu0
      %v639 = vpop.f32.mrb[0].mxu0
      %v640 = vadd.f32 %v448, %v639
      %v641 = vpop.f32.mrb[0].mxu0
      %642 = vmatprep.mubr.bf16.mxu0 0
      %643 = vmatmul.mubr.bf16.gmra.mrb[0].mxu0 %v425
      %v644 = vpop.f32.mrb[0].mxu0
      %v645 = vadd.f32 %v448, %v644
      %v646 = vpop.f32.mrb[0].mxu0
      %v647 = vpop.f32.mrb[0].mxu0
      %v648 = vadd.f32 %v448, %v647
      %v649 = vpop.f32.mrb[0].mxu0
      %650 = vmatprep.mubr.bf16.mxu0 0
      %651 = vmatmul.mubr.bf16.gmra.mrb[0].mxu0 %v426
      %v652 = vpop.f32.mrb[0].mxu0
      %v653 = vadd.f32 %v448, %v652
      %v654 = vpop.f32.mrb[0].mxu0
      %v655 = vpop.f32.mrb[0].mxu0
      %v656 = vadd.f32 %v448, %v655
      %v657 = vpop.f32.mrb[0].mxu0
      %658 = vdwg.mxu0
      %659 = vst [vmem:[%s233] sm:$0xff] %v533
      %660 = vst [vmem:[%s233 + $0x8] sm:$0xff] %v536
      %661 = vst [vmem:[%s233 + $0x10] sm:$0xff] %v541
      %662 = vst [vmem:[%s233 + $0x18] sm:$0xff] %v544
      %663 = vst [vmem:[%s233 + $0x20] sm:$0xff] %v549
      %664 = vst [vmem:[%s233 + $0x28] sm:$0xff] %v552
      %665 = vst [vmem:[%s233 + $0x30] sm:$0xff] %v557
      %666 = vst [vmem:[%s233 + $0x38] sm:$0xff] %v560
      %667 = vst [vmem:[%s233 + $0x40] sm:$0xff] %v565
      %668 = vst [vmem:[%s233 + $0x48] sm:$0xff] %v568
      %669 = vst [vmem:[%s233 + $0x50] sm:$0xff] %v573
      %670 = vst [vmem:[%s233 + $0x58] sm:$0xff] %v576
      %671 = vst [vmem:[%s233 + $0x60] sm:$0xff] %v581
      %672 = vst [vmem:[%s233 + $0x68] sm:$0xff] %v584
      %673 = vst [vmem:[%s233 + $0x70] sm:$0xff] %v589
      %674 = vst [vmem:[%s233 + $0x78] sm:$0xff] %v592
      %675 = vst [vmem:[%s233 + $0x80] sm:$0xff] %v597
      %676 = vst [vmem:[%s233 + $0x88] sm:$0xff] %v600
      %677 = vst [vmem:[%s233 + $0x90] sm:$0xff] %v605
      %678 = vst [vmem:[%s233 + $0x98] sm:$0xff] %v608
      %679 = vst [vmem:[%s233 + $0xa0] sm:$0xff] %v613
      %680 = vst [vmem:[%s233 + $0xa8] sm:$0xff] %v616
      %681 = vst [vmem:[%s233 + $0xb0] sm:$0xff] %v621
      %682 = vst [vmem:[%s233 + $0xb8] sm:$0xff] %v624
      %683 = vst [vmem:[%s233 + $0xc0] sm:$0xff] %v629
      %684 = vst [vmem:[%s233 + $0xc8] sm:$0xff] %v632
      %685 = vst [vmem:[%s233 + $0xd0] sm:$0xff] %v637
      %686 = vst [vmem:[%s233 + $0xd8] sm:$0xff] %v640
      %687 = vst [vmem:[%s233 + $0xe0] sm:$0xff] %v645
      %688 = vst [vmem:[%s233 + $0xe8] sm:$0xff] %v648
      %689 = vst [vmem:[%s233 + $0xf0] sm:$0xff] %v653
      %690 = vst [vmem:[%s233 + $0xf8] sm:$0xff] %v656
      %v691 = vand.u32 2147483647, %v533
      %v692 = vand.u32 2147483647, %v536
      %v693 = vand.u32 2147483647, %v541
      %v694 = vand.u32 2147483647, %v544
      %v695 = vand.u32 2147483647, %v549
      %v696 = vand.u32 2147483647, %v552
      %v697 = vand.u32 2147483647, %v557
      %v698 = vand.u32 2147483647, %v560
      %v699 = vand.u32 2147483647, %v565
      %v700 = vand.u32 2147483647, %v568
      %v701 = vand.u32 2147483647, %v573
      %v702 = vand.u32 2147483647, %v576
      %v703 = vand.u32 2147483647, %v581
      %v704 = vand.u32 2147483647, %v584
      %v705 = vand.u32 2147483647, %v589
      %v706 = vand.u32 2147483647, %v592
      %v707 = vand.u32 2147483647, %v597
      %v708 = vand.u32 2147483647, %v600
      %v709 = vand.u32 2147483647, %v605
      %v710 = vand.u32 2147483647, %v608
      %v711 = vand.u32 2147483647, %v613
      %v712 = vand.u32 2147483647, %v616
      %v713 = vand.u32 2147483647, %v621
      %v714 = vand.u32 2147483647, %v624
      %v715 = vand.u32 2147483647, %v629
      %v716 = vand.u32 2147483647, %v632
      %v717 = vand.u32 2147483647, %v637
      %v718 = vand.u32 2147483647, %v640
      %v719 = vand.u32 2147483647, %v645
      %v720 = vand.u32 2147483647, %v648
      %v721 = vand.u32 2147483647, %v653
      %v722 = vand.u32 2147483647, %v656
      %v723 = vmax.f32 %v691, %v695
      %v724 = vmax.f32 %v692, %v696
      %v725 = vmax.f32 %v693, %v697
      %v726 = vmax.f32 %v694, %v698
      %v727 = vmax.f32 %v723, %v699
      %v728 = vmax.f32 %v724, %v700
      %v729 = vmax.f32 %v725, %v701
      %v730 = vmax.f32 %v726, %v702
      %v731 = vmax.f32 %v727, %v703
      %v732 = vmax.f32 %v728, %v704
      %v733 = vmax.f32 %v729, %v705
      %v734 = vmax.f32 %v730, %v706
      %v735 = vmax.f32 %v731, %v707
      %v736 = vmax.f32 %v732, %v708
      %v737 = vmax.f32 %v733, %v709
      %v738 = vmax.f32 %v734, %v710
      %v739 = vmax.f32 %v735, %v711
      %v740 = vmax.f32 %v736, %v712
      %v741 = vmax.f32 %v737, %v713
      %v742 = vmax.f32 %v738, %v714
      %v743 = vmax.f32 %v739, %v715
      %v744 = vmax.f32 %v740, %v716
      %v745 = vmax.f32 %v741, %v717
      %v746 = vmax.f32 %v742, %v718
      %v747 = vmax.f32 %v743, %v719
      %v748 = vmax.f32 %v744, %v720
      %v749 = vmax.f32 %v745, %v721
      %v750 = vmax.f32 %v746, %v722
      %v751 = vmax.f32 %v747, %v748
      %v752 = vmax.f32 %v749, %v750
      %v753 = vmax.f32 %v751, %v752
      %v754 = vrot.slane %v753, 4
      %v755 = vmax.f32 %v753, %v754
      %v756 = vrot.slane %v755, 2
      %v757 = vmax.f32 %v755, %v756
      %v758 = vrot.slane %v757, 1
      %v759 = vmax.f32 %v757, %v758
      %760 = vst [vmem:[%s237] sm:$0x1] %v759
      %s761 = smul.u32 32, %s18
      %p762 = scmp.lt.s32.totalorder %s761, 63
      %s763 = scalar_select %p762, %s761, 63
      %s764 = smul.addr %s763, 8
      %s765 = scalar_lea.vmem %s4, %s764
      %p766 = scmp.lt.s32.totalorder %s18, 1
      %s767 = scalar_select %p766, %s18, 1
      %s768 = scalar_lea.vmem %s5, %s767
      // Predicated region
      $region37: #{bottleneck_forward.7} parent=35 // pred_check
        %p769 = pneg %p125
      $region38: #{bottleneck_forward.7} parent=35 // pred_check_branch
        %771 = sbr.rel (%p769) target = $region40
      $region39: #{bottleneck_forward.7} parent=35 // pred_region
        %s772 = smul.u32 32, %s18
      $region40: #{bottleneck_forward.7} parent=35 // pred_fallthru
        _
      // Predicated region
      $region41: #{bottleneck_forward.7} parent=35 // pred_check
        %p773 = pneg %p151
      $region42: #{bottleneck_forward.7} parent=35 // pred_check_branch
        %775 = sbr.rel (%p773) target = $region44
      $region43: #{bottleneck_forward.7} parent=35 // pred_region
        _
      $region44: #{bottleneck_forward.7} parent=35 // pred_fallthru
        _
    $region36: #{bottleneck_forward.7} parent=5 // pred_fallthru
      _
    %p776 = scmp.le.s32.totalorder 2, %s13
    // Predicated region
    $region45: #{bottleneck_forward.7} parent=5 // pred_check
      %p777 = pneg %p776
    $region46: #{bottleneck_forward.7} parent=5 // pred_check_branch
      %779 = sbr.rel (%p777) target = $region48
    $region47: #{bottleneck_forward.7} parent=5 // pred_region
      %s780 = ssub.s32 %s13, 2
      // Predicated region
      $region49: #{bottleneck_forward.7} parent=47 // pred_check
        %p781 = pneg %p131
      $region50: #{bottleneck_forward.7} parent=47 // pred_check_branch
        %783 = sbr.rel (%p781) target = $region52
      $region51: #{bottleneck_forward.7} parent=47 // pred_region
        %s784 = smul.u32 32, %s19
        %p785 = scmp.lt.s32.totalorder %s784, 63
        %s786 = scalar_select %p785, %s784, 63
        %s787 = smul.addr %s786, 8
        %s788 = scalar_lea.vmem %s4, %s787
      $region52: #{bottleneck_forward.7} parent=47 // pred_fallthru
        _
      // Predicated region
      $region53: #{bottleneck_forward.7} parent=47 // pred_check
        %p789 = pneg %p157
      $region54: #{bottleneck_forward.7} parent=47 // pred_check_branch
        %791 = sbr.rel (%p789) target = $region56
      $region55: #{bottleneck_forward.7} parent=47 // pred_region
        %p792 = scmp.lt.s32.totalorder %s19, 1
        %s793 = scalar_select %p792, %s19, 1
        %s794 = scalar_lea.vmem %s5, %s793
      $region56: #{bottleneck_forward.7} parent=47 // pred_fallthru
        _
    $region48: #{bottleneck_forward.7} parent=5 // pred_fallthru
      _
  $region6: #{bottleneck_forward.7} parent=0 // loop_footer
    %s17 = sadd.s32 1, %s13
  $region7: #{bottleneck_forward.7} parent=0 // loop_footer_branch
    %12 = sbr.rel target = $region3
  $region8: #{bottleneck_forward.7} parent=0 // loop_exit
    _

// kernel: bottleneck_forward.8
$region0: #{bottleneck_forward.8}
  #allocation0 [shape = 'u32[]', space=smem, size = 0x4, offset = 0x4, fixed_abs, tag = 'smem constant byte address 0x4 - core index']
  #allocation1 [shape = 'u32[144,128]{1,0:T(1,128)}', space=vmem, size = 0x12000, scoped, tag = 'internal scratch']
  #allocation2 [shape = 'f32[1,1]{1,0:T(1,128)S(6)}', space=smem, size = 0x200, scoped, tag = 'scoped memory for bottleneck_forward.8']
  %s0 = inlined_call_operand.<no memory space> [shape: f32[1,1], index: 0, kind: input, shape index: {}]
  %s1 = inlined_call_operand.vmem [shape: f32[512,128], index: 1, kind: input, shape index: {}]
  %s2 = inlined_call_operand.vmem [shape: f32[512,128], index: 2, kind: input, shape index: {}]
  %s3 = inlined_call_operand.vmem [shape: f32[512,128], index: 3, kind: output, shape index: {0}]
  %s4 = inlined_call_operand.vmem [shape: f32[1,256], index: 4, kind: output, shape index: {1}]
  %5 = xla_tuple %s3, %s4
  %s6 = sld [smem:[#allocation0]]
  $region53: #{bottleneck_forward.8} parent=0
    _
  %s8 = ssub.s32 1, %s6
  %s9 = scalar_select 0, %s8, %s6
  %10 = sst [smem:[#allocation2]] %s0
  loop: start=0, step=1, limit=4
  $region2: #{bottleneck_forward.8} parent=0 // loop_pre_header
    _
  $region3: #{bottleneck_forward.8} parent=0 // loop_header
    %s12 = sphi 0, %s16
    %p13 = scmp.ge.s32.totalorder %s12, 4
    %s20 = sphi 0, %s20
    %s22 = sphi 0, %s20
    %s23 = sphi 0, %s22
    %s37 = sphi 0, %s23
    %s43 = sphi 0, %s45
    %s46 = sphi 0, %s43
    %s47 = sphi 0, %s46
    %s63 = sphi 0, %s47
    %s69 = sphi 0, %s71
    %s72 = sphi 0, %s69
    %s73 = sphi 0, %s72
    %s89 = sphi 0, %s73
    %s95 = sphi 0, %s97
    %s98 = sphi 0, %s95
    %s99 = sphi 0, %s98
    %s115 = sphi 0, %s99
    %s121 = sphi 0, %s123
    %s124 = sphi 0, %s121
    %s125 = sphi 0, %s124
    %s141 = sphi 0, %s125
  $region4: #{bottleneck_forward.8} parent=0 // loop_header_branch
    %15 = sbr.rel (%p13) target = $region8
  $region5: #{bottleneck_forward.8} parent=0 // loop_body
    %s17 = ssub.s32 %s12, 1
    %s18 = ssub.s32 %s12, 2
    %s19 = sadd.s32 %s12, 1
    %s21 = sadd.s32 %s20, 1
    %p24 = scmp.eq.s32.totalorder %s12, 1
    %p25 = scmp.ne.s32.totalorder %s20, %s22
    %p26 = scmp.eq.s32.totalorder %s12, 0
    %p27 = por %p25, %p26
    %p28 = scmp.ne.s32.totalorder %s20, %s22
    %p29 = scmp.eq.s32.totalorder %s17, 1
    %p30 = por %p28, %p29
    %p31 = scmp.ne.s32.totalorder %s22, %s23
    %p32 = scmp.eq.s32.totalorder %s17, 0
    %p33 = por %p31, %p32
    %p34 = scmp.ne.s32.totalorder %s22, %s23
    %p35 = scmp.eq.s32.totalorder %s18, 1
    %p36 = por %p34, %p35
    %p38 = scmp.ne.s32.totalorder %s23, %s37
    %p39 = scmp.eq.s32.totalorder %s18, 0
    %p40 = por %p38, %p39
    %s41 = ssub.s32 %s12, %s19
    %p42 = scmp.eq.s32.totalorder %s41, 0
    %s44 = sadd.s32 %s43, 1
    %s45 = scalar_select %p42, %s43, %s44
    %p48 = pneg %p42
    %p49 = scmp.eq.s32.totalorder %s12, 1
    %p50 = por %p48, %p49
    %p51 = scmp.ne.s32.totalorder %s43, %s46
    %p52 = scmp.eq.s32.totalorder %s12, 0
    %p53 = por %p51, %p52
    %p54 = scmp.ne.s32.totalorder %s43, %s46
    %p55 = scmp.eq.s32.totalorder %s17, 1
    %p56 = por %p54, %p55
    %p57 = scmp.ne.s32.totalorder %s46, %s47
    %p58 = scmp.eq.s32.totalorder %s17, 0
    %p59 = por %p57, %p58
    %p60 = scmp.ne.s32.totalorder %s46, %s47
    %p61 = scmp.eq.s32.totalorder %s18, 1
    %p62 = por %p60, %p61
    %p64 = scmp.ne.s32.totalorder %s47, %s63
    %p65 = scmp.eq.s32.totalorder %s18, 0
    %p66 = por %p64, %p65
    %s67 = ssub.s32 %s12, %s19
    %p68 = scmp.eq.s32.totalorder %s67, 0
    %s70 = sadd.s32 %s69, 1
    %s71 = scalar_select %p68, %s69, %s70
    %p74 = pneg %p68
    %p75 = scmp.eq.s32.totalorder %s12, 1
    %p76 = por %p74, %p75
    %p77 = scmp.ne.s32.totalorder %s69, %s72
    %p78 = scmp.eq.s32.totalorder %s12, 0
    %p79 = por %p77, %p78
    %p80 = scmp.ne.s32.totalorder %s69, %s72
    %p81 = scmp.eq.s32.totalorder %s17, 1
    %p82 = por %p80, %p81
    %p83 = scmp.ne.s32.totalorder %s72, %s73
    %p84 = scmp.eq.s32.totalorder %s17, 0
    %p85 = por %p83, %p84
    %p86 = scmp.ne.s32.totalorder %s72, %s73
    %p87 = scmp.eq.s32.totalorder %s18, 1
    %p88 = por %p86, %p87
    %p90 = scmp.ne.s32.totalorder %s73, %s89
    %p91 = scmp.eq.s32.totalorder %s18, 0
    %p92 = por %p90, %p91
    %s93 = ssub.s32 %s12, %s19
    %p94 = scmp.eq.s32.totalorder %s93, 0
    %s96 = sadd.s32 %s95, 1
    %s97 = scalar_select %p94, %s95, %s96
    %p100 = pneg %p94
    %p101 = scmp.eq.s32.totalorder %s12, 1
    %p102 = por %p100, %p101
    %p103 = scmp.ne.s32.totalorder %s95, %s98
    %p104 = scmp.eq.s32.totalorder %s12, 0
    %p105 = por %p103, %p104
    %p106 = scmp.ne.s32.totalorder %s95, %s98
    %p107 = scmp.eq.s32.totalorder %s17, 1
    %p108 = por %p106, %p107
    %p109 = scmp.ne.s32.totalorder %s98, %s99
    %p110 = scmp.eq.s32.totalorder %s17, 0
    %p111 = por %p109, %p110
    %p112 = scmp.ne.s32.totalorder %s98, %s99
    %p113 = scmp.eq.s32.totalorder %s18, 1
    %p114 = por %p112, %p113
    %p116 = scmp.ne.s32.totalorder %s99, %s115
    %p117 = scmp.eq.s32.totalorder %s18, 0
    %p118 = por %p116, %p117
    %s119 = ssub.s32 %s12, %s19
    %p120 = scmp.eq.s32.totalorder %s119, 0
    %s122 = sadd.s32 %s121, 1
    %s123 = scalar_select %p120, %s121, %s122
    %p126 = pneg %p120
    %p127 = scmp.eq.s32.totalorder %s12, 1
    %p128 = por %p126, %p127
    %p129 = scmp.ne.s32.totalorder %s121, %s124
    %p130 = scmp.eq.s32.totalorder %s12, 0
    %p131 = por %p129, %p130
    %p132 = scmp.ne.s32.totalorder %s121, %s124
    %p133 = scmp.eq.s32.totalorder %s17, 1
    %p134 = por %p132, %p133
    %p135 = scmp.ne.s32.totalorder %s124, %s125
    %p136 = scmp.eq.s32.totalorder %s17, 0
    %p137 = por %p135, %p136
    %p138 = scmp.ne.s32.totalorder %s124, %s125
    %p139 = scmp.eq.s32.totalorder %s18, 1
    %p140 = por %p138, %p139
    %p142 = scmp.ne.s32.totalorder %s125, %s141
    %p143 = scmp.eq.s32.totalorder %s18, 0
    %p144 = por %p142, %p143
    %p145 = scmp.le.s32.totalorder 1, %s12
    %p146 = scmp.lt.s32.totalorder %s12, 3
    %p147 = pnand %p145, %p146
    %p148 = pneg %p147
    // Predicated region
    $region9: #{bottleneck_forward.8} parent=5 // pred_check
      _
    $region10: #{bottleneck_forward.8} parent=5 // pred_check_branch
      %150 = sbr.rel (%p147) target = $region12
    $region11: #{bottleneck_forward.8} parent=5 // pred_region
      %s151 = ssub.s32 %s12, 1
      // Predicated region
      $region13: #{bottleneck_forward.8} parent=11 // pred_check
        %p152 = pneg %p33
      $region14: #{bottleneck_forward.8} parent=11 // pred_check_branch
        %154 = sbr.rel (%p152) target = $region16
      $region15: #{bottleneck_forward.8} parent=11 // pred_region
        _
      $region16: #{bottleneck_forward.8} parent=11 // pred_fallthru
        _
    $region12: #{bottleneck_forward.8} parent=5 // pred_fallthru
      _
    %p155 = scmp.lt.s32.totalorder %s12, 2
    // Predicated region
    $region17: #{bottleneck_forward.8} parent=5 // pred_check
      %p156 = pneg %p155
    $region18: #{bottleneck_forward.8} parent=5 // pred_check_branch
      %158 = sbr.rel (%p156) target = $region20
    $region19: #{bottleneck_forward.8} parent=5 // pred_region
      // Predicated region
      $region21: #{bottleneck_forward.8} parent=19 // pred_check
        %p159 = pneg %p53
      $region22: #{bottleneck_forward.8} parent=19 // pred_check_branch
        %161 = sbr.rel (%p159) target = $region24
      $region23: #{bottleneck_forward.8} parent=19 // pred_region
        %s162 = smul.u32 32, %s12
        %p163 = scmp.lt.s32.totalorder %s162, 63
        %s164 = scalar_select %p163, %s162, 63
        %s165 = smul.addr %s164, 8
        %s166 = scalar_lea.vmem %s1, %s165
        %s167 = smul.u32 32, %s12
      $region24: #{bottleneck_forward.8} parent=19 // pred_fallthru
        _
      // Predicated region
      $region25: #{bottleneck_forward.8} parent=19 // pred_check
        %p168 = pneg %p79
      $region26: #{bottleneck_forward.8} parent=19 // pred_check_branch
        %170 = sbr.rel (%p168) target = $region28
      $region27: #{bottleneck_forward.8} parent=19 // pred_region
        %s171 = smul.u32 32, %s12
        %p172 = scmp.lt.s32.totalorder %s171, 63
        %s173 = scalar_select %p172, %s171, 63
        %s174 = smul.addr %s173, 8
        %s175 = scalar_lea.vmem %s2, %s174
        %s176 = smul.u32 32, %s12
      $region28: #{bottleneck_forward.8} parent=19 // pred_fallthru
        _
    $region20: #{bottleneck_forward.8} parent=5 // pred_fallthru
      _
    %p177 = scmp.le.s32.totalorder 1, %s12
    %p178 = scmp.lt.s32.totalorder %s12, 3
    %p179 = pnand %p177, %p178
    %p180 = pneg %p179
    // Predicated region
    $region29: #{bottleneck_forward.8} parent=5 // pred_check
      _
    $region30: #{bottleneck_forward.8} parent=5 // pred_check_branch
      %182 = sbr.rel (%p179) target = $region32
    $region31: #{bottleneck_forward.8} parent=5 // pred_region
      %s183 = ssub.s32 %s12, 1
      %p184 = pneg %p33
      %p185 = pneg %p30
      %s186 = smul.u32 32, %s17
      %p187 = scmp.lt.s32.totalorder %s186, 63
      %s188 = scalar_select %p187, %s186, 63
      %s189 = smul.addr %s188, 8
      %s190 = scalar_lea.vmem %s1, %s189
      %p191 = pneg %p59
      %p192 = pneg %p56
      %s193 = smul.u32 32, %s17
      %p194 = scmp.lt.s32.totalorder %s193, 63
      %s195 = scalar_select %p194, %s193, 63
      %s196 = smul.addr %s195, 8
      %s197 = scalar_lea.vmem %s2, %s196
      %p198 = pneg %p85
      %p199 = pneg %p82
      %p200 = pneg %p111
      %p201 = pneg %p108
      %s202 = smul.u32 32, %s17
      %p203 = scmp.lt.s32.totalorder %s202, 63
      %s204 = scalar_select %p203, %s202, 63
      %s205 = smul.addr %s204, 8
      %s206 = scalar_lea.vmem %s3, %s205
      %p207 = pneg %p137
      %p208 = pneg %p134
      %p209 = scmp.lt.s32.totalorder %s17, 1
      %s210 = scalar_select %p209, %s17, 1
      %s211 = scalar_lea.vmem %s4, %s210
      %s212 = smul.u32 32, %s17
      %p213 = scmp.lt.s32.totalorder %s212, 63
      %s214 = scalar_select %p213, %s212, 63
      %s215 = smul.addr %s214, 8
      %s216 = scalar_lea.vmem %s1, %s215
      %s217 = smul.u32 32, %s17
      %s218 = smul.u32 32, %s17
      %p219 = scmp.lt.s32.totalorder %s218, 63
      %s220 = scalar_select %p219, %s218, 63
      %s221 = smul.addr %s220, 8
      %s222 = scalar_lea.vmem %s2, %s221
      %s223 = smul.u32 32, %s17
      %s224 = smul.u32 32, %s17
      %p225 = scmp.lt.s32.totalorder %s224, 63
      %s226 = scalar_select %p225, %s224, 63
      %s227 = smul.addr %s226, 8
      %s228 = scalar_lea.vmem %s3, %s227
      %s229 = smul.u32 32, %s17
      %p230 = scmp.lt.s32.totalorder %s17, 1
      %s231 = scalar_select %p230, %s17, 1
      %s232 = scalar_lea.vmem %s4, %s231
      %s233 = sld [smem:[#allocation2]]
      %p234 = scmp.gt.f32.partialorder %s233, 0.0
      %s235 = scalar_select %p234, %s233, 1.0
      %v236 = vstv %s235
      %v237 = vrcp.pop %v236
      %s238 = vtos %v237
      %s239 = smul.f32 32767.0, %s238
      %v240 = vrcp.pop 32767.0
      %s241 = vtos %v240
      %s242 = smul.f32 %s235, %s241
      %v243 = vld [vmem:[%s216] sm:$0xff]
      %v244 = vld [vmem:[%s216 + $0x8] sm:$0xff]
      %v245 = vld [vmem:[%s216 + $0x10] sm:$0xff]
      %v246 = vld [vmem:[%s216 + $0x18] sm:$0xff]
      %v247 = vld [vmem:[%s216 + $0x20] sm:$0xff]
      %v248 = vld [vmem:[%s216 + $0x28] sm:$0xff]
      %v249 = vld [vmem:[%s216 + $0x30] sm:$0xff]
      %v250 = vld [vmem:[%s216 + $0x38] sm:$0xff]
      %v251 = vld [vmem:[%s216 + $0x40] sm:$0xff]
      %v252 = vld [vmem:[%s216 + $0x48] sm:$0xff]
      %v253 = vld [vmem:[%s216 + $0x50] sm:$0xff]
      %v254 = vld [vmem:[%s216 + $0x58] sm:$0xff]
      %v255 = vld [vmem:[%s216 + $0x60] sm:$0xff]
      %v256 = vld [vmem:[%s216 + $0x68] sm:$0xff]
      %v257 = vld [vmem:[%s216 + $0x70] sm:$0xff]
      %v258 = vld [vmem:[%s216 + $0x78] sm:$0xff]
      %v259 = vld [vmem:[%s216 + $0x80] sm:$0xff]
      %v260 = vld [vmem:[%s216 + $0x88] sm:$0xff]
      %v261 = vld [vmem:[%s216 + $0x90] sm:$0xff]
      %v262 = vld [vmem:[%s216 + $0x98] sm:$0xff]
      %v263 = vld [vmem:[%s216 + $0xa0] sm:$0xff]
      %v264 = vld [vmem:[%s216 + $0xa8] sm:$0xff]
      %v265 = vld [vmem:[%s216 + $0xb0] sm:$0xff]
      %v266 = vld [vmem:[%s216 + $0xb8] sm:$0xff]
      %v267 = vld [vmem:[%s216 + $0xc0] sm:$0xff]
      %v268 = vld [vmem:[%s216 + $0xc8] sm:$0xff]
      %v269 = vld [vmem:[%s216 + $0xd0] sm:$0xff]
      %v270 = vld [vmem:[%s216 + $0xd8] sm:$0xff]
      %v271 = vld [vmem:[%s216 + $0xe0] sm:$0xff]
      %v272 = vld [vmem:[%s216 + $0xe8] sm:$0xff]
      %v273 = vld [vmem:[%s216 + $0xf0] sm:$0xff]
      %v274 = vld [vmem:[%s216 + $0xf8] sm:$0xff]
      %v275 = vstv %s239
      %v276 = vmul.f32 %v243, %v275
      %v277 = vmul.f32 %v244, %v275
      %v278 = vmul.f32 %v245, %v275
      %v279 = vmul.f32 %v246, %v275
      %v280 = vmul.f32 %v247, %v275
      %v281 = vmul.f32 %v248, %v275
      %v282 = vmul.f32 %v249, %v275
      %v283 = vmul.f32 %v250, %v275
      %v284 = vmul.f32 %v251, %v275
      %v285 = vmul.f32 %v252, %v275
      %v286 = vmul.f32 %v253, %v275
      %v287 = vmul.f32 %v254, %v275
      %v288 = vmul.f32 %v255, %v275
      %v289 = vmul.f32 %v256, %v275
      %v290 = vmul.f32 %v257, %v275
      %v291 = vmul.f32 %v258, %v275
      %v292 = vmul.f32 %v259, %v275
      %v293 = vmul.f32 %v260, %v275
      %v294 = vmul.f32 %v261, %v275
      %v295 = vmul.f32 %v262, %v275
      %v296 = vmul.f32 %v263, %v275
      %v297 = vmul.f32 %v264, %v275
      %v298 = vmul.f32 %v265, %v275
      %v299 = vmul.f32 %v266, %v275
      %v300 = vmul.f32 %v267, %v275
      %v301 = vmul.f32 %v268, %v275
      %v302 = vmul.f32 %v269, %v275
      %v303 = vmul.f32 %v270, %v275
      %v304 = vmul.f32 %v271, %v275
      %v305 = vmul.f32 %v272, %v275
      %v306 = vmul.f32 %v273, %v275
      %v307 = vmul.f32 %v274, %v275
      %v308 = vround.ne.pseudo %v276
      %v309 = vround.ne.pseudo %v277
      %v310 = vround.ne.pseudo %v278
      %v311 = vround.ne.pseudo %v279
      %v312 = vround.ne.pseudo %v280
      %v313 = vround.ne.pseudo %v281
      %v314 = vround.ne.pseudo %v282
      %v315 = vround.ne.pseudo %v283
      %v316 = vround.ne.pseudo %v284
      %v317 = vround.ne.pseudo %v285
      %v318 = vround.ne.pseudo %v286
      %v319 = vround.ne.pseudo %v287
      %v320 = vround.ne.pseudo %v288
      %v321 = vround.ne.pseudo %v289
      %v322 = vround.ne.pseudo %v290
      %v323 = vround.ne.pseudo %v291
      %v324 = vround.ne.pseudo %v292
      %v325 = vround.ne.pseudo %v293
      %v326 = vround.ne.pseudo %v294
      %v327 = vround.ne.pseudo %v295
      %v328 = vround.ne.pseudo %v296
      %v329 = vround.ne.pseudo %v297
      %v330 = vround.ne.pseudo %v298
      %v331 = vround.ne.pseudo %v299
      %v332 = vround.ne.pseudo %v300
      %v333 = vround.ne.pseudo %v301
      %v334 = vround.ne.pseudo %v302
      %v335 = vround.ne.pseudo %v303
      %v336 = vround.ne.pseudo %v304
      %v337 = vround.ne.pseudo %v305
      %v338 = vround.ne.pseudo %v306
      %v339 = vround.ne.pseudo %v307
      %v340 = vstv %s242
      %v341 = vmul.f32 %v308, %v340
      %v342 = vmul.f32 %v309, %v340
      %v343 = vmul.f32 %v310, %v340
      %v344 = vmul.f32 %v311, %v340
      %v345 = vmul.f32 %v312, %v340
      %v346 = vmul.f32 %v313, %v340
      %v347 = vmul.f32 %v314, %v340
      %v348 = vmul.f32 %v315, %v340
      %v349 = vmul.f32 %v316, %v340
      %v350 = vmul.f32 %v317, %v340
      %v351 = vmul.f32 %v318, %v340
      %v352 = vmul.f32 %v319, %v340
      %v353 = vmul.f32 %v320, %v340
      %v354 = vmul.f32 %v321, %v340
      %v355 = vmul.f32 %v322, %v340
      %v356 = vmul.f32 %v323, %v340
      %v357 = vmul.f32 %v324, %v340
      %v358 = vmul.f32 %v325, %v340
      %v359 = vmul.f32 %v326, %v340
      %v360 = vmul.f32 %v327, %v340
      %v361 = vmul.f32 %v328, %v340
      %v362 = vmul.f32 %v329, %v340
      %v363 = vmul.f32 %v330, %v340
      %v364 = vmul.f32 %v331, %v340
      %v365 = vmul.f32 %v332, %v340
      %v366 = vmul.f32 %v333, %v340
      %v367 = vmul.f32 %v334, %v340
      %v368 = vmul.f32 %v335, %v340
      %v369 = vmul.f32 %v336, %v340
      %v370 = vmul.f32 %v337, %v340
      %v371 = vmul.f32 %v338, %v340
      %v372 = vmul.f32 %v339, %v340
      %v373 = vld [vmem:[%s222] sm:$0xff]
      %v374 = vld [vmem:[%s222 + $0x8] sm:$0xff]
      %v375 = vld [vmem:[%s222 + $0x10] sm:$0xff]
      %v376 = vld [vmem:[%s222 + $0x18] sm:$0xff]
      %v377 = vld [vmem:[%s222 + $0x20] sm:$0xff]
      %v378 = vld [vmem:[%s222 + $0x28] sm:$0xff]
      %v379 = vld [vmem:[%s222 + $0x30] sm:$0xff]
      %v380 = vld [vmem:[%s222 + $0x38] sm:$0xff]
      %v381 = vld [vmem:[%s222 + $0x40] sm:$0xff]
      %v382 = vld [vmem:[%s222 + $0x48] sm:$0xff]
      %v383 = vld [vmem:[%s222 + $0x50] sm:$0xff]
      %v384 = vld [vmem:[%s222 + $0x58] sm:$0xff]
      %v385 = vld [vmem:[%s222 + $0x60] sm:$0xff]
      %v386 = vld [vmem:[%s222 + $0x68] sm:$0xff]
      %v387 = vld [vmem:[%s222 + $0x70] sm:$0xff]
      %v388 = vld [vmem:[%s222 + $0x78] sm:$0xff]
      %v389 = vld [vmem:[%s222 + $0x80] sm:$0xff]
      %v390 = vld [vmem:[%s222 + $0x88] sm:$0xff]
      %v391 = vld [vmem:[%s222 + $0x90] sm:$0xff]
      %v392 = vld [vmem:[%s222 + $0x98] sm:$0xff]
      %v393 = vld [vmem:[%s222 + $0xa0] sm:$0xff]
      %v394 = vld [vmem:[%s222 + $0xa8] sm:$0xff]
      %v395 = vld [vmem:[%s222 + $0xb0] sm:$0xff]
      %v396 = vld [vmem:[%s222 + $0xb8] sm:$0xff]
      %v397 = vld [vmem:[%s222 + $0xc0] sm:$0xff]
      %v398 = vld [vmem:[%s222 + $0xc8] sm:$0xff]
      %v399 = vld [vmem:[%s222 + $0xd0] sm:$0xff]
      %v400 = vld [vmem:[%s222 + $0xd8] sm:$0xff]
      %v401 = vld [vmem:[%s222 + $0xe0] sm:$0xff]
      %v402 = vld [vmem:[%s222 + $0xe8] sm:$0xff]
      %v403 = vld [vmem:[%s222 + $0xf0] sm:$0xff]
      %v404 = vld [vmem:[%s222 + $0xf8] sm:$0xff]
      %v405 = vadd.f32 %v341, %v373
      %v406 = vadd.f32 %v342, %v374
      %v407 = vadd.f32 %v343, %v375
      %v408 = vadd.f32 %v344, %v376
      %v409 = vadd.f32 %v345, %v377
      %v410 = vadd.f32 %v346, %v378
      %v411 = vadd.f32 %v347, %v379
      %v412 = vadd.f32 %v348, %v380
      %v413 = vadd.f32 %v349, %v381
      %v414 = vadd.f32 %v350, %v382
      %v415 = vadd.f32 %v351, %v383
      %v416 = vadd.f32 %v352, %v384
      %v417 = vadd.f32 %v353, %v385
      %v418 = vadd.f32 %v354, %v386
      %v419 = vadd.f32 %v355, %v387
      %v420 = vadd.f32 %v356, %v388
      %v421 = vadd.f32 %v357, %v389
      %v422 = vadd.f32 %v358, %v390
      %v423 = vadd.f32 %v359, %v391
      %v424 = vadd.f32 %v360, %v392
      %v425 = vadd.f32 %v361, %v393
      %v426 = vadd.f32 %v362, %v394
      %v427 = vadd.f32 %v363, %v395
      %v428 = vadd.f32 %v364, %v396
      %v429 = vadd.f32 %v365, %v397
      %v430 = vadd.f32 %v366, %v398
      %v431 = vadd.f32 %v367, %v399
      %v432 = vadd.f32 %v368, %v400
      %v433 = vadd.f32 %v369, %v401
      %v434 = vadd.f32 %v370, %v402
      %v435 = vadd.f32 %v371, %v403
      %v436 = vadd.f32 %v372, %v404
      %v437 = vmax.f32 %v405, 0.0
      %v438 = vmax.f32 %v406, 0.0
      %v439 = vmax.f32 %v407, 0.0
      %v440 = vmax.f32 %v408, 0.0
      %v441 = vmax.f32 %v409, 0.0
      %v442 = vmax.f32 %v410, 0.0
      %v443 = vmax.f32 %v411, 0.0
      %v444 = vmax.f32 %v412, 0.0
      %v445 = vmax.f32 %v413, 0.0
      %v446 = vmax.f32 %v414, 0.0
      %v447 = vmax.f32 %v415, 0.0
      %v448 = vmax.f32 %v416, 0.0
      %v449 = vmax.f32 %v417, 0.0
      %v450 = vmax.f32 %v418, 0.0
      %v451 = vmax.f32 %v419, 0.0
      %v452 = vmax.f32 %v420, 0.0
      %v453 = vmax.f32 %v421, 0.0
      %v454 = vmax.f32 %v422, 0.0
      %v455 = vmax.f32 %v423, 0.0
      %v456 = vmax.f32 %v424, 0.0
      %v457 = vmax.f32 %v425, 0.0
      %v458 = vmax.f32 %v426, 0.0
      %v459 = vmax.f32 %v427, 0.0
      %v460 = vmax.f32 %v428, 0.0
      %v461 = vmax.f32 %v429, 0.0
      %v462 = vmax.f32 %v430, 0.0
      %v463 = vmax.f32 %v431, 0.0
      %v464 = vmax.f32 %v432, 0.0
      %v465 = vmax.f32 %v433, 0.0
      %v466 = vmax.f32 %v434, 0.0
      %v467 = vmax.f32 %v435, 0.0
      %v468 = vmax.f32 %v436, 0.0
      %469 = vst [vmem:[%s228] sm:$0xff] %v437
      %470 = vst [vmem:[%s228 + $0x8] sm:$0xff] %v438
      %471 = vst [vmem:[%s228 + $0x10] sm:$0xff] %v439
      %472 = vst [vmem:[%s228 + $0x18] sm:$0xff] %v440
      %473 = vst [vmem:[%s228 + $0x20] sm:$0xff] %v441
      %474 = vst [vmem:[%s228 + $0x28] sm:$0xff] %v442
      %475 = vst [vmem:[%s228 + $0x30] sm:$0xff] %v443
      %476 = vst [vmem:[%s228 + $0x38] sm:$0xff] %v444
      %477 = vst [vmem:[%s228 + $0x40] sm:$0xff] %v445
      %478 = vst [vmem:[%s228 + $0x48] sm:$0xff] %v446
      %479 = vst [vmem:[%s228 + $0x50] sm:$0xff] %v447
      %480 = vst [vmem:[%s228 + $0x58] sm:$0xff] %v448
      %481 = vst [vmem:[%s228 + $0x60] sm:$0xff] %v449
      %482 = vst [vmem:[%s228 + $0x68] sm:$0xff] %v450
      %483 = vst [vmem:[%s228 + $0x70] sm:$0xff] %v451
      %484 = vst [vmem:[%s228 + $0x78] sm:$0xff] %v452
      %485 = vst [vmem:[%s228 + $0x80] sm:$0xff] %v453
      %486 = vst [vmem:[%s228 + $0x88] sm:$0xff] %v454
      %487 = vst [vmem:[%s228 + $0x90] sm:$0xff] %v455
      %488 = vst [vmem:[%s228 + $0x98] sm:$0xff] %v456
      %489 = vst [vmem:[%s228 + $0xa0] sm:$0xff] %v457
      %490 = vst [vmem:[%s228 + $0xa8] sm:$0xff] %v458
      %491 = vst [vmem:[%s228 + $0xb0] sm:$0xff] %v459
      %492 = vst [vmem:[%s228 + $0xb8] sm:$0xff] %v460
      %493 = vst [vmem:[%s228 + $0xc0] sm:$0xff] %v461
      %494 = vst [vmem:[%s228 + $0xc8] sm:$0xff] %v462
      %495 = vst [vmem:[%s228 + $0xd0] sm:$0xff] %v463
      %496 = vst [vmem:[%s228 + $0xd8] sm:$0xff] %v464
      %497 = vst [vmem:[%s228 + $0xe0] sm:$0xff] %v465
      %498 = vst [vmem:[%s228 + $0xe8] sm:$0xff] %v466
      %499 = vst [vmem:[%s228 + $0xf0] sm:$0xff] %v467
      %500 = vst [vmem:[%s228 + $0xf8] sm:$0xff] %v468
      %v501 = vmax.f32 %v437, %v441
      %v502 = vmax.f32 %v438, %v442
      %v503 = vmax.f32 %v439, %v443
      %v504 = vmax.f32 %v440, %v444
      %v505 = vmax.f32 %v501, %v445
      %v506 = vmax.f32 %v502, %v446
      %v507 = vmax.f32 %v503, %v447
      %v508 = vmax.f32 %v504, %v448
      %v509 = vmax.f32 %v505, %v449
      %v510 = vmax.f32 %v506, %v450
      %v511 = vmax.f32 %v507, %v451
      %v512 = vmax.f32 %v508, %v452
      %v513 = vmax.f32 %v509, %v453
      %v514 = vmax.f32 %v510, %v454
      %v515 = vmax.f32 %v511, %v455
      %v516 = vmax.f32 %v512, %v456
      %v517 = vmax.f32 %v513, %v457
      %v518 = vmax.f32 %v514, %v458
      %v519 = vmax.f32 %v515, %v459
      %v520 = vmax.f32 %v516, %v460
      %v521 = vmax.f32 %v517, %v461
      %v522 = vmax.f32 %v518, %v462
      %v523 = vmax.f32 %v519, %v463
      %v524 = vmax.f32 %v520, %v464
      %v525 = vmax.f32 %v521, %v465
      %v526 = vmax.f32 %v522, %v466
      %v527 = vmax.f32 %v523, %v467
      %v528 = vmax.f32 %v524, %v468
      %v529 = vmax.f32 %v525, %v526
      %v530 = vmax.f32 %v527, %v528
      %v531 = vmax.f32 %v529, %v530
      %v532 = vrot.slane %v531, 4
      %v533 = vmax.f32 %v531, %v532
      %v534 = vrot.slane %v533, 2
      %v535 = vmax.f32 %v533, %v534
      %v536 = vrot.slane %v535, 1
      %v537 = vmax.f32 %v535, %v536
      %538 = vst [vmem:[%s232] sm:$0x1] %v537
      %s539 = smul.u32 32, %s17
      %p540 = scmp.lt.s32.totalorder %s539, 63
      %s541 = scalar_select %p540, %s539, 63
      %s542 = smul.addr %s541, 8
      %s543 = scalar_lea.vmem %s3, %s542
      %p544 = scmp.lt.s32.totalorder %s17, 1
      %s545 = scalar_select %p544, %s17, 1
      %s546 = scalar_lea.vmem %s4, %s545
      // Predicated region
      $region33: #{bottleneck_forward.8} parent=31 // pred_check
        %p547 = pneg %p108
      $region34: #{bottleneck_forward.8} parent=31 // pred_check_branch
        %549 = sbr.rel (%p547) target = $region36
      $region35: #{bottleneck_forward.8} parent=31 // pred_region
        %s550 = smul.u32 32, %s17
      $region36: #{bottleneck_forward.8} parent=31 // pred_fallthru
        _
      // Predicated region
      $region37: #{bottleneck_forward.8} parent=31 // pred_check
        %p551 = pneg %p134
      $region38: #{bottleneck_forward.8} parent=31 // pred_check_branch
        %553 = sbr.rel (%p551) target = $region40
      $region39: #{bottleneck_forward.8} parent=31 // pred_region
        _
      $region40: #{bottleneck_forward.8} parent=31 // pred_fallthru
        _
    $region32: #{bottleneck_forward.8} parent=5 // pred_fallthru
      _
    %p554 = scmp.le.s32.totalorder 2, %s12
    // Predicated region
    $region41: #{bottleneck_forward.8} parent=5 // pred_check
      %p555 = pneg %p554
    $region42: #{bottleneck_forward.8} parent=5 // pred_check_branch
      %557 = sbr.rel (%p555) target = $region44
    $region43: #{bottleneck_forward.8} parent=5 // pred_region
      %s558 = ssub.s32 %s12, 2
      // Predicated region
      $region45: #{bottleneck_forward.8} parent=43 // pred_check
        %p559 = pneg %p114
      $region46: #{bottleneck_forward.8} parent=43 // pred_check_branch
        %561 = sbr.rel (%p559) target = $region48
      $region47: #{bottleneck_forward.8} parent=43 // pred_region
        %s562 = smul.u32 32, %s18
        %p563 = scmp.lt.s32.totalorder %s562, 63
        %s564 = scalar_select %p563, %s562, 63
        %s565 = smul.addr %s564, 8
        %s566 = scalar_lea.vmem %s3, %s565
      $region48: #{bottleneck_forward.8} parent=43 // pred_fallthru
        _
      // Predicated region
      $region49: #{bottleneck_forward.8} parent=43 // pred_check
        %p567 = pneg %p140
      $region50: #{bottleneck_forward.8} parent=43 // pred_check_branch
        %569 = sbr.rel (%p567) target = $region52
      $region51: #{bottleneck_forward.8} parent=43 // pred_region
        %p570 = scmp.lt.s32.totalorder %s18, 1
        %s571 = scalar_select %p570, %s18, 1
        %s572 = scalar_lea.vmem %s4, %s571
      $region52: #{bottleneck_forward.8} parent=43 // pred_fallthru
        _
    $region44: #{bottleneck_forward.8} parent=5 // pred_fallthru
      _
  $region6: #{bottleneck_forward.8} parent=0 // loop_footer
    %s16 = sadd.s32 1, %s12
  $region7: #{bottleneck_forward.8} parent=0 // loop_footer_branch
    %11 = sbr.rel target = $region3
  $region8: #{bottleneck_forward.8} parent=0 // loop_exit
    _

// kernel: bottleneck_forward.6
$region0: #{bottleneck_forward.6}
  #allocation0 [shape = 'u32[]', space=smem, size = 0x4, offset = 0x4, fixed_abs, tag = 'smem constant byte address 0x4 - core index']
  #allocation1 [shape = 'u32[144,128]{1,0:T(1,128)}', space=vmem, size = 0x12000, scoped, tag = 'internal scratch']
  #allocation2 [shape = 'f32[18,24,384]{2,1,0:T(8,128)}', space=vmem, size = 0xa2000, scoped, tag = 'scratch operand']
  #allocation3 [shape = 'f32[1,1]{1,0:T(1,128)S(6)}', space=smem, size = 0x200, scoped, tag = 'scoped memory for bottleneck_forward.6']
  %s0 = inlined_call_operand.<no memory space> [shape: f32[1,1], index: 0, kind: input, shape index: {}]
  %s1 = inlined_call_operand.vmem [shape: bf16[2,16,16,128], index: 1, kind: input, shape index: {}]
  %s2 = inlined_call_operand.vmem [shape: bf16[3,384,128], index: 2, kind: input, shape index: {}]
  %s3 = inlined_call_operand.vmem [shape: f32[1,128], index: 3, kind: input, shape index: {}]
  %s4 = inlined_call_operand.vmem [shape: bf16[2,16,16,128], index: 4, kind: output, shape index: {0}]
  %s5 = inlined_call_operand.vmem [shape: f32[1,256], index: 5, kind: output, shape index: {1}]
  %6 = xla_tuple %s4, %s5
  %s7 = sld [smem:[#allocation0]]
  $region57: #{bottleneck_forward.6} parent=0
    _
  %s9 = ssub.s32 1, %s7
  %s10 = scalar_select 0, %s9, %s7
  %11 = sst [smem:[#allocation3]] %s0
  loop: start=0, step=1, limit=4
  $region2: #{bottleneck_forward.6} parent=0 // loop_pre_header
    _
  $region3: #{bottleneck_forward.6} parent=0 // loop_header
    %s13 = sphi 0, %s17
    %p14 = scmp.ge.s32.totalorder %s13, 4
    %s21 = sphi 0, %s21
    %s23 = sphi 0, %s21
    %s24 = sphi 0, %s23
    %s38 = sphi 0, %s24
    %s44 = sphi 0, %s46
    %s47 = sphi 0, %s44
    %s48 = sphi 0, %s47
    %s64 = sphi 0, %s48
    %s68 = sphi 0, %s68
    %s70 = sphi 0, %s68
    %s71 = sphi 0, %s70
    %s85 = sphi 0, %s71
    %s89 = sphi 0, %s89
    %s91 = sphi 0, %s89
    %s92 = sphi 0, %s91
    %s106 = sphi 0, %s92
    %s112 = sphi 0, %s114
    %s115 = sphi 0, %s112
    %s116 = sphi 0, %s115
    %s132 = sphi 0, %s116
    %s138 = sphi 0, %s140
    %s141 = sphi 0, %s138
    %s142 = sphi 0, %s141
    %s158 = sphi 0, %s142
  $region4: #{bottleneck_forward.6} parent=0 // loop_header_branch
    %16 = sbr.rel (%p14) target = $region8
  $region5: #{bottleneck_forward.6} parent=0 // loop_body
    %s18 = ssub.s32 %s13, 1
    %s19 = ssub.s32 %s13, 2
    %s20 = sadd.s32 %s13, 1
    %s22 = sadd.s32 %s21, 1
    %p25 = scmp.eq.s32.totalorder %s13, 1
    %p26 = scmp.ne.s32.totalorder %s21, %s23
    %p27 = scmp.eq.s32.totalorder %s13, 0
    %p28 = por %p26, %p27
    %p29 = scmp.ne.s32.totalorder %s21, %s23
    %p30 = scmp.eq.s32.totalorder %s18, 1
    %p31 = por %p29, %p30
    %p32 = scmp.ne.s32.totalorder %s23, %s24
    %p33 = scmp.eq.s32.totalorder %s18, 0
    %p34 = por %p32, %p33
    %p35 = scmp.ne.s32.totalorder %s23, %s24
    %p36 = scmp.eq.s32.totalorder %s19, 1
    %p37 = por %p35, %p36
    %p39 = scmp.ne.s32.totalorder %s24, %s38
    %p40 = scmp.eq.s32.totalorder %s19, 0
    %p41 = por %p39, %p40
    %s42 = ssub.s32 %s13, %s20
    %p43 = scmp.eq.s32.totalorder %s42, 0
    %s45 = sadd.s32 %s44, 1
    %s46 = scalar_select %p43, %s44, %s45
    %p49 = pneg %p43
    %p50 = scmp.eq.s32.totalorder %s13, 1
    %p51 = por %p49, %p50
    %p52 = scmp.ne.s32.totalorder %s44, %s47
    %p53 = scmp.eq.s32.totalorder %s13, 0
    %p54 = por %p52, %p53
    %p55 = scmp.ne.s32.totalorder %s44, %s47
    %p56 = scmp.eq.s32.totalorder %s18, 1
    %p57 = por %p55, %p56
    %p58 = scmp.ne.s32.totalorder %s47, %s48
    %p59 = scmp.eq.s32.totalorder %s18, 0
    %p60 = por %p58, %p59
    %p61 = scmp.ne.s32.totalorder %s47, %s48
    %p62 = scmp.eq.s32.totalorder %s19, 1
    %p63 = por %p61, %p62
    %p65 = scmp.ne.s32.totalorder %s48, %s64
    %p66 = scmp.eq.s32.totalorder %s19, 0
    %p67 = por %p65, %p66
    %s69 = sadd.s32 %s68, 1
    %p72 = scmp.eq.s32.totalorder %s13, 1
    %p73 = scmp.ne.s32.totalorder %s68, %s70
    %p74 = scmp.eq.s32.totalorder %s13, 0
    %p75 = por %p73, %p74
    %p76 = scmp.ne.s32.totalorder %s68, %s70
    %p77 = scmp.eq.s32.totalorder %s18, 1
    %p78 = por %p76, %p77
    %p79 = scmp.ne.s32.totalorder %s70, %s71
    %p80 = scmp.eq.s32.totalorder %s18, 0
    %p81 = por %p79, %p80
    %p82 = scmp.ne.s32.totalorder %s70, %s71
    %p83 = scmp.eq.s32.totalorder %s19, 1
    %p84 = por %p82, %p83
    %p86 = scmp.ne.s32.totalorder %s71, %s85
    %p87 = scmp.eq.s32.totalorder %s19, 0
    %p88 = por %p86, %p87
    %s90 = sadd.s32 %s89, 1
    %p93 = scmp.eq.s32.totalorder %s13, 1
    %p94 = scmp.ne.s32.totalorder %s89, %s91
    %p95 = scmp.eq.s32.totalorder %s13, 0
    %p96 = por %p94, %p95
    %p97 = scmp.ne.s32.totalorder %s89, %s91
    %p98 = scmp.eq.s32.totalorder %s18, 1
    %p99 = por %p97, %p98
    %p100 = scmp.ne.s32.totalorder %s91, %s92
    %p101 = scmp.eq.s32.totalorder %s18, 0
    %p102 = por %p100, %p101
    %p103 = scmp.ne.s32.totalorder %s91, %s92
    %p104 = scmp.eq.s32.totalorder %s19, 1
    %p105 = por %p103, %p104
    %p107 = scmp.ne.s32.totalorder %s92, %s106
    %p108 = scmp.eq.s32.totalorder %s19, 0
    %p109 = por %p107, %p108
    %s110 = ssub.s32 %s13, %s20
    %p111 = scmp.eq.s32.totalorder %s110, 0
    %s113 = sadd.s32 %s112, 1
    %s114 = scalar_select %p111, %s112, %s113
    %p117 = pneg %p111
    %p118 = scmp.eq.s32.totalorder %s13, 1
    %p119 = por %p117, %p118
    %p120 = scmp.ne.s32.totalorder %s112, %s115
    %p121 = scmp.eq.s32.totalorder %s13, 0
    %p122 = por %p120, %p121
    %p123 = scmp.ne.s32.totalorder %s112, %s115
    %p124 = scmp.eq.s32.totalorder %s18, 1
    %p125 = por %p123, %p124
    %p126 = scmp.ne.s32.totalorder %s115, %s116
    %p127 = scmp.eq.s32.totalorder %s18, 0
    %p128 = por %p126, %p127
    %p129 = scmp.ne.s32.totalorder %s115, %s116
    %p130 = scmp.eq.s32.totalorder %s19, 1
    %p131 = por %p129, %p130
    %p133 = scmp.ne.s32.totalorder %s116, %s132
    %p134 = scmp.eq.s32.totalorder %s19, 0
    %p135 = por %p133, %p134
    %s136 = ssub.s32 %s13, %s20
    %p137 = scmp.eq.s32.totalorder %s136, 0
    %s139 = sadd.s32 %s138, 1
    %s140 = scalar_select %p137, %s138, %s139
    %p143 = pneg %p137
    %p144 = scmp.eq.s32.totalorder %s13, 1
    %p145 = por %p143, %p144
    %p146 = scmp.ne.s32.totalorder %s138, %s141
    %p147 = scmp.eq.s32.totalorder %s13, 0
    %p148 = por %p146, %p147
    %p149 = scmp.ne.s32.totalorder %s138, %s141
    %p150 = scmp.eq.s32.totalorder %s18, 1
    %p151 = por %p149, %p150
    %p152 = scmp.ne.s32.totalorder %s141, %s142
    %p153 = scmp.eq.s32.totalorder %s18, 0
    %p154 = por %p152, %p153
    %p155 = scmp.ne.s32.totalorder %s141, %s142
    %p156 = scmp.eq.s32.totalorder %s19, 1
    %p157 = por %p155, %p156
    %p159 = scmp.ne.s32.totalorder %s142, %s158
    %p160 = scmp.eq.s32.totalorder %s19, 0
    %p161 = por %p159, %p160
    %p162 = scmp.le.s32.totalorder 1, %s13
    %p163 = scmp.lt.s32.totalorder %s13, 3
    %p164 = pnand %p162, %p163
    %p165 = pneg %p164
    // Predicated region
    $region9: #{bottleneck_forward.6} parent=5 // pred_check
      _
    $region10: #{bottleneck_forward.6} parent=5 // pred_check_branch
      %167 = sbr.rel (%p164) target = $region12
    $region11: #{bottleneck_forward.6} parent=5 // pred_region
      %s168 = ssub.s32 %s13, 1
      // Predicated region
      $region13: #{bottleneck_forward.6} parent=11 // pred_check
        %p169 = pneg %p34
      $region14: #{bottleneck_forward.6} parent=11 // pred_check_branch
        %171 = sbr.rel (%p169) target = $region16
      $region15: #{bottleneck_forward.6} parent=11 // pred_region
        _
      $region16: #{bottleneck_forward.6} parent=11 // pred_fallthru
        _
      // Predicated region
      $region17: #{bottleneck_forward.6} parent=11 // pred_check
        %p172 = pneg %p81
      $region18: #{bottleneck_forward.6} parent=11 // pred_check_branch
        %174 = sbr.rel (%p172) target = $region20
      $region19: #{bottleneck_forward.6} parent=11 // pred_region
        _
      $region20: #{bottleneck_forward.6} parent=11 // pred_fallthru
        _
      // Predicated region
      $region21: #{bottleneck_forward.6} parent=11 // pred_check
        %p175 = pneg %p102
      $region22: #{bottleneck_forward.6} parent=11 // pred_check_branch
        %177 = sbr.rel (%p175) target = $region24
      $region23: #{bottleneck_forward.6} parent=11 // pred_region
        _
      $region24: #{bottleneck_forward.6} parent=11 // pred_fallthru
        _
    $region12: #{bottleneck_forward.6} parent=5 // pred_fallthru
      _
    %p178 = scmp.lt.s32.totalorder %s13, 2
    // Predicated region
    $region25: #{bottleneck_forward.6} parent=5 // pred_check
      %p179 = pneg %p178
    $region26: #{bottleneck_forward.6} parent=5 // pred_check_branch
      %181 = sbr.rel (%p179) target = $region28
    $region27: #{bottleneck_forward.6} parent=5 // pred_region
      // Predicated region
      $region29: #{bottleneck_forward.6} parent=27 // pred_check
        %p182 = pneg %p54
      $region30: #{bottleneck_forward.6} parent=27 // pred_check_branch
        %184 = sbr.rel (%p182) target = $region32
      $region31: #{bottleneck_forward.6} parent=27 // pred_region
        %p185 = scmp.lt.s32.totalorder %s13, 1
        %s186 = scalar_select %p185, %s13, 1
        %s187 = smul.addr %s186, 32
        %s188 = smul.addr %s187, 4
        %s189 = scalar_lea.vmem %s1, %s188
      $region32: #{bottleneck_forward.6} parent=27 // pred_fallthru
        _
    $region28: #{bottleneck_forward.6} parent=5 // pred_fallthru
      _
    %p190 = scmp.le.s32.totalorder 1, %s13
    %p191 = scmp.lt.s32.totalorder %s13, 3
    %p192 = pnand %p190, %p191
    %p193 = pneg %p192
    // Predicated region
    $region33: #{bottleneck_forward.6} parent=5 // pred_check
      _
    $region34: #{bottleneck_forward.6} parent=5 // pred_check_branch
      %195 = sbr.rel (%p192) target = $region36
    $region35: #{bottleneck_forward.6} parent=5 // pred_region
      %s196 = ssub.s32 %s13, 1
      %p197 = pneg %p34
      %p198 = pneg %p31
      %p199 = scmp.lt.s32.totalorder %s18, 1
      %s200 = scalar_select %p199, %s18, 1
      %s201 = smul.addr %s200, 32
      %s202 = smul.addr %s201, 4
      %s203 = scalar_lea.vmem %s1, %s202
      %p204 = pneg %p60
      %p205 = pneg %p57
      %p206 = pneg %p81
      %p207 = pneg %p78
      %p208 = pneg %p102
      %p209 = pneg %p99
      %p210 = pneg %p128
      %p211 = pneg %p125
      %p212 = scmp.lt.s32.totalorder %s18, 1
      %s213 = scalar_select %p212, %s18, 1
      %s214 = smul.addr %s213, 32
      %s215 = smul.addr %s214, 4
      %s216 = scalar_lea.vmem %s4, %s215
      %p217 = pneg %p154
      %p218 = pneg %p151
      %p219 = scmp.lt.s32.totalorder %s18, 1
      %s220 = scalar_select %p219, %s18, 1
      %s221 = scalar_lea.vmem %s5, %s220
      %p222 = scmp.lt.s32.totalorder %s18, 1
      %s223 = scalar_select %p222, %s18, 1
      %s224 = smul.addr %s223, 32
      %s225 = smul.addr %s224, 4
      %s226 = scalar_lea.vmem %s1, %s225
      %p227 = scmp.lt.s32.totalorder %s18, 1
      %s228 = scalar_select %p227, %s18, 1
      %s229 = smul.addr %s228, 32
      %s230 = smul.addr %s229, 4
      %s231 = scalar_lea.vmem %s4, %s230
      %p232 = scmp.lt.s32.totalorder %s18, 1
      %s233 = scalar_select %p232, %s18, 1
      %s234 = scalar_lea.vmem %s5, %s233
      %s236 = sld [smem:[#allocation3]]
      %p237 = scmp.gt.f32.partialorder %s236, 0.0
      %s238 = scalar_select %p237, %s236, 1.0
      %v239 = vstv %s238
      %v240 = vrcp.pop %v239
      %s241 = vtos %v240
      %s242 = smul.f32 32767.0, %s241
      %v243 = vrcp.pop 32767.0
      %s244 = vtos %v243
      %s245 = smul.f32 %s238, %s244
      %246 = vst [vmem:[#allocation2] sm:$0xff] 0.0
      %247 = vst [vmem:[#allocation2 + $0x8] sm:$0xff] 0.0
      %248 = vst [vmem:[#allocation2 + $0x10] sm:$0xff] 0.0
      %249 = vst [vmem:[#allocation2 + $0x18] sm:$0xff] 0.0
      %250 = vst [vmem:[#allocation2 + $0x20] sm:$0xff] 0.0
      %251 = vst [vmem:[#allocation2 + $0x28] sm:$0xff] 0.0
      %252 = vst [vmem:[#allocation2 + $0x30] sm:$0xff] 0.0
      %253 = vst [vmem:[#allocation2 + $0x38] sm:$0xff] 0.0
      %254 = vst [vmem:[#allocation2 + $0x40] sm:$0xff] 0.0
      %255 = vst [vmem:[#allocation2 + $0x48] sm:$0xff] 0.0
      %256 = vst [vmem:[#allocation2 + $0x50] sm:$0xff] 0.0
      %257 = vst [vmem:[#allocation2 + $0x58] sm:$0xff] 0.0
      %258 = vst [vmem:[#allocation2 + $0x60] sm:$0xff] 0.0
      %259 = vst [vmem:[#allocation2 + $0x68] sm:$0xff] 0.0
      %260 = vst [vmem:[#allocation2 + $0x70] sm:$0xff] 0.0
      %261 = vst [vmem:[#allocation2 + $0x78] sm:$0xff] 0.0
      %262 = vst [vmem:[#allocation2 + $0x80] sm:$0xff] 0.0
      %263 = vst [vmem:[#allocation2 + $0x88] sm:$0xff] 0.0
      %264 = vst [vmem:[#allocation2 + $0x90] sm:$0xff] 0.0
      %265 = vst [vmem:[#allocation2 + $0x98] sm:$0xff] 0.0
      %266 = vst [vmem:[#allocation2 + $0xa0] sm:$0xff] 0.0
      %267 = vst [vmem:[#allocation2 + $0xa8] sm:$0xff] 0.0
      %268 = vst [vmem:[#allocation2 + $0xb0] sm:$0xff] 0.0
      %269 = vst [vmem:[#allocation2 + $0xb8] sm:$0xff] 0.0
      %270 = vst [vmem:[#allocation2 + $0xc0] sm:$0xff] 0.0
      %271 = vst [vmem:[#allocation2 + $0xc8] sm:$0xff] 0.0
      %272 = vst [vmem:[#allocation2 + $0xd0] sm:$0xff] 0.0
      %273 = vst [vmem:[#allocation2 + $0xd8] sm:$0xff] 0.0
      %274 = vst [vmem:[#allocation2 + $0xe0] sm:$0xff] 0.0
      %275 = vst [vmem:[#allocation2 + $0xe8] sm:$0xff] 0.0
      %276 = vst [vmem:[#allocation2 + $0xf0] sm:$0xff] 0.0
      %277 = vst [vmem:[#allocation2 + $0xf8] sm:$0xff] 0.0
      %278 = vst [vmem:[#allocation2 + $0x100] sm:$0xff] 0.0
      %279 = vst [vmem:[#allocation2 + $0x108] sm:$0xff] 0.0
      %280 = vst [vmem:[#allocation2 + $0x110] sm:$0xff] 0.0
      %281 = vst [vmem:[#allocation2 + $0x118] sm:$0xff] 0.0
      %282 = vst [vmem:[#allocation2 + $0x120] sm:$0xff] 0.0
      %283 = vst [vmem:[#allocation2 + $0x128] sm:$0xff] 0.0
      %284 = vst [vmem:[#allocation2 + $0x130] sm:$0xff] 0.0
      %285 = vst [vmem:[#allocation2 + $0x138] sm:$0xff] 0.0
      %286 = vst [vmem:[#allocation2 + $0x140] sm:$0xff] 0.0
      %287 = vst [vmem:[#allocation2 + $0x148] sm:$0xff] 0.0
      %288 = vst [vmem:[#allocation2 + $0x150] sm:$0xff] 0.0
      %289 = vst [vmem:[#allocation2 + $0x158] sm:$0xff] 0.0
      %290 = vst [vmem:[#allocation2 + $0x160] sm:$0xff] 0.0
      %291 = vst [vmem:[#allocation2 + $0x168] sm:$0xff] 0.0
      %292 = vst [vmem:[#allocation2 + $0x170] sm:$0xff] 0.0
      %293 = vst [vmem:[#allocation2 + $0x178] sm:$0xff] 0.0
      %294 = vst [vmem:[#allocation2 + $0x180] sm:$0xff] 0.0
      %295 = vst [vmem:[#allocation2 + $0x188] sm:$0xff] 0.0
      %296 = vst [vmem:[#allocation2 + $0x190] sm:$0xff] 0.0
      %297 = vst [vmem:[#allocation2 + $0x198] sm:$0xff] 0.0
      %298 = vst [vmem:[#allocation2 + $0x1a0] sm:$0xff] 0.0
      %299 = vst [vmem:[#allocation2 + $0x1a8] sm:$0xff] 0.0
      %300 = vst [vmem:[#allocation2 + $0x1b0] sm:$0xff] 0.0
      %301 = vst [vmem:[#allocation2 + $0x1b8] sm:$0xff] 0.0
      %302 = vst [vmem:[#allocation2 + $0x1c0] sm:$0xff] 0.0
      %303 = vst [vmem:[#allocation2 + $0x1c8] sm:$0xff] 0.0
      %304 = vst [vmem:[#allocation2 + $0x1d0] sm:$0xff] 0.0
      %305 = vst [vmem:[#allocation2 + $0x1d8] sm:$0xff] 0.0
      %306 = vst [vmem:[#allocation2 + $0x1e0] sm:$0xff] 0.0
      %307 = vst [vmem:[#allocation2 + $0x1e8] sm:$0xff] 0.0
      %308 = vst [vmem:[#allocation2 + $0x1f0] sm:$0xff] 0.0
      %309 = vst [vmem:[#allocation2 + $0x1f8] sm:$0xff] 0.0
      %310 = vst [vmem:[#allocation2 + $0x200] sm:$0xff] 0.0
      %311 = vst [vmem:[#allocation2 + $0x208] sm:$0xff] 0.0
      %312 = vst [vmem:[#allocation2 + $0x210] sm:$0xff] 0.0
      %313 = vst [vmem:[#allocation2 + $0x218] sm:$0xff] 0.0
      %314 = vst [vmem:[#allocation2 + $0x220] sm:$0xff] 0.0
      %315 = vst [vmem:[#allocation2 + $0x228] sm:$0xff] 0.0
      %316 = vst [vmem:[#allocation2 + $0x230] sm:$0xff] 0.0
      %317 = vst [vmem:[#allocation2 + $0x238] sm:$0xff] 0.0
      %318 = vst [vmem:[#allocation2 + $0x240] sm:$0xff] 0.0
      %319 = vst [vmem:[#allocation2 + $0x248] sm:$0xff] 0.0
      %320 = vst [vmem:[#allocation2 + $0x250] sm:$0xff] 0.0
      %321 = vst [vmem:[#allocation2 + $0x258] sm:$0xff] 0.0
      %322 = vst [vmem:[#allocation2 + $0x260] sm:$0xff] 0.0
      %323 = vst [vmem:[#allocation2 + $0x268] sm:$0xff] 0.0
      %324 = vst [vmem:[#allocation2 + $0x270] sm:$0xff] 0.0
      %325 = vst [vmem:[#allocation2 + $0x278] sm:$0xff] 0.0
      %326 = vst [vmem:[#allocation2 + $0x280] sm:$0xff] 0.0
      %327 = vst [vmem:[#allocation2 + $0x288] sm:$0xff] 0.0
      %328 = vst [vmem:[#allocation2 + $0x290] sm:$0xff] 0.0
      %329 = vst [vmem:[#allocation2 + $0x298] sm:$0xff] 0.0
      %330 = vst [vmem:[#allocation2 + $0x2a0] sm:$0xff] 0.0
      %331 = vst [vmem:[#allocation2 + $0x2a8] sm:$0xff] 0.0
      %332 = vst [vmem:[#allocation2 + $0x2b0] sm:$0xff] 0.0
      %333 = vst [vmem:[#allocation2 + $0x2b8] sm:$0xff] 0.0
      %334 = vst [vmem:[#allocation2 + $0x2c0] sm:$0xff] 0.0
      %335 = vst [vmem:[#allocation2 + $0x2c8] sm:$0xff] 0.0
      %336 = vst [vmem:[#allocation2 + $0x2d0] sm:$0xff] 0.0
      %337 = vst [vmem:[#allocation2 + $0x2d8] sm:$0xff] 0.0
      %338 = vst [vmem:[#allocation2 + $0x2e0] sm:$0xff] 0.0
      %339 = vst [vmem:[#allocation2 + $0x2e8] sm:$0xff] 0.0
      %340 = vst [vmem:[#allocation2 + $0x2f0] sm:$0xff] 0.0
      %341 = vst [vmem:[#allocation2 + $0x2f8] sm:$0xff] 0.0
      %342 = vst [vmem:[#allocation2 + $0x300] sm:$0xff] 0.0
      %343 = vst [vmem:[#allocation2 + $0x308] sm:$0xff] 0.0
      %344 = vst [vmem:[#allocation2 + $0x310] sm:$0xff] 0.0
      %345 = vst [vmem:[#allocation2 + $0x318] sm:$0xff] 0.0
      %346 = vst [vmem:[#allocation2 + $0x320] sm:$0xff] 0.0
      %347 = vst [vmem:[#allocation2 + $0x328] sm:$0xff] 0.0
      %348 = vst [vmem:[#allocation2 + $0x330] sm:$0xff] 0.0
      %349 = vst [vmem:[#allocation2 + $0x338] sm:$0xff] 0.0
      %350 = vst [vmem:[#allocation2 + $0x340] sm:$0xff] 0.0
      %351 = vst [vmem:[#allocation2 + $0x348] sm:$0xff] 0.0
      %352 = vst [vmem:[#allocation2 + $0x350] sm:$0xff] 0.0
      %353 = vst [vmem:[#allocation2 + $0x358] sm:$0xff] 0.0
      %354 = vst [vmem:[#allocation2 + $0x360] sm:$0xff] 0.0
      %355 = vst [vmem:[#allocation2 + $0x368] sm:$0xff] 0.0
      %356 = vst [vmem:[#allocation2 + $0x370] sm:$0xff] 0.0
      %357 = vst [vmem:[#allocation2 + $0x378] sm:$0xff] 0.0
      %358 = vst [vmem:[#allocation2 + $0x380] sm:$0xff] 0.0
      %359 = vst [vmem:[#allocation2 + $0x388] sm:$0xff] 0.0
      %360 = vst [vmem:[#allocation2 + $0x390] sm:$0xff] 0.0
      %361 = vst [vmem:[#allocation2 + $0x398] sm:$0xff] 0.0
      %362 = vst [vmem:[#allocation2 + $0x3a0] sm:$0xff] 0.0
      %363 = vst [vmem:[#allocation2 + $0x3a8] sm:$0xff] 0.0
      %364 = vst [vmem:[#allocation2 + $0x3b0] sm:$0xff] 0.0
      %365 = vst [vmem:[#allocation2 + $0x3b8] sm:$0xff] 0.0
      %366 = vst [vmem:[#allocation2 + $0x3c0] sm:$0xff] 0.0
      %367 = vst [vmem:[#allocation2 + $0x3c8] sm:$0xff] 0.0
      %368 = vst [vmem:[#allocation2 + $0x3d0] sm:$0xff] 0.0
      %369 = vst [vmem:[#allocation2 + $0x3d8] sm:$0xff] 0.0
      %370 = vst [vmem:[#allocation2 + $0x3e0] sm:$0xff] 0.0
      %371 = vst [vmem:[#allocation2 + $0x3e8] sm:$0xff] 0.0
      %372 = vst [vmem:[#allocation2 + $0x3f0] sm:$0xff] 0.0
      %373 = vst [vmem:[#allocation2 + $0x3f8] sm:$0xff] 0.0
      %374 = vst [vmem:[#allocation2 + $0x400] sm:$0xff] 0.0
      %375 = vst [vmem:[#allocation2 + $0x408] sm:$0xff] 0.0
      %376 = vst [vmem:[#allocation2 + $0x410] sm:$0xff] 0.0
      %377 = vst [vmem:[#allocation2 + $0x418] sm:$0xff] 0.0
      %378 = vst [vmem:[#allocation2 + $0x420] sm:$0xff] 0.0
      %379 = vst [vmem:[#allocation2 + $0x428] sm:$0xff] 0.0
      %380 = vst [vmem:[#allocation2 + $0x430] sm:$0xff] 0.0
      %381 = vst [vmem:[#allocation2 + $0x438] sm:$0xff] 0.0
      %382 = vst [vmem:[#allocation2 + $0x440] sm:$0xff] 0.0
      %383 = vst [vmem:[#allocation2 + $0x448] sm:$0xff] 0.0
      %384 = vst [vmem:[#allocation2 + $0x450] sm:$0xff] 0.0
      %385 = vst [vmem:[#allocation2 + $0x458] sm:$0xff] 0.0
      %386 = vst [vmem:[#allocation2 + $0x460] sm:$0xff] 0.0
      %387 = vst [vmem:[#allocation2 + $0x468] sm:$0xff] 0.0
      %388 = vst [vmem:[#allocation2 + $0x470] sm:$0xff] 0.0
      %389 = vst [vmem:[#allocation2 + $0x478] sm:$0xff] 0.0
      %390 = vst [vmem:[#allocation2 + $0x480] sm:$0xff] 0.0
      %391 = vst [vmem:[#allocation2 + $0x488] sm:$0xff] 0.0
      %392 = vst [vmem:[#allocation2 + $0x490] sm:$0xff] 0.0
      %393 = vst [vmem:[#allocation2 + $0x498] sm:$0xff] 0.0
      %394 = vst [vmem:[#allocation2 + $0x4a0] sm:$0xff] 0.0
      %395 = vst [vmem:[#allocation2 + $0x4a8] sm:$0xff] 0.0
      %396 = vst [vmem:[#allocation2 + $0x4b0] sm:$0xff] 0.0
      %397 = vst [vmem:[#allocation2 + $0x4b8] sm:$0xff] 0.0
      %398 = vst [vmem:[#allocation2 + $0x4c0] sm:$0xff] 0.0
      %399 = vst [vmem:[#allocation2 + $0x4c8] sm:$0xff] 0.0
      %400 = vst [vmem:[#allocation2 + $0x4d0] sm:$0xff] 0.0
      %401 = vst [vmem:[#allocation2 + $0x4d8] sm:$0xff] 0.0
      %402 = vst [vmem:[#allocation2 + $0x4e0] sm:$0xff] 0.0
      %403 = vst [vmem:[#allocation2 + $0x4e8] sm:$0xff] 0.0
      %404 = vst [vmem:[#allocation2 + $0x4f0] sm:$0xff] 0.0
      %405 = vst [vmem:[#allocation2 + $0x4f8] sm:$0xff] 0.0
      %406 = vst [vmem:[#allocation2 + $0x500] sm:$0xff] 0.0
      %407 = vst [vmem:[#allocation2 + $0x508] sm:$0xff] 0.0
      %v408 = vld [vmem:[%s226] sm:$0xf]
      %v409 = vld [vmem:[%s226 + $0x4] sm:$0xf]
      %v410 = vld [vmem:[%s226 + $0x8] sm:$0xf]
      %v411 = vld [vmem:[%s226 + $0xc] sm:$0xf]
      %v412 = vld [vmem:[%s226 + $0x10] sm:$0xf]
      %v413 = vld [vmem:[%s226 + $0x14] sm:$0xf]
      %v414 = vld [vmem:[%s226 + $0x18] sm:$0xf]
      %v415 = vld [vmem:[%s226 + $0x1c] sm:$0xf]
      %v416 = vld [vmem:[%s226 + $0x20] sm:$0xf]
      %v417 = vld [vmem:[%s226 + $0x24] sm:$0xf]
      %v418 = vld [vmem:[%s226 + $0x28] sm:$0xf]
      %v419 = vld [vmem:[%s226 + $0x2c] sm:$0xf]
      %v420 = vld [vmem:[%s226 + $0x30] sm:$0xf]
      %v421 = vld [vmem:[%s226 + $0x34] sm:$0xf]
      %v422 = vld [vmem:[%s226 + $0x38] sm:$0xf]
      %v423 = vld [vmem:[%s226 + $0x3c] sm:$0xf]
      %v424 = vld [vmem:[%s226 + $0x40] sm:$0xf]
      %v425 = vld [vmem:[%s226 + $0x44] sm:$0xf]
      %v426 = vld [vmem:[%s226 + $0x48] sm:$0xf]
      %v427 = vld [vmem:[%s226 + $0x4c] sm:$0xf]
      %v428 = vld [vmem:[%s226 + $0x50] sm:$0xf]
      %v429 = vld [vmem:[%s226 + $0x54] sm:$0xf]
      %v430 = vld [vmem:[%s226 + $0x58] sm:$0xf]
      %v431 = vld [vmem:[%s226 + $0x5c] sm:$0xf]
      %v432 = vld [vmem:[%s226 + $0x60] sm:$0xf]
      %v433 = vld [vmem:[%s226 + $0x64] sm:$0xf]
      %v434 = vld [vmem:[%s226 + $0x68] sm:$0xf]
      %v435 = vld [vmem:[%s226 + $0x6c] sm:$0xf]
      %v436 = vld [vmem:[%s226 + $0x70] sm:$0xf]
      %v437 = vld [vmem:[%s226 + $0x74] sm:$0xf]
      %v438 = vld [vmem:[%s226 + $0x78] sm:$0xf]
      %v439 = vld [vmem:[%s226 + $0x7c] sm:$0xf]
      %v440 = vunpack.c.l.bf16 %v408
      %v441 = vunpack.c.l.bf16 %v409
      %v442 = vunpack.c.l.bf16 %v410
      %v443 = vunpack.c.l.bf16 %v411
      %v444 = vunpack.c.l.bf16 %v412
      %v445 = vunpack.c.l.bf16 %v413
      %v446 = vunpack.c.l.bf16 %v414
      %v447 = vunpack.c.l.bf16 %v415
      %v448 = vunpack.c.l.bf16 %v416
      %v449 = vunpack.c.l.bf16 %v417
      %v450 = vunpack.c.l.bf16 %v418
      %v451 = vunpack.c.l.bf16 %v419
      %v452 = vunpack.c.l.bf16 %v420
      %v453 = vunpack.c.l.bf16 %v421
      %v454 = vunpack.c.l.bf16 %v422
      %v455 = vunpack.c.l.bf16 %v423
      %v456 = vunpack.c.l.bf16 %v424
      %v457 = vunpack.c.l.bf16 %v425
      %v458 = vunpack.c.l.bf16 %v426
      %v459 = vunpack.c.l.bf16 %v427
      %v460 = vunpack.c.l.bf16 %v428
      %v461 = vunpack.c.l.bf16 %v429
      %v462 = vunpack.c.l.bf16 %v430
      %v463 = vunpack.c.l.bf16 %v431
      %v464 = vunpack.c.l.bf16 %v432
      %v465 = vunpack.c.l.bf16 %v433
      %v466 = vunpack.c.l.bf16 %v434
      %v467 = vunpack.c.l.bf16 %v435
      %v468 = vunpack.c.l.bf16 %v436
      %v469 = vunpack.c.l.bf16 %v437
      %v470 = vunpack.c.l.bf16 %v438
      %v471 = vunpack.c.l.bf16 %v439
      %v472 = vstv %s242
      %v473 = vmul.f32 %v440, %v472
      %v474 = vmul.f32 %v441, %v472
      %v475 = vmul.f32 %v442, %v472
      %v476 = vmul.f32 %v443, %v472
      %v477 = vmul.f32 %v444, %v472
      %v478 = vmul.f32 %v445, %v472
      %v479 = vmul.f32 %v446, %v472
      %v480 = vmul.f32 %v447, %v472
      %v481 = vmul.f32 %v448, %v472
      %v482 = vmul.f32 %v449, %v472
      %v483 = vmul.f32 %v450, %v472
      %v484 = vmul.f32 %v451, %v472
      %v485 = vmul.f32 %v452, %v472
      %v486 = vmul.f32 %v453, %v472
      %v487 = vmul.f32 %v454, %v472
      %v488 = vmul.f32 %v455, %v472
      %v489 = vmul.f32 %v456, %v472
      %v490 = vmul.f32 %v457, %v472
      %v491 = vmul.f32 %v458, %v472
      %v492 = vmul.f32 %v459, %v472
      %v493 = vmul.f32 %v460, %v472
      %v494 = vmul.f32 %v461, %v472
      %v495 = vmul.f32 %v462, %v472
      %v496 = vmul.f32 %v463, %v472
      %v497 = vmul.f32 %v464, %v472
      %v498 = vmul.f32 %v465, %v472
      %v499 = vmul.f32 %v466, %v472
      %v500 = vmul.f32 %v467, %v472
      %v501 = vmul.f32 %v468, %v472
      %v502 = vmul.f32 %v469, %v472
      %v503 = vmul.f32 %v470, %v472
      %v504 = vmul.f32 %v471, %v472
      %v505 = vround.ne.pseudo %v473
      %v506 = vround.ne.pseudo %v474
      %v507 = vround.ne.pseudo %v475
      %v508 = vround.ne.pseudo %v476
      %v509 = vround.ne.pseudo %v477
      %v510 = vround.ne.pseudo %v478
      %v511 = vround.ne.pseudo %v479
      %v512 = vround.ne.pseudo %v480
      %v513 = vround.ne.pseudo %v481
      %v514 = vround.ne.pseudo %v482
      %v515 = vround.ne.pseudo %v483
      %v516 = vround.ne.pseudo %v484
      %v517 = vround.ne.pseudo %v485
      %v518 = vround.ne.pseudo %v486
      %v519 = vround.ne.pseudo %v487
      %v520 = vround.ne.pseudo %v488
      %v521 = vround.ne.pseudo %v489
      %v522 = vround.ne.pseudo %v490
      %v523 = vround.ne.pseudo %v491
      %v524 = vround.ne.pseudo %v492
      %v525 = vround.ne.pseudo %v493
      %v526 = vround.ne.pseudo %v494
      %v527 = vround.ne.pseudo %v495
      %v528 = vround.ne.pseudo %v496
      %v529 = vround.ne.pseudo %v497
      %v530 = vround.ne.pseudo %v498
      %v531 = vround.ne.pseudo %v499
      %v532 = vround.ne.pseudo %v500
      %v533 = vround.ne.pseudo %v501
      %v534 = vround.ne.pseudo %v502
      %v535 = vround.ne.pseudo %v503
      %v536 = vround.ne.pseudo %v504
      %v537 = vstv %s245
      %v538 = vmul.f32 %v505, %v537
      %v539 = vmul.f32 %v506, %v537
      %v540 = vmul.f32 %v507, %v537
      %v541 = vmul.f32 %v508, %v537
      %v542 = vmul.f32 %v509, %v537
      %v543 = vmul.f32 %v510, %v537
      %v544 = vmul.f32 %v511, %v537
      %v545 = vmul.f32 %v512, %v537
      %v546 = vmul.f32 %v513, %v537
      %v547 = vmul.f32 %v514, %v537
      %v548 = vmul.f32 %v515, %v537
      %v549 = vmul.f32 %v516, %v537
      %v550 = vmul.f32 %v517, %v537
      %v551 = vmul.f32 %v518, %v537
      %v552 = vmul.f32 %v519, %v537
      %v553 = vmul.f32 %v520, %v537
      %v554 = vmul.f32 %v521, %v537
      %v555 = vmul.f32 %v522, %v537
      %v556 = vmul.f32 %v523, %v537
      %v557 = vmul.f32 %v524, %v537
      %v558 = vmul.f32 %v525, %v537
      %v559 = vmul.f32 %v526, %v537
      %v560 = vmul.f32 %v527, %v537
      %v561 = vmul.f32 %v528, %v537
      %v562 = vmul.f32 %v529, %v537
      %v563 = vmul.f32 %v530, %v537
      %v564 = vmul.f32 %v531, %v537
      %v565 = vmul.f32 %v532, %v537
      %v566 = vmul.f32 %v533, %v537
      %v567 = vmul.f32 %v534, %v537
      %v568 = vmul.f32 %v535, %v537
      %v569 = vmul.f32 %v536, %v537
      %vm602 = vcmask 1040384
      %v603 = vrot.slane %v538, 7
      %v604 = vrot.slane %v539, 7
      %v605 = vsel %vm602, %v603, %v604
      %v606 = vrot.slane %v540, 7
      %v607 = vrot.slane %v541, 7
      %v608 = vsel %vm602, %v606, %v607
      %v609 = vrot.slane %v542, 7
      %v610 = vrot.slane %v543, 7
      %v611 = vsel %vm602, %v609, %v610
      %v612 = vrot.slane %v544, 7
      %v613 = vrot.slane %v545, 7
      %v614 = vsel %vm602, %v612, %v613
      %v615 = vrot.slane %v546, 7
      %v616 = vrot.slane %v547, 7
      %v617 = vsel %vm602, %v615, %v616
      %v618 = vrot.slane %v548, 7
      %v619 = vrot.slane %v549, 7
      %v620 = vsel %vm602, %v618, %v619
      %v621 = vrot.slane %v550, 7
      %v622 = vrot.slane %v551, 7
      %v623 = vsel %vm602, %v621, %v622
      %v624 = vrot.slane %v552, 7
      %v625 = vrot.slane %v553, 7
      %v626 = vsel %vm602, %v624, %v625
      %v627 = vrot.slane %v554, 7
      %v628 = vrot.slane %v555, 7
      %v629 = vsel %vm602, %v627, %v628
      %v630 = vrot.slane %v556, 7
      %v631 = vrot.slane %v557, 7
      %v632 = vsel %vm602, %v630, %v631
      %v633 = vrot.slane %v558, 7
      %v634 = vrot.slane %v559, 7
      %v635 = vsel %vm602, %v633, %v634
      %v636 = vrot.slane %v560, 7
      %v637 = vrot.slane %v561, 7
      %v638 = vsel %vm602, %v636, %v637
      %v639 = vrot.slane %v562, 7
      %v640 = vrot.slane %v563, 7
      %v641 = vsel %vm602, %v639, %v640
      %v642 = vrot.slane %v564, 7
      %v643 = vrot.slane %v565, 7
      %v644 = vsel %vm602, %v642, %v643
      %v645 = vrot.slane %v566, 7
      %v646 = vrot.slane %v567, 7
      %v647 = vsel %vm602, %v645, %v646
      %v648 = vrot.slane %v568, 7
      %v649 = vrot.slane %v569, 7
      %v650 = vsel %vm602, %v648, %v649
      %s699 = scalar_lea.vmem [#allocation2], 72
      %700 = vst [vmem:[%s699] sm:$0xfe] %v603
      %701 = vst [vmem:[%s699 + $0x18] sm:$0xff] %v605
      %702 = vst [vmem:[%s699 + $0x30] sm:$0x1] %v604
      %703 = vst [vmem:[%s699 + $0x48] sm:$0xfe] %v606
      %704 = vst [vmem:[%s699 + $0x60] sm:$0xff] %v608
      %705 = vst [vmem:[%s699 + $0x78] sm:$0x1] %v607
      %706 = vst [vmem:[%s699 + $0x90] sm:$0xfe] %v609
      %707 = vst [vmem:[%s699 + $0xa8] sm:$0xff] %v611
      %708 = vst [vmem:[%s699 + $0xc0] sm:$0x1] %v610
      %709 = vst [vmem:[%s699 + $0xd8] sm:$0xfe] %v612
      %710 = vst [vmem:[%s699 + $0xf0] sm:$0xff] %v614
      %711 = vst [vmem:[%s699 + $0x108] sm:$0x1] %v613
      %712 = vst [vmem:[%s699 + $0x120] sm:$0xfe] %v615
      %713 = vst [vmem:[%s699 + $0x138] sm:$0xff] %v617
      %714 = vst [vmem:[%s699 + $0x150] sm:$0x1] %v616
      %715 = vst [vmem:[%s699 + $0x168] sm:$0xfe] %v618
      %716 = vst [vmem:[%s699 + $0x180] sm:$0xff] %v620
      %717 = vst [vmem:[%s699 + $0x198] sm:$0x1] %v619
      %718 = vst [vmem:[%s699 + $0x1b0] sm:$0xfe] %v621
      %719 = vst [vmem:[%s699 + $0x1c8] sm:$0xff] %v623
      %720 = vst [vmem:[%s699 + $0x1e0] sm:$0x1] %v622
      %721 = vst [vmem:[%s699 + $0x1f8] sm:$0xfe] %v624
      %722 = vst [vmem:[%s699 + $0x210] sm:$0xff] %v626
      %723 = vst [vmem:[%s699 + $0x228] sm:$0x1] %v625
      %724 = vst [vmem:[%s699 + $0x240] sm:$0xfe] %v627
      %725 = vst [vmem:[%s699 + $0x258] sm:$0xff] %v629
      %726 = vst [vmem:[%s699 + $0x270] sm:$0x1] %v628
      %727 = vst [vmem:[%s699 + $0x288] sm:$0xfe] %v630
      %728 = vst [vmem:[%s699 + $0x2a0] sm:$0xff] %v632
      %729 = vst [vmem:[%s699 + $0x2b8] sm:$0x1] %v631
      %730 = vst [vmem:[%s699 + $0x2d0] sm:$0xfe] %v633
      %731 = vst [vmem:[%s699 + $0x2e8] sm:$0xff] %v635
      %732 = vst [vmem:[%s699 + $0x300] sm:$0x1] %v634
      %733 = vst [vmem:[%s699 + $0x318] sm:$0xfe] %v636
      %734 = vst [vmem:[%s699 + $0x330] sm:$0xff] %v638
      %735 = vst [vmem:[%s699 + $0x348] sm:$0x1] %v637
      %736 = vst [vmem:[%s699 + $0x360] sm:$0xfe] %v639
      %737 = vst [vmem:[%s699 + $0x378] sm:$0xff] %v641
      %738 = vst [vmem:[%s699 + $0x390] sm:$0x1] %v640
      %739 = vst [vmem:[%s699 + $0x3a8] sm:$0xfe] %v642
      %740 = vst [vmem:[%s699 + $0x3c0] sm:$0xff] %v644
      %741 = vst [vmem:[%s699 + $0x3d8] sm:$0x1] %v643
      %742 = vst [vmem:[%s699 + $0x3f0] sm:$0xfe] %v645
      %743 = vst [vmem:[%s699 + $0x408] sm:$0xff] %v647
      %744 = vst [vmem:[%s699 + $0x420] sm:$0x1] %v646
      %745 = vst [vmem:[%s699 + $0x438] sm:$0xfe] %v648
      %746 = vst [vmem:[%s699 + $0x450] sm:$0xff] %v650
      %747 = vst [vmem:[%s699 + $0x468] sm:$0x1] %v649
      %748 = vst [vmem:[%s699 + $0x8] sm:$0xff] %v538
      %749 = vst [vmem:[%s699 + $0x20] sm:$0xff] %v539
      %750 = vst [vmem:[%s699 + $0x50] sm:$0xff] %v540
      %751 = vst [vmem:[%s699 + $0x68] sm:$0xff] %v541
      %752 = vst [vmem:[%s699 + $0x98] sm:$0xff] %v542
      %753 = vst [vmem:[%s699 + $0xb0] sm:$0xff] %v543
      %754 = vst [vmem:[%s699 + $0xe0] sm:$0xff] %v544
      %755 = vst [vmem:[%s699 + $0xf8] sm:$0xff] %v545
      %756 = vst [vmem:[%s699 + $0x128] sm:$0xff] %v546
      %757 = vst [vmem:[%s699 + $0x140] sm:$0xff] %v547
      %758 = vst [vmem:[%s699 + $0x170] sm:$0xff] %v548
      %759 = vst [vmem:[%s699 + $0x188] sm:$0xff] %v549
      %760 = vst [vmem:[%s699 + $0x1b8] sm:$0xff] %v550
      %761 = vst [vmem:[%s699 + $0x1d0] sm:$0xff] %v551
      %762 = vst [vmem:[%s699 + $0x200] sm:$0xff] %v552
      %763 = vst [vmem:[%s699 + $0x218] sm:$0xff] %v553
      %764 = vst [vmem:[%s699 + $0x248] sm:$0xff] %v554
      %765 = vst [vmem:[%s699 + $0x260] sm:$0xff] %v555
      %766 = vst [vmem:[%s699 + $0x290] sm:$0xff] %v556
      %767 = vst [vmem:[%s699 + $0x2a8] sm:$0xff] %v557
      %768 = vst [vmem:[%s699 + $0x2d8] sm:$0xff] %v558
      %769 = vst [vmem:[%s699 + $0x2f0] sm:$0xff] %v559
      %770 = vst [vmem:[%s699 + $0x320] sm:$0xff] %v560
      %771 = vst [vmem:[%s699 + $0x338] sm:$0xff] %v561
      %772 = vst [vmem:[%s699 + $0x368] sm:$0xff] %v562
      %773 = vst [vmem:[%s699 + $0x380] sm:$0xff] %v563
      %774 = vst [vmem:[%s699 + $0x3b0] sm:$0xff] %v564
      %775 = vst [vmem:[%s699 + $0x3c8] sm:$0xff] %v565
      %776 = vst [vmem:[%s699 + $0x3f8] sm:$0xff] %v566
      %777 = vst [vmem:[%s699 + $0x410] sm:$0xff] %v567
      %778 = vst [vmem:[%s699 + $0x440] sm:$0xff] %v568
      %779 = vst [vmem:[%s699 + $0x458] sm:$0xff] %v569
      %vm780 = vcmask 1046528
      %v781 = vrot.slane %v538, 1
      %v782 = vrot.slane %v539, 1
      %v783 = vsel %vm780, %v781, %v782
      %v784 = vrot.slane %v540, 1
      %v785 = vrot.slane %v541, 1
      %v786 = vsel %vm780, %v784, %v785
      %v787 = vrot.slane %v542, 1
      %v788 = vrot.slane %v543, 1
      %v789 = vsel %vm780, %v787, %v788
      %v790 = vrot.slane %v544, 1
      %v791 = vrot.slane %v545, 1
      %v792 = vsel %vm780, %v790, %v791
      %v793 = vrot.slane %v546, 1
      %v794 = vrot.slane %v547, 1
      %v795 = vsel %vm780, %v793, %v794
      %v796 = vrot.slane %v548, 1
      %v797 = vrot.slane %v549, 1
      %v798 = vsel %vm780, %v796, %v797
      %v799 = vrot.slane %v550, 1
      %v800 = vrot.slane %v551, 1
      %v801 = vsel %vm780, %v799, %v800
      %v802 = vrot.slane %v552, 1
      %v803 = vrot.slane %v553, 1
      %v804 = vsel %vm780, %v802, %v803
      %v805 = vrot.slane %v554, 1
      %v806 = vrot.slane %v555, 1
      %v807 = vsel %vm780, %v805, %v806
      %v808 = vrot.slane %v556, 1
      %v809 = vrot.slane %v557, 1
      %v810 = vsel %vm780, %v808, %v809
      %v811 = vrot.slane %v558, 1
      %v812 = vrot.slane %v559, 1
      %v813 = vsel %vm780, %v811, %v812
      %v814 = vrot.slane %v560, 1
      %v815 = vrot.slane %v561, 1
      %v816 = vsel %vm780, %v814, %v815
      %v817 = vrot.slane %v562, 1
      %v818 = vrot.slane %v563, 1
      %v819 = vsel %vm780, %v817, %v818
      %v820 = vrot.slane %v564, 1
      %v821 = vrot.slane %v565, 1
      %v822 = vsel %vm780, %v820, %v821
      %v823 = vrot.slane %v566, 1
      %v824 = vrot.slane %v567, 1
      %v825 = vsel %vm780, %v823, %v824
      %v826 = vrot.slane %v568, 1
      %v827 = vrot.slane %v569, 1
      %v828 = vsel %vm780, %v826, %v827
      %861 = vst [vmem:[%s699 + $0x10] sm:$0xff] %v783
      %862 = vst [vmem:[%s699 + $0x28] sm:$0x7f] %v782
      %863 = vst [vmem:[%s699 + $0x58] sm:$0xff] %v786
      %864 = vst [vmem:[%s699 + $0x70] sm:$0x7f] %v785
      %865 = vst [vmem:[%s699 + $0xa0] sm:$0xff] %v789
      %866 = vst [vmem:[%s699 + $0xb8] sm:$0x7f] %v788
      %867 = vst [vmem:[%s699 + $0xe8] sm:$0xff] %v792
      %868 = vst [vmem:[%s699 + $0x100] sm:$0x7f] %v791
      %869 = vst [vmem:[%s699 + $0x130] sm:$0xff] %v795
      %870 = vst [vmem:[%s699 + $0x148] sm:$0x7f] %v794
      %871 = vst [vmem:[%s699 + $0x178] sm:$0xff] %v798
      %872 = vst [vmem:[%s699 + $0x190] sm:$0x7f] %v797
      %873 = vst [vmem:[%s699 + $0x1c0] sm:$0xff] %v801
      %874 = vst [vmem:[%s699 + $0x1d8] sm:$0x7f] %v800
      %875 = vst [vmem:[%s699 + $0x208] sm:$0xff] %v804
      %876 = vst [vmem:[%s699 + $0x220] sm:$0x7f] %v803
      %877 = vst [vmem:[%s699 + $0x250] sm:$0xff] %v807
      %878 = vst [vmem:[%s699 + $0x268] sm:$0x7f] %v806
      %879 = vst [vmem:[%s699 + $0x298] sm:$0xff] %v810
      %880 = vst [vmem:[%s699 + $0x2b0] sm:$0x7f] %v809
      %881 = vst [vmem:[%s699 + $0x2e0] sm:$0xff] %v813
      %882 = vst [vmem:[%s699 + $0x2f8] sm:$0x7f] %v812
      %883 = vst [vmem:[%s699 + $0x328] sm:$0xff] %v816
      %884 = vst [vmem:[%s699 + $0x340] sm:$0x7f] %v815
      %885 = vst [vmem:[%s699 + $0x370] sm:$0xff] %v819
      %886 = vst [vmem:[%s699 + $0x388] sm:$0x7f] %v818
      %887 = vst [vmem:[%s699 + $0x3b8] sm:$0xff] %v822
      %888 = vst [vmem:[%s699 + $0x3d0] sm:$0x7f] %v821
      %889 = vst [vmem:[%s699 + $0x400] sm:$0xff] %v825
      %890 = vst [vmem:[%s699 + $0x418] sm:$0x7f] %v824
      %891 = vst [vmem:[%s699 + $0x448] sm:$0xff] %v828
      %892 = vst [vmem:[%s699 + $0x460] sm:$0x7f] %v827
      %893 = vst [vmem:[#allocation2 + $0x47] sm:$0x1] %v538
      %894 = vst [vmem:[#allocation2 + $0x8f] sm:$0x1] %v540
      %895 = vst [vmem:[#allocation2 + $0xd7] sm:$0x1] %v542
      %896 = vst [vmem:[#allocation2 + $0x11f] sm:$0x1] %v544
      %897 = vst [vmem:[#allocation2 + $0x167] sm:$0x1] %v546
      %898 = vst [vmem:[#allocation2 + $0x1af] sm:$0x1] %v548
      %899 = vst [vmem:[#allocation2 + $0x1f7] sm:$0x1] %v550
      %900 = vst [vmem:[#allocation2 + $0x23f] sm:$0x1] %v552
      %901 = vst [vmem:[#allocation2 + $0x287] sm:$0x1] %v554
      %902 = vst [vmem:[#allocation2 + $0x2cf] sm:$0x1] %v556
      %903 = vst [vmem:[#allocation2 + $0x317] sm:$0x1] %v558
      %904 = vst [vmem:[#allocation2 + $0x35f] sm:$0x1] %v560
      %905 = vst [vmem:[#allocation2 + $0x3a7] sm:$0x1] %v562
      %906 = vst [vmem:[#allocation2 + $0x3ef] sm:$0x1] %v564
      %907 = vst [vmem:[#allocation2 + $0x437] sm:$0x1] %v566
      %908 = vst [vmem:[#allocation2 + $0x47f] sm:$0x1] %v568
      %v909 = vld [vmem:[#allocation2] sm:$0xff]
      %v910 = vld [vmem:[#allocation2 + $0x8] sm:$0xff]
      %v911 = vld [vmem:[#allocation2 + $0x10] sm:$0xff]
      %v912 = vld [vmem:[#allocation2 + $0x18] sm:$0xff]
      %v913 = vld [vmem:[#allocation2 + $0x20] sm:$0xff]
      %v914 = vld [vmem:[#allocation2 + $0x28] sm:$0xff]
      %v915 = vld [vmem:[#allocation2 + $0x30] sm:$0xff]
      %v916 = vld [vmem:[#allocation2 + $0x38] sm:$0xff]
      %v917 = vld [vmem:[#allocation2 + $0x40] sm:$0xff]
      %v918 = vld [vmem:[#allocation2 + $0x48] sm:$0xff]
      %v919 = vld [vmem:[#allocation2 + $0x50] sm:$0xff]
      %v920 = vld [vmem:[#allocation2 + $0x58] sm:$0xff]
      %v921 = vld [vmem:[#allocation2 + $0x60] sm:$0xff]
      %v922 = vld [vmem:[#allocation2 + $0x68] sm:$0xff]
      %v923 = vld [vmem:[#allocation2 + $0x70] sm:$0xff]
      %v924 = vld [vmem:[#allocation2 + $0x78] sm:$0xff]
      %v925 = vld [vmem:[#allocation2 + $0x80] sm:$0xff]
      %v926 = vld [vmem:[#allocation2 + $0x88] sm:$0xff]
      %v927 = vld [vmem:[#allocation2 + $0x90] sm:$0xff]
      %v928 = vld [vmem:[#allocation2 + $0x98] sm:$0xff]
      %v929 = vld [vmem:[#allocation2 + $0xa0] sm:$0xff]
      %v930 = vld [vmem:[#allocation2 + $0xa8] sm:$0xff]
      %v931 = vld [vmem:[#allocation2 + $0xb0] sm:$0xff]
      %v932 = vld [vmem:[#allocation2 + $0xb8] sm:$0xff]
      %v933 = vld [vmem:[#allocation2 + $0xc0] sm:$0xff]
      %v934 = vld [vmem:[#allocation2 + $0xc8] sm:$0xff]
      %v935 = vld [vmem:[#allocation2 + $0xd0] sm:$0xff]
      %v936 = vld [vmem:[#allocation2 + $0xd8] sm:$0xff]
      %v937 = vld [vmem:[#allocation2 + $0xe0] sm:$0xff]
      %v938 = vld [vmem:[#allocation2 + $0xe8] sm:$0xff]
      %v939 = vld [vmem:[#allocation2 + $0xf0] sm:$0xff]
      %v940 = vld [vmem:[#allocation2 + $0xf8] sm:$0xff]
      %v941 = vld [vmem:[#allocation2 + $0x100] sm:$0xff]
      %v942 = vld [vmem:[#allocation2 + $0x108] sm:$0xff]
      %v943 = vld [vmem:[#allocation2 + $0x110] sm:$0xff]
      %v944 = vld [vmem:[#allocation2 + $0x118] sm:$0xff]
      %v945 = vld [vmem:[#allocation2 + $0x120] sm:$0xff]
      %v946 = vld [vmem:[#allocation2 + $0x128] sm:$0xff]
      %v947 = vld [vmem:[#allocation2 + $0x130] sm:$0xff]
      %v948 = vld [vmem:[#allocation2 + $0x138] sm:$0xff]
      %v949 = vld [vmem:[#allocation2 + $0x140] sm:$0xff]
      %v950 = vld [vmem:[#allocation2 + $0x148] sm:$0xff]
      %v951 = vld [vmem:[#allocation2 + $0x150] sm:$0xff]
      %v952 = vld [vmem:[#allocation2 + $0x158] sm:$0xff]
      %v953 = vld [vmem:[#allocation2 + $0x160] sm:$0xff]
      %v954 = vld [vmem:[#allocation2 + $0x168] sm:$0xff]
      %v955 = vld [vmem:[#allocation2 + $0x170] sm:$0xff]
      %v956 = vld [vmem:[#allocation2 + $0x178] sm:$0xff]
      %v957 = vld [vmem:[#allocation2 + $0x180] sm:$0xff]
      %v958 = vld [vmem:[#allocation2 + $0x188] sm:$0xff]
      %v959 = vld [vmem:[#allocation2 + $0x190] sm:$0xff]
      %v960 = vld [vmem:[#allocation2 + $0x198] sm:$0xff]
      %v961 = vld [vmem:[#allocation2 + $0x1a0] sm:$0xff]
      %v962 = vld [vmem:[#allocation2 + $0x1a8] sm:$0xff]
      %v963 = vld [vmem:[#allocation2 + $0x1b0] sm:$0xff]
      %v964 = vld [vmem:[#allocation2 + $0x1b8] sm:$0xff]
      %v965 = vld [vmem:[#allocation2 + $0x1c0] sm:$0xff]
      %v966 = vld [vmem:[#allocation2 + $0x1c8] sm:$0xff]
      %v967 = vld [vmem:[#allocation2 + $0x1d0] sm:$0xff]
      %v968 = vld [vmem:[#allocation2 + $0x1d8] sm:$0xff]
      %v969 = vld [vmem:[#allocation2 + $0x1e0] sm:$0xff]
      %v970 = vld [vmem:[#allocation2 + $0x1e8] sm:$0xff]
      %v971 = vld [vmem:[#allocation2 + $0x1f0] sm:$0xff]
      %v972 = vld [vmem:[#allocation2 + $0x1f8] sm:$0xff]
      %v973 = vld [vmem:[#allocation2 + $0x200] sm:$0xff]
      %v974 = vld [vmem:[#allocation2 + $0x208] sm:$0xff]
      %v975 = vld [vmem:[#allocation2 + $0x210] sm:$0xff]
      %v976 = vld [vmem:[#allocation2 + $0x218] sm:$0xff]
      %v977 = vld [vmem:[#allocation2 + $0x220] sm:$0xff]
      %v978 = vld [vmem:[#allocation2 + $0x228] sm:$0xff]
      %v979 = vld [vmem:[#allocation2 + $0x230] sm:$0xff]
      %v980 = vld [vmem:[#allocation2 + $0x238] sm:$0xff]
      %v981 = vld [vmem:[#allocation2 + $0x240] sm:$0xff]
      %v982 = vld [vmem:[#allocation2 + $0x248] sm:$0xff]
      %v983 = vld [vmem:[#allocation2 + $0x250] sm:$0xff]
      %v984 = vld [vmem:[#allocation2 + $0x258] sm:$0xff]
      %v985 = vld [vmem:[#allocation2 + $0x260] sm:$0xff]
      %v986 = vld [vmem:[#allocation2 + $0x268] sm:$0xff]
      %v987 = vld [vmem:[#allocation2 + $0x270] sm:$0xff]
      %v988 = vld [vmem:[#allocation2 + $0x278] sm:$0xff]
      %v989 = vld [vmem:[#allocation2 + $0x280] sm:$0xff]
      %v990 = vld [vmem:[#allocation2 + $0x288] sm:$0xff]
      %v991 = vld [vmem:[#allocation2 + $0x290] sm:$0xff]
      %v992 = vld [vmem:[#allocation2 + $0x298] sm:$0xff]
      %v993 = vld [vmem:[#allocation2 + $0x2a0] sm:$0xff]
      %v994 = vld [vmem:[#allocation2 + $0x2a8] sm:$0xff]
      %v995 = vld [vmem:[#allocation2 + $0x2b0] sm:$0xff]
      %v996 = vld [vmem:[#allocation2 + $0x2b8] sm:$0xff]
      %v997 = vld [vmem:[#allocation2 + $0x2c0] sm:$0xff]
      %v998 = vld [vmem:[#allocation2 + $0x2c8] sm:$0xff]
      %v999 = vld [vmem:[#allocation2 + $0x2d0] sm:$0xff]
      %v1000 = vld [vmem:[#allocation2 + $0x2d8] sm:$0xff]
      %v1001 = vld [vmem:[#allocation2 + $0x2e0] sm:$0xff]
      %v1002 = vld [vmem:[#allocation2 + $0x2e8] sm:$0xff]
      %v1003 = vld [vmem:[#allocation2 + $0x2f0] sm:$0xff]
      %v1004 = vld [vmem:[#allocation2 + $0x2f8] sm:$0xff]
      %v1005 = vld [vmem:[#allocation2 + $0x300] sm:$0xff]
      %v1006 = vld [vmem:[#allocation2 + $0x308] sm:$0xff]
      %v1007 = vld [vmem:[#allocation2 + $0x310] sm:$0xff]
      %v1008 = vld [vmem:[#allocation2 + $0x318] sm:$0xff]
      %v1009 = vld [vmem:[#allocation2 + $0x320] sm:$0xff]
      %v1010 = vld [vmem:[#allocation2 + $0x328] sm:$0xff]
      %v1011 = vld [vmem:[#allocation2 + $0x330] sm:$0xff]
      %v1012 = vld [vmem:[#allocation2 + $0x338] sm:$0xff]
      %v1013 = vld [vmem:[#allocation2 + $0x340] sm:$0xff]
      %v1014 = vld [vmem:[#allocation2 + $0x348] sm:$0xff]
      %v1015 = vld [vmem:[#allocation2 + $0x350] sm:$0xff]
      %v1016 = vld [vmem:[#allocation2 + $0x358] sm:$0xff]
      %v1017 = vld [vmem:[#allocation2 + $0x360] sm:$0xff]
      %v1018 = vld [vmem:[#allocation2 + $0x368] sm:$0xff]
      %v1019 = vld [vmem:[#allocation2 + $0x370] sm:$0xff]
      %v1020 = vld [vmem:[#allocation2 + $0x378] sm:$0xff]
      %v1021 = vld [vmem:[#allocation2 + $0x380] sm:$0xff]
      %v1022 = vld [vmem:[#allocation2 + $0x388] sm:$0xff]
      %v1023 = vld [vmem:[#allocation2 + $0x390] sm:$0xff]
      %v1024 = vld [vmem:[#allocation2 + $0x398] sm:$0xff]
      %v1025 = vld [vmem:[#allocation2 + $0x3a0] sm:$0xff]
      %v1026 = vld [vmem:[#allocation2 + $0x3a8] sm:$0xff]
      %v1027 = vld [vmem:[#allocation2 + $0x3b0] sm:$0xff]
      %v1028 = vld [vmem:[#allocation2 + $0x3b8] sm:$0xff]
      %v1029 = vld [vmem:[#allocation2 + $0x3c0] sm:$0xff]
      %v1030 = vld [vmem:[#allocation2 + $0x3c8] sm:$0xff]
      %v1031 = vld [vmem:[#allocation2 + $0x3d0] sm:$0xff]
      %v1032 = vld [vmem:[#allocation2 + $0x3d8] sm:$0xff]
      %v1033 = vld [vmem:[#allocation2 + $0x3e0] sm:$0xff]
      %v1034 = vld [vmem:[#allocation2 + $0x3e8] sm:$0xff]
      %v1035 = vld [vmem:[#allocation2 + $0x3f0] sm:$0xff]
      %v1036 = vld [vmem:[#allocation2 + $0x3f8] sm:$0xff]
      %v1037 = vld [vmem:[#allocation2 + $0x400] sm:$0xff]
      %v1038 = vld [vmem:[#allocation2 + $0x408] sm:$0xff]
      %v1039 = vld [vmem:[#allocation2 + $0x410] sm:$0xff]
      %v1040 = vld [vmem:[#allocation2 + $0x418] sm:$0xff]
      %v1041 = vld [vmem:[#allocation2 + $0x420] sm:$0xff]
      %v1042 = vld [vmem:[#allocation2 + $0x428] sm:$0xff]
      %v1043 = vld [vmem:[#allocation2 + $0x430] sm:$0xff]
      %v1044 = vld [vmem:[#allocation2 + $0x438] sm:$0xff]
      %v1045 = vld [vmem:[#allocation2 + $0x440] sm:$0xff]
      %v1046 = vld [vmem:[#allocation2 + $0x448] sm:$0xff]
      %v1047 = vld [vmem:[#allocation2 + $0x450] sm:$0xff]
      %v1048 = vld [vmem:[#allocation2 + $0x458] sm:$0xff]
      %v1049 = vld [vmem:[#allocation2 + $0x460] sm:$0xff]
      %v1050 = vld [vmem:[#allocation2 + $0x468] sm:$0xff]
      %v1051 = vld [vmem:[#allocation2 + $0x470] sm:$0xff]
      %v1052 = vld [vmem:[#allocation2 + $0x478] sm:$0xff]
      %v1053 = vpack.c.bf16 %v912, %v909
      %v1054 = vpack.c.bf16 %v913, %v910
      %v1055 = vpack.c.bf16 %v914, %v911
      %v1056 = vpack.c.bf16 %v918, %v915
      %v1057 = vpack.c.bf16 %v919, %v916
      %v1058 = vpack.c.bf16 %v920, %v917
      %v1059 = vpack.c.bf16 %v924, %v921
      %v1060 = vpack.c.bf16 %v925, %v922
      %v1061 = vpack.c.bf16 %v926, %v923
      %v1062 = vpack.c.bf16 %v930, %v927
      %v1063 = vpack.c.bf16 %v931, %v928
      %v1064 = vpack.c.bf16 %v932, %v929
      %v1065 = vpack.c.bf16 %v936, %v933
      %v1066 = vpack.c.bf16 %v937, %v934
      %v1067 = vpack.c.bf16 %v938, %v935
      %v1068 = vpack.c.bf16 %v942, %v939
      %v1069 = vpack.c.bf16 %v943, %v940
      %v1070 = vpack.c.bf16 %v944, %v941
      %v1071 = vpack.c.bf16 %v948, %v945
      %v1072 = vpack.c.bf16 %v949, %v946
      %v1073 = vpack.c.bf16 %v950, %v947
      %v1074 = vpack.c.bf16 %v954, %v951
      %v1075 = vpack.c.bf16 %v955, %v952
      %v1076 = vpack.c.bf16 %v956, %v953
      %v1077 = vpack.c.bf16 %v960, %v957
      %v1078 = vpack.c.bf16 %v961, %v958
      %v1079 = vpack.c.bf16 %v962, %v959
      %v1080 = vpack.c.bf16 %v966, %v963
      %v1081 = vpack.c.bf16 %v967, %v964
      %v1082 = vpack.c.bf16 %v968, %v965
      %v1083 = vpack.c.bf16 %v972, %v969
      %v1084 = vpack.c.bf16 %v973, %v970
      %v1085 = vpack.c.bf16 %v974, %v971
      %v1086 = vpack.c.bf16 %v978, %v975
      %v1087 = vpack.c.bf16 %v979, %v976
      %v1088 = vpack.c.bf16 %v980, %v977
      %v1089 = vpack.c.bf16 %v984, %v981
      %v1090 = vpack.c.bf16 %v985, %v982
      %v1091 = vpack.c.bf16 %v986, %v983
      %v1092 = vpack.c.bf16 %v990, %v987
      %v1093 = vpack.c.bf16 %v991, %v988
      %v1094 = vpack.c.bf16 %v992, %v989
      %v1095 = vpack.c.bf16 %v996, %v993
      %v1096 = vpack.c.bf16 %v997, %v994
      %v1097 = vpack.c.bf16 %v998, %v995
      %v1098 = vpack.c.bf16 %v1002, %v999
      %v1099 = vpack.c.bf16 %v1003, %v1000
      %v1100 = vpack.c.bf16 %v1004, %v1001
      %v1101 = vpack.c.bf16 %v1008, %v1005
      %v1102 = vpack.c.bf16 %v1009, %v1006
      %v1103 = vpack.c.bf16 %v1010, %v1007
      %v1104 = vpack.c.bf16 %v1014, %v1011
      %v1105 = vpack.c.bf16 %v1015, %v1012
      %v1106 = vpack.c.bf16 %v1016, %v1013
      %v1107 = vpack.c.bf16 %v1020, %v1017
      %v1108 = vpack.c.bf16 %v1021, %v1018
      %v1109 = vpack.c.bf16 %v1022, %v1019
      %v1110 = vpack.c.bf16 %v1026, %v1023
      %v1111 = vpack.c.bf16 %v1027, %v1024
      %v1112 = vpack.c.bf16 %v1028, %v1025
      %v1113 = vpack.c.bf16 %v1032, %v1029
      %v1114 = vpack.c.bf16 %v1033, %v1030
      %v1115 = vpack.c.bf16 %v1034, %v1031
      %v1116 = vpack.c.bf16 %v1038, %v1035
      %v1117 = vpack.c.bf16 %v1039, %v1036
      %v1118 = vpack.c.bf16 %v1040, %v1037
      %v1119 = vpack.c.bf16 %v1044, %v1041
      %v1120 = vpack.c.bf16 %v1045, %v1042
      %v1121 = vpack.c.bf16 %v1046, %v1043
      %v1122 = vpack.c.bf16 %v1050, %v1047
      %v1123 = vpack.c.bf16 %v1051, %v1048
      %v1124 = vpack.c.bf16 %v1052, %v1049
      %v1125 = vld [vmem:[%s2] sm:$0xf]
      %v1126 = vld [vmem:[%s2 + $0x4] sm:$0xf]
      %v1127 = vld [vmem:[%s2 + $0x8] sm:$0xf]
      %v1128 = vld [vmem:[%s2 + $0xc] sm:$0xf]
      %v1129 = vld [vmem:[%s2 + $0x10] sm:$0xf]
      %v1130 = vld [vmem:[%s2 + $0x14] sm:$0xf]
      %v1131 = vld [vmem:[%s2 + $0x18] sm:$0xf]
      %v1132 = vld [vmem:[%s2 + $0x1c] sm:$0xf]
      %v1133 = vld [vmem:[%s2 + $0x20] sm:$0xf]
      %v1134 = vld [vmem:[%s2 + $0x24] sm:$0xf]
      %v1135 = vld [vmem:[%s2 + $0x28] sm:$0xf]
      %v1136 = vld [vmem:[%s2 + $0x2c] sm:$0xf]
      %v1137 = vld [vmem:[%s2 + $0x30] sm:$0xf]
      %v1138 = vld [vmem:[%s2 + $0x34] sm:$0xf]
      %v1139 = vld [vmem:[%s2 + $0x38] sm:$0xf]
      %v1140 = vld [vmem:[%s2 + $0x3c] sm:$0xf]
      %v1141 = vld [vmem:[%s2 + $0x40] sm:$0xf]
      %v1142 = vld [vmem:[%s2 + $0x44] sm:$0xf]
      %v1143 = vld [vmem:[%s2 + $0x48] sm:$0xf]
      %v1144 = vld [vmem:[%s2 + $0x4c] sm:$0xf]
      %v1145 = vld [vmem:[%s2 + $0x50] sm:$0xf]
      %v1146 = vld [vmem:[%s2 + $0x54] sm:$0xf]
      %v1147 = vld [vmem:[%s2 + $0x58] sm:$0xf]
      %v1148 = vld [vmem:[%s2 + $0x5c] sm:$0xf]
      %v1149 = vld [vmem:[%s2 + $0x60] sm:$0xf]
      %v1150 = vld [vmem:[%s2 + $0x64] sm:$0xf]
      %v1151 = vld [vmem:[%s2 + $0x68] sm:$0xf]
      %v1152 = vld [vmem:[%s2 + $0x6c] sm:$0xf]
      %v1153 = vld [vmem:[%s2 + $0x70] sm:$0xf]
      %v1154 = vld [vmem:[%s2 + $0x74] sm:$0xf]
      %v1155 = vld [vmem:[%s2 + $0x78] sm:$0xf]
      %v1156 = vld [vmem:[%s2 + $0x7c] sm:$0xf]
      %v1157 = vld [vmem:[%s2 + $0x80] sm:$0xf]
      %v1158 = vld [vmem:[%s2 + $0x84] sm:$0xf]
      %v1159 = vld [vmem:[%s2 + $0x88] sm:$0xf]
      %v1160 = vld [vmem:[%s2 + $0x8c] sm:$0xf]
      %v1161 = vld [vmem:[%s2 + $0x90] sm:$0xf]
      %v1162 = vld [vmem:[%s2 + $0x94] sm:$0xf]
      %v1163 = vld [vmem:[%s2 + $0x98] sm:$0xf]
      %v1164 = vld [vmem:[%s2 + $0x9c] sm:$0xf]
      %v1165 = vld [vmem:[%s2 + $0xa0] sm:$0xf]
      %v1166 = vld [vmem:[%s2 + $0xa4] sm:$0xf]
      %v1167 = vld [vmem:[%s2 + $0xa8] sm:$0xf]
      %v1168 = vld [vmem:[%s2 + $0xac] sm:$0xf]
      %v1169 = vld [vmem:[%s2 + $0xb0] sm:$0xf]
      %v1170 = vld [vmem:[%s2 + $0xb4] sm:$0xf]
      %v1171 = vld [vmem:[%s2 + $0xb8] sm:$0xf]
      %v1172 = vld [vmem:[%s2 + $0xbc] sm:$0xf]
      %v1173 = vld [vmem:[%s699] sm:$0xff]
      %v1174 = vld [vmem:[%s699 + $0x8] sm:$0xff]
      %v1175 = vld [vmem:[%s699 + $0x10] sm:$0xff]
      %v1176 = vld [vmem:[%s699 + $0x18] sm:$0xff]
      %v1177 = vld [vmem:[%s699 + $0x20] sm:$0xff]
      %v1178 = vld [vmem:[%s699 + $0x28] sm:$0xff]
      %v1179 = vld [vmem:[%s699 + $0x30] sm:$0xff]
      %v1180 = vld [vmem:[%s699 + $0x38] sm:$0xff]
      %v1181 = vld [vmem:[%s699 + $0x40] sm:$0xff]
      %v1182 = vld [vmem:[%s699 + $0x48] sm:$0xff]
      %v1183 = vld [vmem:[%s699 + $0x50] sm:$0xff]
      %v1184 = vld [vmem:[%s699 + $0x58] sm:$0xff]
      %v1185 = vld [vmem:[%s699 + $0x60] sm:$0xff]
      %v1186 = vld [vmem:[%s699 + $0x68] sm:$0xff]
      %v1187 = vld [vmem:[%s699 + $0x70] sm:$0xff]
      %v1188 = vld [vmem:[%s699 + $0x78] sm:$0xff]
      %v1189 = vld [vmem:[%s699 + $0x80] sm:$0xff]
      %v1190 = vld [vmem:[%s699 + $0x88] sm:$0xff]
      %v1191 = vld [vmem:[%s699 + $0x90] sm:$0xff]
      %v1192 = vld [vmem:[%s699 + $0x98] sm:$0xff]
      %v1193 = vld [vmem:[%s699 + $0xa0] sm:$0xff]
      %v1194 = vld [vmem:[%s699 + $0xa8] sm:$0xff]
      %v1195 = vld [vmem:[%s699 + $0xb0] sm:$0xff]
      %v1196 = vld [vmem:[%s699 + $0xb8] sm:$0xff]
      %v1197 = vld [vmem:[%s699 + $0xc0] sm:$0xff]
      %v1198 = vld [vmem:[%s699 + $0xc8] sm:$0xff]
      %v1199 = vld [vmem:[%s699 + $0xd0] sm:$0xff]
      %v1200 = vld [vmem:[%s699 + $0xd8] sm:$0xff]
      %v1201 = vld [vmem:[%s699 + $0xe0] sm:$0xff]
      %v1202 = vld [vmem:[%s699 + $0xe8] sm:$0xff]
      %v1203 = vld [vmem:[%s699 + $0xf0] sm:$0xff]
      %v1204 = vld [vmem:[%s699 + $0xf8] sm:$0xff]
      %v1205 = vld [vmem:[%s699 + $0x100] sm:$0xff]
      %v1206 = vld [vmem:[%s699 + $0x108] sm:$0xff]
      %v1207 = vld [vmem:[%s699 + $0x110] sm:$0xff]
      %v1208 = vld [vmem:[%s699 + $0x118] sm:$0xff]
      %v1209 = vld [vmem:[%s699 + $0x120] sm:$0xff]
      %v1210 = vld [vmem:[%s699 + $0x128] sm:$0xff]
      %v1211 = vld [vmem:[%s699 + $0x130] sm:$0xff]
      %v1212 = vld [vmem:[%s699 + $0x138] sm:$0xff]
      %v1213 = vld [vmem:[%s699 + $0x140] sm:$0xff]
      %v1214 = vld [vmem:[%s699 + $0x148] sm:$0xff]
      %v1215 = vld [vmem:[%s699 + $0x150] sm:$0xff]
      %v1216 = vld [vmem:[%s699 + $0x158] sm:$0xff]
      %v1217 = vld [vmem:[%s699 + $0x160] sm:$0xff]
      %v1218 = vld [vmem:[%s699 + $0x168] sm:$0xff]
      %v1219 = vld [vmem:[%s699 + $0x170] sm:$0xff]
      %v1220 = vld [vmem:[%s699 + $0x178] sm:$0xff]
      %v1221 = vld [vmem:[%s699 + $0x180] sm:$0xff]
      %v1222 = vld [vmem:[%s699 + $0x188] sm:$0xff]
      %v1223 = vld [vmem:[%s699 + $0x190] sm:$0xff]
      %v1224 = vld [vmem:[%s699 + $0x198] sm:$0xff]
      %v1225 = vld [vmem:[%s699 + $0x1a0] sm:$0xff]
      %v1226 = vld [vmem:[%s699 + $0x1a8] sm:$0xff]
      %v1227 = vld [vmem:[%s699 + $0x1b0] sm:$0xff]
      %v1228 = vld [vmem:[%s699 + $0x1b8] sm:$0xff]
      %v1229 = vld [vmem:[%s699 + $0x1c0] sm:$0xff]
      %v1230 = vld [vmem:[%s699 + $0x1c8] sm:$0xff]
      %v1231 = vld [vmem:[%s699 + $0x1d0] sm:$0xff]
      %v1232 = vld [vmem:[%s699 + $0x1d8] sm:$0xff]
      %v1233 = vld [vmem:[%s699 + $0x1e0] sm:$0xff]
      %v1234 = vld [vmem:[%s699 + $0x1e8] sm:$0xff]
      %v1235 = vld [vmem:[%s699 + $0x1f0] sm:$0xff]
      %v1236 = vld [vmem:[%s699 + $0x1f8] sm:$0xff]
      %v1237 = vld [vmem:[%s699 + $0x200] sm:$0xff]
      %v1238 = vld [vmem:[%s699 + $0x208] sm:$0xff]
      %v1239 = vld [vmem:[%s699 + $0x210] sm:$0xff]
      %v1240 = vld [vmem:[%s699 + $0x218] sm:$0xff]
      %v1241 = vld [vmem:[%s699 + $0x220] sm:$0xff]
      %v1242 = vld [vmem:[%s699 + $0x228] sm:$0xff]
      %v1243 = vld [vmem:[%s699 + $0x230] sm:$0xff]
      %v1244 = vld [vmem:[%s699 + $0x238] sm:$0xff]
      %v1245 = vld [vmem:[%s699 + $0x240] sm:$0xff]
      %v1246 = vld [vmem:[%s699 + $0x248] sm:$0xff]
      %v1247 = vld [vmem:[%s699 + $0x250] sm:$0xff]
      %v1248 = vld [vmem:[%s699 + $0x258] sm:$0xff]
      %v1249 = vld [vmem:[%s699 + $0x260] sm:$0xff]
      %v1250 = vld [vmem:[%s699 + $0x268] sm:$0xff]
      %v1251 = vld [vmem:[%s699 + $0x270] sm:$0xff]
      %v1252 = vld [vmem:[%s699 + $0x278] sm:$0xff]
      %v1253 = vld [vmem:[%s699 + $0x280] sm:$0xff]
      %v1254 = vld [vmem:[%s699 + $0x288] sm:$0xff]
      %v1255 = vld [vmem:[%s699 + $0x290] sm:$0xff]
      %v1256 = vld [vmem:[%s699 + $0x298] sm:$0xff]
      %v1257 = vld [vmem:[%s699 + $0x2a0] sm:$0xff]
      %v1258 = vld [vmem:[%s699 + $0x2a8] sm:$0xff]
      %v1259 = vld [vmem:[%s699 + $0x2b0] sm:$0xff]
      %v1260 = vld [vmem:[%s699 + $0x2b8] sm:$0xff]
      %v1261 = vld [vmem:[%s699 + $0x2c0] sm:$0xff]
      %v1262 = vld [vmem:[%s699 + $0x2c8] sm:$0xff]
      %v1263 = vld [vmem:[%s699 + $0x2d0] sm:$0xff]
      %v1264 = vld [vmem:[%s699 + $0x2d8] sm:$0xff]
      %v1265 = vld [vmem:[%s699 + $0x2e0] sm:$0xff]
      %v1266 = vld [vmem:[%s699 + $0x2e8] sm:$0xff]
      %v1267 = vld [vmem:[%s699 + $0x2f0] sm:$0xff]
      %v1268 = vld [vmem:[%s699 + $0x2f8] sm:$0xff]
      %v1269 = vld [vmem:[%s699 + $0x300] sm:$0xff]
      %v1270 = vld [vmem:[%s699 + $0x308] sm:$0xff]
      %v1271 = vld [vmem:[%s699 + $0x310] sm:$0xff]
      %v1272 = vld [vmem:[%s699 + $0x318] sm:$0xff]
      %v1273 = vld [vmem:[%s699 + $0x320] sm:$0xff]
      %v1274 = vld [vmem:[%s699 + $0x328] sm:$0xff]
      %v1275 = vld [vmem:[%s699 + $0x330] sm:$0xff]
      %v1276 = vld [vmem:[%s699 + $0x338] sm:$0xff]
      %v1277 = vld [vmem:[%s699 + $0x340] sm:$0xff]
      %v1278 = vld [vmem:[%s699 + $0x348] sm:$0xff]
      %v1279 = vld [vmem:[%s699 + $0x350] sm:$0xff]
      %v1280 = vld [vmem:[%s699 + $0x358] sm:$0xff]
      %v1281 = vld [vmem:[%s699 + $0x360] sm:$0xff]
      %v1282 = vld [vmem:[%s699 + $0x368] sm:$0xff]
      %v1283 = vld [vmem:[%s699 + $0x370] sm:$0xff]
      %v1284 = vld [vmem:[%s699 + $0x378] sm:$0xff]
      %v1285 = vld [vmem:[%s699 + $0x380] sm:$0xff]
      %v1286 = vld [vmem:[%s699 + $0x388] sm:$0xff]
      %v1287 = vld [vmem:[%s699 + $0x390] sm:$0xff]
      %v1288 = vld [vmem:[%s699 + $0x398] sm:$0xff]
      %v1289 = vld [vmem:[%s699 + $0x3a0] sm:$0xff]
      %v1290 = vld [vmem:[%s699 + $0x3a8] sm:$0xff]
      %v1291 = vld [vmem:[%s699 + $0x3b0] sm:$0xff]
      %v1292 = vld [vmem:[%s699 + $0x3b8] sm:$0xff]
      %v1293 = vld [vmem:[%s699 + $0x3c0] sm:$0xff]
      %v1294 = vld [vmem:[%s699 + $0x3c8] sm:$0xff]
      %v1295 = vld [vmem:[%s699 + $0x3d0] sm:$0xff]
      %v1296 = vld [vmem:[%s699 + $0x3d8] sm:$0xff]
      %v1297 = vld [vmem:[%s699 + $0x3e0] sm:$0xff]
      %v1298 = vld [vmem:[%s699 + $0x3e8] sm:$0xff]
      %v1299 = vld [vmem:[%s699 + $0x3f0] sm:$0xff]
      %v1300 = vld [vmem:[%s699 + $0x3f8] sm:$0xff]
      %v1301 = vld [vmem:[%s699 + $0x400] sm:$0xff]
      %v1302 = vld [vmem:[%s699 + $0x408] sm:$0xff]
      %v1303 = vld [vmem:[%s699 + $0x410] sm:$0xff]
      %v1304 = vld [vmem:[%s699 + $0x418] sm:$0xff]
      %v1305 = vld [vmem:[%s699 + $0x420] sm:$0xff]
      %v1306 = vld [vmem:[%s699 + $0x428] sm:$0xff]
      %v1307 = vld [vmem:[%s699 + $0x430] sm:$0xff]
      %v1308 = vld [vmem:[%s699 + $0x438] sm:$0xff]
      %v1309 = vld [vmem:[%s699 + $0x440] sm:$0xff]
      %v1310 = vld [vmem:[%s699 + $0x448] sm:$0xff]
      %v1311 = vld [vmem:[%s699 + $0x450] sm:$0xff]
      %v1312 = vld [vmem:[%s699 + $0x458] sm:$0xff]
      %v1313 = vld [vmem:[%s699 + $0x460] sm:$0xff]
      %v1314 = vld [vmem:[%s699 + $0x468] sm:$0xff]
      %v1315 = vld [vmem:[%s699 + $0x470] sm:$0xff]
      %v1316 = vld [vmem:[%s699 + $0x478] sm:$0xff]
      %v1317 = vpack.c.bf16 %v1176, %v1173
      %v1318 = vpack.c.bf16 %v1177, %v1174
      %v1319 = vpack.c.bf16 %v1178, %v1175
      %v1320 = vpack.c.bf16 %v1182, %v1179
      %v1321 = vpack.c.bf16 %v1183, %v1180
      %v1322 = vpack.c.bf16 %v1184, %v1181
      %v1323 = vpack.c.bf16 %v1188, %v1185
      %v1324 = vpack.c.bf16 %v1189, %v1186
      %v1325 = vpack.c.bf16 %v1190, %v1187
      %v1326 = vpack.c.bf16 %v1194, %v1191
      %v1327 = vpack.c.bf16 %v1195, %v1192
      %v1328 = vpack.c.bf16 %v1196, %v1193
      %v1329 = vpack.c.bf16 %v1200, %v1197
      %v1330 = vpack.c.bf16 %v1201, %v1198
      %v1331 = vpack.c.bf16 %v1202, %v1199
      %v1332 = vpack.c.bf16 %v1206, %v1203
      %v1333 = vpack.c.bf16 %v1207, %v1204
      %v1334 = vpack.c.bf16 %v1208, %v1205
      %v1335 = vpack.c.bf16 %v1212, %v1209
      %v1336 = vpack.c.bf16 %v1213, %v1210
      %v1337 = vpack.c.bf16 %v1214, %v1211
      %v1338 = vpack.c.bf16 %v1218, %v1215
      %v1339 = vpack.c.bf16 %v1219, %v1216
      %v1340 = vpack.c.bf16 %v1220, %v1217
      %v1341 = vpack.c.bf16 %v1224, %v1221
      %v1342 = vpack.c.bf16 %v1225, %v1222
      %v1343 = vpack.c.bf16 %v1226, %v1223
      %v1344 = vpack.c.bf16 %v1230, %v1227
      %v1345 = vpack.c.bf16 %v1231, %v1228
      %v1346 = vpack.c.bf16 %v1232, %v1229
      %v1347 = vpack.c.bf16 %v1236, %v1233
      %v1348 = vpack.c.bf16 %v1237, %v1234
      %v1349 = vpack.c.bf16 %v1238, %v1235
      %v1350 = vpack.c.bf16 %v1242, %v1239
      %v1351 = vpack.c.bf16 %v1243, %v1240
      %v1352 = vpack.c.bf16 %v1244, %v1241
      %v1353 = vpack.c.bf16 %v1248, %v1245
      %v1354 = vpack.c.bf16 %v1249, %v1246
      %v1355 = vpack.c.bf16 %v1250, %v1247
      %v1356 = vpack.c.bf16 %v1254, %v1251
      %v1357 = vpack.c.bf16 %v1255, %v1252
      %v1358 = vpack.c.bf16 %v1256, %v1253
      %v1359 = vpack.c.bf16 %v1260, %v1257
      %v1360 = vpack.c.bf16 %v1261, %v1258
      %v1361 = vpack.c.bf16 %v1262, %v1259
      %v1362 = vpack.c.bf16 %v1266, %v1263
      %v1363 = vpack.c.bf16 %v1267, %v1264
      %v1364 = vpack.c.bf16 %v1268, %v1265
      %v1365 = vpack.c.bf16 %v1272, %v1269
      %v1366 = vpack.c.bf16 %v1273, %v1270
      %v1367 = vpack.c.bf16 %v1274, %v1271
      %v1368 = vpack.c.bf16 %v1278, %v1275
      %v1369 = vpack.c.bf16 %v1279, %v1276
      %v1370 = vpack.c.bf16 %v1280, %v1277
      %v1371 = vpack.c.bf16 %v1284, %v1281
      %v1372 = vpack.c.bf16 %v1285, %v1282
      %v1373 = vpack.c.bf16 %v1286, %v1283
      %v1374 = vpack.c.bf16 %v1290, %v1287
      %v1375 = vpack.c.bf16 %v1291, %v1288
      %v1376 = vpack.c.bf16 %v1292, %v1289
      %v1377 = vpack.c.bf16 %v1296, %v1293
      %v1378 = vpack.c.bf16 %v1297, %v1294
      %v1379 = vpack.c.bf16 %v1298, %v1295
      %v1380 = vpack.c.bf16 %v1302, %v1299
      %v1381 = vpack.c.bf16 %v1303, %v1300
      %v1382 = vpack.c.bf16 %v1304, %v1301
      %v1383 = vpack.c.bf16 %v1308, %v1305
      %v1384 = vpack.c.bf16 %v1309, %v1306
      %v1385 = vpack.c.bf16 %v1310, %v1307
      %v1386 = vpack.c.bf16 %v1314, %v1311
      %v1387 = vpack.c.bf16 %v1315, %v1312
      %v1388 = vpack.c.bf16 %v1316, %v1313
      %s1389 = scalar_lea.vmem %s2, 192
      %v1390 = vld [vmem:[%s1389] sm:$0xf]
      %v1391 = vld [vmem:[%s1389 + $0x4] sm:$0xf]
      %v1392 = vld [vmem:[%s1389 + $0x8] sm:$0xf]
      %v1393 = vld [vmem:[%s1389 + $0xc] sm:$0xf]
      %v1394 = vld [vmem:[%s1389 + $0x10] sm:$0xf]
      %v1395 = vld [vmem:[%s1389 + $0x14] sm:$0xf]
      %v1396 = vld [vmem:[%s1389 + $0x18] sm:$0xf]
      %v1397 = vld [vmem:[%s1389 + $0x1c] sm:$0xf]
      %v1398 = vld [vmem:[%s1389 + $0x20] sm:$0xf]
      %v1399 = vld [vmem:[%s1389 + $0x24] sm:$0xf]
      %v1400 = vld [vmem:[%s1389 + $0x28] sm:$0xf]
      %v1401 = vld [vmem:[%s1389 + $0x2c] sm:$0xf]
      %v1402 = vld [vmem:[%s1389 + $0x30] sm:$0xf]
      %v1403 = vld [vmem:[%s1389 + $0x34] sm:$0xf]
      %v1404 = vld [vmem:[%s1389 + $0x38] sm:$0xf]
      %v1405 = vld [vmem:[%s1389 + $0x3c] sm:$0xf]
      %v1406 = vld [vmem:[%s1389 + $0x40] sm:$0xf]
      %v1407 = vld [vmem:[%s1389 + $0x44] sm:$0xf]
      %v1408 = vld [vmem:[%s1389 + $0x48] sm:$0xf]
      %v1409 = vld [vmem:[%s1389 + $0x4c] sm:$0xf]
      %v1410 = vld [vmem:[%s1389 + $0x50] sm:$0xf]
      %v1411 = vld [vmem:[%s1389 + $0x54] sm:$0xf]
      %v1412 = vld [vmem:[%s1389 + $0x58] sm:$0xf]
      %v1413 = vld [vmem:[%s1389 + $0x5c] sm:$0xf]
      %v1414 = vld [vmem:[%s1389 + $0x60] sm:$0xf]
      %v1415 = vld [vmem:[%s1389 + $0x64] sm:$0xf]
      %v1416 = vld [vmem:[%s1389 + $0x68] sm:$0xf]
      %v1417 = vld [vmem:[%s1389 + $0x6c] sm:$0xf]
      %v1418 = vld [vmem:[%s1389 + $0x70] sm:$0xf]
      %v1419 = vld [vmem:[%s1389 + $0x74] sm:$0xf]
      %v1420 = vld [vmem:[%s1389 + $0x78] sm:$0xf]
      %v1421 = vld [vmem:[%s1389 + $0x7c] sm:$0xf]
      %v1422 = vld [vmem:[%s1389 + $0x80] sm:$0xf]
      %v1423 = vld [vmem:[%s1389 + $0x84] sm:$0xf]
      %v1424 = vld [vmem:[%s1389 + $0x88] sm:$0xf]
      %v1425 = vld [vmem:[%s1389 + $0x8c] sm:$0xf]
      %v1426 = vld [vmem:[%s1389 + $0x90] sm:$0xf]
      %v1427 = vld [vmem:[%s1389 + $0x94] sm:$0xf]
      %v1428 = vld [vmem:[%s1389 + $0x98] sm:$0xf]
      %v1429 = vld [vmem:[%s1389 + $0x9c] sm:$0xf]
      %v1430 = vld [vmem:[%s1389 + $0xa0] sm:$0xf]
      %v1431 = vld [vmem:[%s1389 + $0xa4] sm:$0xf]
      %v1432 = vld [vmem:[%s1389 + $0xa8] sm:$0xf]
      %v1433 = vld [vmem:[%s1389 + $0xac] sm:$0xf]
      %v1434 = vld [vmem:[%s1389 + $0xb0] sm:$0xf]
      %v1435 = vld [vmem:[%s1389 + $0xb4] sm:$0xf]
      %v1436 = vld [vmem:[%s1389 + $0xb8] sm:$0xf]
      %v1437 = vld [vmem:[%s1389 + $0xbc] sm:$0xf]
      %v1486 = vunpack.c.l.b16 %v1390
      %v1487 = vunpack.c.l.b16 %v1391
      %v1488 = vunpack.c.l.b16 %v1392
      %v1489 = vunpack.c.l.b16 %v1393
      %v1490 = vunpack.c.l.b16 %v1394
      %v1491 = vunpack.c.l.b16 %v1395
      %v1492 = vunpack.c.l.b16 %v1396
      %v1493 = vunpack.c.l.b16 %v1397
      %v1494 = vunpack.c.l.b16 %v1398
      %v1495 = vunpack.c.l.b16 %v1399
      %v1496 = vunpack.c.l.b16 %v1400
      %v1497 = vunpack.c.l.b16 %v1401
      %v1498 = vunpack.c.l.b16 %v1402
      %v1499 = vunpack.c.l.b16 %v1403
      %v1500 = vunpack.c.l.b16 %v1404
      %v1501 = vunpack.c.l.b16 %v1405
      %v1502 = vunpack.c.l.b16 %v1406
      %v1503 = vunpack.c.l.b16 %v1407
      %v1504 = vunpack.c.l.b16 %v1408
      %v1505 = vunpack.c.l.b16 %v1409
      %v1506 = vunpack.c.l.b16 %v1410
      %v1507 = vunpack.c.l.b16 %v1411
      %v1508 = vunpack.c.l.b16 %v1412
      %v1509 = vunpack.c.l.b16 %v1413
      %v1510 = vunpack.c.l.b16 %v1414
      %v1511 = vunpack.c.l.b16 %v1415
      %v1512 = vunpack.c.l.b16 %v1416
      %v1513 = vunpack.c.l.b16 %v1417
      %v1514 = vunpack.c.l.b16 %v1418
      %v1515 = vunpack.c.l.b16 %v1419
      %v1516 = vunpack.c.l.b16 %v1420
      %v1517 = vunpack.c.l.b16 %v1421
      %v1518 = vunpack.c.l.b16 %v1422
      %v1519 = vunpack.c.l.b16 %v1423
      %v1520 = vunpack.c.l.b16 %v1424
      %v1521 = vunpack.c.l.b16 %v1425
      %v1522 = vunpack.c.l.b16 %v1426
      %v1523 = vunpack.c.l.b16 %v1427
      %v1524 = vunpack.c.l.b16 %v1428
      %v1525 = vunpack.c.l.b16 %v1429
      %v1526 = vunpack.c.l.b16 %v1430
      %v1527 = vunpack.c.l.b16 %v1431
      %v1528 = vunpack.c.l.b16 %v1432
      %v1529 = vunpack.c.l.b16 %v1433
      %v1530 = vunpack.c.l.b16 %v1434
      %v1531 = vunpack.c.l.b16 %v1435
      %v1532 = vunpack.c.l.b16 %v1436
      %v1533 = vunpack.c.l.b16 %v1437
      %v1534 = vpack.c.b16 %v1487, %v1486
      %v1535 = vpack.c.b16 %v1489, %v1488
      %v1536 = vpack.c.b16 %v1491, %v1490
      %v1537 = vpack.c.b16 %v1493, %v1492
      %v1538 = vpack.c.b16 %v1495, %v1494
      %v1539 = vpack.c.b16 %v1497, %v1496
      %v1540 = vpack.c.b16 %v1499, %v1498
      %v1541 = vpack.c.b16 %v1501, %v1500
      %v1542 = vpack.c.b16 %v1503, %v1502
      %v1543 = vpack.c.b16 %v1505, %v1504
      %v1544 = vpack.c.b16 %v1507, %v1506
      %v1545 = vpack.c.b16 %v1509, %v1508
      %v1546 = vpack.c.b16 %v1511, %v1510
      %v1547 = vpack.c.b16 %v1513, %v1512
      %v1548 = vpack.c.b16 %v1515, %v1514
      %v1549 = vpack.c.b16 %v1517, %v1516
      %v1550 = vpack.c.b16 %v1519, %v1518
      %v1551 = vpack.c.b16 %v1521, %v1520
      %v1552 = vpack.c.b16 %v1523, %v1522
      %v1553 = vpack.c.b16 %v1525, %v1524
      %v1554 = vpack.c.b16 %v1527, %v1526
      %v1555 = vpack.c.b16 %v1529, %v1528
      %v1556 = vpack.c.b16 %v1531, %v1530
      %v1557 = vpack.c.b16 %v1533, %v1532
      %1582 = vmatprep.subr.bf16.mxu0 0
      %1583 = vmatpush1.bf16.msra.mxu0 %v1534
      %1584 = vmatprep.subr.bf16.mxu0 0
      %1585 = vmatpush1.bf16.msra.mxu0 %v1535
      %1586 = vmatprep.subr.bf16.mxu0 0
      %1587 = vmatpush1.bf16.msra.mxu0 %v1536
      %1588 = vmatprep.subr.bf16.mxu0 0
      %1589 = vmatpush1.bf16.msra.mxu0 %v1537
      %1590 = vmatprep.subr.bf16.mxu0 0
      %1591 = vmatpush1.bf16.msra.mxu0 %v1538
      %1592 = vmatprep.subr.bf16.mxu0 0
      %1593 = vmatpush1.bf16.msra.mxu0 %v1539
      %1594 = vmatprep.subr.bf16.mxu0 0
      %1595 = vmatpush1.bf16.msra.mxu0 %v1540
      %1596 = vmatprep.subr.bf16.mxu0 0
      %1597 = vmatpush1.bf16.msra.mxu0 %v1541
      %1598 = vmatprep.subr.bf16.mxu0 0
      %1599 = vmatpush1.bf16.msra.mxu0 %v1542
      %1600 = vmatprep.subr.bf16.mxu0 0
      %1601 = vmatpush1.bf16.msra.mxu0 %v1543
      %1602 = vmatprep.subr.bf16.mxu0 0
      %1603 = vmatpush1.bf16.msra.mxu0 %v1544
      %1604 = vmatprep.subr.bf16.mxu0 0
      %1605 = vmatpush1.bf16.msra.mxu0 %v1545
      %1606 = vmatprep.subr.bf16.mxu0 0
      %1607 = vmatpush1.bf16.msra.mxu0 %v1546
      %1608 = vmatprep.subr.bf16.mxu0 0
      %1609 = vmatpush1.bf16.msra.mxu0 %v1547
      %1610 = vmatprep.subr.bf16.mxu0 0
      %1611 = vmatpush1.bf16.msra.mxu0 %v1548
      %1612 = vmatprep.subr.bf16.mxu0 0
      %1613 = vmatpush1.bf16.msra.mxu0 %v1549
      %1614 = vmatprep.mubr.bf16.mxu0 %v1318
      %1615 = vmatmul.mubr.bf16.gmra.mrb[0].mxu0 %v1317
      %v1616 = vpop.f32.mrb[0].mxu0
      %v1617 = vadd.f32 0.0, %v1616
      %v1618 = vpop.f32.mrb[0].mxu0
      %v1619 = vpop.f32.mrb[0].mxu0
      %v1620 = vadd.f32 0.0, %v1619
      %v1621 = vpop.f32.mrb[0].mxu0
      %1622 = vmatprep.mubr.bf16.mxu0 %v1321
      %1623 = vmatmul.mubr.bf16.gmra.mrb[0].mxu0 %v1320
      %v1624 = vpop.f32.mrb[0].mxu0
      %v1625 = vpop.f32.mrb[0].mxu0
      %v1626 = vpop.f32.mrb[0].mxu0
      %v1627 = vadd.f32 0.0, %v1626
      %v1628 = vpop.f32.mrb[0].mxu0
      %1629 = vmatprep.mubr.bf16.mxu0 %v1324
      %1630 = vmatmul.mubr.bf16.gmra.mrb[0].mxu0 %v1323
      %v1631 = vpop.f32.mrb[0].mxu0
      %v1632 = vadd.f32 0.0, %v1631
      %v1633 = vpop.f32.mrb[0].mxu0
      %v1634 = vpop.f32.mrb[0].mxu0
      %v1635 = vpop.f32.mrb[0].mxu0
      %1636 = vmatprep.mubr.bf16.mxu0 %v1327
      %1637 = vmatmul.mubr.bf16.gmra.mrb[0].mxu0 %v1326
      %v1638 = vpop.f32.mrb[0].mxu0
      %v1639 = vadd.f32 0.0, %v1638
      %v1640 = vpop.f32.mrb[0].mxu0
      %v1641 = vpop.f32.mrb[0].mxu0
      %v1642 = vadd.f32 0.0, %v1641
      %v1643 = vpop.f32.mrb[0].mxu0
      %1644 = vmatprep.mubr.bf16.mxu0 %v1330
      %1645 = vmatmul.mubr.bf16.gmra.mrb[0].mxu0 %v1329
      %v1646 = vpop.f32.mrb[0].mxu0
      %v1647 = vpop.f32.mrb[0].mxu0
      %v1648 = vpop.f32.mrb[0].mxu0
      %v1649 = vadd.f32 0.0, %v1648
      %v1650 = vpop.f32.mrb[0].mxu0
      %1651 = vmatprep.mubr.bf16.mxu0 %v1333
      %1652 = vmatmul.mubr.bf16.gmra.mrb[0].mxu0 %v1332
      %v1653 = vpop.f32.mrb[0].mxu0
      %v1654 = vadd.f32 0.0, %v1653
      %v1655 = vpop.f32.mrb[0].mxu0
      %v1656 = vpop.f32.mrb[0].mxu0
      %v1657 = vpop.f32.mrb[0].mxu0
      %1658 = vmatprep.mubr.bf16.mxu0 %v1336
      %1659 = vmatmul.mubr.bf16.gmra.mrb[0].mxu0 %v1335
      %v1660 = vpop.f32.mrb[0].mxu0
      %v1661 = vadd.f32 0.0, %v1660
      %v1662 = vpop.f32.mrb[0].mxu0
      %v1663 = vpop.f32.mrb[0].mxu0
      %v1664 = vadd.f32 0.0, %v1663
      %v1665 = vpop.f32.mrb[0].mxu0
      %1666 = vmatprep.mubr.bf16.mxu0 %v1339
      %1667 = vmatmul.mubr.bf16.gmra.mrb[0].mxu0 %v1338
      %v1668 = vpop.f32.mrb[0].mxu0
      %v1669 = vpop.f32.mrb[0].mxu0
      %v1670 = vpop.f32.mrb[0].mxu0
      %v1671 = vadd.f32 0.0, %v1670
      %v1672 = vpop.f32.mrb[0].mxu0
      %1673 = vmatprep.mubr.bf16.mxu0 %v1342
      %1674 = vmatmul.mubr.bf16.gmra.mrb[0].mxu0 %v1341
      %v1675 = vpop.f32.mrb[0].mxu0
      %v1676 = vadd.f32 0.0, %v1675
      %v1677 = vpop.f32.mrb[0].mxu0
      %v1678 = vpop.f32.mrb[0].mxu0
      %v1679 = vpop.f32.mrb[0].mxu0
      %1680 = vmatprep.mubr.bf16.mxu0 %v1345
      %1681 = vmatmul.mubr.bf16.gmra.mrb[0].mxu0 %v1344
      %v1682 = vpop.f32.mrb[0].mxu0
      %v1683 = vadd.f32 0.0, %v1682
      %v1684 = vpop.f32.mrb[0].mxu0
      %v1685 = vpop.f32.mrb[0].mxu0
      %v1686 = vadd.f32 0.0, %v1685
      %v1687 = vpop.f32.mrb[0].mxu0
      %1688 = vmatprep.mubr.bf16.mxu0 %v1348
      %1689 = vmatmul.mubr.bf16.gmra.mrb[0].mxu0 %v1347
      %v1690 = vpop.f32.mrb[0].mxu0
      %v1691 = vpop.f32.mrb[0].mxu0
      %v1692 = vpop.f32.mrb[0].mxu0
      %v1693 = vadd.f32 0.0, %v1692
      %v1694 = vpop.f32.mrb[0].mxu0
      %1695 = vmatprep.mubr.bf16.mxu0 %v1351
      %1696 = vmatmul.mubr.bf16.gmra.mrb[0].mxu0 %v1350
      %v1697 = vpop.f32.mrb[0].mxu0
      %v1698 = vadd.f32 0.0, %v1697
      %v1699 = vpop.f32.mrb[0].mxu0
      %v1700 = vpop.f32.mrb[0].mxu0
      %v1701 = vpop.f32.mrb[0].mxu0
      %1702 = vmatprep.mubr.bf16.mxu0 %v1354
      %1703 = vmatmul.mubr.bf16.gmra.mrb[0].mxu0 %v1353
      %v1704 = vpop.f32.mrb[0].mxu0
      %v1705 = vadd.f32 0.0, %v1704
      %v1706 = vpop.f32.mrb[0].mxu0
      %v1707 = vpop.f32.mrb[0].mxu0
      %v1708 = vadd.f32 0.0, %v1707
      %v1709 = vpop.f32.mrb[0].mxu0
      %1710 = vmatprep.mubr.bf16.mxu0 %v1357
      %1711 = vmatmul.mubr.bf16.gmra.mrb[0].mxu0 %v1356
      %v1712 = vpop.f32.mrb[0].mxu0
      %v1713 = vpop.f32.mrb[0].mxu0
      %v1714 = vpop.f32.mrb[0].mxu0
      %v1715 = vadd.f32 0.0, %v1714
      %v1716 = vpop.f32.mrb[0].mxu0
      %1717 = vmatprep.mubr.bf16.mxu0 %v1360
      %1718 = vmatmul.mubr.bf16.gmra.mrb[0].mxu0 %v1359
      %v1719 = vpop.f32.mrb[0].mxu0
      %v1720 = vadd.f32 0.0, %v1719
      %v1721 = vpop.f32.mrb[0].mxu0
      %v1722 = vpop.f32.mrb[0].mxu0
      %v1723 = vpop.f32.mrb[0].mxu0
      %1724 = vmatprep.mubr.bf16.mxu0 %v1363
      %1725 = vmatmul.mubr.bf16.gmra.mrb[0].mxu0 %v1362
      %v1726 = vpop.f32.mrb[0].mxu0
      %v1727 = vadd.f32 0.0, %v1726
      %v1728 = vpop.f32.mrb[0].mxu0
      %v1729 = vpop.f32.mrb[0].mxu0
      %v1730 = vadd.f32 0.0, %v1729
      %v1731 = vpop.f32.mrb[0].mxu0
      %1732 = vmatprep.mubr.bf16.mxu0 %v1366
      %1733 = vmatmul.mubr.bf16.gmra.mrb[0].mxu0 %v1365
      %v1734 = vpop.f32.mrb[0].mxu0
      %v1735 = vpop.f32.mrb[0].mxu0
      %v1736 = vpop.f32.mrb[0].mxu0
      %v1737 = vadd.f32 0.0, %v1736
      %v1738 = vpop.f32.mrb[0].mxu0
      %1739 = vmatprep.mubr.bf16.mxu0 %v1369
      %1740 = vmatmul.mubr.bf16.gmra.mrb[0].mxu0 %v1368
      %v1741 = vpop.f32.mrb[0].mxu0
      %v1742 = vadd.f32 0.0, %v1741
      %v1743 = vpop.f32.mrb[0].mxu0
      %v1744 = vpop.f32.mrb[0].mxu0
      %v1745 = vpop.f32.mrb[0].mxu0
      %1746 = vmatprep.mubr.bf16.mxu0 %v1372
      %1747 = vmatmul.mubr.bf16.gmra.mrb[0].mxu0 %v1371
      %v1748 = vpop.f32.mrb[0].mxu0
      %v1749 = vadd.f32 0.0, %v1748
      %v1750 = vpop.f32.mrb[0].mxu0
      %v1751 = vpop.f32.mrb[0].mxu0
      %v1752 = vadd.f32 0.0, %v1751
      %v1753 = vpop.f32.mrb[0].mxu0
      %1754 = vmatprep.mubr.bf16.mxu0 %v1375
      %1755 = vmatmul.mubr.bf16.gmra.mrb[0].mxu0 %v1374
      %v1756 = vpop.f32.mrb[0].mxu0
      %v1757 = vpop.f32.mrb[0].mxu0
      %v1758 = vpop.f32.mrb[0].mxu0
      %v1759 = vadd.f32 0.0, %v1758
      %v1760 = vpop.f32.mrb[0].mxu0
      %1761 = vmatprep.mubr.bf16.mxu0 %v1378
      %1762 = vmatmul.mubr.bf16.gmra.mrb[0].mxu0 %v1377
      %v1763 = vpop.f32.mrb[0].mxu0
      %v1764 = vadd.f32 0.0, %v1763
      %v1765 = vpop.f32.mrb[0].mxu0
      %v1766 = vpop.f32.mrb[0].mxu0
      %v1767 = vpop.f32.mrb[0].mxu0
      %1768 = vmatprep.mubr.bf16.mxu0 %v1381
      %1769 = vmatmul.mubr.bf16.gmra.mrb[0].mxu0 %v1380
      %v1770 = vpop.f32.mrb[0].mxu0
      %v1771 = vadd.f32 0.0, %v1770
      %v1772 = vpop.f32.mrb[0].mxu0
      %v1773 = vpop.f32.mrb[0].mxu0
      %v1774 = vadd.f32 0.0, %v1773
      %v1775 = vpop.f32.mrb[0].mxu0
      %1776 = vmatprep.mubr.bf16.mxu0 %v1384
      %1777 = vmatmul.mubr.bf16.gmra.mrb[0].mxu0 %v1383
      %v1778 = vpop.f32.mrb[0].mxu0
      %v1779 = vpop.f32.mrb[0].mxu0
      %v1780 = vpop.f32.mrb[0].mxu0
      %v1781 = vadd.f32 0.0, %v1780
      %v1782 = vpop.f32.mrb[0].mxu0
      %1783 = vmatprep.mubr.bf16.mxu0 %v1387
      %1784 = vmatmul.mubr.bf16.gmra.mrb[0].mxu0 %v1386
      %v1785 = vpop.f32.mrb[0].mxu0
      %v1786 = vadd.f32 0.0, %v1785
      %v1787 = vpop.f32.mrb[0].mxu0
      %v1788 = vpop.f32.mrb[0].mxu0
      %v1789 = vpop.f32.mrb[0].mxu0
      %1790 = vdwg.mxu0
      %1791 = vmatprep.subr.bf16.mxu0 0
      %1792 = vmatpush1.bf16.msra.mxu0 %v1550
      %1793 = vmatprep.subr.bf16.mxu0 0
      %1794 = vmatpush1.bf16.msra.mxu0 %v1551
      %1795 = vmatprep.subr.bf16.mxu0 0
      %1796 = vmatpush1.bf16.msra.mxu0 %v1552
      %1797 = vmatprep.subr.bf16.mxu0 0
      %1798 = vmatpush1.bf16.msra.mxu0 %v1553
      %1799 = vmatprep.subr.bf16.mxu0 0
      %1800 = vmatpush1.bf16.msra.mxu0 %v1554
      %1801 = vmatprep.subr.bf16.mxu0 0
      %1802 = vmatpush1.bf16.msra.mxu0 %v1555
      %1803 = vmatprep.subr.bf16.mxu0 0
      %1804 = vmatpush1.bf16.msra.mxu0 %v1556
      %1805 = vmatprep.subr.bf16.mxu0 0
      %1806 = vmatpush1.bf16.msra.mxu0 %v1557
      %1807 = vmatprep.subr.bf16.mxu0 0
      %1808 = vmatpush1.bf16.msra.mxu0 0
      %1809 = vmatprep.subr.bf16.mxu0 0
      %1810 = vmatpush1.bf16.msra.mxu0 0
      %1811 = vmatprep.subr.bf16.mxu0 0
      %1812 = vmatpush1.bf16.msra.mxu0 0
      %1813 = vmatprep.subr.bf16.mxu0 0
      %1814 = vmatpush1.bf16.msra.mxu0 0
      %1815 = vmatprep.subr.bf16.mxu0 0
      %1816 = vmatpush1.bf16.msra.mxu0 0
      %1817 = vmatprep.subr.bf16.mxu0 0
      %1818 = vmatpush1.bf16.msra.mxu0 0
      %1819 = vmatprep.subr.bf16.mxu0 0
      %1820 = vmatpush1.bf16.msra.mxu0 0
      %1821 = vmatprep.subr.bf16.mxu0 0
      %1822 = vmatpush1.bf16.msra.mxu0 0
      %1823 = vmatprep.mubr.bf16.mxu0 0
      %1824 = vmatmul.mubr.bf16.gmra.mrb[0].mxu0 %v1319
      %v1825 = vpop.f32.mrb[0].mxu0
      %v1826 = vadd.f32 %v1617, %v1825
      %v1827 = vpop.f32.mrb[0].mxu0
      %v1828 = vpop.f32.mrb[0].mxu0
      %v1829 = vadd.f32 %v1620, %v1828
      %v1830 = vpop.f32.mrb[0].mxu0
      %1831 = vmatprep.mubr.bf16.mxu0 0
      %1832 = vmatmul.mubr.bf16.gmra.mrb[0].mxu0 %v1322
      %v1833 = vpop.f32.mrb[0].mxu0
      %v1834 = vpop.f32.mrb[0].mxu0
      %v1835 = vpop.f32.mrb[0].mxu0
      %v1836 = vadd.f32 %v1627, %v1835
      %v1837 = vpop.f32.mrb[0].mxu0
      %1838 = vmatprep.mubr.bf16.mxu0 0
      %1839 = vmatmul.mubr.bf16.gmra.mrb[0].mxu0 %v1325
      %v1840 = vpop.f32.mrb[0].mxu0
      %v1841 = vadd.f32 %v1632, %v1840
      %v1842 = vpop.f32.mrb[0].mxu0
      %v1843 = vpop.f32.mrb[0].mxu0
      %v1844 = vpop.f32.mrb[0].mxu0
      %1845 = vmatprep.mubr.bf16.mxu0 0
      %1846 = vmatmul.mubr.bf16.gmra.mrb[0].mxu0 %v1328
      %v1847 = vpop.f32.mrb[0].mxu0
      %v1848 = vadd.f32 %v1639, %v1847
      %v1849 = vpop.f32.mrb[0].mxu0
      %v1850 = vpop.f32.mrb[0].mxu0
      %v1851 = vadd.f32 %v1642, %v1850
      %v1852 = vpop.f32.mrb[0].mxu0
      %1853 = vmatprep.mubr.bf16.mxu0 0
      %1854 = vmatmul.mubr.bf16.gmra.mrb[0].mxu0 %v1331
      %v1855 = vpop.f32.mrb[0].mxu0
      %v1856 = vpop.f32.mrb[0].mxu0
      %v1857 = vpop.f32.mrb[0].mxu0
      %v1858 = vadd.f32 %v1649, %v1857
      %v1859 = vpop.f32.mrb[0].mxu0
      %1860 = vmatprep.mubr.bf16.mxu0 0
      %1861 = vmatmul.mubr.bf16.gmra.mrb[0].mxu0 %v1334
      %v1862 = vpop.f32.mrb[0].mxu0
      %v1863 = vadd.f32 %v1654, %v1862
      %v1864 = vpop.f32.mrb[0].mxu0
      %v1865 = vpop.f32.mrb[0].mxu0
      %v1866 = vpop.f32.mrb[0].mxu0
      %1867 = vmatprep.mubr.bf16.mxu0 0
      %1868 = vmatmul.mubr.bf16.gmra.mrb[0].mxu0 %v1337
      %v1869 = vpop.f32.mrb[0].mxu0
      %v1870 = vadd.f32 %v1661, %v1869
      %v1871 = vpop.f32.mrb[0].mxu0
      %v1872 = vpop.f32.mrb[0].mxu0
      %v1873 = vadd.f32 %v1664, %v1872
      %v1874 = vpop.f32.mrb[0].mxu0
      %1875 = vmatprep.mubr.bf16.mxu0 0
      %1876 = vmatmul.mubr.bf16.gmra.mrb[0].mxu0 %v1340
      %v1877 = vpop.f32.mrb[0].mxu0
      %v1878 = vpop.f32.mrb[0].mxu0
      %v1879 = vpop.f32.mrb[0].mxu0
      %v1880 = vadd.f32 %v1671, %v1879
      %v1881 = vpop.f32.mrb[0].mxu0
      %1882 = vmatprep.mubr.bf16.mxu0 0
      %1883 = vmatmul.mubr.bf16.gmra.mrb[0].mxu0 %v1343
      %v1884 = vpop.f32.mrb[0].mxu0
      %v1885 = vadd.f32 %v1676, %v1884
      %v1886 = vpop.f32.mrb[0].mxu0
      %v1887 = vpop.f32.mrb[0].mxu0
      %v1888 = vpop.f32.mrb[0].mxu0
      %1889 = vmatprep.mubr.bf16.mxu0 0
      %1890 = vmatmul.mubr.bf16.gmra.mrb[0].mxu0 %v1346
      %v1891 = vpop.f32.mrb[0].mxu0
      %v1892 = vadd.f32 %v1683, %v1891
      %v1893 = vpop.f32.mrb[0].mxu0
      %v1894 = vpop.f32.mrb[0].mxu0
      %v1895 = vadd.f32 %v1686, %v1894
      %v1896 = vpop.f32.mrb[0].mxu0
      %1897 = vmatprep.mubr.bf16.mxu0 0
      %1898 = vmatmul.mubr.bf16.gmra.mrb[0].mxu0 %v1349
      %v1899 = vpop.f32.mrb[0].mxu0
      %v1900 = vpop.f32.mrb[0].mxu0
      %v1901 = vpop.f32.mrb[0].mxu0
      %v1902 = vadd.f32 %v1693, %v1901
      %v1903 = vpop.f32.mrb[0].mxu0
      %1904 = vmatprep.mubr.bf16.mxu0 0
      %1905 = vmatmul.mubr.bf16.gmra.mrb[0].mxu0 %v1352
      %v1906 = vpop.f32.mrb[0].mxu0
      %v1907 = vadd.f32 %v1698, %v1906
      %v1908 = vpop.f32.mrb[0].mxu0
      %v1909 = vpop.f32.mrb[0].mxu0
      %v1910 = vpop.f32.mrb[0].mxu0
      %1911 = vmatprep.mubr.bf16.mxu0 0
      %1912 = vmatmul.mubr.bf16.gmra.mrb[0].mxu0 %v1355
      %v1913 = vpop.f32.mrb[0].mxu0
      %v1914 = vadd.f32 %v1705, %v1913
      %v1915 = vpop.f32.mrb[0].mxu0
      %v1916 = vpop.f32.mrb[0].mxu0
      %v1917 = vadd.f32 %v1708, %v1916
      %v1918 = vpop.f32.mrb[0].mxu0
      %1919 = vmatprep.mubr.bf16.mxu0 0
      %1920 = vmatmul.mubr.bf16.gmra.mrb[0].mxu0 %v1358
      %v1921 = vpop.f32.mrb[0].mxu0
      %v1922 = vpop.f32.mrb[0].mxu0
      %v1923 = vpop.f32.mrb[0].mxu0
      %v1924 = vadd.f32 %v1715, %v1923
      %v1925 = vpop.f32.mrb[0].mxu0
      %1926 = vmatprep.mubr.bf16.mxu0 0
      %1927 = vmatmul.mubr.bf16.gmra.mrb[0].mxu0 %v1361
      %v1928 = vpop.f32.mrb[0].mxu0
      %v1929 = vadd.f32 %v1720, %v1928
      %v1930 = vpop.f32.mrb[0].mxu0
      %v1931 = vpop.f32.mrb[0].mxu0
      %v1932 = vpop.f32.mrb[0].mxu0
      %1933 = vmatprep.mubr.bf16.mxu0 0
      %1934 = vmatmul.mubr.bf16.gmra.mrb[0].mxu0 %v1364
      %v1935 = vpop.f32.mrb[0].mxu0
      %v1936 = vadd.f32 %v1727, %v1935
      %v1937 = vpop.f32.mrb[0].mxu0
      %v1938 = vpop.f32.mrb[0].mxu0
      %v1939 = vadd.f32 %v1730, %v1938
      %v1940 = vpop.f32.mrb[0].mxu0
      %1941 = vmatprep.mubr.bf16.mxu0 0
      %1942 = vmatmul.mubr.bf16.gmra.mrb[0].mxu0 %v1367
      %v1943 = vpop.f32.mrb[0].mxu0
      %v1944 = vpop.f32.mrb[0].mxu0
      %v1945 = vpop.f32.mrb[0].mxu0
      %v1946 = vadd.f32 %v1737, %v1945
      %v1947 = vpop.f32.mrb[0].mxu0
      %1948 = vmatprep.mubr.bf16.mxu0 0
      %1949 = vmatmul.mubr.bf16.gmra.mrb[0].mxu0 %v1370
      %v1950 = vpop.f32.mrb[0].mxu0
      %v1951 = vadd.f32 %v1742, %v1950
      %v1952 = vpop.f32.mrb[0].mxu0
      %v1953 = vpop.f32.mrb[0].mxu0
      %v1954 = vpop.f32.mrb[0].mxu0
      %1955 = vmatprep.mubr.bf16.mxu0 0
      %1956 = vmatmul.mubr.bf16.gmra.mrb[0].mxu0 %v1373
      %v1957 = vpop.f32.mrb[0].mxu0
      %v1958 = vadd.f32 %v1749, %v1957
      %v1959 = vpop.f32.mrb[0].mxu0
      %v1960 = vpop.f32.mrb[0].mxu0
      %v1961 = vadd.f32 %v1752, %v1960
      %v1962 = vpop.f32.mrb[0].mxu0
      %1963 = vmatprep.mubr.bf16.mxu0 0
      %1964 = vmatmul.mubr.bf16.gmra.mrb[0].mxu0 %v1376
      %v1965 = vpop.f32.mrb[0].mxu0
      %v1966 = vpop.f32.mrb[0].mxu0
      %v1967 = vpop.f32.mrb[0].mxu0
      %v1968 = vadd.f32 %v1759, %v1967
      %v1969 = vpop.f32.mrb[0].mxu0
      %1970 = vmatprep.mubr.bf16.mxu0 0
      %1971 = vmatmul.mubr.bf16.gmra.mrb[0].mxu0 %v1379
      %v1972 = vpop.f32.mrb[0].mxu0
      %v1973 = vadd.f32 %v1764, %v1972
      %v1974 = vpop.f32.mrb[0].mxu0
      %v1975 = vpop.f32.mrb[0].mxu0
      %v1976 = vpop.f32.mrb[0].mxu0
      %1977 = vmatprep.mubr.bf16.mxu0 0
      %1978 = vmatmul.mubr.bf16.gmra.mrb[0].mxu0 %v1382
      %v1979 = vpop.f32.mrb[0].mxu0
      %v1980 = vadd.f32 %v1771, %v1979
      %v1981 = vpop.f32.mrb[0].mxu0
      %v1982 = vpop.f32.mrb[0].mxu0
      %v1983 = vadd.f32 %v1774, %v1982
      %v1984 = vpop.f32.mrb[0].mxu0
      %1985 = vmatprep.mubr.bf16.mxu0 0
      %1986 = vmatmul.mubr.bf16.gmra.mrb[0].mxu0 %v1385
      %v1987 = vpop.f32.mrb[0].mxu0
      %v1988 = vpop.f32.mrb[0].mxu0
      %v1989 = vpop.f32.mrb[0].mxu0
      %v1990 = vadd.f32 %v1781, %v1989
      %v1991 = vpop.f32.mrb[0].mxu0
      %1992 = vmatprep.mubr.bf16.mxu0 0
      %1993 = vmatmul.mubr.bf16.gmra.mrb[0].mxu0 %v1388
      %v1994 = vpop.f32.mrb[0].mxu0
      %v1995 = vadd.f32 %v1786, %v1994
      %v1996 = vpop.f32.mrb[0].mxu0
      %v1997 = vpop.f32.mrb[0].mxu0
      %v1998 = vpop.f32.mrb[0].mxu0
      %1999 = vdwg.mxu0
      %v2048 = vunpack.c.l.b16 %v1125
      %v2049 = vunpack.c.l.b16 %v1126
      %v2050 = vunpack.c.l.b16 %v1127
      %v2051 = vunpack.c.l.b16 %v1128
      %v2052 = vunpack.c.l.b16 %v1129
      %v2053 = vunpack.c.l.b16 %v1130
      %v2054 = vunpack.c.l.b16 %v1131
      %v2055 = vunpack.c.l.b16 %v1132
      %v2056 = vunpack.c.l.b16 %v1133
      %v2057 = vunpack.c.l.b16 %v1134
      %v2058 = vunpack.c.l.b16 %v1135
      %v2059 = vunpack.c.l.b16 %v1136
      %v2060 = vunpack.c.l.b16 %v1137
      %v2061 = vunpack.c.l.b16 %v1138
      %v2062 = vunpack.c.l.b16 %v1139
      %v2063 = vunpack.c.l.b16 %v1140
      %v2064 = vunpack.c.l.b16 %v1141
      %v2065 = vunpack.c.l.b16 %v1142
      %v2066 = vunpack.c.l.b16 %v1143
      %v2067 = vunpack.c.l.b16 %v1144
      %v2068 = vunpack.c.l.b16 %v1145
      %v2069 = vunpack.c.l.b16 %v1146
      %v2070 = vunpack.c.l.b16 %v1147
      %v2071 = vunpack.c.l.b16 %v1148
      %v2072 = vunpack.c.l.b16 %v1149
      %v2073 = vunpack.c.l.b16 %v1150
      %v2074 = vunpack.c.l.b16 %v1151
      %v2075 = vunpack.c.l.b16 %v1152
      %v2076 = vunpack.c.l.b16 %v1153
      %v2077 = vunpack.c.l.b16 %v1154
      %v2078 = vunpack.c.l.b16 %v1155
      %v2079 = vunpack.c.l.b16 %v1156
      %v2080 = vunpack.c.l.b16 %v1157
      %v2081 = vunpack.c.l.b16 %v1158
      %v2082 = vunpack.c.l.b16 %v1159
      %v2083 = vunpack.c.l.b16 %v1160
      %v2084 = vunpack.c.l.b16 %v1161
      %v2085 = vunpack.c.l.b16 %v1162
      %v2086 = vunpack.c.l.b16 %v1163
      %v2087 = vunpack.c.l.b16 %v1164
      %v2088 = vunpack.c.l.b16 %v1165
      %v2089 = vunpack.c.l.b16 %v1166
      %v2090 = vunpack.c.l.b16 %v1167
      %v2091 = vunpack.c.l.b16 %v1168
      %v2092 = vunpack.c.l.b16 %v1169
      %v2093 = vunpack.c.l.b16 %v1170
      %v2094 = vunpack.c.l.b16 %v1171
      %v2095 = vunpack.c.l.b16 %v1172
      %v2096 = vpack.c.b16 %v2049, %v2048
      %v2097 = vpack.c.b16 %v2051, %v2050
      %v2098 = vpack.c.b16 %v2053, %v2052
      %v2099 = vpack.c.b16 %v2055, %v2054
      %v2100 = vpack.c.b16 %v2057, %v2056
      %v2101 = vpack.c.b16 %v2059, %v2058
      %v2102 = vpack.c.b16 %v2061, %v2060
      %v2103 = vpack.c.b16 %v2063, %v2062
      %v2104 = vpack.c.b16 %v2065, %v2064
      %v2105 = vpack.c.b16 %v2067, %v2066
      %v2106 = vpack.c.b16 %v2069, %v2068
      %v2107 = vpack.c.b16 %v2071, %v2070
      %v2108 = vpack.c.b16 %v2073, %v2072
      %v2109 = vpack.c.b16 %v2075, %v2074
      %v2110 = vpack.c.b16 %v2077, %v2076
      %v2111 = vpack.c.b16 %v2079, %v2078
      %v2112 = vpack.c.b16 %v2081, %v2080
      %v2113 = vpack.c.b16 %v2083, %v2082
      %v2114 = vpack.c.b16 %v2085, %v2084
      %v2115 = vpack.c.b16 %v2087, %v2086
      %v2116 = vpack.c.b16 %v2089, %v2088
      %v2117 = vpack.c.b16 %v2091, %v2090
      %v2118 = vpack.c.b16 %v2093, %v2092
      %v2119 = vpack.c.b16 %v2095, %v2094
      %2144 = vmatprep.subr.bf16.mxu0 0
      %2145 = vmatpush1.bf16.msra.mxu0 %v2096
      %2146 = vmatprep.subr.bf16.mxu0 0
      %2147 = vmatpush1.bf16.msra.mxu0 %v2097
      %2148 = vmatprep.subr.bf16.mxu0 0
      %2149 = vmatpush1.bf16.msra.mxu0 %v2098
      %2150 = vmatprep.subr.bf16.mxu0 0
      %2151 = vmatpush1.bf16.msra.mxu0 %v2099
      %2152 = vmatprep.subr.bf16.mxu0 0
      %2153 = vmatpush1.bf16.msra.mxu0 %v2100
      %2154 = vmatprep.subr.bf16.mxu0 0
      %2155 = vmatpush1.bf16.msra.mxu0 %v2101
      %2156 = vmatprep.subr.bf16.mxu0 0
      %2157 = vmatpush1.bf16.msra.mxu0 %v2102
      %2158 = vmatprep.subr.bf16.mxu0 0
      %2159 = vmatpush1.bf16.msra.mxu0 %v2103
      %2160 = vmatprep.subr.bf16.mxu0 0
      %2161 = vmatpush1.bf16.msra.mxu0 %v2104
      %2162 = vmatprep.subr.bf16.mxu0 0
      %2163 = vmatpush1.bf16.msra.mxu0 %v2105
      %2164 = vmatprep.subr.bf16.mxu0 0
      %2165 = vmatpush1.bf16.msra.mxu0 %v2106
      %2166 = vmatprep.subr.bf16.mxu0 0
      %2167 = vmatpush1.bf16.msra.mxu0 %v2107
      %2168 = vmatprep.subr.bf16.mxu0 0
      %2169 = vmatpush1.bf16.msra.mxu0 %v2108
      %2170 = vmatprep.subr.bf16.mxu0 0
      %2171 = vmatpush1.bf16.msra.mxu0 %v2109
      %2172 = vmatprep.subr.bf16.mxu0 0
      %2173 = vmatpush1.bf16.msra.mxu0 %v2110
      %2174 = vmatprep.subr.bf16.mxu0 0
      %2175 = vmatpush1.bf16.msra.mxu0 %v2111
      %2176 = vmatprep.mubr.bf16.mxu0 %v1054
      %2177 = vmatmul.mubr.bf16.gmra.mrb[0].mxu0 %v1053
      %v2178 = vpop.f32.mrb[0].mxu0
      %v2179 = vadd.f32 %v1826, %v2178
      %v2180 = vpop.f32.mrb[0].mxu0
      %v2181 = vpop.f32.mrb[0].mxu0
      %v2182 = vadd.f32 %v1829, %v2181
      %v2183 = vpop.f32.mrb[0].mxu0
      %2184 = vmatprep.mubr.bf16.mxu0 %v1057
      %2185 = vmatmul.mubr.bf16.gmra.mrb[0].mxu0 %v1056
      %v2186 = vpop.f32.mrb[0].mxu0
      %v2187 = vpop.f32.mrb[0].mxu0
      %v2188 = vpop.f32.mrb[0].mxu0
      %v2189 = vadd.f32 %v1836, %v2188
      %v2190 = vpop.f32.mrb[0].mxu0
      %2191 = vmatprep.mubr.bf16.mxu0 %v1060
      %2192 = vmatmul.mubr.bf16.gmra.mrb[0].mxu0 %v1059
      %v2193 = vpop.f32.mrb[0].mxu0
      %v2194 = vadd.f32 %v1841, %v2193
      %v2195 = vpop.f32.mrb[0].mxu0
      %v2196 = vpop.f32.mrb[0].mxu0
      %v2197 = vpop.f32.mrb[0].mxu0
      %2198 = vmatprep.mubr.bf16.mxu0 %v1063
      %2199 = vmatmul.mubr.bf16.gmra.mrb[0].mxu0 %v1062
      %v2200 = vpop.f32.mrb[0].mxu0
      %v2201 = vadd.f32 %v1848, %v2200
      %v2202 = vpop.f32.mrb[0].mxu0
      %v2203 = vpop.f32.mrb[0].mxu0
      %v2204 = vadd.f32 %v1851, %v2203
      %v2205 = vpop.f32.mrb[0].mxu0
      %2206 = vmatprep.mubr.bf16.mxu0 %v1066
      %2207 = vmatmul.mubr.bf16.gmra.mrb[0].mxu0 %v1065
      %v2208 = vpop.f32.mrb[0].mxu0
      %v2209 = vpop.f32.mrb[0].mxu0
      %v2210 = vpop.f32.mrb[0].mxu0
      %v2211 = vadd.f32 %v1858, %v2210
      %v2212 = vpop.f32.mrb[0].mxu0
      %2213 = vmatprep.mubr.bf16.mxu0 %v1069
      %2214 = vmatmul.mubr.bf16.gmra.mrb[0].mxu0 %v1068
      %v2215 = vpop.f32.mrb[0].mxu0
      %v2216 = vadd.f32 %v1863, %v2215
      %v2217 = vpop.f32.mrb[0].mxu0
      %v2218 = vpop.f32.mrb[0].mxu0
      %v2219 = vpop.f32.mrb[0].mxu0
      %2220 = vmatprep.mubr.bf16.mxu0 %v1072
      %2221 = vmatmul.mubr.bf16.gmra.mrb[0].mxu0 %v1071
      %v2222 = vpop.f32.mrb[0].mxu0
      %v2223 = vadd.f32 %v1870, %v2222
      %v2224 = vpop.f32.mrb[0].mxu0
      %v2225 = vpop.f32.mrb[0].mxu0
      %v2226 = vadd.f32 %v1873, %v2225
      %v2227 = vpop.f32.mrb[0].mxu0
      %2228 = vmatprep.mubr.bf16.mxu0 %v1075
      %2229 = vmatmul.mubr.bf16.gmra.mrb[0].mxu0 %v1074
      %v2230 = vpop.f32.mrb[0].mxu0
      %v2231 = vpop.f32.mrb[0].mxu0
      %v2232 = vpop.f32.mrb[0].mxu0
      %v2233 = vadd.f32 %v1880, %v2232
      %v2234 = vpop.f32.mrb[0].mxu0
      %2235 = vmatprep.mubr.bf16.mxu0 %v1078
      %2236 = vmatmul.mubr.bf16.gmra.mrb[0].mxu0 %v1077
      %v2237 = vpop.f32.mrb[0].mxu0
      %v2238 = vadd.f32 %v1885, %v2237
      %v2239 = vpop.f32.mrb[0].mxu0
      %v2240 = vpop.f32.mrb[0].mxu0
      %v2241 = vpop.f32.mrb[0].mxu0
      %2242 = vmatprep.mubr.bf16.mxu0 %v1081
      %2243 = vmatmul.mubr.bf16.gmra.mrb[0].mxu0 %v1080
      %v2244 = vpop.f32.mrb[0].mxu0
      %v2245 = vadd.f32 %v1892, %v2244
      %v2246 = vpop.f32.mrb[0].mxu0
      %v2247 = vpop.f32.mrb[0].mxu0
      %v2248 = vadd.f32 %v1895, %v2247
      %v2249 = vpop.f32.mrb[0].mxu0
      %2250 = vmatprep.mubr.bf16.mxu0 %v1084
      %2251 = vmatmul.mubr.bf16.gmra.mrb[0].mxu0 %v1083
      %v2252 = vpop.f32.mrb[0].mxu0
      %v2253 = vpop.f32.mrb[0].mxu0
      %v2254 = vpop.f32.mrb[0].mxu0
      %v2255 = vadd.f32 %v1902, %v2254
      %v2256 = vpop.f32.mrb[0].mxu0
      %2257 = vmatprep.mubr.bf16.mxu0 %v1087
      %2258 = vmatmul.mubr.bf16.gmra.mrb[0].mxu0 %v1086
      %v2259 = vpop.f32.mrb[0].mxu0
      %v2260 = vadd.f32 %v1907, %v2259
      %v2261 = vpop.f32.mrb[0].mxu0
      %v2262 = vpop.f32.mrb[0].mxu0
      %v2263 = vpop.f32.mrb[0].mxu0
      %2264 = vmatprep.mubr.bf16.mxu0 %v1090
      %2265 = vmatmul.mubr.bf16.gmra.mrb[0].mxu0 %v1089
      %v2266 = vpop.f32.mrb[0].mxu0
      %v2267 = vadd.f32 %v1914, %v2266
      %v2268 = vpop.f32.mrb[0].mxu0
      %v2269 = vpop.f32.mrb[0].mxu0
      %v2270 = vadd.f32 %v1917, %v2269
      %v2271 = vpop.f32.mrb[0].mxu0
      %2272 = vmatprep.mubr.bf16.mxu0 %v1093
      %2273 = vmatmul.mubr.bf16.gmra.mrb[0].mxu0 %v1092
      %v2274 = vpop.f32.mrb[0].mxu0
      %v2275 = vpop.f32.mrb[0].mxu0
      %v2276 = vpop.f32.mrb[0].mxu0
      %v2277 = vadd.f32 %v1924, %v2276
      %v2278 = vpop.f32.mrb[0].mxu0
      %2279 = vmatprep.mubr.bf16.mxu0 %v1096
      %2280 = vmatmul.mubr.bf16.gmra.mrb[0].mxu0 %v1095
      %v2281 = vpop.f32.mrb[0].mxu0
      %v2282 = vadd.f32 %v1929, %v2281
      %v2283 = vpop.f32.mrb[0].mxu0
      %v2284 = vpop.f32.mrb[0].mxu0
      %v2285 = vpop.f32.mrb[0].mxu0
      %2286 = vmatprep.mubr.bf16.mxu0 %v1099
      %2287 = vmatmul.mubr.bf16.gmra.mrb[0].mxu0 %v1098
      %v2288 = vpop.f32.mrb[0].mxu0
      %v2289 = vadd.f32 %v1936, %v2288
      %v2290 = vpop.f32.mrb[0].mxu0
      %v2291 = vpop.f32.mrb[0].mxu0
      %v2292 = vadd.f32 %v1939, %v2291
      %v2293 = vpop.f32.mrb[0].mxu0
      %2294 = vmatprep.mubr.bf16.mxu0 %v1102
      %2295 = vmatmul.mubr.bf16.gmra.mrb[0].mxu0 %v1101
      %v2296 = vpop.f32.mrb[0].mxu0
      %v2297 = vpop.f32.mrb[0].mxu0
      %v2298 = vpop.f32.mrb[0].mxu0
      %v2299 = vadd.f32 %v1946, %v2298
      %v2300 = vpop.f32.mrb[0].mxu0
      %2301 = vmatprep.mubr.bf16.mxu0 %v1105
      %2302 = vmatmul.mubr.bf16.gmra.mrb[0].mxu0 %v1104
      %v2303 = vpop.f32.mrb[0].mxu0
      %v2304 = vadd.f32 %v1951, %v2303
      %v2305 = vpop.f32.mrb[0].mxu0
      %v2306 = vpop.f32.mrb[0].mxu0
      %v2307 = vpop.f32.mrb[0].mxu0
      %2308 = vmatprep.mubr.bf16.mxu0 %v1108
      %2309 = vmatmul.mubr.bf16.gmra.mrb[0].mxu0 %v1107
      %v2310 = vpop.f32.mrb[0].mxu0
      %v2311 = vadd.f32 %v1958, %v2310
      %v2312 = vpop.f32.mrb[0].mxu0
      %v2313 = vpop.f32.mrb[0].mxu0
      %v2314 = vadd.f32 %v1961, %v2313
      %v2315 = vpop.f32.mrb[0].mxu0
      %2316 = vmatprep.mubr.bf16.mxu0 %v1111
      %2317 = vmatmul.mubr.bf16.gmra.mrb[0].mxu0 %v1110
      %v2318 = vpop.f32.mrb[0].mxu0
      %v2319 = vpop.f32.mrb[0].mxu0
      %v2320 = vpop.f32.mrb[0].mxu0
      %v2321 = vadd.f32 %v1968, %v2320
      %v2322 = vpop.f32.mrb[0].mxu0
      %2323 = vmatprep.mubr.bf16.mxu0 %v1114
      %2324 = vmatmul.mubr.bf16.gmra.mrb[0].mxu0 %v1113
      %v2325 = vpop.f32.mrb[0].mxu0
      %v2326 = vadd.f32 %v1973, %v2325
      %v2327 = vpop.f32.mrb[0].mxu0
      %v2328 = vpop.f32.mrb[0].mxu0
      %v2329 = vpop.f32.mrb[0].mxu0
      %2330 = vmatprep.mubr.bf16.mxu0 %v1117
      %2331 = vmatmul.mubr.bf16.gmra.mrb[0].mxu0 %v1116
      %v2332 = vpop.f32.mrb[0].mxu0
      %v2333 = vadd.f32 %v1980, %v2332
      %v2334 = vpop.f32.mrb[0].mxu0
      %v2335 = vpop.f32.mrb[0].mxu0
      %v2336 = vadd.f32 %v1983, %v2335
      %v2337 = vpop.f32.mrb[0].mxu0
      %2338 = vmatprep.mubr.bf16.mxu0 %v1120
      %2339 = vmatmul.mubr.bf16.gmra.mrb[0].mxu0 %v1119
      %v2340 = vpop.f32.mrb[0].mxu0
      %v2341 = vpop.f32.mrb[0].mxu0
      %v2342 = vpop.f32.mrb[0].mxu0
      %v2343 = vadd.f32 %v1990, %v2342
      %v2344 = vpop.f32.mrb[0].mxu0
      %2345 = vmatprep.mubr.bf16.mxu0 %v1123
      %2346 = vmatmul.mubr.bf16.gmra.mrb[0].mxu0 %v1122
      %v2347 = vpop.f32.mrb[0].mxu0
      %v2348 = vadd.f32 %v1995, %v2347
      %v2349 = vpop.f32.mrb[0].mxu0
      %v2350 = vpop.f32.mrb[0].mxu0
      %v2351 = vpop.f32.mrb[0].mxu0
      %2352 = vdwg.mxu0
      %2353 = vmatprep.subr.bf16.mxu0 0
      %2354 = vmatpush1.bf16.msra.mxu0 %v2112
      %2355 = vmatprep.subr.bf16.mxu0 0
      %2356 = vmatpush1.bf16.msra.mxu0 %v2113
      %2357 = vmatprep.subr.bf16.mxu0 0
      %2358 = vmatpush1.bf16.msra.mxu0 %v2114
      %2359 = vmatprep.subr.bf16.mxu0 0
      %2360 = vmatpush1.bf16.msra.mxu0 %v2115
      %2361 = vmatprep.subr.bf16.mxu0 0
      %2362 = vmatpush1.bf16.msra.mxu0 %v2116
      %2363 = vmatprep.subr.bf16.mxu0 0
      %2364 = vmatpush1.bf16.msra.mxu0 %v2117
      %2365 = vmatprep.subr.bf16.mxu0 0
      %2366 = vmatpush1.bf16.msra.mxu0 %v2118
      %2367 = vmatprep.subr.bf16.mxu0 0
      %2368 = vmatpush1.bf16.msra.mxu0 %v2119
      %2369 = vmatprep.subr.bf16.mxu0 0
      %2370 = vmatpush1.bf16.msra.mxu0 0
      %2371 = vmatprep.subr.bf16.mxu0 0
      %2372 = vmatpush1.bf16.msra.mxu0 0
      %2373 = vmatprep.subr.bf16.mxu0 0
      %2374 = vmatpush1.bf16.msra.mxu0 0
      %2375 = vmatprep.subr.bf16.mxu0 0
      %2376 = vmatpush1.bf16.msra.mxu0 0
      %2377 = vmatprep.subr.bf16.mxu0 0
      %2378 = vmatpush1.bf16.msra.mxu0 0
      %2379 = vmatprep.subr.bf16.mxu0 0
      %2380 = vmatpush1.bf16.msra.mxu0 0
      %2381 = vmatprep.subr.bf16.mxu0 0
      %2382 = vmatpush1.bf16.msra.mxu0 0
      %2383 = vmatprep.subr.bf16.mxu0 0
      %2384 = vmatpush1.bf16.msra.mxu0 0
      %2385 = vmatprep.mubr.bf16.mxu0 0
      %2386 = vmatmul.mubr.bf16.gmra.mrb[0].mxu0 %v1055
      %v2387 = vpop.f32.mrb[0].mxu0
      %v2388 = vadd.f32 %v2179, %v2387
      %v2389 = vpop.f32.mrb[0].mxu0
      %v2390 = vpop.f32.mrb[0].mxu0
      %v2391 = vadd.f32 %v2182, %v2390
      %v2392 = vpop.f32.mrb[0].mxu0
      %2393 = vmatprep.mubr.bf16.mxu0 0
      %2394 = vmatmul.mubr.bf16.gmra.mrb[0].mxu0 %v1058
      %v2395 = vpop.f32.mrb[0].mxu0
      %v2396 = vpop.f32.mrb[0].mxu0
      %v2397 = vpop.f32.mrb[0].mxu0
      %v2398 = vadd.f32 %v2189, %v2397
      %v2399 = vpop.f32.mrb[0].mxu0
      %2400 = vmatprep.mubr.bf16.mxu0 0
      %2401 = vmatmul.mubr.bf16.gmra.mrb[0].mxu0 %v1061
      %v2402 = vpop.f32.mrb[0].mxu0
      %v2403 = vadd.f32 %v2194, %v2402
      %v2404 = vpop.f32.mrb[0].mxu0
      %v2405 = vpop.f32.mrb[0].mxu0
      %v2406 = vpop.f32.mrb[0].mxu0
      %2407 = vmatprep.mubr.bf16.mxu0 0
      %2408 = vmatmul.mubr.bf16.gmra.mrb[0].mxu0 %v1064
      %v2409 = vpop.f32.mrb[0].mxu0
      %v2410 = vadd.f32 %v2201, %v2409
      %v2411 = vpop.f32.mrb[0].mxu0
      %v2412 = vpop.f32.mrb[0].mxu0
      %v2413 = vadd.f32 %v2204, %v2412
      %v2414 = vpop.f32.mrb[0].mxu0
      %2415 = vmatprep.mubr.bf16.mxu0 0
      %2416 = vmatmul.mubr.bf16.gmra.mrb[0].mxu0 %v1067
      %v2417 = vpop.f32.mrb[0].mxu0
      %v2418 = vpop.f32.mrb[0].mxu0
      %v2419 = vpop.f32.mrb[0].mxu0
      %v2420 = vadd.f32 %v2211, %v2419
      %v2421 = vpop.f32.mrb[0].mxu0
      %2422 = vmatprep.mubr.bf16.mxu0 0
      %2423 = vmatmul.mubr.bf16.gmra.mrb[0].mxu0 %v1070
      %v2424 = vpop.f32.mrb[0].mxu0
      %v2425 = vadd.f32 %v2216, %v2424
      %v2426 = vpop.f32.mrb[0].mxu0
      %v2427 = vpop.f32.mrb[0].mxu0
      %v2428 = vpop.f32.mrb[0].mxu0
      %2429 = vmatprep.mubr.bf16.mxu0 0
      %2430 = vmatmul.mubr.bf16.gmra.mrb[0].mxu0 %v1073
      %v2431 = vpop.f32.mrb[0].mxu0
      %v2432 = vadd.f32 %v2223, %v2431
      %v2433 = vpop.f32.mrb[0].mxu0
      %v2434 = vpop.f32.mrb[0].mxu0
      %v2435 = vadd.f32 %v2226, %v2434
      %v2436 = vpop.f32.mrb[0].mxu0
      %2437 = vmatprep.mubr.bf16.mxu0 0
      %2438 = vmatmul.mubr.bf16.gmra.mrb[0].mxu0 %v1076
      %v2439 = vpop.f32.mrb[0].mxu0
      %v2440 = vpop.f32.mrb[0].mxu0
      %v2441 = vpop.f32.mrb[0].mxu0
      %v2442 = vadd.f32 %v2233, %v2441
      %v2443 = vpop.f32.mrb[0].mxu0
      %2444 = vmatprep.mubr.bf16.mxu0 0
      %2445 = vmatmul.mubr.bf16.gmra.mrb[0].mxu0 %v1079
      %v2446 = vpop.f32.mrb[0].mxu0
      %v2447 = vadd.f32 %v2238, %v2446
      %v2448 = vpop.f32.mrb[0].mxu0
      %v2449 = vpop.f32.mrb[0].mxu0
      %v2450 = vpop.f32.mrb[0].mxu0
      %2451 = vmatprep.mubr.bf16.mxu0 0
      %2452 = vmatmul.mubr.bf16.gmra.mrb[0].mxu0 %v1082
      %v2453 = vpop.f32.mrb[0].mxu0
      %v2454 = vadd.f32 %v2245, %v2453
      %v2455 = vpop.f32.mrb[0].mxu0
      %v2456 = vpop.f32.mrb[0].mxu0
      %v2457 = vadd.f32 %v2248, %v2456
      %v2458 = vpop.f32.mrb[0].mxu0
      %2459 = vmatprep.mubr.bf16.mxu0 0
      %2460 = vmatmul.mubr.bf16.gmra.mrb[0].mxu0 %v1085
      %v2461 = vpop.f32.mrb[0].mxu0
      %v2462 = vpop.f32.mrb[0].mxu0
      %v2463 = vpop.f32.mrb[0].mxu0
      %v2464 = vadd.f32 %v2255, %v2463
      %v2465 = vpop.f32.mrb[0].mxu0
      %2466 = vmatprep.mubr.bf16.mxu0 0
      %2467 = vmatmul.mubr.bf16.gmra.mrb[0].mxu0 %v1088
      %v2468 = vpop.f32.mrb[0].mxu0
      %v2469 = vadd.f32 %v2260, %v2468
      %v2470 = vpop.f32.mrb[0].mxu0
      %v2471 = vpop.f32.mrb[0].mxu0
      %v2472 = vpop.f32.mrb[0].mxu0
      %2473 = vmatprep.mubr.bf16.mxu0 0
      %2474 = vmatmul.mubr.bf16.gmra.mrb[0].mxu0 %v1091
      %v2475 = vpop.f32.mrb[0].mxu0
      %v2476 = vadd.f32 %v2267, %v2475
      %v2477 = vpop.f32.mrb[0].mxu0
      %v2478 = vpop.f32.mrb[0].mxu0
      %v2479 = vadd.f32 %v2270, %v2478
      %v2480 = vpop.f32.mrb[0].mxu0
      %2481 = vmatprep.mubr.bf16.mxu0 0
      %2482 = vmatmul.mubr.bf16.gmra.mrb[0].mxu0 %v1094
      %v2483 = vpop.f32.mrb[0].mxu0
      %v2484 = vpop.f32.mrb[0].mxu0
      %v2485 = vpop.f32.mrb[0].mxu0
      %v2486 = vadd.f32 %v2277, %v2485
      %v2487 = vpop.f32.mrb[0].mxu0
      %2488 = vmatprep.mubr.bf16.mxu0 0
      %2489 = vmatmul.mubr.bf16.gmra.mrb[0].mxu0 %v1097
      %v2490 = vpop.f32.mrb[0].mxu0
      %v2491 = vadd.f32 %v2282, %v2490
      %v2492 = vpop.f32.mrb[0].mxu0
      %v2493 = vpop.f32.mrb[0].mxu0
      %v2494 = vpop.f32.mrb[0].mxu0
      %2495 = vmatprep.mubr.bf16.mxu0 0
      %2496 = vmatmul.mubr.bf16.gmra.mrb[0].mxu0 %v1100
      %v2497 = vpop.f32.mrb[0].mxu0
      %v2498 = vadd.f32 %v2289, %v2497
      %v2499 = vpop.f32.mrb[0].mxu0
      %v2500 = vpop.f32.mrb[0].mxu0
      %v2501 = vadd.f32 %v2292, %v2500
      %v2502 = vpop.f32.mrb[0].mxu0
      %2503 = vmatprep.mubr.bf16.mxu0 0
      %2504 = vmatmul.mubr.bf16.gmra.mrb[0].mxu0 %v1103
      %v2505 = vpop.f32.mrb[0].mxu0
      %v2506 = vpop.f32.mrb[0].mxu0
      %v2507 = vpop.f32.mrb[0].mxu0
      %v2508 = vadd.f32 %v2299, %v2507
      %v2509 = vpop.f32.mrb[0].mxu0
      %2510 = vmatprep.mubr.bf16.mxu0 0
      %2511 = vmatmul.mubr.bf16.gmra.mrb[0].mxu0 %v1106
      %v2512 = vpop.f32.mrb[0].mxu0
      %v2513 = vadd.f32 %v2304, %v2512
      %v2514 = vpop.f32.mrb[0].mxu0
      %v2515 = vpop.f32.mrb[0].mxu0
      %v2516 = vpop.f32.mrb[0].mxu0
      %2517 = vmatprep.mubr.bf16.mxu0 0
      %2518 = vmatmul.mubr.bf16.gmra.mrb[0].mxu0 %v1109
      %v2519 = vpop.f32.mrb[0].mxu0
      %v2520 = vadd.f32 %v2311, %v2519
      %v2521 = vpop.f32.mrb[0].mxu0
      %v2522 = vpop.f32.mrb[0].mxu0
      %v2523 = vadd.f32 %v2314, %v2522
      %v2524 = vpop.f32.mrb[0].mxu0
      %2525 = vmatprep.mubr.bf16.mxu0 0
      %2526 = vmatmul.mubr.bf16.gmra.mrb[0].mxu0 %v1112
      %v2527 = vpop.f32.mrb[0].mxu0
      %v2528 = vpop.f32.mrb[0].mxu0
      %v2529 = vpop.f32.mrb[0].mxu0
      %v2530 = vadd.f32 %v2321, %v2529
      %v2531 = vpop.f32.mrb[0].mxu0
      %2532 = vmatprep.mubr.bf16.mxu0 0
      %2533 = vmatmul.mubr.bf16.gmra.mrb[0].mxu0 %v1115
      %v2534 = vpop.f32.mrb[0].mxu0
      %v2535 = vadd.f32 %v2326, %v2534
      %v2536 = vpop.f32.mrb[0].mxu0
      %v2537 = vpop.f32.mrb[0].mxu0
      %v2538 = vpop.f32.mrb[0].mxu0
      %2539 = vmatprep.mubr.bf16.mxu0 0
      %2540 = vmatmul.mubr.bf16.gmra.mrb[0].mxu0 %v1118
      %v2541 = vpop.f32.mrb[0].mxu0
      %v2542 = vadd.f32 %v2333, %v2541
      %v2543 = vpop.f32.mrb[0].mxu0
      %v2544 = vpop.f32.mrb[0].mxu0
      %v2545 = vadd.f32 %v2336, %v2544
      %v2546 = vpop.f32.mrb[0].mxu0
      %2547 = vmatprep.mubr.bf16.mxu0 0
      %2548 = vmatmul.mubr.bf16.gmra.mrb[0].mxu0 %v1121
      %v2549 = vpop.f32.mrb[0].mxu0
      %v2550 = vpop.f32.mrb[0].mxu0
      %v2551 = vpop.f32.mrb[0].mxu0
      %v2552 = vadd.f32 %v2343, %v2551
      %v2553 = vpop.f32.mrb[0].mxu0
      %2554 = vmatprep.mubr.bf16.mxu0 0
      %2555 = vmatmul.mubr.bf16.gmra.mrb[0].mxu0 %v1124
      %v2556 = vpop.f32.mrb[0].mxu0
      %v2557 = vadd.f32 %v2348, %v2556
      %v2558 = vpop.f32.mrb[0].mxu0
      %v2559 = vpop.f32.mrb[0].mxu0
      %v2560 = vpop.f32.mrb[0].mxu0
      %2561 = vdwg.mxu0
      %s2562 = scalar_lea.vmem [#allocation2], 144
      %v2563 = vld [vmem:[%s2562] sm:$0xff]
      %v2564 = vld [vmem:[%s2562 + $0x8] sm:$0xff]
      %v2565 = vld [vmem:[%s2562 + $0x10] sm:$0xff]
      %v2566 = vld [vmem:[%s2562 + $0x18] sm:$0xff]
      %v2567 = vld [vmem:[%s2562 + $0x20] sm:$0xff]
      %v2568 = vld [vmem:[%s2562 + $0x28] sm:$0xff]
      %v2569 = vld [vmem:[%s2562 + $0x30] sm:$0xff]
      %v2570 = vld [vmem:[%s2562 + $0x38] sm:$0xff]
      %v2571 = vld [vmem:[%s2562 + $0x40] sm:$0xff]
      %v2572 = vld [vmem:[%s2562 + $0x48] sm:$0xff]
      %v2573 = vld [vmem:[%s2562 + $0x50] sm:$0xff]
      %v2574 = vld [vmem:[%s2562 + $0x58] sm:$0xff]
      %v2575 = vld [vmem:[%s2562 + $0x60] sm:$0xff]
      %v2576 = vld [vmem:[%s2562 + $0x68] sm:$0xff]
      %v2577 = vld [vmem:[%s2562 + $0x70] sm:$0xff]
      %v2578 = vld [vmem:[%s2562 + $0x78] sm:$0xff]
      %v2579 = vld [vmem:[%s2562 + $0x80] sm:$0xff]
      %v2580 = vld [vmem:[%s2562 + $0x88] sm:$0xff]
      %v2581 = vld [vmem:[%s2562 + $0x90] sm:$0xff]
      %v2582 = vld [vmem:[%s2562 + $0x98] sm:$0xff]
      %v2583 = vld [vmem:[%s2562 + $0xa0] sm:$0xff]
      %v2584 = vld [vmem:[%s2562 + $0xa8] sm:$0xff]
      %v2585 = vld [vmem:[%s2562 + $0xb0] sm:$0xff]
      %v2586 = vld [vmem:[%s2562 + $0xb8] sm:$0xff]
      %v2587 = vld [vmem:[%s2562 + $0xc0] sm:$0xff]
      %v2588 = vld [vmem:[%s2562 + $0xc8] sm:$0xff]
      %v2589 = vld [vmem:[%s2562 + $0xd0] sm:$0xff]
      %v2590 = vld [vmem:[%s2562 + $0xd8] sm:$0xff]
      %v2591 = vld [vmem:[%s2562 + $0xe0] sm:$0xff]
      %v2592 = vld [vmem:[%s2562 + $0xe8] sm:$0xff]
      %v2593 = vld [vmem:[%s2562 + $0xf0] sm:$0xff]
      %v2594 = vld [vmem:[%s2562 + $0xf8] sm:$0xff]
      %v2595 = vld [vmem:[%s2562 + $0x100] sm:$0xff]
      %v2596 = vld [vmem:[%s2562 + $0x108] sm:$0xff]
      %v2597 = vld [vmem:[%s2562 + $0x110] sm:$0xff]
      %v2598 = vld [vmem:[%s2562 + $0x118] sm:$0xff]
      %v2599 = vld [vmem:[%s2562 + $0x120] sm:$0xff]
      %v2600 = vld [vmem:[%s2562 + $0x128] sm:$0xff]
      %v2601 = vld [vmem:[%s2562 + $0x130] sm:$0xff]
      %v2602 = vld [vmem:[%s2562 + $0x138] sm:$0xff]
      %v2603 = vld [vmem:[%s2562 + $0x140] sm:$0xff]
      %v2604 = vld [vmem:[%s2562 + $0x148] sm:$0xff]
      %v2605 = vld [vmem:[%s2562 + $0x150] sm:$0xff]
      %v2606 = vld [vmem:[%s2562 + $0x158] sm:$0xff]
      %v2607 = vld [vmem:[%s2562 + $0x160] sm:$0xff]
      %v2608 = vld [vmem:[%s2562 + $0x168] sm:$0xff]
      %v2609 = vld [vmem:[%s2562 + $0x170] sm:$0xff]
      %v2610 = vld [vmem:[%s2562 + $0x178] sm:$0xff]
      %v2611 = vld [vmem:[%s2562 + $0x180] sm:$0xff]
      %v2612 = vld [vmem:[%s2562 + $0x188] sm:$0xff]
      %v2613 = vld [vmem:[%s2562 + $0x190] sm:$0xff]
      %v2614 = vld [vmem:[%s2562 + $0x198] sm:$0xff]
      %v2615 = vld [vmem:[%s2562 + $0x1a0] sm:$0xff]
      %v2616 = vld [vmem:[%s2562 + $0x1a8] sm:$0xff]
      %v2617 = vld [vmem:[%s2562 + $0x1b0] sm:$0xff]
      %v2618 = vld [vmem:[%s2562 + $0x1b8] sm:$0xff]
      %v2619 = vld [vmem:[%s2562 + $0x1c0] sm:$0xff]
      %v2620 = vld [vmem:[%s2562 + $0x1c8] sm:$0xff]
      %v2621 = vld [vmem:[%s2562 + $0x1d0] sm:$0xff]
      %v2622 = vld [vmem:[%s2562 + $0x1d8] sm:$0xff]
      %v2623 = vld [vmem:[%s2562 + $0x1e0] sm:$0xff]
      %v2624 = vld [vmem:[%s2562 + $0x1e8] sm:$0xff]
      %v2625 = vld [vmem:[%s2562 + $0x1f0] sm:$0xff]
      %v2626 = vld [vmem:[%s2562 + $0x1f8] sm:$0xff]
      %v2627 = vld [vmem:[%s2562 + $0x200] sm:$0xff]
      %v2628 = vld [vmem:[%s2562 + $0x208] sm:$0xff]
      %v2629 = vld [vmem:[%s2562 + $0x210] sm:$0xff]
      %v2630 = vld [vmem:[%s2562 + $0x218] sm:$0xff]
      %v2631 = vld [vmem:[%s2562 + $0x220] sm:$0xff]
      %v2632 = vld [vmem:[%s2562 + $0x228] sm:$0xff]
      %v2633 = vld [vmem:[%s2562 + $0x230] sm:$0xff]
      %v2634 = vld [vmem:[%s2562 + $0x238] sm:$0xff]
      %v2635 = vld [vmem:[%s2562 + $0x240] sm:$0xff]
      %v2636 = vld [vmem:[%s2562 + $0x248] sm:$0xff]
      %v2637 = vld [vmem:[%s2562 + $0x250] sm:$0xff]
      %v2638 = vld [vmem:[%s2562 + $0x258] sm:$0xff]
      %v2639 = vld [vmem:[%s2562 + $0x260] sm:$0xff]
      %v2640 = vld [vmem:[%s2562 + $0x268] sm:$0xff]
      %v2641 = vld [vmem:[%s2562 + $0x270] sm:$0xff]
      %v2642 = vld [vmem:[%s2562 + $0x278] sm:$0xff]
      %v2643 = vld [vmem:[%s2562 + $0x280] sm:$0xff]
      %v2644 = vld [vmem:[%s2562 + $0x288] sm:$0xff]
      %v2645 = vld [vmem:[%s2562 + $0x290] sm:$0xff]
      %v2646 = vld [vmem:[%s2562 + $0x298] sm:$0xff]
      %v2647 = vld [vmem:[%s2562 + $0x2a0] sm:$0xff]
      %v2648 = vld [vmem:[%s2562 + $0x2a8] sm:$0xff]
      %v2649 = vld [vmem:[%s2562 + $0x2b0] sm:$0xff]
      %v2650 = vld [vmem:[%s2562 + $0x2b8] sm:$0xff]
      %v2651 = vld [vmem:[%s2562 + $0x2c0] sm:$0xff]
      %v2652 = vld [vmem:[%s2562 + $0x2c8] sm:$0xff]
      %v2653 = vld [vmem:[%s2562 + $0x2d0] sm:$0xff]
      %v2654 = vld [vmem:[%s2562 + $0x2d8] sm:$0xff]
      %v2655 = vld [vmem:[%s2562 + $0x2e0] sm:$0xff]
      %v2656 = vld [vmem:[%s2562 + $0x2e8] sm:$0xff]
      %v2657 = vld [vmem:[%s2562 + $0x2f0] sm:$0xff]
      %v2658 = vld [vmem:[%s2562 + $0x2f8] sm:$0xff]
      %v2659 = vld [vmem:[%s2562 + $0x300] sm:$0xff]
      %v2660 = vld [vmem:[%s2562 + $0x308] sm:$0xff]
      %v2661 = vld [vmem:[%s2562 + $0x310] sm:$0xff]
      %v2662 = vld [vmem:[%s2562 + $0x318] sm:$0xff]
      %v2663 = vld [vmem:[%s2562 + $0x320] sm:$0xff]
      %v2664 = vld [vmem:[%s2562 + $0x328] sm:$0xff]
      %v2665 = vld [vmem:[%s2562 + $0x330] sm:$0xff]
      %v2666 = vld [vmem:[%s2562 + $0x338] sm:$0xff]
      %v2667 = vld [vmem:[%s2562 + $0x340] sm:$0xff]
      %v2668 = vld [vmem:[%s2562 + $0x348] sm:$0xff]
      %v2669 = vld [vmem:[%s2562 + $0x350] sm:$0xff]
      %v2670 = vld [vmem:[%s2562 + $0x358] sm:$0xff]
      %v2671 = vld [vmem:[%s2562 + $0x360] sm:$0xff]
      %v2672 = vld [vmem:[%s2562 + $0x368] sm:$0xff]
      %v2673 = vld [vmem:[%s2562 + $0x370] sm:$0xff]
      %v2674 = vld [vmem:[%s2562 + $0x378] sm:$0xff]
      %v2675 = vld [vmem:[%s2562 + $0x380] sm:$0xff]
      %v2676 = vld [vmem:[%s2562 + $0x388] sm:$0xff]
      %v2677 = vld [vmem:[%s2562 + $0x390] sm:$0xff]
      %v2678 = vld [vmem:[%s2562 + $0x398] sm:$0xff]
      %v2679 = vld [vmem:[%s2562 + $0x3a0] sm:$0xff]
      %v2680 = vld [vmem:[%s2562 + $0x3a8] sm:$0xff]
      %v2681 = vld [vmem:[%s2562 + $0x3b0] sm:$0xff]
      %v2682 = vld [vmem:[%s2562 + $0x3b8] sm:$0xff]
      %v2683 = vld [vmem:[%s2562 + $0x3c0] sm:$0xff]
      %v2684 = vld [vmem:[%s2562 + $0x3c8] sm:$0xff]
      %v2685 = vld [vmem:[%s2562 + $0x3d0] sm:$0xff]
      %v2686 = vld [vmem:[%s2562 + $0x3d8] sm:$0xff]
      %v2687 = vld [vmem:[%s2562 + $0x3e0] sm:$0xff]
      %v2688 = vld [vmem:[%s2562 + $0x3e8] sm:$0xff]
      %v2689 = vld [vmem:[%s2562 + $0x3f0] sm:$0xff]
      %v2690 = vld [vmem:[%s2562 + $0x3f8] sm:$0xff]
      %v2691 = vld [vmem:[%s2562 + $0x400] sm:$0xff]
      %v2692 = vld [vmem:[%s2562 + $0x408] sm:$0xff]
      %v2693 = vld [vmem:[%s2562 + $0x410] sm:$0xff]
      %v2694 = vld [vmem:[%s2562 + $0x418] sm:$0xff]
      %v2695 = vld [vmem:[%s2562 + $0x420] sm:$0xff]
      %v2696 = vld [vmem:[%s2562 + $0x428] sm:$0xff]
      %v2697 = vld [vmem:[%s2562 + $0x430] sm:$0xff]
      %v2698 = vld [vmem:[%s2562 + $0x438] sm:$0xff]
      %v2699 = vld [vmem:[%s2562 + $0x440] sm:$0xff]
      %v2700 = vld [vmem:[%s2562 + $0x448] sm:$0xff]
      %v2701 = vld [vmem:[%s2562 + $0x450] sm:$0xff]
      %v2702 = vld [vmem:[%s2562 + $0x458] sm:$0xff]
      %v2703 = vld [vmem:[%s2562 + $0x460] sm:$0xff]
      %v2704 = vld [vmem:[%s2562 + $0x468] sm:$0xff]
      %v2705 = vld [vmem:[%s2562 + $0x470] sm:$0xff]
      %v2706 = vld [vmem:[%s2562 + $0x478] sm:$0xff]
      %v2707 = vpack.c.bf16 %v2566, %v2563
      %v2708 = vpack.c.bf16 %v2567, %v2564
      %v2709 = vpack.c.bf16 %v2568, %v2565
      %v2710 = vpack.c.bf16 %v2572, %v2569
      %v2711 = vpack.c.bf16 %v2573, %v2570
      %v2712 = vpack.c.bf16 %v2574, %v2571
      %v2713 = vpack.c.bf16 %v2578, %v2575
      %v2714 = vpack.c.bf16 %v2579, %v2576
      %v2715 = vpack.c.bf16 %v2580, %v2577
      %v2716 = vpack.c.bf16 %v2584, %v2581
      %v2717 = vpack.c.bf16 %v2585, %v2582
      %v2718 = vpack.c.bf16 %v2586, %v2583
      %v2719 = vpack.c.bf16 %v2590, %v2587
      %v2720 = vpack.c.bf16 %v2591, %v2588
      %v2721 = vpack.c.bf16 %v2592, %v2589
      %v2722 = vpack.c.bf16 %v2596, %v2593
      %v2723 = vpack.c.bf16 %v2597, %v2594
      %v2724 = vpack.c.bf16 %v2598, %v2595
      %v2725 = vpack.c.bf16 %v2602, %v2599
      %v2726 = vpack.c.bf16 %v2603, %v2600
      %v2727 = vpack.c.bf16 %v2604, %v2601
      %v2728 = vpack.c.bf16 %v2608, %v2605
      %v2729 = vpack.c.bf16 %v2609, %v2606
      %v2730 = vpack.c.bf16 %v2610, %v2607
      %v2731 = vpack.c.bf16 %v2614, %v2611
      %v2732 = vpack.c.bf16 %v2615, %v2612
      %v2733 = vpack.c.bf16 %v2616, %v2613
      %v2734 = vpack.c.bf16 %v2620, %v2617
      %v2735 = vpack.c.bf16 %v2621, %v2618
      %v2736 = vpack.c.bf16 %v2622, %v2619
      %v2737 = vpack.c.bf16 %v2626, %v2623
      %v2738 = vpack.c.bf16 %v2627, %v2624
      %v2739 = vpack.c.bf16 %v2628, %v2625
      %v2740 = vpack.c.bf16 %v2632, %v2629
      %v2741 = vpack.c.bf16 %v2633, %v2630
      %v2742 = vpack.c.bf16 %v2634, %v2631
      %v2743 = vpack.c.bf16 %v2638, %v2635
      %v2744 = vpack.c.bf16 %v2639, %v2636
      %v2745 = vpack.c.bf16 %v2640, %v2637
      %v2746 = vpack.c.bf16 %v2644, %v2641
      %v2747 = vpack.c.bf16 %v2645, %v2642
      %v2748 = vpack.c.bf16 %v2646, %v2643
      %v2749 = vpack.c.bf16 %v2650, %v2647
      %v2750 = vpack.c.bf16 %v2651, %v2648
      %v2751 = vpack.c.bf16 %v2652, %v2649
      %v2752 = vpack.c.bf16 %v2656, %v2653
      %v2753 = vpack.c.bf16 %v2657, %v2654
      %v2754 = vpack.c.bf16 %v2658, %v2655
      %v2755 = vpack.c.bf16 %v2662, %v2659
      %v2756 = vpack.c.bf16 %v2663, %v2660
      %v2757 = vpack.c.bf16 %v2664, %v2661
      %v2758 = vpack.c.bf16 %v2668, %v2665
      %v2759 = vpack.c.bf16 %v2669, %v2666
      %v2760 = vpack.c.bf16 %v2670, %v2667
      %v2761 = vpack.c.bf16 %v2674, %v2671
      %v2762 = vpack.c.bf16 %v2675, %v2672
      %v2763 = vpack.c.bf16 %v2676, %v2673
      %v2764 = vpack.c.bf16 %v2680, %v2677
      %v2765 = vpack.c.bf16 %v2681, %v2678
      %v2766 = vpack.c.bf16 %v2682, %v2679
      %v2767 = vpack.c.bf16 %v2686, %v2683
      %v2768 = vpack.c.bf16 %v2687, %v2684
      %v2769 = vpack.c.bf16 %v2688, %v2685
      %v2770 = vpack.c.bf16 %v2692, %v2689
      %v2771 = vpack.c.bf16 %v2693, %v2690
      %v2772 = vpack.c.bf16 %v2694, %v2691
      %v2773 = vpack.c.bf16 %v2698, %v2695
      %v2774 = vpack.c.bf16 %v2699, %v2696
      %v2775 = vpack.c.bf16 %v2700, %v2697
      %v2776 = vpack.c.bf16 %v2704, %v2701
      %v2777 = vpack.c.bf16 %v2705, %v2702
      %v2778 = vpack.c.bf16 %v2706, %v2703
      %s2779 = scalar_lea.vmem %s2, 384
      %v2780 = vld [vmem:[%s2779] sm:$0xf]
      %v2781 = vld [vmem:[%s2779 + $0x4] sm:$0xf]
      %v2782 = vld [vmem:[%s2779 + $0x8] sm:$0xf]
      %v2783 = vld [vmem:[%s2779 + $0xc] sm:$0xf]
      %v2784 = vld [vmem:[%s2779 + $0x10] sm:$0xf]
      %v2785 = vld [vmem:[%s2779 + $0x14] sm:$0xf]
      %v2786 = vld [vmem:[%s2779 + $0x18] sm:$0xf]
      %v2787 = vld [vmem:[%s2779 + $0x1c] sm:$0xf]
      %v2788 = vld [vmem:[%s2779 + $0x20] sm:$0xf]
      %v2789 = vld [vmem:[%s2779 + $0x24] sm:$0xf]
      %v2790 = vld [vmem:[%s2779 + $0x28] sm:$0xf]
      %v2791 = vld [vmem:[%s2779 + $0x2c] sm:$0xf]
      %v2792 = vld [vmem:[%s2779 + $0x30] sm:$0xf]
      %v2793 = vld [vmem:[%s2779 + $0x34] sm:$0xf]
      %v2794 = vld [vmem:[%s2779 + $0x38] sm:$0xf]
      %v2795 = vld [vmem:[%s2779 + $0x3c] sm:$0xf]
      %v2796 = vld [vmem:[%s2779 + $0x40] sm:$0xf]
      %v2797 = vld [vmem:[%s2779 + $0x44] sm:$0xf]
      %v2798 = vld [vmem:[%s2779 + $0x48] sm:$0xf]
      %v2799 = vld [vmem:[%s2779 + $0x4c] sm:$0xf]
      %v2800 = vld [vmem:[%s2779 + $0x50] sm:$0xf]
      %v2801 = vld [vmem:[%s2779 + $0x54] sm:$0xf]
      %v2802 = vld [vmem:[%s2779 + $0x58] sm:$0xf]
      %v2803 = vld [vmem:[%s2779 + $0x5c] sm:$0xf]
      %v2804 = vld [vmem:[%s2779 + $0x60] sm:$0xf]
      %v2805 = vld [vmem:[%s2779 + $0x64] sm:$0xf]
      %v2806 = vld [vmem:[%s2779 + $0x68] sm:$0xf]
      %v2807 = vld [vmem:[%s2779 + $0x6c] sm:$0xf]
      %v2808 = vld [vmem:[%s2779 + $0x70] sm:$0xf]
      %v2809 = vld [vmem:[%s2779 + $0x74] sm:$0xf]
      %v2810 = vld [vmem:[%s2779 + $0x78] sm:$0xf]
      %v2811 = vld [vmem:[%s2779 + $0x7c] sm:$0xf]
      %v2812 = vld [vmem:[%s2779 + $0x80] sm:$0xf]
      %v2813 = vld [vmem:[%s2779 + $0x84] sm:$0xf]
      %v2814 = vld [vmem:[%s2779 + $0x88] sm:$0xf]
      %v2815 = vld [vmem:[%s2779 + $0x8c] sm:$0xf]
      %v2816 = vld [vmem:[%s2779 + $0x90] sm:$0xf]
      %v2817 = vld [vmem:[%s2779 + $0x94] sm:$0xf]
      %v2818 = vld [vmem:[%s2779 + $0x98] sm:$0xf]
      %v2819 = vld [vmem:[%s2779 + $0x9c] sm:$0xf]
      %v2820 = vld [vmem:[%s2779 + $0xa0] sm:$0xf]
      %v2821 = vld [vmem:[%s2779 + $0xa4] sm:$0xf]
      %v2822 = vld [vmem:[%s2779 + $0xa8] sm:$0xf]
      %v2823 = vld [vmem:[%s2779 + $0xac] sm:$0xf]
      %v2824 = vld [vmem:[%s2779 + $0xb0] sm:$0xf]
      %v2825 = vld [vmem:[%s2779 + $0xb4] sm:$0xf]
      %v2826 = vld [vmem:[%s2779 + $0xb8] sm:$0xf]
      %v2827 = vld [vmem:[%s2779 + $0xbc] sm:$0xf]
      %v2876 = vunpack.c.l.b16 %v2780
      %v2877 = vunpack.c.l.b16 %v2781
      %v2878 = vunpack.c.l.b16 %v2782
      %v2879 = vunpack.c.l.b16 %v2783
      %v2880 = vunpack.c.l.b16 %v2784
      %v2881 = vunpack.c.l.b16 %v2785
      %v2882 = vunpack.c.l.b16 %v2786
      %v2883 = vunpack.c.l.b16 %v2787
      %v2884 = vunpack.c.l.b16 %v2788
      %v2885 = vunpack.c.l.b16 %v2789
      %v2886 = vunpack.c.l.b16 %v2790
      %v2887 = vunpack.c.l.b16 %v2791
      %v2888 = vunpack.c.l.b16 %v2792
      %v2889 = vunpack.c.l.b16 %v2793
      %v2890 = vunpack.c.l.b16 %v2794
      %v2891 = vunpack.c.l.b16 %v2795
      %v2892 = vunpack.c.l.b16 %v2796
      %v2893 = vunpack.c.l.b16 %v2797
      %v2894 = vunpack.c.l.b16 %v2798
      %v2895 = vunpack.c.l.b16 %v2799
      %v2896 = vunpack.c.l.b16 %v2800
      %v2897 = vunpack.c.l.b16 %v2801
      %v2898 = vunpack.c.l.b16 %v2802
      %v2899 = vunpack.c.l.b16 %v2803
      %v2900 = vunpack.c.l.b16 %v2804
      %v2901 = vunpack.c.l.b16 %v2805
      %v2902 = vunpack.c.l.b16 %v2806
      %v2903 = vunpack.c.l.b16 %v2807
      %v2904 = vunpack.c.l.b16 %v2808
      %v2905 = vunpack.c.l.b16 %v2809
      %v2906 = vunpack.c.l.b16 %v2810
      %v2907 = vunpack.c.l.b16 %v2811
      %v2908 = vunpack.c.l.b16 %v2812
      %v2909 = vunpack.c.l.b16 %v2813
      %v2910 = vunpack.c.l.b16 %v2814
      %v2911 = vunpack.c.l.b16 %v2815
      %v2912 = vunpack.c.l.b16 %v2816
      %v2913 = vunpack.c.l.b16 %v2817
      %v2914 = vunpack.c.l.b16 %v2818
      %v2915 = vunpack.c.l.b16 %v2819
      %v2916 = vunpack.c.l.b16 %v2820
      %v2917 = vunpack.c.l.b16 %v2821
      %v2918 = vunpack.c.l.b16 %v2822
      %v2919 = vunpack.c.l.b16 %v2823
      %v2920 = vunpack.c.l.b16 %v2824
      %v2921 = vunpack.c.l.b16 %v2825
      %v2922 = vunpack.c.l.b16 %v2826
      %v2923 = vunpack.c.l.b16 %v2827
      %v2924 = vpack.c.b16 %v2877, %v2876
      %v2925 = vpack.c.b16 %v2879, %v2878
      %v2926 = vpack.c.b16 %v2881, %v2880
      %v2927 = vpack.c.b16 %v2883, %v2882
      %v2928 = vpack.c.b16 %v2885, %v2884
      %v2929 = vpack.c.b16 %v2887, %v2886
      %v2930 = vpack.c.b16 %v2889, %v2888
      %v2931 = vpack.c.b16 %v2891, %v2890
      %v2932 = vpack.c.b16 %v2893, %v2892
      %v2933 = vpack.c.b16 %v2895, %v2894
      %v2934 = vpack.c.b16 %v2897, %v2896
      %v2935 = vpack.c.b16 %v2899, %v2898
      %v2936 = vpack.c.b16 %v2901, %v2900
      %v2937 = vpack.c.b16 %v2903, %v2902
      %v2938 = vpack.c.b16 %v2905, %v2904
      %v2939 = vpack.c.b16 %v2907, %v2906
      %v2940 = vpack.c.b16 %v2909, %v2908
      %v2941 = vpack.c.b16 %v2911, %v2910
      %v2942 = vpack.c.b16 %v2913, %v2912
      %v2943 = vpack.c.b16 %v2915, %v2914
      %v2944 = vpack.c.b16 %v2917, %v2916
      %v2945 = vpack.c.b16 %v2919, %v2918
      %v2946 = vpack.c.b16 %v2921, %v2920
      %v2947 = vpack.c.b16 %v2923, %v2922
      %2972 = vmatprep.subr.bf16.mxu0 0
      %2973 = vmatpush1.bf16.msra.mxu0 %v2924
      %2974 = vmatprep.subr.bf16.mxu0 0
      %2975 = vmatpush1.bf16.msra.mxu0 %v2925
      %2976 = vmatprep.subr.bf16.mxu0 0
      %2977 = vmatpush1.bf16.msra.mxu0 %v2926
      %2978 = vmatprep.subr.bf16.mxu0 0
      %2979 = vmatpush1.bf16.msra.mxu0 %v2927
      %2980 = vmatprep.subr.bf16.mxu0 0
      %2981 = vmatpush1.bf16.msra.mxu0 %v2928
      %2982 = vmatprep.subr.bf16.mxu0 0
      %2983 = vmatpush1.bf16.msra.mxu0 %v2929
      %2984 = vmatprep.subr.bf16.mxu0 0
      %2985 = vmatpush1.bf16.msra.mxu0 %v2930
      %2986 = vmatprep.subr.bf16.mxu0 0
      %2987 = vmatpush1.bf16.msra.mxu0 %v2931
      %2988 = vmatprep.subr.bf16.mxu0 0
      %2989 = vmatpush1.bf16.msra.mxu0 %v2932
      %2990 = vmatprep.subr.bf16.mxu0 0
      %2991 = vmatpush1.bf16.msra.mxu0 %v2933
      %2992 = vmatprep.subr.bf16.mxu0 0
      %2993 = vmatpush1.bf16.msra.mxu0 %v2934
      %2994 = vmatprep.subr.bf16.mxu0 0
      %2995 = vmatpush1.bf16.msra.mxu0 %v2935
      %2996 = vmatprep.subr.bf16.mxu0 0
      %2997 = vmatpush1.bf16.msra.mxu0 %v2936
      %2998 = vmatprep.subr.bf16.mxu0 0
      %2999 = vmatpush1.bf16.msra.mxu0 %v2937
      %3000 = vmatprep.subr.bf16.mxu0 0
      %3001 = vmatpush1.bf16.msra.mxu0 %v2938
      %3002 = vmatprep.subr.bf16.mxu0 0
      %3003 = vmatpush1.bf16.msra.mxu0 %v2939
      %3004 = vmatprep.mubr.bf16.mxu0 %v2708
      %3005 = vmatmul.mubr.bf16.gmra.mrb[0].mxu0 %v2707
      %v3006 = vpop.f32.mrb[0].mxu0
      %v3007 = vadd.f32 0.0, %v3006
      %v3008 = vpop.f32.mrb[0].mxu0
      %v3009 = vpop.f32.mrb[0].mxu0
      %v3010 = vadd.f32 0.0, %v3009
      %v3011 = vpop.f32.mrb[0].mxu0
      %3012 = vmatprep.mubr.bf16.mxu0 %v2711
      %3013 = vmatmul.mubr.bf16.gmra.mrb[0].mxu0 %v2710
      %v3014 = vpop.f32.mrb[0].mxu0
      %v3015 = vpop.f32.mrb[0].mxu0
      %v3016 = vpop.f32.mrb[0].mxu0
      %v3017 = vadd.f32 0.0, %v3016
      %v3018 = vpop.f32.mrb[0].mxu0
      %3019 = vmatprep.mubr.bf16.mxu0 %v2714
      %3020 = vmatmul.mubr.bf16.gmra.mrb[0].mxu0 %v2713
      %v3021 = vpop.f32.mrb[0].mxu0
      %v3022 = vadd.f32 0.0, %v3021
      %v3023 = vpop.f32.mrb[0].mxu0
      %v3024 = vpop.f32.mrb[0].mxu0
      %v3025 = vpop.f32.mrb[0].mxu0
      %3026 = vmatprep.mubr.bf16.mxu0 %v2717
      %3027 = vmatmul.mubr.bf16.gmra.mrb[0].mxu0 %v2716
      %v3028 = vpop.f32.mrb[0].mxu0
      %v3029 = vadd.f32 0.0, %v3028
      %v3030 = vpop.f32.mrb[0].mxu0
      %v3031 = vpop.f32.mrb[0].mxu0
      %v3032 = vadd.f32 0.0, %v3031
      %v3033 = vpop.f32.mrb[0].mxu0
      %3034 = vmatprep.mubr.bf16.mxu0 %v2720
      %3035 = vmatmul.mubr.bf16.gmra.mrb[0].mxu0 %v2719
      %v3036 = vpop.f32.mrb[0].mxu0
      %v3037 = vpop.f32.mrb[0].mxu0
      %v3038 = vpop.f32.mrb[0].mxu0
      %v3039 = vadd.f32 0.0, %v3038
      %v3040 = vpop.f32.mrb[0].mxu0
      %3041 = vmatprep.mubr.bf16.mxu0 %v2723
      %3042 = vmatmul.mubr.bf16.gmra.mrb[0].mxu0 %v2722
      %v3043 = vpop.f32.mrb[0].mxu0
      %v3044 = vadd.f32 0.0, %v3043
      %v3045 = vpop.f32.mrb[0].mxu0
      %v3046 = vpop.f32.mrb[0].mxu0
      %v3047 = vpop.f32.mrb[0].mxu0
      %3048 = vmatprep.mubr.bf16.mxu0 %v2726
      %3049 = vmatmul.mubr.bf16.gmra.mrb[0].mxu0 %v2725
      %v3050 = vpop.f32.mrb[0].mxu0
      %v3051 = vadd.f32 0.0, %v3050
      %v3052 = vpop.f32.mrb[0].mxu0
      %v3053 = vpop.f32.mrb[0].mxu0
      %v3054 = vadd.f32 0.0, %v3053
      %v3055 = vpop.f32.mrb[0].mxu0
      %3056 = vmatprep.mubr.bf16.mxu0 %v2729
      %3057 = vmatmul.mubr.bf16.gmra.mrb[0].mxu0 %v2728
      %v3058 = vpop.f32.mrb[0].mxu0
      %v3059 = vpop.f32.mrb[0].mxu0
      %v3060 = vpop.f32.mrb[0].mxu0
      %v3061 = vadd.f32 0.0, %v3060
      %v3062 = vpop.f32.mrb[0].mxu0
      %3063 = vmatprep.mubr.bf16.mxu0 %v2732
      %3064 = vmatmul.mubr.bf16.gmra.mrb[0].mxu0 %v2731
      %v3065 = vpop.f32.mrb[0].mxu0
      %v3066 = vadd.f32 0.0, %v3065
      %v3067 = vpop.f32.mrb[0].mxu0
      %v3068 = vpop.f32.mrb[0].mxu0
      %v3069 = vpop.f32.mrb[0].mxu0
      %3070 = vmatprep.mubr.bf16.mxu0 %v2735
      %3071 = vmatmul.mubr.bf16.gmra.mrb[0].mxu0 %v2734
      %v3072 = vpop.f32.mrb[0].mxu0
      %v3073 = vadd.f32 0.0, %v3072
      %v3074 = vpop.f32.mrb[0].mxu0
      %v3075 = vpop.f32.mrb[0].mxu0
      %v3076 = vadd.f32 0.0, %v3075
      %v3077 = vpop.f32.mrb[0].mxu0
      %3078 = vmatprep.mubr.bf16.mxu0 %v2738
      %3079 = vmatmul.mubr.bf16.gmra.mrb[0].mxu0 %v2737
      %v3080 = vpop.f32.mrb[0].mxu0
      %v3081 = vpop.f32.mrb[0].mxu0
      %v3082 = vpop.f32.mrb[0].mxu0
      %v3083 = vadd.f32 0.0, %v3082
      %v3084 = vpop.f32.mrb[0].mxu0
      %3085 = vmatprep.mubr.bf16.mxu0 %v2741
      %3086 = vmatmul.mubr.bf16.gmra.mrb[0].mxu0 %v2740
      %v3087 = vpop.f32.mrb[0].mxu0
      %v3088 = vadd.f32 0.0, %v3087
      %v3089 = vpop.f32.mrb[0].mxu0
      %v3090 = vpop.f32.mrb[0].mxu0
      %v3091 = vpop.f32.mrb[0].mxu0
      %3092 = vmatprep.mubr.bf16.mxu0 %v2744
      %3093 = vmatmul.mubr.bf16.gmra.mrb[0].mxu0 %v2743
      %v3094 = vpop.f32.mrb[0].mxu0
      %v3095 = vadd.f32 0.0, %v3094
      %v3096 = vpop.f32.mrb[0].mxu0
      %v3097 = vpop.f32.mrb[0].mxu0
      %v3098 = vadd.f32 0.0, %v3097
      %v3099 = vpop.f32.mrb[0].mxu0
      %3100 = vmatprep.mubr.bf16.mxu0 %v2747
      %3101 = vmatmul.mubr.bf16.gmra.mrb[0].mxu0 %v2746
      %v3102 = vpop.f32.mrb[0].mxu0
      %v3103 = vpop.f32.mrb[0].mxu0
      %v3104 = vpop.f32.mrb[0].mxu0
      %v3105 = vadd.f32 0.0, %v3104
      %v3106 = vpop.f32.mrb[0].mxu0
      %3107 = vmatprep.mubr.bf16.mxu0 %v2750
      %3108 = vmatmul.mubr.bf16.gmra.mrb[0].mxu0 %v2749
      %v3109 = vpop.f32.mrb[0].mxu0
      %v3110 = vadd.f32 0.0, %v3109
      %v3111 = vpop.f32.mrb[0].mxu0
      %v3112 = vpop.f32.mrb[0].mxu0
      %v3113 = vpop.f32.mrb[0].mxu0
      %3114 = vmatprep.mubr.bf16.mxu0 %v2753
      %3115 = vmatmul.mubr.bf16.gmra.mrb[0].mxu0 %v2752
      %v3116 = vpop.f32.mrb[0].mxu0
      %v3117 = vadd.f32 0.0, %v3116
      %v3118 = vpop.f32.mrb[0].mxu0
      %v3119 = vpop.f32.mrb[0].mxu0
      %v3120 = vadd.f32 0.0, %v3119
      %v3121 = vpop.f32.mrb[0].mxu0
      %3122 = vmatprep.mubr.bf16.mxu0 %v2756
      %3123 = vmatmul.mubr.bf16.gmra.mrb[0].mxu0 %v2755
      %v3124 = vpop.f32.mrb[0].mxu0
      %v3125 = vpop.f32.mrb[0].mxu0
      %v3126 = vpop.f32.mrb[0].mxu0
      %v3127 = vadd.f32 0.0, %v3126
      %v3128 = vpop.f32.mrb[0].mxu0
      %3129 = vmatprep.mubr.bf16.mxu0 %v2759
      %3130 = vmatmul.mubr.bf16.gmra.mrb[0].mxu0 %v2758
      %v3131 = vpop.f32.mrb[0].mxu0
      %v3132 = vadd.f32 0.0, %v3131
      %v3133 = vpop.f32.mrb[0].mxu0
      %v3134 = vpop.f32.mrb[0].mxu0
      %v3135 = vpop.f32.mrb[0].mxu0
      %3136 = vmatprep.mubr.bf16.mxu0 %v2762
      %3137 = vmatmul.mubr.bf16.gmra.mrb[0].mxu0 %v2761
      %v3138 = vpop.f32.mrb[0].mxu0
      %v3139 = vadd.f32 0.0, %v3138
      %v3140 = vpop.f32.mrb[0].mxu0
      %v3141 = vpop.f32.mrb[0].mxu0
      %v3142 = vadd.f32 0.0, %v3141
      %v3143 = vpop.f32.mrb[0].mxu0
      %3144 = vmatprep.mubr.bf16.mxu0 %v2765
      %3145 = vmatmul.mubr.bf16.gmra.mrb[0].mxu0 %v2764
      %v3146 = vpop.f32.mrb[0].mxu0
      %v3147 = vpop.f32.mrb[0].mxu0
      %v3148 = vpop.f32.mrb[0].mxu0
      %v3149 = vadd.f32 0.0, %v3148
      %v3150 = vpop.f32.mrb[0].mxu0
      %3151 = vmatprep.mubr.bf16.mxu0 %v2768
      %3152 = vmatmul.mubr.bf16.gmra.mrb[0].mxu0 %v2767
      %v3153 = vpop.f32.mrb[0].mxu0
      %v3154 = vadd.f32 0.0, %v3153
      %v3155 = vpop.f32.mrb[0].mxu0
      %v3156 = vpop.f32.mrb[0].mxu0
      %v3157 = vpop.f32.mrb[0].mxu0
      %3158 = vmatprep.mubr.bf16.mxu0 %v2771
      %3159 = vmatmul.mubr.bf16.gmra.mrb[0].mxu0 %v2770
      %v3160 = vpop.f32.mrb[0].mxu0
      %v3161 = vadd.f32 0.0, %v3160
      %v3162 = vpop.f32.mrb[0].mxu0
      %v3163 = vpop.f32.mrb[0].mxu0
      %v3164 = vadd.f32 0.0, %v3163
      %v3165 = vpop.f32.mrb[0].mxu0
      %3166 = vmatprep.mubr.bf16.mxu0 %v2774
      %3167 = vmatmul.mubr.bf16.gmra.mrb[0].mxu0 %v2773
      %v3168 = vpop.f32.mrb[0].mxu0
      %v3169 = vpop.f32.mrb[0].mxu0
      %v3170 = vpop.f32.mrb[0].mxu0
      %v3171 = vadd.f32 0.0, %v3170
      %v3172 = vpop.f32.mrb[0].mxu0
      %3173 = vmatprep.mubr.bf16.mxu0 %v2777
      %3174 = vmatmul.mubr.bf16.gmra.mrb[0].mxu0 %v2776
      %v3175 = vpop.f32.mrb[0].mxu0
      %v3176 = vadd.f32 0.0, %v3175
      %v3177 = vpop.f32.mrb[0].mxu0
      %v3178 = vpop.f32.mrb[0].mxu0
      %v3179 = vpop.f32.mrb[0].mxu0
      %3180 = vdwg.mxu0
      %3181 = vmatprep.subr.bf16.mxu0 0
      %3182 = vmatpush1.bf16.msra.mxu0 %v2940
      %3183 = vmatprep.subr.bf16.mxu0 0
      %3184 = vmatpush1.bf16.msra.mxu0 %v2941
      %3185 = vmatprep.subr.bf16.mxu0 0
      %3186 = vmatpush1.bf16.msra.mxu0 %v2942
      %3187 = vmatprep.subr.bf16.mxu0 0
      %3188 = vmatpush1.bf16.msra.mxu0 %v2943
      %3189 = vmatprep.subr.bf16.mxu0 0
      %3190 = vmatpush1.bf16.msra.mxu0 %v2944
      %3191 = vmatprep.subr.bf16.mxu0 0
      %3192 = vmatpush1.bf16.msra.mxu0 %v2945
      %3193 = vmatprep.subr.bf16.mxu0 0
      %3194 = vmatpush1.bf16.msra.mxu0 %v2946
      %3195 = vmatprep.subr.bf16.mxu0 0
      %3196 = vmatpush1.bf16.msra.mxu0 %v2947
      %3197 = vmatprep.subr.bf16.mxu0 0
      %3198 = vmatpush1.bf16.msra.mxu0 0
      %3199 = vmatprep.subr.bf16.mxu0 0
      %3200 = vmatpush1.bf16.msra.mxu0 0
      %3201 = vmatprep.subr.bf16.mxu0 0
      %3202 = vmatpush1.bf16.msra.mxu0 0
      %3203 = vmatprep.subr.bf16.mxu0 0
      %3204 = vmatpush1.bf16.msra.mxu0 0
      %3205 = vmatprep.subr.bf16.mxu0 0
      %3206 = vmatpush1.bf16.msra.mxu0 0
      %3207 = vmatprep.subr.bf16.mxu0 0
      %3208 = vmatpush1.bf16.msra.mxu0 0
      %3209 = vmatprep.subr.bf16.mxu0 0
      %3210 = vmatpush1.bf16.msra.mxu0 0
      %3211 = vmatprep.subr.bf16.mxu0 0
      %3212 = vmatpush1.bf16.msra.mxu0 0
      %3213 = vmatprep.mubr.bf16.mxu0 0
      %3214 = vmatmul.mubr.bf16.gmra.mrb[0].mxu0 %v2709
      %v3215 = vpop.f32.mrb[0].mxu0
      %v3216 = vadd.f32 %v3007, %v3215
      %v3217 = vpop.f32.mrb[0].mxu0
      %v3218 = vpop.f32.mrb[0].mxu0
      %v3219 = vadd.f32 %v3010, %v3218
      %v3220 = vpop.f32.mrb[0].mxu0
      %3221 = vmatprep.mubr.bf16.mxu0 0
      %3222 = vmatmul.mubr.bf16.gmra.mrb[0].mxu0 %v2712
      %v3223 = vpop.f32.mrb[0].mxu0
      %v3224 = vpop.f32.mrb[0].mxu0
      %v3225 = vpop.f32.mrb[0].mxu0
      %v3226 = vadd.f32 %v3017, %v3225
      %v3227 = vpop.f32.mrb[0].mxu0
      %3228 = vmatprep.mubr.bf16.mxu0 0
      %3229 = vmatmul.mubr.bf16.gmra.mrb[0].mxu0 %v2715
      %v3230 = vpop.f32.mrb[0].mxu0
      %v3231 = vadd.f32 %v3022, %v3230
      %v3232 = vpop.f32.mrb[0].mxu0
      %v3233 = vpop.f32.mrb[0].mxu0
      %v3234 = vpop.f32.mrb[0].mxu0
      %3235 = vmatprep.mubr.bf16.mxu0 0
      %3236 = vmatmul.mubr.bf16.gmra.mrb[0].mxu0 %v2718
      %v3237 = vpop.f32.mrb[0].mxu0
      %v3238 = vadd.f32 %v3029, %v3237
      %v3239 = vpop.f32.mrb[0].mxu0
      %v3240 = vpop.f32.mrb[0].mxu0
      %v3241 = vadd.f32 %v3032, %v3240
      %v3242 = vpop.f32.mrb[0].mxu0
      %3243 = vmatprep.mubr.bf16.mxu0 0
      %3244 = vmatmul.mubr.bf16.gmra.mrb[0].mxu0 %v2721
      %v3245 = vpop.f32.mrb[0].mxu0
      %v3246 = vpop.f32.mrb[0].mxu0
      %v3247 = vpop.f32.mrb[0].mxu0
      %v3248 = vadd.f32 %v3039, %v3247
      %v3249 = vpop.f32.mrb[0].mxu0
      %3250 = vmatprep.mubr.bf16.mxu0 0
      %3251 = vmatmul.mubr.bf16.gmra.mrb[0].mxu0 %v2724
      %v3252 = vpop.f32.mrb[0].mxu0
      %v3253 = vadd.f32 %v3044, %v3252
      %v3254 = vpop.f32.mrb[0].mxu0
      %v3255 = vpop.f32.mrb[0].mxu0
      %v3256 = vpop.f32.mrb[0].mxu0
      %3257 = vmatprep.mubr.bf16.mxu0 0
      %3258 = vmatmul.mubr.bf16.gmra.mrb[0].mxu0 %v2727
      %v3259 = vpop.f32.mrb[0].mxu0
      %v3260 = vadd.f32 %v3051, %v3259
      %v3261 = vpop.f32.mrb[0].mxu0
      %v3262 = vpop.f32.mrb[0].mxu0
      %v3263 = vadd.f32 %v3054, %v3262
      %v3264 = vpop.f32.mrb[0].mxu0
      %3265 = vmatprep.mubr.bf16.mxu0 0
      %3266 = vmatmul.mubr.bf16.gmra.mrb[0].mxu0 %v2730
      %v3267 = vpop.f32.mrb[0].mxu0
      %v3268 = vpop.f32.mrb[0].mxu0
      %v3269 = vpop.f32.mrb[0].mxu0
      %v3270 = vadd.f32 %v3061, %v3269
      %v3271 = vpop.f32.mrb[0].mxu0
      %3272 = vmatprep.mubr.bf16.mxu0 0
      %3273 = vmatmul.mubr.bf16.gmra.mrb[0].mxu0 %v2733
      %v3274 = vpop.f32.mrb[0].mxu0
      %v3275 = vadd.f32 %v3066, %v3274
      %v3276 = vpop.f32.mrb[0].mxu0
      %v3277 = vpop.f32.mrb[0].mxu0
      %v3278 = vpop.f32.mrb[0].mxu0
      %3279 = vmatprep.mubr.bf16.mxu0 0
      %3280 = vmatmul.mubr.bf16.gmra.mrb[0].mxu0 %v2736
      %v3281 = vpop.f32.mrb[0].mxu0
      %v3282 = vadd.f32 %v3073, %v3281
      %v3283 = vpop.f32.mrb[0].mxu0
      %v3284 = vpop.f32.mrb[0].mxu0
      %v3285 = vadd.f32 %v3076, %v3284
      %v3286 = vpop.f32.mrb[0].mxu0
      %3287 = vmatprep.mubr.bf16.mxu0 0
      %3288 = vmatmul.mubr.bf16.gmra.mrb[0].mxu0 %v2739
      %v3289 = vpop.f32.mrb[0].mxu0
      %v3290 = vpop.f32.mrb[0].mxu0
      %v3291 = vpop.f32.mrb[0].mxu0
      %v3292 = vadd.f32 %v3083, %v3291
      %v3293 = vpop.f32.mrb[0].mxu0
      %3294 = vmatprep.mubr.bf16.mxu0 0
      %3295 = vmatmul.mubr.bf16.gmra.mrb[0].mxu0 %v2742
      %v3296 = vpop.f32.mrb[0].mxu0
      %v3297 = vadd.f32 %v3088, %v3296
      %v3298 = vpop.f32.mrb[0].mxu0
      %v3299 = vpop.f32.mrb[0].mxu0
      %v3300 = vpop.f32.mrb[0].mxu0
      %3301 = vmatprep.mubr.bf16.mxu0 0
      %3302 = vmatmul.mubr.bf16.gmra.mrb[0].mxu0 %v2745
      %v3303 = vpop.f32.mrb[0].mxu0
      %v3304 = vadd.f32 %v3095, %v3303
      %v3305 = vpop.f32.mrb[0].mxu0
      %v3306 = vpop.f32.mrb[0].mxu0
      %v3307 = vadd.f32 %v3098, %v3306
      %v3308 = vpop.f32.mrb[0].mxu0
      %3309 = vmatprep.mubr.bf16.mxu0 0
      %3310 = vmatmul.mubr.bf16.gmra.mrb[0].mxu0 %v2748
      %v3311 = vpop.f32.mrb[0].mxu0
      %v3312 = vpop.f32.mrb[0].mxu0
      %v3313 = vpop.f32.mrb[0].mxu0
      %v3314 = vadd.f32 %v3105, %v3313
      %v3315 = vpop.f32.mrb[0].mxu0
      %3316 = vmatprep.mubr.bf16.mxu0 0
      %3317 = vmatmul.mubr.bf16.gmra.mrb[0].mxu0 %v2751
      %v3318 = vpop.f32.mrb[0].mxu0
      %v3319 = vadd.f32 %v3110, %v3318
      %v3320 = vpop.f32.mrb[0].mxu0
      %v3321 = vpop.f32.mrb[0].mxu0
      %v3322 = vpop.f32.mrb[0].mxu0
      %3323 = vmatprep.mubr.bf16.mxu0 0
      %3324 = vmatmul.mubr.bf16.gmra.mrb[0].mxu0 %v2754
      %v3325 = vpop.f32.mrb[0].mxu0
      %v3326 = vadd.f32 %v3117, %v3325
      %v3327 = vpop.f32.mrb[0].mxu0
      %v3328 = vpop.f32.mrb[0].mxu0
      %v3329 = vadd.f32 %v3120, %v3328
      %v3330 = vpop.f32.mrb[0].mxu0
      %3331 = vmatprep.mubr.bf16.mxu0 0
      %3332 = vmatmul.mubr.bf16.gmra.mrb[0].mxu0 %v2757
      %v3333 = vpop.f32.mrb[0].mxu0
      %v3334 = vpop.f32.mrb[0].mxu0
      %v3335 = vpop.f32.mrb[0].mxu0
      %v3336 = vadd.f32 %v3127, %v3335
      %v3337 = vpop.f32.mrb[0].mxu0
      %3338 = vmatprep.mubr.bf16.mxu0 0
      %3339 = vmatmul.mubr.bf16.gmra.mrb[0].mxu0 %v2760
      %v3340 = vpop.f32.mrb[0].mxu0
      %v3341 = vadd.f32 %v3132, %v3340
      %v3342 = vpop.f32.mrb[0].mxu0
      %v3343 = vpop.f32.mrb[0].mxu0
      %v3344 = vpop.f32.mrb[0].mxu0
      %3345 = vmatprep.mubr.bf16.mxu0 0
      %3346 = vmatmul.mubr.bf16.gmra.mrb[0].mxu0 %v2763
      %v3347 = vpop.f32.mrb[0].mxu0
      %v3348 = vadd.f32 %v3139, %v3347
      %v3349 = vpop.f32.mrb[0].mxu0
      %v3350 = vpop.f32.mrb[0].mxu0
      %v3351 = vadd.f32 %v3142, %v3350
      %v3352 = vpop.f32.mrb[0].mxu0
      %3353 = vmatprep.mubr.bf16.mxu0 0
      %3354 = vmatmul.mubr.bf16.gmra.mrb[0].mxu0 %v2766
      %v3355 = vpop.f32.mrb[0].mxu0
      %v3356 = vpop.f32.mrb[0].mxu0
      %v3357 = vpop.f32.mrb[0].mxu0
      %v3358 = vadd.f32 %v3149, %v3357
      %v3359 = vpop.f32.mrb[0].mxu0
      %3360 = vmatprep.mubr.bf16.mxu0 0
      %3361 = vmatmul.mubr.bf16.gmra.mrb[0].mxu0 %v2769
      %v3362 = vpop.f32.mrb[0].mxu0
      %v3363 = vadd.f32 %v3154, %v3362
      %v3364 = vpop.f32.mrb[0].mxu0
      %v3365 = vpop.f32.mrb[0].mxu0
      %v3366 = vpop.f32.mrb[0].mxu0
      %3367 = vmatprep.mubr.bf16.mxu0 0
      %3368 = vmatmul.mubr.bf16.gmra.mrb[0].mxu0 %v2772
      %v3369 = vpop.f32.mrb[0].mxu0
      %v3370 = vadd.f32 %v3161, %v3369
      %v3371 = vpop.f32.mrb[0].mxu0
      %v3372 = vpop.f32.mrb[0].mxu0
      %v3373 = vadd.f32 %v3164, %v3372
      %v3374 = vpop.f32.mrb[0].mxu0
      %3375 = vmatprep.mubr.bf16.mxu0 0
      %3376 = vmatmul.mubr.bf16.gmra.mrb[0].mxu0 %v2775
      %v3377 = vpop.f32.mrb[0].mxu0
      %v3378 = vpop.f32.mrb[0].mxu0
      %v3379 = vpop.f32.mrb[0].mxu0
      %v3380 = vadd.f32 %v3171, %v3379
      %v3381 = vpop.f32.mrb[0].mxu0
      %3382 = vmatprep.mubr.bf16.mxu0 0
      %3383 = vmatmul.mubr.bf16.gmra.mrb[0].mxu0 %v2778
      %v3384 = vpop.f32.mrb[0].mxu0
      %v3385 = vadd.f32 %v3176, %v3384
      %v3386 = vpop.f32.mrb[0].mxu0
      %v3387 = vpop.f32.mrb[0].mxu0
      %v3388 = vpop.f32.mrb[0].mxu0
      %3389 = vdwg.mxu0
      %v3390 = vadd.f32 %v2388, %v3216
      %v3391 = vadd.f32 %v2391, %v3219
      %v3392 = vadd.f32 %v2398, %v3226
      %v3393 = vadd.f32 %v2403, %v3231
      %v3394 = vadd.f32 %v2410, %v3238
      %v3395 = vadd.f32 %v2413, %v3241
      %v3396 = vadd.f32 %v2420, %v3248
      %v3397 = vadd.f32 %v2425, %v3253
      %v3398 = vadd.f32 %v2432, %v3260
      %v3399 = vadd.f32 %v2435, %v3263
      %v3400 = vadd.f32 %v2442, %v3270
      %v3401 = vadd.f32 %v2447, %v3275
      %v3402 = vadd.f32 %v2454, %v3282
      %v3403 = vadd.f32 %v2457, %v3285
      %v3404 = vadd.f32 %v2464, %v3292
      %v3405 = vadd.f32 %v2469, %v3297
      %v3406 = vadd.f32 %v2476, %v3304
      %v3407 = vadd.f32 %v2479, %v3307
      %v3408 = vadd.f32 %v2486, %v3314
      %v3409 = vadd.f32 %v2491, %v3319
      %v3410 = vadd.f32 %v2498, %v3326
      %v3411 = vadd.f32 %v2501, %v3329
      %v3412 = vadd.f32 %v2508, %v3336
      %v3413 = vadd.f32 %v2513, %v3341
      %v3414 = vadd.f32 %v2520, %v3348
      %v3415 = vadd.f32 %v2523, %v3351
      %v3416 = vadd.f32 %v2530, %v3358
      %v3417 = vadd.f32 %v2535, %v3363
      %v3418 = vadd.f32 %v2542, %v3370
      %v3419 = vadd.f32 %v2545, %v3373
      %v3420 = vadd.f32 %v2552, %v3380
      %v3421 = vadd.f32 %v2557, %v3385
      %v3422 = vld [vmem:[%s3] sm:$0x1]
      %v3424 = vlaneseq
      %v3425 = vshrl.u32 %v3424, 7
      %v3426 = vsub.s32 0, %v3425
      %v3427 = vrot.slane %v3422, %v3426
      %v3429 = vadd.f32 %v3390, %v3427
      %v3430 = vadd.f32 %v3391, %v3427
      %v3431 = vadd.f32 %v3392, %v3427
      %v3432 = vadd.f32 %v3393, %v3427
      %v3433 = vadd.f32 %v3394, %v3427
      %v3434 = vadd.f32 %v3395, %v3427
      %v3435 = vadd.f32 %v3396, %v3427
      %v3436 = vadd.f32 %v3397, %v3427
      %v3437 = vadd.f32 %v3398, %v3427
      %v3438 = vadd.f32 %v3399, %v3427
      %v3439 = vadd.f32 %v3400, %v3427
      %v3440 = vadd.f32 %v3401, %v3427
      %v3441 = vadd.f32 %v3402, %v3427
      %v3442 = vadd.f32 %v3403, %v3427
      %v3443 = vadd.f32 %v3404, %v3427
      %v3444 = vadd.f32 %v3405, %v3427
      %v3445 = vadd.f32 %v3406, %v3427
      %v3446 = vadd.f32 %v3407, %v3427
      %v3447 = vadd.f32 %v3408, %v3427
      %v3448 = vadd.f32 %v3409, %v3427
      %v3449 = vadd.f32 %v3410, %v3427
      %v3450 = vadd.f32 %v3411, %v3427
      %v3451 = vadd.f32 %v3412, %v3427
      %v3452 = vadd.f32 %v3413, %v3427
      %v3453 = vadd.f32 %v3414, %v3427
      %v3454 = vadd.f32 %v3415, %v3427
      %v3455 = vadd.f32 %v3416, %v3427
      %v3456 = vadd.f32 %v3417, %v3427
      %v3457 = vadd.f32 %v3418, %v3427
      %v3458 = vadd.f32 %v3419, %v3427
      %v3459 = vadd.f32 %v3420, %v3427
      %v3460 = vadd.f32 %v3421, %v3427
      %v3461 = vmax.f32 %v3429, 0.0
      %v3462 = vmax.f32 %v3430, 0.0
      %v3463 = vmax.f32 %v3431, 0.0
      %v3464 = vmax.f32 %v3432, 0.0
      %v3465 = vmax.f32 %v3433, 0.0
      %v3466 = vmax.f32 %v3434, 0.0
      %v3467 = vmax.f32 %v3435, 0.0
      %v3468 = vmax.f32 %v3436, 0.0
      %v3469 = vmax.f32 %v3437, 0.0
      %v3470 = vmax.f32 %v3438, 0.0
      %v3471 = vmax.f32 %v3439, 0.0
      %v3472 = vmax.f32 %v3440, 0.0
      %v3473 = vmax.f32 %v3441, 0.0
      %v3474 = vmax.f32 %v3442, 0.0
      %v3475 = vmax.f32 %v3443, 0.0
      %v3476 = vmax.f32 %v3444, 0.0
      %v3477 = vmax.f32 %v3445, 0.0
      %v3478 = vmax.f32 %v3446, 0.0
      %v3479 = vmax.f32 %v3447, 0.0
      %v3480 = vmax.f32 %v3448, 0.0
      %v3481 = vmax.f32 %v3449, 0.0
      %v3482 = vmax.f32 %v3450, 0.0
      %v3483 = vmax.f32 %v3451, 0.0
      %v3484 = vmax.f32 %v3452, 0.0
      %v3485 = vmax.f32 %v3453, 0.0
      %v3486 = vmax.f32 %v3454, 0.0
      %v3487 = vmax.f32 %v3455, 0.0
      %v3488 = vmax.f32 %v3456, 0.0
      %v3489 = vmax.f32 %v3457, 0.0
      %v3490 = vmax.f32 %v3458, 0.0
      %v3491 = vmax.f32 %v3459, 0.0
      %v3492 = vmax.f32 %v3460, 0.0
      %v3493 = vpack.c.bf16 %v3462, %v3461
      %v3494 = vpack.c.bf16 %v3464, %v3463
      %v3495 = vpack.c.bf16 %v3466, %v3465
      %v3496 = vpack.c.bf16 %v3468, %v3467
      %v3497 = vpack.c.bf16 %v3470, %v3469
      %v3498 = vpack.c.bf16 %v3472, %v3471
      %v3499 = vpack.c.bf16 %v3474, %v3473
      %v3500 = vpack.c.bf16 %v3476, %v3475
      %v3501 = vpack.c.bf16 %v3478, %v3477
      %v3502 = vpack.c.bf16 %v3480, %v3479
      %v3503 = vpack.c.bf16 %v3482, %v3481
      %v3504 = vpack.c.bf16 %v3484, %v3483
      %v3505 = vpack.c.bf16 %v3486, %v3485
      %v3506 = vpack.c.bf16 %v3488, %v3487
      %v3507 = vpack.c.bf16 %v3490, %v3489
      %v3508 = vpack.c.bf16 %v3492, %v3491
      %v3525 = vunpack.c.l.b16 %v3493
      %v3526 = vunpack.c.h.b16 %v3493
      %v3527 = vunpack.c.l.b16 %v3494
      %v3528 = vunpack.c.h.b16 %v3494
      %v3529 = vunpack.c.l.b16 %v3495
      %v3530 = vunpack.c.h.b16 %v3495
      %v3531 = vunpack.c.l.b16 %v3496
      %v3532 = vunpack.c.h.b16 %v3496
      %v3533 = vunpack.c.l.b16 %v3497
      %v3534 = vunpack.c.h.b16 %v3497
      %v3535 = vunpack.c.l.b16 %v3498
      %v3536 = vunpack.c.h.b16 %v3498
      %v3537 = vunpack.c.l.b16 %v3499
      %v3538 = vunpack.c.h.b16 %v3499
      %v3539 = vunpack.c.l.b16 %v3500
      %v3540 = vunpack.c.h.b16 %v3500
      %v3541 = vunpack.c.l.b16 %v3501
      %v3542 = vunpack.c.h.b16 %v3501
      %v3543 = vunpack.c.l.b16 %v3502
      %v3544 = vunpack.c.h.b16 %v3502
      %v3545 = vunpack.c.l.b16 %v3503
      %v3546 = vunpack.c.h.b16 %v3503
      %v3547 = vunpack.c.l.b16 %v3504
      %v3548 = vunpack.c.h.b16 %v3504
      %v3549 = vunpack.c.l.b16 %v3505
      %v3550 = vunpack.c.h.b16 %v3505
      %v3551 = vunpack.c.l.b16 %v3506
      %v3552 = vunpack.c.h.b16 %v3506
      %v3553 = vunpack.c.l.b16 %v3507
      %v3554 = vunpack.c.h.b16 %v3507
      %v3555 = vunpack.c.l.b16 %v3508
      %v3556 = vunpack.c.h.b16 %v3508
      %v3557 = vpack.c.b16 %v3525, %v3525
      %v3558 = vpack.c.b16 %v3526, %v3526
      %v3559 = vpack.c.b16 %v3527, %v3527
      %v3560 = vpack.c.b16 %v3528, %v3528
      %v3561 = vpack.c.b16 %v3529, %v3529
      %v3562 = vpack.c.b16 %v3530, %v3530
      %v3563 = vpack.c.b16 %v3531, %v3531
      %v3564 = vpack.c.b16 %v3532, %v3532
      %v3565 = vpack.c.b16 %v3533, %v3533
      %v3566 = vpack.c.b16 %v3534, %v3534
      %v3567 = vpack.c.b16 %v3535, %v3535
      %v3568 = vpack.c.b16 %v3536, %v3536
      %v3569 = vpack.c.b16 %v3537, %v3537
      %v3570 = vpack.c.b16 %v3538, %v3538
      %v3571 = vpack.c.b16 %v3539, %v3539
      %v3572 = vpack.c.b16 %v3540, %v3540
      %v3573 = vpack.c.b16 %v3541, %v3541
      %v3574 = vpack.c.b16 %v3542, %v3542
      %v3575 = vpack.c.b16 %v3543, %v3543
      %v3576 = vpack.c.b16 %v3544, %v3544
      %v3577 = vpack.c.b16 %v3545, %v3545
      %v3578 = vpack.c.b16 %v3546, %v3546
      %v3579 = vpack.c.b16 %v3547, %v3547
      %v3580 = vpack.c.b16 %v3548, %v3548
      %v3581 = vpack.c.b16 %v3549, %v3549
      %v3582 = vpack.c.b16 %v3550, %v3550
      %v3583 = vpack.c.b16 %v3551, %v3551
      %v3584 = vpack.c.b16 %v3552, %v3552
      %v3585 = vpack.c.b16 %v3553, %v3553
      %v3586 = vpack.c.b16 %v3554, %v3554
      %v3587 = vpack.c.b16 %v3555, %v3555
      %v3588 = vpack.c.b16 %v3556, %v3556
      %3621 = vst [vmem:[%s231] sm:$0xf] %v3557
      %3622 = vst [vmem:[%s231 + $0x4] sm:$0xf] %v3558
      %3623 = vst [vmem:[%s231 + $0x8] sm:$0xf] %v3559
      %3624 = vst [vmem:[%s231 + $0xc] sm:$0xf] %v3560
      %3625 = vst [vmem:[%s231 + $0x10] sm:$0xf] %v3561
      %3626 = vst [vmem:[%s231 + $0x14] sm:$0xf] %v3562
      %3627 = vst [vmem:[%s231 + $0x18] sm:$0xf] %v3563
      %3628 = vst [vmem:[%s231 + $0x1c] sm:$0xf] %v3564
      %3629 = vst [vmem:[%s231 + $0x20] sm:$0xf] %v3565
      %3630 = vst [vmem:[%s231 + $0x24] sm:$0xf] %v3566
      %3631 = vst [vmem:[%s231 + $0x28] sm:$0xf] %v3567
      %3632 = vst [vmem:[%s231 + $0x2c] sm:$0xf] %v3568
      %3633 = vst [vmem:[%s231 + $0x30] sm:$0xf] %v3569
      %3634 = vst [vmem:[%s231 + $0x34] sm:$0xf] %v3570
      %3635 = vst [vmem:[%s231 + $0x38] sm:$0xf] %v3571
      %3636 = vst [vmem:[%s231 + $0x3c] sm:$0xf] %v3572
      %3637 = vst [vmem:[%s231 + $0x40] sm:$0xf] %v3573
      %3638 = vst [vmem:[%s231 + $0x44] sm:$0xf] %v3574
      %3639 = vst [vmem:[%s231 + $0x48] sm:$0xf] %v3575
      %3640 = vst [vmem:[%s231 + $0x4c] sm:$0xf] %v3576
      %3641 = vst [vmem:[%s231 + $0x50] sm:$0xf] %v3577
      %3642 = vst [vmem:[%s231 + $0x54] sm:$0xf] %v3578
      %3643 = vst [vmem:[%s231 + $0x58] sm:$0xf] %v3579
      %3644 = vst [vmem:[%s231 + $0x5c] sm:$0xf] %v3580
      %3645 = vst [vmem:[%s231 + $0x60] sm:$0xf] %v3581
      %3646 = vst [vmem:[%s231 + $0x64] sm:$0xf] %v3582
      %3647 = vst [vmem:[%s231 + $0x68] sm:$0xf] %v3583
      %3648 = vst [vmem:[%s231 + $0x6c] sm:$0xf] %v3584
      %3649 = vst [vmem:[%s231 + $0x70] sm:$0xf] %v3585
      %3650 = vst [vmem:[%s231 + $0x74] sm:$0xf] %v3586
      %3651 = vst [vmem:[%s231 + $0x78] sm:$0xf] %v3587
      %3652 = vst [vmem:[%s231 + $0x7c] sm:$0xf] %v3588
      %v3653 = vunpack.c.l.bf16 %v3493
      %v3654 = vunpack.c.h.bf16 %v3493
      %v3655 = vunpack.c.l.bf16 %v3494
      %v3656 = vunpack.c.h.bf16 %v3494
      %v3657 = vunpack.c.l.bf16 %v3495
      %v3658 = vunpack.c.h.bf16 %v3495
      %v3659 = vunpack.c.l.bf16 %v3496
      %v3660 = vunpack.c.h.bf16 %v3496
      %v3661 = vunpack.c.l.bf16 %v3497
      %v3662 = vunpack.c.h.bf16 %v3497
      %v3663 = vunpack.c.l.bf16 %v3498
      %v3664 = vunpack.c.h.bf16 %v3498
      %v3665 = vunpack.c.l.bf16 %v3499
      %v3666 = vunpack.c.h.bf16 %v3499
      %v3667 = vunpack.c.l.bf16 %v3500
      %v3668 = vunpack.c.h.bf16 %v3500
      %v3669 = vunpack.c.l.bf16 %v3501
      %v3670 = vunpack.c.h.bf16 %v3501
      %v3671 = vunpack.c.l.bf16 %v3502
      %v3672 = vunpack.c.h.bf16 %v3502
      %v3673 = vunpack.c.l.bf16 %v3503
      %v3674 = vunpack.c.h.bf16 %v3503
      %v3675 = vunpack.c.l.bf16 %v3504
      %v3676 = vunpack.c.h.bf16 %v3504
      %v3677 = vunpack.c.l.bf16 %v3505
      %v3678 = vunpack.c.h.bf16 %v3505
      %v3679 = vunpack.c.l.bf16 %v3506
      %v3680 = vunpack.c.h.bf16 %v3506
      %v3681 = vunpack.c.l.bf16 %v3507
      %v3682 = vunpack.c.h.bf16 %v3507
      %v3683 = vunpack.c.l.bf16 %v3508
      %v3684 = vunpack.c.h.bf16 %v3508
      %v3685 = vmax.f32 %v3653, %v3657
      %v3686 = vmax.f32 %v3654, %v3658
      %v3687 = vmax.f32 %v3655, %v3659
      %v3688 = vmax.f32 %v3656, %v3660
      %v3689 = vmax.f32 %v3685, %v3661
      %v3690 = vmax.f32 %v3686, %v3662
      %v3691 = vmax.f32 %v3687, %v3663
      %v3692 = vmax.f32 %v3688, %v3664
      %v3693 = vmax.f32 %v3689, %v3665
      %v3694 = vmax.f32 %v3690, %v3666
      %v3695 = vmax.f32 %v3691, %v3667
      %v3696 = vmax.f32 %v3692, %v3668
      %v3697 = vmax.f32 %v3693, %v3669
      %v3698 = vmax.f32 %v3694, %v3670
      %v3699 = vmax.f32 %v3695, %v3671
      %v3700 = vmax.f32 %v3696, %v3672
      %v3701 = vmax.f32 %v3697, %v3673
      %v3702 = vmax.f32 %v3698, %v3674
      %v3703 = vmax.f32 %v3699, %v3675
      %v3704 = vmax.f32 %v3700, %v3676
      %v3705 = vmax.f32 %v3701, %v3677
      %v3706 = vmax.f32 %v3702, %v3678
      %v3707 = vmax.f32 %v3703, %v3679
      %v3708 = vmax.f32 %v3704, %v3680
      %v3709 = vmax.f32 %v3705, %v3681
      %v3710 = vmax.f32 %v3706, %v3682
      %v3711 = vmax.f32 %v3707, %v3683
      %v3712 = vmax.f32 %v3708, %v3684
      %v3713 = vmax.f32 %v3709, %v3710
      %v3714 = vmax.f32 %v3711, %v3712
      %v3715 = vmax.f32 %v3713, %v3714
      %v3716 = vrot.slane %v3715, 4
      %v3717 = vmax.f32 %v3715, %v3716
      %v3718 = vrot.slane %v3717, 2
      %v3719 = vmax.f32 %v3717, %v3718
      %v3720 = vrot.slane %v3719, 1
      %v3721 = vmax.f32 %v3719, %v3720
      %3722 = vst [vmem:[%s234] sm:$0x1] %v3721
      %p3723 = scmp.lt.s32.totalorder %s18, 1
      %s3724 = scalar_select %p3723, %s18, 1
      %s3725 = smul.addr %s3724, 32
      %s3726 = smul.addr %s3725, 4
      %s3727 = scalar_lea.vmem %s4, %s3726
      %p3728 = scmp.lt.s32.totalorder %s18, 1
      %s3729 = scalar_select %p3728, %s18, 1
      %s3730 = scalar_lea.vmem %s5, %s3729
      // Predicated region
      $region37: #{bottleneck_forward.6} parent=35 // pred_check
        %p3731 = pneg %p125
      $region38: #{bottleneck_forward.6} parent=35 // pred_check_branch
        %3733 = sbr.rel (%p3731) target = $region40
      $region39: #{bottleneck_forward.6} parent=35 // pred_region
        _
      $region40: #{bottleneck_forward.6} parent=35 // pred_fallthru
        _
      // Predicated region
      $region41: #{bottleneck_forward.6} parent=35 // pred_check
        %p3734 = pneg %p151
      $region42: #{bottleneck_forward.6} parent=35 // pred_check_branch
        %3736 = sbr.rel (%p3734) target = $region44
      $region43: #{bottleneck_forward.6} parent=35 // pred_region
        _
      $region44: #{bottleneck_forward.6} parent=35 // pred_fallthru
        _
    $region36: #{bottleneck_forward.6} parent=5 // pred_fallthru
      _
    %p3737 = scmp.le.s32.totalorder 2, %s13
    // Predicated region
    $region45: #{bottleneck_forward.6} parent=5 // pred_check
      %p3738 = pneg %p3737
    $region46: #{bottleneck_forward.6} parent=5 // pred_check_branch
      %3740 = sbr.rel (%p3738) target = $region48
    $region47: #{bottleneck_forward.6} parent=5 // pred_region
      %s3741 = ssub.s32 %s13, 2
      // Predicated region
      $region49: #{bottleneck_forward.6} parent=47 // pred_check
        %p3742 = pneg %p131
      $region50: #{bottleneck_forward.6} parent=47 // pred_check_branch
        %3744 = sbr.rel (%p3742) target = $region52
      $region51: #{bottleneck_forward.6} parent=47 // pred_region
        %p3745 = scmp.lt.s32.totalorder %s19, 1
        %s3746 = scalar_select %p3745, %s19, 1
        %s3747 = smul.addr %s3746, 32
        %s3748 = smul.addr %s3747, 4
        %s3749 = scalar_lea.vmem %s4, %s3748
      $region52: #{bottleneck_forward.6} parent=47 // pred_fallthru
        _
      // Predicated region
      $region53: #{bottleneck_forward.6} parent=47 // pred_check
        %p3750 = pneg %p157
      $region54: #{bottleneck_forward.6} parent=47 // pred_check_branch
        %3752 = sbr.rel (%p3750) target = $region56
      $region55: #{bottleneck_forward.6} parent=47 // pred_region
        %p3753 = scmp.lt.s32.totalorder %s19, 1
        %s3754 = scalar_select %p3753, %s19, 1
        %s3755 = scalar_lea.vmem %s5, %s3754
      $region56: #{bottleneck_forward.6} parent=47 // pred_fallthru
        _
    $region48: #{bottleneck_forward.6} parent=5 // pred_fallthru
      _
  $region6: #{bottleneck_forward.6} parent=0 // loop_footer
    %s17 = sadd.s32 1, %s13
  $region7: #{bottleneck_forward.6} parent=0 // loop_footer_branch
    %12 = sbr.rel target = $region3
  $region8: #{bottleneck_forward.6} parent=0 // loop_exit
    _

</llo_original>
